<compile_context>
chip_gen: v6e
topology: v6e:2x2x1
jax: 0.10.0
libtpu: 0.0.40
codegen_flags: <defaults>
</compile_context>

<pallas_src>
import functools

import jax
import jax.numpy as jnp
import numpy as np
from jax.experimental import pallas as pl
from jax.experimental.pallas import tpu as pltpu


PADC = 128            # lane-aligned column offset of the image interior in pad_ref


def _round8(n):
    return ((n + 7) // 8) * 8


# ----------------------------------------------------------------------------
# In-kernel 'same' 3x3 conv on a lane-dense (Cin, H*W) f32 slab.
# Taps are read from a zero-margined f32 scratch and stored straight into a
# bf16 im2col patches scratch, then one MXU matmul with f32 accumulation.
# ----------------------------------------------------------------------------
def _conv3x3(x, w2d, bcol, pad_ref, patches_ref, h, w):
    cin, hw = x.shape
    m = w + 1                                   # largest |flat shift| of any tap
    zeros_m = jnp.zeros((cin, m), jnp.float32)
    # Zero ONLY the margins the taps actually read (interior is overwritten).
    pad_ref[0:cin, PADC - m:PADC] = zeros_m
    pad_ref[0:cin, PADC + hw:PADC + hw + m] = zeros_m
    pad_ref[0:cin, PADC:PADC + hw] = x          # lane-aligned bulk store

    col = jax.lax.broadcasted_iota(jnp.int32, (1, hw), 1) % w
    ok_l = col >= 1                             # reading column c-1 is valid
    ok_r = col <= w - 2                         # reading column c+1 is valid

    t = 0
    for dy in (-1, 0, 1):
        for dx in (-1, 0, 1):
            off = PADC + dy * w + dx
            tap = pad_ref[0:cin, off:off + hw]  # x[., f + dy*w + dx] (or pad zeros)
            if dx == -1:
                tap = jnp.where(ok_l, tap, 0.0)
            elif dx == 1:
                tap = jnp.where(ok_r, tap, 0.0)
            # direct bf16 store into the im2col scratch, row block = tap index
            patches_ref[t * cin:(t + 1) * cin, 0:hw] = tap.astype(jnp.bfloat16)
            t += 1

    acc = jnp.dot(w2d, patches_ref[0:9 * cin, 0:hw],
                  preferred_element_type=jnp.float32)     # (Cout, HW), f32 acc
    return acc + bcol


# ----------------------------------------------------------------------------
# The fused Ladder kernel: one grid step == one image, whole net in VMEM.
# ----------------------------------------------------------------------------
def _ladder_kernel(x_ref, tab_ref, bias_ref, o_ref, pad_ref, patches_ref, *,
                   ops, H, W):
    x = x_ref[0].astype(jnp.float32)            # (Cin0, H*W), lane-dense
    h, w = H, W
    skips = []
    for op in ops:
        kind = op[0]
        if kind == "conv":
            _, K, cin, cout, relu, w_off, b_off = op
            w2d = tab_ref[w_off:w_off + cout, 0:K * K * cin]     # bf16 weights
            bcol = bias_ref[b_off:b_off + cout, 0:1]             # f32 bias col
            if K == 1:
                acc = jnp.dot(w2d, x.astype(jnp.bfloat16),
                              preferred_element_type=jnp.float32) + bcol
            else:
                acc = _conv3x3(x, w2d, bcol, pad_ref, patches_ref, h, w)
            x = jnp.maximum(acc, 0.0) if relu else acc
        elif kind == "save":
            skips.append(x)
        elif kind == "pool":                    # 2x2 maxpool via 4 selector matmuls
            sel_off = op[1]
            hw, hq, wq = h * w, h // 2, w // 2
            q = hq * wq
            xb = x.astype(jnp.bfloat16)
            best = None
            for k in range(4):
                s = tab_ref[sel_off + k * hw:sel_off + (k + 1) * hw, 0:q]
                cand = jnp.dot(xb, s, preferred_element_type=jnp.float32)
                best = cand if best is None else jnp.maximum(best, cand)
            x = best
            h, w = hq, wq
        elif kind == "up":                      # x2 nearest upsample via one matmul
            sel_off = op[1]
            hw = h * w
            u = tab_ref[sel_off:sel_off + hw, 0:4 * hw]
            x = jnp.dot(x.astype(jnp.bfloat16), u,
                        preferred_element_type=jnp.float32)
            h, w = 2 * h, 2 * w
        elif kind == "addskip":
            x = x + skips.pop()                 # ladder skip connection
    o_ref[0] = x.astype(o_ref.dtype)            # lane-dense (num_classes, H*W)


# ----------------------------------------------------------------------------
# Parameters (deterministic init, same structure as the PyTorch constructor).
# ----------------------------------------------------------------------------
def make_ladder_params(key, *, base=8, inc=8, depth=2, block_layers=1,
                       num_classes=2, input_channels=3):
    sizes = [base + i * inc for i in range(depth + 1)]      # encoder_sizes
    keys = iter(jax.random.split(key, 128))

    def conv_p(cin, cout, k):
        kw, kb = next(keys), next(keys)
        scale = 1.0 / np.sqrt(cin * k * k)
        w = jax.random.normal(kw, (k, k, cin, cout), jnp.float32) * scale
        b = jax.random.normal(kb, (cout,), jnp.float32) * scale
        return (w, b)

    params = {"initial": conv_p(input_channels, base, 3)}
    encoder = []
    for lvl in range(depth + 1):
        blocks = [conv_p(sizes[lvl], sizes[lvl], 3) for _ in range(block_layers)]
        down = conv_p(sizes[lvl], sizes[lvl + 1], 3) if lvl < depth else None
        encoder.append((blocks, down))
    params["encoder"] = encoder
    decoder = []
    for lvl in range(depth, 0, -1):
        up = conv_p(sizes[lvl], sizes[lvl - 1], 3)
        blocks = [conv_p(sizes[lvl - 1], sizes[lvl - 1], 3)
                  for _ in range(block_layers)]
        decoder.append((up, blocks))
    params["decoder"] = decoder
    params["classifier"] = conv_p(base, num_classes, 1)
    return params


# ----------------------------------------------------------------------------
# Plan building: static op list + ONE packed bf16 table slab (weights + host
# precomputed pool/upsample selectors) + ONE f32 bias slab.
# ----------------------------------------------------------------------------
def build_plan(params, input_channels, H, W):
    cin0 = max(8, _round8(input_channels))       # pad input channels to sublanes
    ops = []
    tab_blocks = []      # (row_offset, 2-D block) -> bf16 table slab
    bias_blocks = []     # (row_offset, (cout,1) f32)
    trow, brow, maxw = 0, 0, 8

    def alloc_t(nrows):
        nonlocal trow
        off = trow
        trow += _round8(nrows)
        return off

    def alloc_b(nrows):
        nonlocal brow
        off = brow
        brow += _round8(nrows)
        return off

    def add_conv(wb, relu, cin_pad=None):
        nonlocal maxw
        wgt, b = wb
        K, _, cin, cout = wgt.shape
        if cin_pad is not None and cin_pad > cin:
            wgt = jnp.pad(wgt, ((0, 0), (0, 0), (0, cin_pad - cin), (0, 0)))
            cin = cin_pad
        # column order = (ky, kx, cin)  -- must match tap order in the kernel
        w2d = jnp.transpose(wgt, (3, 0, 1, 2)).reshape(cout, K * K * cin)
        w_off = alloc_t(cout)
        tab_blocks.append((w_off, w2d))
        maxw = max(maxw, K * K * cin)
        b_off = alloc_b(cout)
        bias_blocks.append((b_off, jnp.reshape(b, (cout, 1))))
        ops.append(("conv", K, cin, cout, relu, w_off, b_off))

    sel_cache = {}

    def add_pool(h, w):          # 4 one-hot selectors (HW, HW/4), host-built
        nonlocal maxw
        key = ("pool", h, w)
        if key not in sel_cache:
            hw, hq, wq = h * w, h // 2, w // 2
            q = hq * wq
            off = alloc_t(4 * hw)
            g = np.arange(q)
            anchor = (g // wq) * (2 * w) + (g % wq) * 2
            for k, koff in enumerate((0, 1, w, w + 1)):   # 2x2 window members
                S = np.zeros((hw, q), np.float32)
                S[anchor + koff, g] = 1.0
                tab_blocks.append((off + k * hw, S))
            maxw = max(maxw, q)
            sel_cache[key] = off
        ops.append(("pool", sel_cache[key]))

    def add_up(h, w):            # one one-hot selector (HW, 4*HW), host-built
        nonlocal maxw
        key = ("up", h, w)
        if key not in sel_cache:
            hw, W2 = h * w, 2 * w
            hw2 = 4 * hw
            off = alloc_t(hw)
            U = np.zeros((hw, hw2), np.float32)
            f = np.arange(hw2)
            src = (f // W2 // 2) * w + (f % W2) // 2
            U[src, f] = 1.0
            tab_blocks.append((off, U))
            maxw = max(maxw, hw2)
            sel_cache[key] = off
        ops.append(("up", sel_cache[key]))

    # --- walk the network structure, tracking the spatial size ---
    h, w = H, W
    add_conv(params["initial"], relu=False, cin_pad=cin0)    # self.initial
    for blocks, down in params["encoder"]:                    # self.encoder
        for wb in blocks:                                     # basic_block
            add_conv(wb, relu=True)
        if down is not None:
            ops.append(("save",))
            add_pool(h, w)
            h, w = h // 2, w // 2
            add_conv(down, relu=True)
    for up, blocks in params["decoder"]:                      # self.decoder
        add_up(h, w)
        h, w = 2 * h, 2 * w
        add_conv(up, relu=True)
        ops.append(("addskip",))
        for wb in blocks:
            add_conv(wb, relu=True)
    add_conv(params["classifier"], relu=False)                # 1x1 classifier

    num_classes = ops[-1][3]

    # --- pack the single bf16 table slab and the f32 bias slab ---
    tabw = ((maxw + 127) // 128) * 128
    tab = jnp.zeros((_round8(trow), tabw), jnp.bfloat16)
    for off, blk in tab_blocks:
        blk = jnp.asarray(blk).astype(jnp.bfloat16)
        tab = tab.at[off:off + blk.shape[0], 0:blk.shape[1]].set(blk)
    bias = jnp.zeros((_round8(brow), 1), jnp.float32)
    for off, blk in bias_blocks:
        bias = bias.at[off:off + blk.shape[0], 0:1].set(
            jnp.asarray(blk).astype(jnp.float32))

    return tuple(ops), tab, bias, cin0, num_classes


# ----------------------------------------------------------------------------
# Forward pass: one fused pallas_call, grid=(N,) (one image per grid step).
# ----------------------------------------------------------------------------
def ladder_forward(params, x_nchw):
    N, Cin, H, W = x_nchw.shape
    HW = H * W
    assert W + 1 <= PADC, "whole-image-in-VMEM scheme assumes small spatial dims"
    ops, tab, bias, cin0, num_classes = build_plan(params, Cin, H, W)

    # NCHW flattened to (N, C, H*W): H*W lands on the lane axis, no transpose.
    x_flat = x_nchw.reshape(N, Cin, HW)
    if cin0 > Cin:
        x_flat = jnp.pad(x_flat, ((0, 0), (0, cin0 - Cin), (0, 0)))

    max_cin = max(op[2] for op in ops if op[0] == "conv" and op[1] == 3)
    pad_cols = PADC + HW + 128                       # interior at PADC, room for margin
    patch_rows = ((9 * max_cin + 15) // 16) * 16
    patch_cols = ((HW + 127) // 128) * 128

    kernel = functools.partial(_ladder_kernel, ops=ops, H=H, W=W)
    out_flat = pl.pallas_call(
        kernel,
        out_shape=jax.ShapeDtypeStruct((N, num_classes, HW), x_nchw.dtype),
        grid=(N,),
        in_specs=[
            pl.BlockSpec((1, cin0, HW), lambda n: (n, 0, 0)),   # image n
            pl.BlockSpec(tab.shape, lambda n: (0, 0)),          # weights+selectors
            pl.BlockSpec(bias.shape, lambda n: (0, 0)),         # biases
        ],
        out_specs=pl.BlockSpec((1, num_classes, HW), lambda n: (n, 0, 0)),
        scratch_shapes=[
            pltpu.VMEM((max_cin, pad_cols), jnp.float32),        # zero-margin taps
            pltpu.VMEM((patch_rows, patch_cols), jnp.bfloat16),  # bf16 im2col patches
        ],
        compiler_params=pltpu.CompilerParams(
            dimension_semantics=("parallel",)),   # v7x: one image per TensorCore
    )(x_flat, tab, bias)

    return out_flat.reshape(N, num_classes, H, W)


if __name__ == "__main__":
    key = jax.random.PRNGKey(0)
    pkey, xkey = jax.random.split(key)

    params = make_ladder_params(pkey, base=8, inc=8, depth=2, block_layers=1,
                                num_classes=2, input_channels=3)

    # Small NCHW input, matching the PyTorch module's convention.
    x = jax.random.normal(xkey, (2, 3, 16, 16), jnp.float32)

    out = jax.jit(ladder_forward)(params, x)
    out = jax.block_until_ready(out)

    assert out.shape == (2, 2, 16, 16), out.shape
    assert bool(jnp.all(jnp.isfinite(out)))
    print("KERNEL_OK")
</pallas_src>

<mosaic_0001>
module attributes {stable_mosaic.version = 11 : i64} {
  func.func @_ladder_kernel(%arg0: i32, %arg1: memref<1x8x256xf32, #tpu.memory_space<vmem>>, %arg2: memref<1512x256xbf16, #tpu.memory_space<vmem>>, %arg3: memref<152x1xf32, #tpu.memory_space<vmem>>, %arg4: memref<1x2x256xf32, #tpu.memory_space<vmem>>, %arg5: memref<24x512xf32, #tpu.memory_space<vmem>>, %arg6: memref<224x256xbf16, #tpu.memory_space<vmem>>) attributes {dimension_semantics = [#tpu.dimension_semantics<parallel>], iteration_bounds = array<i64: 2>, scalar_prefetch = 0 : i64, scratch_operands = 2 : i64, tpu.core_type = #tpu.core_type<tc>, window_params = [{transform_indices = @transform_0, window_bounds = array<i64: 1, 8, 256>}, {pipeline_mode = #tpu.pipeline_mode<synchronous>, transform_indices = @transform_1, window_bounds = array<i64: 1512, 256>}, {pipeline_mode = #tpu.pipeline_mode<synchronous>, transform_indices = @transform_2, window_bounds = array<i64: 152, 1>}, {transform_indices = @transform_3, window_bounds = array<i64: 1, 2, 256>}]} {
    %c0 = arith.constant 0 : index
    %c0_0 = arith.constant 0 : index
    %c0_1 = arith.constant 0 : index
    %0 = vector.load %arg1[%c0, %c0_0, %c0_1] : memref<1x8x256xf32, #tpu.memory_space<vmem>>, vector<1x8x256xf32>
    %1 = vector.shape_cast %0 : vector<1x8x256xf32> to vector<8x256xf32>
    %c0_2 = arith.constant 0 : index
    %c0_3 = arith.constant 0 : index
    %2 = vector.load %arg2[%c0_2, %c0_3] : memref<1512x256xbf16, #tpu.memory_space<vmem>>, vector<8x72xbf16>
    %c0_4 = arith.constant 0 : index
    %c0_5 = arith.constant 0 : index
    %3 = vector.load %arg3[%c0_4, %c0_5] : memref<152x1xf32, #tpu.memory_space<vmem>>, vector<8x1xf32>
    %cst = arith.constant 0.000000e+00 : f32
    %4 = vector.broadcast %cst : f32 to vector<8x17xf32>
    %c0_6 = arith.constant 0 : index
    %c111 = arith.constant 111 : index
    %5 = vector.load %arg5[%c0_6, %c111] : memref<24x512xf32, #tpu.memory_space<vmem>>, vector<8x17xf32>
    tpu.vector_store %arg5[%c0_6, %c111], %4 {strides = array<i32>} : memref<24x512xf32, #tpu.memory_space<vmem>>, vector<8x17xf32>,
    %c0_7 = arith.constant 0 : index
    %c384 = arith.constant 384 : index
    %6 = vector.load %arg5[%c0_7, %c384] : memref<24x512xf32, #tpu.memory_space<vmem>>, vector<8x17xf32>
    tpu.vector_store %arg5[%c0_7, %c384], %4 {strides = array<i32>} : memref<24x512xf32, #tpu.memory_space<vmem>>, vector<8x17xf32>,
    %c0_8 = arith.constant 0 : index
    %c128 = arith.constant 128 : index
    %7 = vector.load %arg5[%c0_8, %c128] : memref<24x512xf32, #tpu.memory_space<vmem>>, vector<8x256xf32>
    tpu.vector_store %arg5[%c0_8, %c128], %1 {strides = array<i32>} : memref<24x512xf32, #tpu.memory_space<vmem>>, vector<8x256xf32>,
    %8 = tpu.iota {dimensions = array<i32: 1>} : vector<1x256xi32>
    %c16_i32 = arith.constant 16 : i32
    %c0_i32 = arith.constant 0 : i32
    %9 = arith.cmpi eq, %c16_i32, %c0_i32 : i32
    %c1_i32 = arith.constant 1 : i32
    %10 = arith.select %9, %c1_i32, %c16_i32 : i32
    %11 = vector.broadcast %10 : i32 to vector<1x256xi32>
    %12 = arith.remsi %8, %11 : vector<1x256xi32>
    %c0_i32_9 = arith.constant 0 : i32
    %13 = vector.broadcast %c0_i32_9 : i32 to vector<1x256xi32>
    %14 = arith.cmpi ne, %12, %13 : vector<1x256xi32>
    %c0_i32_10 = arith.constant 0 : i32
    %15 = vector.broadcast %c0_i32_10 : i32 to vector<1x256xi32>
    %16 = arith.cmpi slt, %12, %15 : vector<1x256xi32>
    %c0_i32_11 = arith.constant 0 : i32
    %17 = arith.cmpi slt, %10, %c0_i32_11 : i32
    %18 = vector.broadcast %17 : i1 to vector<1x256xi1>
    %19 = vector.broadcast %18 : vector<1x256xi1> to vector<1x256xi1>
    %20 = arith.xori %16, %19 : vector<1x256xi1>
    %21 = arith.andi %20, %14 : vector<1x256xi1>
    %22 = vector.broadcast %10 : i32 to vector<1x256xi32>
    %23 = arith.addi %12, %22 : vector<1x256xi32>
    %24 = arith.select %21, %23, %12 : vector<1x256xi1>, vector<1x256xi32>
    %c1_i32_12 = arith.constant 1 : i32
    %25 = vector.broadcast %c1_i32_12 : i32 to vector<1x256xi32>
    %26 = arith.cmpi sge, %24, %25 : vector<1x256xi32>
    %c14_i32 = arith.constant 14 : i32
    %27 = vector.broadcast %c14_i32 : i32 to vector<1x256xi32>
    %28 = arith.cmpi sle, %24, %27 : vector<1x256xi32>
    %c0_13 = arith.constant 0 : index
    %c111_14 = arith.constant 111 : index
    %29 = vector.load %arg5[%c0_13, %c111_14] : memref<24x512xf32, #tpu.memory_space<vmem>>, vector<8x256xf32>
    %cst_15 = arith.constant 0.000000e+00 : f32
    %30 = vector.shape_cast %26 : vector<1x256xi1> to vector<1x256xi1>
    %31 = vector.broadcast %30 : vector<1x256xi1> to vector<8x256xi1>
    %32 = vector.broadcast %cst_15 : f32 to vector<8x256xf32>
    %33 = arith.select %31, %29, %32 : vector<8x256xi1>, vector<8x256xf32>
    %34 = arith.truncf %33 : vector<8x256xf32> to vector<8x256xbf16>
    %c0_16 = arith.constant 0 : index
    %c0_17 = arith.constant 0 : index
    %35 = vector.load %arg6[%c0_16, %c0_17] : memref<224x256xbf16, #tpu.memory_space<vmem>>, vector<8x256xbf16>
    tpu.vector_store %arg6[%c0_16, %c0_17], %34 {strides = array<i32>} : memref<224x256xbf16, #tpu.memory_space<vmem>>, vector<8x256xbf16>,
    %c0_18 = arith.constant 0 : index
    %c112 = arith.constant 112 : index
    %36 = vector.load %arg5[%c0_18, %c112] : memref<24x512xf32, #tpu.memory_space<vmem>>, vector<8x256xf32>
    %37 = arith.truncf %36 : vector<8x256xf32> to vector<8x256xbf16>
    %c8 = arith.constant 8 : index
    %c0_19 = arith.constant 0 : index
    %38 = vector.load %arg6[%c8, %c0_19] : memref<224x256xbf16, #tpu.memory_space<vmem>>, vector<8x256xbf16>
    tpu.vector_store %arg6[%c8, %c0_19], %37 {strides = array<i32>} : memref<224x256xbf16, #tpu.memory_space<vmem>>, vector<8x256xbf16>,
    %c0_20 = arith.constant 0 : index
    %c113 = arith.constant 113 : index
    %39 = vector.load %arg5[%c0_20, %c113] : memref<24x512xf32, #tpu.memory_space<vmem>>, vector<8x256xf32>
    %cst_21 = arith.constant 0.000000e+00 : f32
    %40 = vector.shape_cast %28 : vector<1x256xi1> to vector<1x256xi1>
    %41 = vector.broadcast %40 : vector<1x256xi1> to vector<8x256xi1>
    %42 = vector.broadcast %cst_21 : f32 to vector<8x256xf32>
    %43 = arith.select %41, %39, %42 : vector<8x256xi1>, vector<8x256xf32>
    %44 = arith.truncf %43 : vector<8x256xf32> to vector<8x256xbf16>
    %c16 = arith.constant 16 : index
    %c0_22 = arith.constant 0 : index
    %45 = vector.load %arg6[%c16, %c0_22] : memref<224x256xbf16, #tpu.memory_space<vmem>>, vector<8x256xbf16>
    tpu.vector_store %arg6[%c16, %c0_22], %44 {strides = array<i32>} : memref<224x256xbf16, #tpu.memory_space<vmem>>, vector<8x256xbf16>,
    %c0_23 = arith.constant 0 : index
    %c127 = arith.constant 127 : index
    %46 = vector.load %arg5[%c0_23, %c127] : memref<24x512xf32, #tpu.memory_space<vmem>>, vector<8x256xf32>
    %cst_24 = arith.constant 0.000000e+00 : f32
    %47 = vector.shape_cast %26 : vector<1x256xi1> to vector<1x256xi1>
    %48 = vector.broadcast %47 : vector<1x256xi1> to vector<8x256xi1>
    %49 = vector.broadcast %cst_24 : f32 to vector<8x256xf32>
    %50 = arith.select %48, %46, %49 : vector<8x256xi1>, vector<8x256xf32>
    %51 = arith.truncf %50 : vector<8x256xf32> to vector<8x256xbf16>
    %c24 = arith.constant 24 : index
    %c0_25 = arith.constant 0 : index
    %52 = vector.load %arg6[%c24, %c0_25] : memref<224x256xbf16, #tpu.memory_space<vmem>>, vector<8x256xbf16>
    tpu.vector_store %arg6[%c24, %c0_25], %51 {strides = array<i32>} : memref<224x256xbf16, #tpu.memory_space<vmem>>, vector<8x256xbf16>,
    %c0_26 = arith.constant 0 : index
    %c128_27 = arith.constant 128 : index
    %53 = vector.load %arg5[%c0_26, %c128_27] : memref<24x512xf32, #tpu.memory_space<vmem>>, vector<8x256xf32>
    %54 = arith.truncf %53 : vector<8x256xf32> to vector<8x256xbf16>
    %c32 = arith.constant 32 : index
    %c0_28 = arith.constant 0 : index
    %55 = vector.load %arg6[%c32, %c0_28] : memref<224x256xbf16, #tpu.memory_space<vmem>>, vector<8x256xbf16>
    tpu.vector_store %arg6[%c32, %c0_28], %54 {strides = array<i32>} : memref<224x256xbf16, #tpu.memory_space<vmem>>, vector<8x256xbf16>,
    %c0_29 = arith.constant 0 : index
    %c129 = arith.constant 129 : index
    %56 = vector.load %arg5[%c0_29, %c129] : memref<24x512xf32, #tpu.memory_space<vmem>>, vector<8x256xf32>
    %cst_30 = arith.constant 0.000000e+00 : f32
    %57 = vector.shape_cast %28 : vector<1x256xi1> to vector<1x256xi1>
    %58 = vector.broadcast %57 : vector<1x256xi1> to vector<8x256xi1>
    %59 = vector.broadcast %cst_30 : f32 to vector<8x256xf32>
    %60 = arith.select %58, %56, %59 : vector<8x256xi1>, vector<8x256xf32>
    %61 = arith.truncf %60 : vector<8x256xf32> to vector<8x256xbf16>
    %c40 = arith.constant 40 : index
    %c0_31 = arith.constant 0 : index
    %62 = vector.load %arg6[%c40, %c0_31] : memref<224x256xbf16, #tpu.memory_space<vmem>>, vector<8x256xbf16>
    tpu.vector_store %arg6[%c40, %c0_31], %61 {strides = array<i32>} : memref<224x256xbf16, #tpu.memory_space<vmem>>, vector<8x256xbf16>,
    %c0_32 = arith.constant 0 : index
    %c143 = arith.constant 143 : index
    %63 = vector.load %arg5[%c0_32, %c143] : memref<24x512xf32, #tpu.memory_space<vmem>>, vector<8x256xf32>
    %cst_33 = arith.constant 0.000000e+00 : f32
    %64 = vector.shape_cast %26 : vector<1x256xi1> to vector<1x256xi1>
    %65 = vector.broadcast %64 : vector<1x256xi1> to vector<8x256xi1>
    %66 = vector.broadcast %cst_33 : f32 to vector<8x256xf32>
    %67 = arith.select %65, %63, %66 : vector<8x256xi1>, vector<8x256xf32>
    %68 = arith.truncf %67 : vector<8x256xf32> to vector<8x256xbf16>
    %c48 = arith.constant 48 : index
    %c0_34 = arith.constant 0 : index
    %69 = vector.load %arg6[%c48, %c0_34] : memref<224x256xbf16, #tpu.memory_space<vmem>>, vector<8x256xbf16>
    tpu.vector_store %arg6[%c48, %c0_34], %68 {strides = array<i32>} : memref<224x256xbf16, #tpu.memory_space<vmem>>, vector<8x256xbf16>,
    %c0_35 = arith.constant 0 : index
    %c144 = arith.constant 144 : index
    %70 = vector.load %arg5[%c0_35, %c144] : memref<24x512xf32, #tpu.memory_space<vmem>>, vector<8x256xf32>
    %71 = arith.truncf %70 : vector<8x256xf32> to vector<8x256xbf16>
    %c56 = arith.constant 56 : index
    %c0_36 = arith.constant 0 : index
    %72 = vector.load %arg6[%c56, %c0_36] : memref<224x256xbf16, #tpu.memory_space<vmem>>, vector<8x256xbf16>
    tpu.vector_store %arg6[%c56, %c0_36], %71 {strides = array<i32>} : memref<224x256xbf16, #tpu.memory_space<vmem>>, vector<8x256xbf16>,
    %c0_37 = arith.constant 0 : index
    %c145 = arith.constant 145 : index
    %73 = vector.load %arg5[%c0_37, %c145] : memref<24x512xf32, #tpu.memory_space<vmem>>, vector<8x256xf32>
    %cst_38 = arith.constant 0.000000e+00 : f32
    %74 = vector.shape_cast %28 : vector<1x256xi1> to vector<1x256xi1>
    %75 = vector.broadcast %74 : vector<1x256xi1> to vector<8x256xi1>
    %76 = vector.broadcast %cst_38 : f32 to vector<8x256xf32>
    %77 = arith.select %75, %73, %76 : vector<8x256xi1>, vector<8x256xf32>
    %78 = arith.truncf %77 : vector<8x256xf32> to vector<8x256xbf16>
    %c64 = arith.constant 64 : index
    %c0_39 = arith.constant 0 : index
    %79 = vector.load %arg6[%c64, %c0_39] : memref<224x256xbf16, #tpu.memory_space<vmem>>, vector<8x256xbf16>
    tpu.vector_store %arg6[%c64, %c0_39], %78 {strides = array<i32>} : memref<224x256xbf16, #tpu.memory_space<vmem>>, vector<8x256xbf16>,
    %c0_40 = arith.constant 0 : index
    %c0_41 = arith.constant 0 : index
    %80 = vector.load %arg6[%c0_40, %c0_41] : memref<224x256xbf16, #tpu.memory_space<vmem>>, vector<72x256xbf16>
    %cst_42 = arith.constant dense<0.000000e+00> : vector<8x256xf32>
    %81 = tpu.matmul %2, %80, %cst_42 {dimension_numbers = #tpu.dot_dimension_numbers<[1], [0], [0], [1], [0, 0, 1, 1], [], []>} : vector<8x72xbf16>, vector<72x256xbf16>, vector<8x256xf32> -> vector<8x256xf32>
    %82 = vector.broadcast %3 : vector<8x1xf32> to vector<8x256xf32>
    %83 = arith.addf %81, %82 : vector<8x256xf32>
    %c8_43 = arith.constant 8 : index
    %c0_44 = arith.constant 0 : index
    %84 = vector.load %arg2[%c8_43, %c0_44] : memref<1512x256xbf16, #tpu.memory_space<vmem>>, vector<8x72xbf16>
    %c8_45 = arith.constant 8 : index
    %c0_46 = arith.constant 0 : index
    %85 = vector.load %arg3[%c8_45, %c0_46] : memref<152x1xf32, #tpu.memory_space<vmem>>, vector<8x1xf32>
    %cst_47 = arith.constant 0.000000e+00 : f32
    %86 = vector.broadcast %cst_47 : f32 to vector<8x17xf32>
    %c0_48 = arith.constant 0 : index
    %c111_49 = arith.constant 111 : index
    %87 = vector.load %arg5[%c0_48, %c111_49] : memref<24x512xf32, #tpu.memory_space<vmem>>, vector<8x17xf32>
    tpu.vector_store %arg5[%c0_48, %c111_49], %86 {strides = array<i32>} : memref<24x512xf32, #tpu.memory_space<vmem>>, vector<8x17xf32>,
    %c0_50 = arith.constant 0 : index
    %c384_51 = arith.constant 384 : index
    %88 = vector.load %arg5[%c0_50, %c384_51] : memref<24x512xf32, #tpu.memory_space<vmem>>, vector<8x17xf32>
    tpu.vector_store %arg5[%c0_50, %c384_51], %86 {strides = array<i32>} : memref<24x512xf32, #tpu.memory_space<vmem>>, vector<8x17xf32>,
    %c0_52 = arith.constant 0 : index
    %c128_53 = arith.constant 128 : index
    %89 = vector.load %arg5[%c0_52, %c128_53] : memref<24x512xf32, #tpu.memory_space<vmem>>, vector<8x256xf32>
    tpu.vector_store %arg5[%c0_52, %c128_53], %83 {strides = array<i32>} : memref<24x512xf32, #tpu.memory_space<vmem>>, vector<8x256xf32>,
    %90 = tpu.iota {dimensions = array<i32: 1>} : vector<1x256xi32>
    %c16_i32_54 = arith.constant 16 : i32
    %c0_i32_55 = arith.constant 0 : i32
    %91 = arith.cmpi eq, %c16_i32_54, %c0_i32_55 : i32
    %c1_i32_56 = arith.constant 1 : i32
    %92 = arith.select %91, %c1_i32_56, %c16_i32_54 : i32
    %93 = vector.broadcast %92 : i32 to vector<1x256xi32>
    %94 = arith.remsi %90, %93 : vector<1x256xi32>
    %c0_i32_57 = arith.constant 0 : i32
    %95 = vector.broadcast %c0_i32_57 : i32 to vector<1x256xi32>
    %96 = arith.cmpi ne, %94, %95 : vector<1x256xi32>
    %c0_i32_58 = arith.constant 0 : i32
    %97 = vector.broadcast %c0_i32_58 : i32 to vector<1x256xi32>
    %98 = arith.cmpi slt, %94, %97 : vector<1x256xi32>
    %c0_i32_59 = arith.constant 0 : i32
    %99 = arith.cmpi slt, %92, %c0_i32_59 : i32
    %100 = vector.broadcast %99 : i1 to vector<1x256xi1>
    %101 = vector.broadcast %100 : vector<1x256xi1> to vector<1x256xi1>
    %102 = arith.xori %98, %101 : vector<1x256xi1>
    %103 = arith.andi %102, %96 : vector<1x256xi1>
    %104 = vector.broadcast %92 : i32 to vector<1x256xi32>
    %105 = arith.addi %94, %104 : vector<1x256xi32>
    %106 = arith.select %103, %105, %94 : vector<1x256xi1>, vector<1x256xi32>
    %c1_i32_60 = arith.constant 1 : i32
    %107 = vector.broadcast %c1_i32_60 : i32 to vector<1x256xi32>
    %108 = arith.cmpi sge, %106, %107 : vector<1x256xi32>
    %c14_i32_61 = arith.constant 14 : i32
    %109 = vector.broadcast %c14_i32_61 : i32 to vector<1x256xi32>
    %110 = arith.cmpi sle, %106, %109 : vector<1x256xi32>
    %c0_62 = arith.constant 0 : index
    %c111_63 = arith.constant 111 : index
    %111 = vector.load %arg5[%c0_62, %c111_63] : memref<24x512xf32, #tpu.memory_space<vmem>>, vector<8x256xf32>
    %cst_64 = arith.constant 0.000000e+00 : f32
    %112 = vector.shape_cast %108 : vector<1x256xi1> to vector<1x256xi1>
    %113 = vector.broadcast %112 : vector<1x256xi1> to vector<8x256xi1>
    %114 = vector.broadcast %cst_64 : f32 to vector<8x256xf32>
    %115 = arith.select %113, %111, %114 : vector<8x256xi1>, vector<8x256xf32>
    %116 = arith.truncf %115 : vector<8x256xf32> to vector<8x256xbf16>
    %c0_65 = arith.constant 0 : index
    %c0_66 = arith.constant 0 : index
    %117 = vector.load %arg6[%c0_65, %c0_66] : memref<224x256xbf16, #tpu.memory_space<vmem>>, vector<8x256xbf16>
    tpu.vector_store %arg6[%c0_65, %c0_66], %116 {strides = array<i32>} : memref<224x256xbf16, #tpu.memory_space<vmem>>, vector<8x256xbf16>,
    %c0_67 = arith.constant 0 : index
    %c112_68 = arith.constant 112 : index
    %118 = vector.load %arg5[%c0_67, %c112_68] : memref<24x512xf32, #tpu.memory_space<vmem>>, vector<8x256xf32>
    %119 = arith.truncf %118 : vector<8x256xf32> to vector<8x256xbf16>
    %c8_69 = arith.constant 8 : index
    %c0_70 = arith.constant 0 : index
    %120 = vector.load %arg6[%c8_69, %c0_70] : memref<224x256xbf16, #tpu.memory_space<vmem>>, vector<8x256xbf16>
    tpu.vector_store %arg6[%c8_69, %c0_70], %119 {strides = array<i32>} : memref<224x256xbf16, #tpu.memory_space<vmem>>, vector<8x256xbf16>,
    %c0_71 = arith.constant 0 : index
    %c113_72 = arith.constant 113 : index
    %121 = vector.load %arg5[%c0_71, %c113_72] : memref<24x512xf32, #tpu.memory_space<vmem>>, vector<8x256xf32>
    %cst_73 = arith.constant 0.000000e+00 : f32
    %122 = vector.shape_cast %110 : vector<1x256xi1> to vector<1x256xi1>
    %123 = vector.broadcast %122 : vector<1x256xi1> to vector<8x256xi1>
    %124 = vector.broadcast %cst_73 : f32 to vector<8x256xf32>
    %125 = arith.select %123, %121, %124 : vector<8x256xi1>, vector<8x256xf32>
    %126 = arith.truncf %125 : vector<8x256xf32> to vector<8x256xbf16>
    %c16_74 = arith.constant 16 : index
    %c0_75 = arith.constant 0 : index
    %127 = vector.load %arg6[%c16_74, %c0_75] : memref<224x256xbf16, #tpu.memory_space<vmem>>, vector<8x256xbf16>
    tpu.vector_store %arg6[%c16_74, %c0_75], %126 {strides = array<i32>} : memref<224x256xbf16, #tpu.memory_space<vmem>>, vector<8x256xbf16>,
    %c0_76 = arith.constant 0 : index
    %c127_77 = arith.constant 127 : index
    %128 = vector.load %arg5[%c0_76, %c127_77] : memref<24x512xf32, #tpu.memory_space<vmem>>, vector<8x256xf32>
    %cst_78 = arith.constant 0.000000e+00 : f32
    %129 = vector.shape_cast %108 : vector<1x256xi1> to vector<1x256xi1>
    %130 = vector.broadcast %129 : vector<1x256xi1> to vector<8x256xi1>
    %131 = vector.broadcast %cst_78 : f32 to vector<8x256xf32>
    %132 = arith.select %130, %128, %131 : vector<8x256xi1>, vector<8x256xf32>
    %133 = arith.truncf %132 : vector<8x256xf32> to vector<8x256xbf16>
    %c24_79 = arith.constant 24 : index
    %c0_80 = arith.constant 0 : index
    %134 = vector.load %arg6[%c24_79, %c0_80] : memref<224x256xbf16, #tpu.memory_space<vmem>>, vector<8x256xbf16>
    tpu.vector_store %arg6[%c24_79, %c0_80], %133 {strides = array<i32>} : memref<224x256xbf16, #tpu.memory_space<vmem>>, vector<8x256xbf16>,
    %c0_81 = arith.constant 0 : index
    %c128_82 = arith.constant 128 : index
    %135 = vector.load %arg5[%c0_81, %c128_82] : memref<24x512xf32, #tpu.memory_space<vmem>>, vector<8x256xf32>
    %136 = arith.truncf %135 : vector<8x256xf32> to vector<8x256xbf16>
    %c32_83 = arith.constant 32 : index
    %c0_84 = arith.constant 0 : index
    %137 = vector.load %arg6[%c32_83, %c0_84] : memref<224x256xbf16, #tpu.memory_space<vmem>>, vector<8x256xbf16>
    tpu.vector_store %arg6[%c32_83, %c0_84], %136 {strides = array<i32>} : memref<224x256xbf16, #tpu.memory_space<vmem>>, vector<8x256xbf16>,
    %c0_85 = arith.constant 0 : index
    %c129_86 = arith.constant 129 : index
    %138 = vector.load %arg5[%c0_85, %c129_86] : memref<24x512xf32, #tpu.memory_space<vmem>>, vector<8x256xf32>
    %cst_87 = arith.constant 0.000000e+00 : f32
    %139 = vector.shape_cast %110 : vector<1x256xi1> to vector<1x256xi1>
    %140 = vector.broadcast %139 : vector<1x256xi1> to vector<8x256xi1>
    %141 = vector.broadcast %cst_87 : f32 to vector<8x256xf32>
    %142 = arith.select %140, %138, %141 : vector<8x256xi1>, vector<8x256xf32>
    %143 = arith.truncf %142 : vector<8x256xf32> to vector<8x256xbf16>
    %c40_88 = arith.constant 40 : index
    %c0_89 = arith.constant 0 : index
    %144 = vector.load %arg6[%c40_88, %c0_89] : memref<224x256xbf16, #tpu.memory_space<vmem>>, vector<8x256xbf16>
    tpu.vector_store %arg6[%c40_88, %c0_89], %143 {strides = array<i32>} : memref<224x256xbf16, #tpu.memory_space<vmem>>, vector<8x256xbf16>,
    %c0_90 = arith.constant 0 : index
    %c143_91 = arith.constant 143 : index
    %145 = vector.load %arg5[%c0_90, %c143_91] : memref<24x512xf32, #tpu.memory_space<vmem>>, vector<8x256xf32>
    %cst_92 = arith.constant 0.000000e+00 : f32
    %146 = vector.shape_cast %108 : vector<1x256xi1> to vector<1x256xi1>
    %147 = vector.broadcast %146 : vector<1x256xi1> to vector<8x256xi1>
    %148 = vector.broadcast %cst_92 : f32 to vector<8x256xf32>
    %149 = arith.select %147, %145, %148 : vector<8x256xi1>, vector<8x256xf32>
    %150 = arith.truncf %149 : vector<8x256xf32> to vector<8x256xbf16>
    %c48_93 = arith.constant 48 : index
    %c0_94 = arith.constant 0 : index
    %151 = vector.load %arg6[%c48_93, %c0_94] : memref<224x256xbf16, #tpu.memory_space<vmem>>, vector<8x256xbf16>
    tpu.vector_store %arg6[%c48_93, %c0_94], %150 {strides = array<i32>} : memref<224x256xbf16, #tpu.memory_space<vmem>>, vector<8x256xbf16>,
    %c0_95 = arith.constant 0 : index
    %c144_96 = arith.constant 144 : index
    %152 = vector.load %arg5[%c0_95, %c144_96] : memref<24x512xf32, #tpu.memory_space<vmem>>, vector<8x256xf32>
    %153 = arith.truncf %152 : vector<8x256xf32> to vector<8x256xbf16>
    %c56_97 = arith.constant 56 : index
    %c0_98 = arith.constant 0 : index
    %154 = vector.load %arg6[%c56_97, %c0_98] : memref<224x256xbf16, #tpu.memory_space<vmem>>, vector<8x256xbf16>
    tpu.vector_store %arg6[%c56_97, %c0_98], %153 {strides = array<i32>} : memref<224x256xbf16, #tpu.memory_space<vmem>>, vector<8x256xbf16>,
    %c0_99 = arith.constant 0 : index
    %c145_100 = arith.constant 145 : index
    %155 = vector.load %arg5[%c0_99, %c145_100] : memref<24x512xf32, #tpu.memory_space<vmem>>, vector<8x256xf32>
    %cst_101 = arith.constant 0.000000e+00 : f32
    %156 = vector.shape_cast %110 : vector<1x256xi1> to vector<1x256xi1>
    %157 = vector.broadcast %156 : vector<1x256xi1> to vector<8x256xi1>
    %158 = vector.broadcast %cst_101 : f32 to vector<8x256xf32>
    %159 = arith.select %157, %155, %158 : vector<8x256xi1>, vector<8x256xf32>
    %160 = arith.truncf %159 : vector<8x256xf32> to vector<8x256xbf16>
    %c64_102 = arith.constant 64 : index
    %c0_103 = arith.constant 0 : index
    %161 = vector.load %arg6[%c64_102, %c0_103] : memref<224x256xbf16, #tpu.memory_space<vmem>>, vector<8x256xbf16>
    tpu.vector_store %arg6[%c64_102, %c0_103], %160 {strides = array<i32>} : memref<224x256xbf16, #tpu.memory_space<vmem>>, vector<8x256xbf16>,
    %c0_104 = arith.constant 0 : index
    %c0_105 = arith.constant 0 : index
    %162 = vector.load %arg6[%c0_104, %c0_105] : memref<224x256xbf16, #tpu.memory_space<vmem>>, vector<72x256xbf16>
    %cst_106 = arith.constant dense<0.000000e+00> : vector<8x256xf32>
    %163 = tpu.matmul %84, %162, %cst_106 {dimension_numbers = #tpu.dot_dimension_numbers<[1], [0], [0], [1], [0, 0, 1, 1], [], []>} : vector<8x72xbf16>, vector<72x256xbf16>, vector<8x256xf32> -> vector<8x256xf32>
    %164 = vector.broadcast %85 : vector<8x1xf32> to vector<8x256xf32>
    %165 = arith.addf %163, %164 : vector<8x256xf32>
    %cst_107 = arith.constant 0.000000e+00 : f32
    %166 = vector.broadcast %cst_107 : f32 to vector<8x256xf32>
    %167 = arith.maximumf %165, %166 : vector<8x256xf32>
    %168 = arith.truncf %167 : vector<8x256xf32> to vector<8x256xbf16>
    %c16_108 = arith.constant 16 : index
    %c0_109 = arith.constant 0 : index
    %169 = vector.load %arg2[%c16_108, %c0_109] : memref<1512x256xbf16, #tpu.memory_space<vmem>>, vector<256x64xbf16>
    %cst_110 = arith.constant dense<0.000000e+00> : vector<8x64xf32>
    %170 = tpu.matmul %168, %169, %cst_110 {dimension_numbers = #tpu.dot_dimension_numbers<[1], [0], [0], [1], [0, 0, 1, 1], [], []>} : vector<8x256xbf16>, vector<256x64xbf16>, vector<8x64xf32> -> vector<8x64xf32>
    %c272 = arith.constant 272 : index
    %c0_111 = arith.constant 0 : index
    %171 = vector.load %arg2[%c272, %c0_111] : memref<1512x256xbf16, #tpu.memory_space<vmem>>, vector<256x64xbf16>
    %cst_112 = arith.constant dense<0.000000e+00> : vector<8x64xf32>
    %172 = tpu.matmul %168, %171, %cst_112 {dimension_numbers = #tpu.dot_dimension_numbers<[1], [0], [0], [1], [0, 0, 1, 1], [], []>} : vector<8x256xbf16>, vector<256x64xbf16>, vector<8x64xf32> -> vector<8x64xf32>
    %173 = arith.maximumf %170, %172 : vector<8x64xf32>
    %c528 = arith.constant 528 : index
    %c0_113 = arith.constant 0 : index
    %174 = vector.load %arg2[%c528, %c0_113] : memref<1512x256xbf16, #tpu.memory_space<vmem>>, vector<256x64xbf16>
    %cst_114 = arith.constant dense<0.000000e+00> : vector<8x64xf32>
    %175 = tpu.matmul %168, %174, %cst_114 {dimension_numbers = #tpu.dot_dimension_numbers<[1], [0], [0], [1], [0, 0, 1, 1], [], []>} : vector<8x256xbf16>, vector<256x64xbf16>, vector<8x64xf32> -> vector<8x64xf32>
    %176 = arith.maximumf %173, %175 : vector<8x64xf32>
    %c784 = arith.constant 784 : index
    %c0_115 = arith.constant 0 : index
    %177 = vector.load %arg2[%c784, %c0_115] : memref<1512x256xbf16, #tpu.memory_space<vmem>>, vector<256x64xbf16>
    %cst_116 = arith.constant dense<0.000000e+00> : vector<8x64xf32>
    %178 = tpu.matmul %168, %177, %cst_116 {dimension_numbers = #tpu.dot_dimension_numbers<[1], [0], [0], [1], [0, 0, 1, 1], [], []>} : vector<8x256xbf16>, vector<256x64xbf16>, vector<8x64xf32> -> vector<8x64xf32>
    %179 = arith.maximumf %176, %178 : vector<8x64xf32>
    %c1040 = arith.constant 1040 : index
    %c0_117 = arith.constant 0 : index
    %180 = vector.load %arg2[%c1040, %c0_117] : memref<1512x256xbf16, #tpu.memory_space<vmem>>, vector<16x72xbf16>
    %c16_118 = arith.constant 16 : index
    %c0_119 = arith.constant 0 : index
    %181 = vector.load %arg3[%c16_118, %c0_119] : memref<152x1xf32, #tpu.memory_space<vmem>>, vector<16x1xf32>
    %cst_120 = arith.constant 0.000000e+00 : f32
    %182 = vector.broadcast %cst_120 : f32 to vector<8x9xf32>
    %c0_121 = arith.constant 0 : index
    %c119 = arith.constant 119 : index
    %183 = vector.load %arg5[%c0_121, %c119] : memref<24x512xf32, #tpu.memory_space<vmem>>, vector<8x9xf32>
    tpu.vector_store %arg5[%c0_121, %c119], %182 {strides = array<i32>} : memref<24x512xf32, #tpu.memory_space<vmem>>, vector<8x9xf32>,
    %c0_122 = arith.constant 0 : index
    %c192 = arith.constant 192 : index
    %184 = vector.load %arg5[%c0_122, %c192] : memref<24x512xf32, #tpu.memory_space<vmem>>, vector<8x9xf32>
    tpu.vector_store %arg5[%c0_122, %c192], %182 {strides = array<i32>} : memref<24x512xf32, #tpu.memory_space<vmem>>, vector<8x9xf32>,
    %c0_123 = arith.constant 0 : index
    %c128_124 = arith.constant 128 : index
    %185 = vector.load %arg5[%c0_123, %c128_124] : memref<24x512xf32, #tpu.memory_space<vmem>>, vector<8x64xf32>
    tpu.vector_store %arg5[%c0_123, %c128_124], %179 {strides = array<i32>} : memref<24x512xf32, #tpu.memory_space<vmem>>, vector<8x64xf32>,
    %186 = tpu.iota {dimensions = array<i32: 1>} : vector<1x64xi32>
    %c8_i32 = arith.constant 8 : i32
    %c0_i32_125 = arith.constant 0 : i32
    %187 = arith.cmpi eq, %c8_i32, %c0_i32_125 : i32
    %c1_i32_126 = arith.constant 1 : i32
    %188 = arith.select %187, %c1_i32_126, %c8_i32 : i32
    %189 = vector.broadcast %188 : i32 to vector<1x64xi32>
    %190 = arith.remsi %186, %189 : vector<1x64xi32>
    %c0_i32_127 = arith.constant 0 : i32
    %191 = vector.broadcast %c0_i32_127 : i32 to vector<1x64xi32>
    %192 = arith.cmpi ne, %190, %191 : vector<1x64xi32>
    %c0_i32_128 = arith.constant 0 : i32
    %193 = vector.broadcast %c0_i32_128 : i32 to vector<1x64xi32>
    %194 = arith.cmpi slt, %190, %193 : vector<1x64xi32>
    %c0_i32_129 = arith.constant 0 : i32
    %195 = arith.cmpi slt, %188, %c0_i32_129 : i32
    %196 = vector.broadcast %195 : i1 to vector<1x64xi1>
    %197 = vector.broadcast %196 : vector<1x64xi1> to vector<1x64xi1>
    %198 = arith.xori %194, %197 : vector<1x64xi1>
    %199 = arith.andi %198, %192 : vector<1x64xi1>
    %200 = vector.broadcast %188 : i32 to vector<1x64xi32>
    %201 = arith.addi %190, %200 : vector<1x64xi32>
    %202 = arith.select %199, %201, %190 : vector<1x64xi1>, vector<1x64xi32>
    %c1_i32_130 = arith.constant 1 : i32
    %203 = vector.broadcast %c1_i32_130 : i32 to vector<1x64xi32>
    %204 = arith.cmpi sge, %202, %203 : vector<1x64xi32>
    %c6_i32 = arith.constant 6 : i32
    %205 = vector.broadcast %c6_i32 : i32 to vector<1x64xi32>
    %206 = arith.cmpi sle, %202, %205 : vector<1x64xi32>
    %c0_131 = arith.constant 0 : index
    %c119_132 = arith.constant 119 : index
    %207 = vector.load %arg5[%c0_131, %c119_132] : memref<24x512xf32, #tpu.memory_space<vmem>>, vector<8x64xf32>
    %cst_133 = arith.constant 0.000000e+00 : f32
    %208 = vector.shape_cast %204 : vector<1x64xi1> to vector<1x64xi1>
    %209 = vector.broadcast %208 : vector<1x64xi1> to vector<8x64xi1>
    %210 = vector.broadcast %cst_133 : f32 to vector<8x64xf32>
    %211 = arith.select %209, %207, %210 : vector<8x64xi1>, vector<8x64xf32>
    %212 = arith.truncf %211 : vector<8x64xf32> to vector<8x64xbf16>
    %c0_134 = arith.constant 0 : index
    %c0_135 = arith.constant 0 : index
    %213 = vector.load %arg6[%c0_134, %c0_135] : memref<224x256xbf16, #tpu.memory_space<vmem>>, vector<8x64xbf16>
    tpu.vector_store %arg6[%c0_134, %c0_135], %212 {strides = array<i32>} : memref<224x256xbf16, #tpu.memory_space<vmem>>, vector<8x64xbf16>,
    %c0_136 = arith.constant 0 : index
    %c120 = arith.constant 120 : index
    %214 = vector.load %arg5[%c0_136, %c120] : memref<24x512xf32, #tpu.memory_space<vmem>>, vector<8x64xf32>
    %215 = arith.truncf %214 : vector<8x64xf32> to vector<8x64xbf16>
    %c8_137 = arith.constant 8 : index
    %c0_138 = arith.constant 0 : index
    %216 = vector.load %arg6[%c8_137, %c0_138] : memref<224x256xbf16, #tpu.memory_space<vmem>>, vector<8x64xbf16>
    tpu.vector_store %arg6[%c8_137, %c0_138], %215 {strides = array<i32>} : memref<224x256xbf16, #tpu.memory_space<vmem>>, vector<8x64xbf16>,
    %c0_139 = arith.constant 0 : index
    %c121 = arith.constant 121 : index
    %217 = vector.load %arg5[%c0_139, %c121] : memref<24x512xf32, #tpu.memory_space<vmem>>, vector<8x64xf32>
    %cst_140 = arith.constant 0.000000e+00 : f32
    %218 = vector.shape_cast %206 : vector<1x64xi1> to vector<1x64xi1>
    %219 = vector.broadcast %218 : vector<1x64xi1> to vector<8x64xi1>
    %220 = vector.broadcast %cst_140 : f32 to vector<8x64xf32>
    %221 = arith.select %219, %217, %220 : vector<8x64xi1>, vector<8x64xf32>
    %222 = arith.truncf %221 : vector<8x64xf32> to vector<8x64xbf16>
    %c16_141 = arith.constant 16 : index
    %c0_142 = arith.constant 0 : index
    %223 = vector.load %arg6[%c16_141, %c0_142] : memref<224x256xbf16, #tpu.memory_space<vmem>>, vector<8x64xbf16>
    tpu.vector_store %arg6[%c16_141, %c0_142], %222 {strides = array<i32>} : memref<224x256xbf16, #tpu.memory_space<vmem>>, vector<8x64xbf16>,
    %c0_143 = arith.constant 0 : index
    %c127_144 = arith.constant 127 : index
    %224 = vector.load %arg5[%c0_143, %c127_144] : memref<24x512xf32, #tpu.memory_space<vmem>>, vector<8x64xf32>
    %cst_145 = arith.constant 0.000000e+00 : f32
    %225 = vector.shape_cast %204 : vector<1x64xi1> to vector<1x64xi1>
    %226 = vector.broadcast %225 : vector<1x64xi1> to vector<8x64xi1>
    %227 = vector.broadcast %cst_145 : f32 to vector<8x64xf32>
    %228 = arith.select %226, %224, %227 : vector<8x64xi1>, vector<8x64xf32>
    %229 = arith.truncf %228 : vector<8x64xf32> to vector<8x64xbf16>
    %c24_146 = arith.constant 24 : index
    %c0_147 = arith.constant 0 : index
    %230 = vector.load %arg6[%c24_146, %c0_147] : memref<224x256xbf16, #tpu.memory_space<vmem>>, vector<8x64xbf16>
    tpu.vector_store %arg6[%c24_146, %c0_147], %229 {strides = array<i32>} : memref<224x256xbf16, #tpu.memory_space<vmem>>, vector<8x64xbf16>,
    %c0_148 = arith.constant 0 : index
    %c128_149 = arith.constant 128 : index
    %231 = vector.load %arg5[%c0_148, %c128_149] : memref<24x512xf32, #tpu.memory_space<vmem>>, vector<8x64xf32>
    %232 = arith.truncf %231 : vector<8x64xf32> to vector<8x64xbf16>
    %c32_150 = arith.constant 32 : index
    %c0_151 = arith.constant 0 : index
    %233 = vector.load %arg6[%c32_150, %c0_151] : memref<224x256xbf16, #tpu.memory_space<vmem>>, vector<8x64xbf16>
    tpu.vector_store %arg6[%c32_150, %c0_151], %232 {strides = array<i32>} : memref<224x256xbf16, #tpu.memory_space<vmem>>, vector<8x64xbf16>,
    %c0_152 = arith.constant 0 : index
    %c129_153 = arith.constant 129 : index
    %234 = vector.load %arg5[%c0_152, %c129_153] : memref<24x512xf32, #tpu.memory_space<vmem>>, vector<8x64xf32>
    %cst_154 = arith.constant 0.000000e+00 : f32
    %235 = vector.shape_cast %206 : vector<1x64xi1> to vector<1x64xi1>
    %236 = vector.broadcast %235 : vector<1x64xi1> to vector<8x64xi1>
    %237 = vector.broadcast %cst_154 : f32 to vector<8x64xf32>
    %238 = arith.select %236, %234, %237 : vector<8x64xi1>, vector<8x64xf32>
    %239 = arith.truncf %238 : vector<8x64xf32> to vector<8x64xbf16>
    %c40_155 = arith.constant 40 : index
    %c0_156 = arith.constant 0 : index
    %240 = vector.load %arg6[%c40_155, %c0_156] : memref<224x256xbf16, #tpu.memory_space<vmem>>, vector<8x64xbf16>
    tpu.vector_store %arg6[%c40_155, %c0_156], %239 {strides = array<i32>} : memref<224x256xbf16, #tpu.memory_space<vmem>>, vector<8x64xbf16>,
    %c0_157 = arith.constant 0 : index
    %c135 = arith.constant 135 : index
    %241 = vector.load %arg5[%c0_157, %c135] : memref<24x512xf32, #tpu.memory_space<vmem>>, vector<8x64xf32>
    %cst_158 = arith.constant 0.000000e+00 : f32
    %242 = vector.shape_cast %204 : vector<1x64xi1> to vector<1x64xi1>
    %243 = vector.broadcast %242 : vector<1x64xi1> to vector<8x64xi1>
    %244 = vector.broadcast %cst_158 : f32 to vector<8x64xf32>
    %245 = arith.select %243, %241, %244 : vector<8x64xi1>, vector<8x64xf32>
    %246 = arith.truncf %245 : vector<8x64xf32> to vector<8x64xbf16>
    %c48_159 = arith.constant 48 : index
    %c0_160 = arith.constant 0 : index
    %247 = vector.load %arg6[%c48_159, %c0_160] : memref<224x256xbf16, #tpu.memory_space<vmem>>, vector<8x64xbf16>
    tpu.vector_store %arg6[%c48_159, %c0_160], %246 {strides = array<i32>} : memref<224x256xbf16, #tpu.memory_space<vmem>>, vector<8x64xbf16>,
    %c0_161 = arith.constant 0 : index
    %c136 = arith.constant 136 : index
    %248 = vector.load %arg5[%c0_161, %c136] : memref<24x512xf32, #tpu.memory_space<vmem>>, vector<8x64xf32>
    %249 = arith.truncf %248 : vector<8x64xf32> to vector<8x64xbf16>
    %c56_162 = arith.constant 56 : index
    %c0_163 = arith.constant 0 : index
    %250 = vector.load %arg6[%c56_162, %c0_163] : memref<224x256xbf16, #tpu.memory_space<vmem>>, vector<8x64xbf16>
    tpu.vector_store %arg6[%c56_162, %c0_163], %249 {strides = array<i32>} : memref<224x256xbf16, #tpu.memory_space<vmem>>, vector<8x64xbf16>,
    %c0_164 = arith.constant 0 : index
    %c137 = arith.constant 137 : index
    %251 = vector.load %arg5[%c0_164, %c137] : memref<24x512xf32, #tpu.memory_space<vmem>>, vector<8x64xf32>
    %cst_165 = arith.constant 0.000000e+00 : f32
    %252 = vector.shape_cast %206 : vector<1x64xi1> to vector<1x64xi1>
    %253 = vector.broadcast %252 : vector<1x64xi1> to vector<8x64xi1>
    %254 = vector.broadcast %cst_165 : f32 to vector<8x64xf32>
    %255 = arith.select %253, %251, %254 : vector<8x64xi1>, vector<8x64xf32>
    %256 = arith.truncf %255 : vector<8x64xf32> to vector<8x64xbf16>
    %c64_166 = arith.constant 64 : index
    %c0_167 = arith.constant 0 : index
    %257 = vector.load %arg6[%c64_166, %c0_167] : memref<224x256xbf16, #tpu.memory_space<vmem>>, vector<8x64xbf16>
    tpu.vector_store %arg6[%c64_166, %c0_167], %256 {strides = array<i32>} : memref<224x256xbf16, #tpu.memory_space<vmem>>, vector<8x64xbf16>,
    %c0_168 = arith.constant 0 : index
    %c0_169 = arith.constant 0 : index
    %258 = vector.load %arg6[%c0_168, %c0_169] : memref<224x256xbf16, #tpu.memory_space<vmem>>, vector<72x64xbf16>
    %cst_170 = arith.constant dense<0.000000e+00> : vector<16x64xf32>
    %259 = tpu.matmul %180, %258, %cst_170 {dimension_numbers = #tpu.dot_dimension_numbers<[1], [0], [0], [1], [0, 0, 1, 1], [], []>} : vector<16x72xbf16>, vector<72x64xbf16>, vector<16x64xf32> -> vector<16x64xf32>
    %260 = vector.broadcast %181 : vector<16x1xf32> to vector<16x64xf32>
    %261 = arith.addf %259, %260 : vector<16x64xf32>
    %cst_171 = arith.constant 0.000000e+00 : f32
    %262 = vector.broadcast %cst_171 : f32 to vector<16x64xf32>
    %263 = arith.maximumf %261, %262 : vector<16x64xf32>
    %c1056 = arith.constant 1056 : index
    %c0_172 = arith.constant 0 : index
    %264 = vector.load %arg2[%c1056, %c0_172] : memref<1512x256xbf16, #tpu.memory_space<vmem>>, vector<16x144xbf16>
    %c32_173 = arith.constant 32 : index
    %c0_174 = arith.constant 0 : index
    %265 = vector.load %arg3[%c32_173, %c0_174] : memref<152x1xf32, #tpu.memory_space<vmem>>, vector<16x1xf32>
    %cst_175 = arith.constant 0.000000e+00 : f32
    %266 = vector.broadcast %cst_175 : f32 to vector<16x9xf32>
    %c0_176 = arith.constant 0 : index
    %c119_177 = arith.constant 119 : index
    %267 = vector.load %arg5[%c0_176, %c119_177] : memref<24x512xf32, #tpu.memory_space<vmem>>, vector<16x9xf32>
    tpu.vector_store %arg5[%c0_176, %c119_177], %266 {strides = array<i32>} : memref<24x512xf32, #tpu.memory_space<vmem>>, vector<16x9xf32>,
    %c0_178 = arith.constant 0 : index
    %c192_179 = arith.constant 192 : index
    %268 = vector.load %arg5[%c0_178, %c192_179] : memref<24x512xf32, #tpu.memory_space<vmem>>, vector<16x9xf32>
    tpu.vector_store %arg5[%c0_178, %c192_179], %266 {strides = array<i32>} : memref<24x512xf32, #tpu.memory_space<vmem>>, vector<16x9xf32>,
    %c0_180 = arith.constant 0 : index
    %c128_181 = arith.constant 128 : index
    %269 = vector.load %arg5[%c0_180, %c128_181] : memref<24x512xf32, #tpu.memory_space<vmem>>, vector<16x64xf32>
    tpu.vector_store %arg5[%c0_180, %c128_181], %263 {strides = array<i32>} : memref<24x512xf32, #tpu.memory_space<vmem>>, vector<16x64xf32>,
    %270 = tpu.iota {dimensions = array<i32: 1>} : vector<1x64xi32>
    %c8_i32_182 = arith.constant 8 : i32
    %c0_i32_183 = arith.constant 0 : i32
    %271 = arith.cmpi eq, %c8_i32_182, %c0_i32_183 : i32
    %c1_i32_184 = arith.constant 1 : i32
    %272 = arith.select %271, %c1_i32_184, %c8_i32_182 : i32
    %273 = vector.broadcast %272 : i32 to vector<1x64xi32>
    %274 = arith.remsi %270, %273 : vector<1x64xi32>
    %c0_i32_185 = arith.constant 0 : i32
    %275 = vector.broadcast %c0_i32_185 : i32 to vector<1x64xi32>
    %276 = arith.cmpi ne, %274, %275 : vector<1x64xi32>
    %c0_i32_186 = arith.constant 0 : i32
    %277 = vector.broadcast %c0_i32_186 : i32 to vector<1x64xi32>
    %278 = arith.cmpi slt, %274, %277 : vector<1x64xi32>
    %c0_i32_187 = arith.constant 0 : i32
    %279 = arith.cmpi slt, %272, %c0_i32_187 : i32
    %280 = vector.broadcast %279 : i1 to vector<1x64xi1>
    %281 = vector.broadcast %280 : vector<1x64xi1> to vector<1x64xi1>
    %282 = arith.xori %278, %281 : vector<1x64xi1>
    %283 = arith.andi %282, %276 : vector<1x64xi1>
    %284 = vector.broadcast %272 : i32 to vector<1x64xi32>
    %285 = arith.addi %274, %284 : vector<1x64xi32>
    %286 = arith.select %283, %285, %274 : vector<1x64xi1>, vector<1x64xi32>
    %c1_i32_188 = arith.constant 1 : i32
    %287 = vector.broadcast %c1_i32_188 : i32 to vector<1x64xi32>
    %288 = arith.cmpi sge, %286, %287 : vector<1x64xi32>
    %c6_i32_189 = arith.constant 6 : i32
    %289 = vector.broadcast %c6_i32_189 : i32 to vector<1x64xi32>
    %290 = arith.cmpi sle, %286, %289 : vector<1x64xi32>
    %c0_190 = arith.constant 0 : index
    %c119_191 = arith.constant 119 : index
    %291 = vector.load %arg5[%c0_190, %c119_191] : memref<24x512xf32, #tpu.memory_space<vmem>>, vector<16x64xf32>
    %cst_192 = arith.constant 0.000000e+00 : f32
    %292 = vector.shape_cast %288 : vector<1x64xi1> to vector<1x64xi1>
    %293 = vector.broadcast %292 : vector<1x64xi1> to vector<16x64xi1>
    %294 = vector.broadcast %cst_192 : f32 to vector<16x64xf32>
    %295 = arith.select %293, %291, %294 : vector<16x64xi1>, vector<16x64xf32>
    %296 = arith.truncf %295 : vector<16x64xf32> to vector<16x64xbf16>
    %c0_193 = arith.constant 0 : index
    %c0_194 = arith.constant 0 : index
    %297 = vector.load %arg6[%c0_193, %c0_194] : memref<224x256xbf16, #tpu.memory_space<vmem>>, vector<16x64xbf16>
    tpu.vector_store %arg6[%c0_193, %c0_194], %296 {strides = array<i32>} : memref<224x256xbf16, #tpu.memory_space<vmem>>, vector<16x64xbf16>,
    %c0_195 = arith.constant 0 : index
    %c120_196 = arith.constant 120 : index
    %298 = vector.load %arg5[%c0_195, %c120_196] : memref<24x512xf32, #tpu.memory_space<vmem>>, vector<16x64xf32>
    %299 = arith.truncf %298 : vector<16x64xf32> to vector<16x64xbf16>
    %c16_197 = arith.constant 16 : index
    %c0_198 = arith.constant 0 : index
    %300 = vector.load %arg6[%c16_197, %c0_198] : memref<224x256xbf16, #tpu.memory_space<vmem>>, vector<16x64xbf16>
    tpu.vector_store %arg6[%c16_197, %c0_198], %299 {strides = array<i32>} : memref<224x256xbf16, #tpu.memory_space<vmem>>, vector<16x64xbf16>,
    %c0_199 = arith.constant 0 : index
    %c121_200 = arith.constant 121 : index
    %301 = vector.load %arg5[%c0_199, %c121_200] : memref<24x512xf32, #tpu.memory_space<vmem>>, vector<16x64xf32>
    %cst_201 = arith.constant 0.000000e+00 : f32
    %302 = vector.shape_cast %290 : vector<1x64xi1> to vector<1x64xi1>
    %303 = vector.broadcast %302 : vector<1x64xi1> to vector<16x64xi1>
    %304 = vector.broadcast %cst_201 : f32 to vector<16x64xf32>
    %305 = arith.select %303, %301, %304 : vector<16x64xi1>, vector<16x64xf32>
    %306 = arith.truncf %305 : vector<16x64xf32> to vector<16x64xbf16>
    %c32_202 = arith.constant 32 : index
    %c0_203 = arith.constant 0 : index
    %307 = vector.load %arg6[%c32_202, %c0_203] : memref<224x256xbf16, #tpu.memory_space<vmem>>, vector<16x64xbf16>
    tpu.vector_store %arg6[%c32_202, %c0_203], %306 {strides = array<i32>} : memref<224x256xbf16, #tpu.memory_space<vmem>>, vector<16x64xbf16>,
    %c0_204 = arith.constant 0 : index
    %c127_205 = arith.constant 127 : index
    %308 = vector.load %arg5[%c0_204, %c127_205] : memref<24x512xf32, #tpu.memory_space<vmem>>, vector<16x64xf32>
    %cst_206 = arith.constant 0.000000e+00 : f32
    %309 = vector.shape_cast %288 : vector<1x64xi1> to vector<1x64xi1>
    %310 = vector.broadcast %309 : vector<1x64xi1> to vector<16x64xi1>
    %311 = vector.broadcast %cst_206 : f32 to vector<16x64xf32>
    %312 = arith.select %310, %308, %311 : vector<16x64xi1>, vector<16x64xf32>
    %313 = arith.truncf %312 : vector<16x64xf32> to vector<16x64xbf16>
    %c48_207 = arith.constant 48 : index
    %c0_208 = arith.constant 0 : index
    %314 = vector.load %arg6[%c48_207, %c0_208] : memref<224x256xbf16, #tpu.memory_space<vmem>>, vector<16x64xbf16>
    tpu.vector_store %arg6[%c48_207, %c0_208], %313 {strides = array<i32>} : memref<224x256xbf16, #tpu.memory_space<vmem>>, vector<16x64xbf16>,
    %c0_209 = arith.constant 0 : index
    %c128_210 = arith.constant 128 : index
    %315 = vector.load %arg5[%c0_209, %c128_210] : memref<24x512xf32, #tpu.memory_space<vmem>>, vector<16x64xf32>
    %316 = arith.truncf %315 : vector<16x64xf32> to vector<16x64xbf16>
    %c64_211 = arith.constant 64 : index
    %c0_212 = arith.constant 0 : index
    %317 = vector.load %arg6[%c64_211, %c0_212] : memref<224x256xbf16, #tpu.memory_space<vmem>>, vector<16x64xbf16>
    tpu.vector_store %arg6[%c64_211, %c0_212], %316 {strides = array<i32>} : memref<224x256xbf16, #tpu.memory_space<vmem>>, vector<16x64xbf16>,
    %c0_213 = arith.constant 0 : index
    %c129_214 = arith.constant 129 : index
    %318 = vector.load %arg5[%c0_213, %c129_214] : memref<24x512xf32, #tpu.memory_space<vmem>>, vector<16x64xf32>
    %cst_215 = arith.constant 0.000000e+00 : f32
    %319 = vector.shape_cast %290 : vector<1x64xi1> to vector<1x64xi1>
    %320 = vector.broadcast %319 : vector<1x64xi1> to vector<16x64xi1>
    %321 = vector.broadcast %cst_215 : f32 to vector<16x64xf32>
    %322 = arith.select %320, %318, %321 : vector<16x64xi1>, vector<16x64xf32>
    %323 = arith.truncf %322 : vector<16x64xf32> to vector<16x64xbf16>
    %c80 = arith.constant 80 : index
    %c0_216 = arith.constant 0 : index
    %324 = vector.load %arg6[%c80, %c0_216] : memref<224x256xbf16, #tpu.memory_space<vmem>>, vector<16x64xbf16>
    tpu.vector_store %arg6[%c80, %c0_216], %323 {strides = array<i32>} : memref<224x256xbf16, #tpu.memory_space<vmem>>, vector<16x64xbf16>,
    %c0_217 = arith.constant 0 : index
    %c135_218 = arith.constant 135 : index
    %325 = vector.load %arg5[%c0_217, %c135_218] : memref<24x512xf32, #tpu.memory_space<vmem>>, vector<16x64xf32>
    %cst_219 = arith.constant 0.000000e+00 : f32
    %326 = vector.shape_cast %288 : vector<1x64xi1> to vector<1x64xi1>
    %327 = vector.broadcast %326 : vector<1x64xi1> to vector<16x64xi1>
    %328 = vector.broadcast %cst_219 : f32 to vector<16x64xf32>
    %329 = arith.select %327, %325, %328 : vector<16x64xi1>, vector<16x64xf32>
    %330 = arith.truncf %329 : vector<16x64xf32> to vector<16x64xbf16>
    %c96 = arith.constant 96 : index
    %c0_220 = arith.constant 0 : index
    %331 = vector.load %arg6[%c96, %c0_220] : memref<224x256xbf16, #tpu.memory_space<vmem>>, vector<16x64xbf16>
    tpu.vector_store %arg6[%c96, %c0_220], %330 {strides = array<i32>} : memref<224x256xbf16, #tpu.memory_space<vmem>>, vector<16x64xbf16>,
    %c0_221 = arith.constant 0 : index
    %c136_222 = arith.constant 136 : index
    %332 = vector.load %arg5[%c0_221, %c136_222] : memref<24x512xf32, #tpu.memory_space<vmem>>, vector<16x64xf32>
    %333 = arith.truncf %332 : vector<16x64xf32> to vector<16x64xbf16>
    %c112_223 = arith.constant 112 : index
    %c0_224 = arith.constant 0 : index
    %334 = vector.load %arg6[%c112_223, %c0_224] : memref<224x256xbf16, #tpu.memory_space<vmem>>, vector<16x64xbf16>
    tpu.vector_store %arg6[%c112_223, %c0_224], %333 {strides = array<i32>} : memref<224x256xbf16, #tpu.memory_space<vmem>>, vector<16x64xbf16>,
    %c0_225 = arith.constant 0 : index
    %c137_226 = arith.constant 137 : index
    %335 = vector.load %arg5[%c0_225, %c137_226] : memref<24x512xf32, #tpu.memory_space<vmem>>, vector<16x64xf32>
    %cst_227 = arith.constant 0.000000e+00 : f32
    %336 = vector.shape_cast %290 : vector<1x64xi1> to vector<1x64xi1>
    %337 = vector.broadcast %336 : vector<1x64xi1> to vector<16x64xi1>
    %338 = vector.broadcast %cst_227 : f32 to vector<16x64xf32>
    %339 = arith.select %337, %335, %338 : vector<16x64xi1>, vector<16x64xf32>
    %340 = arith.truncf %339 : vector<16x64xf32> to vector<16x64xbf16>
    %c128_228 = arith.constant 128 : index
    %c0_229 = arith.constant 0 : index
    %341 = vector.load %arg6[%c128_228, %c0_229] : memref<224x256xbf16, #tpu.memory_space<vmem>>, vector<16x64xbf16>
    tpu.vector_store %arg6[%c128_228, %c0_229], %340 {strides = array<i32>} : memref<224x256xbf16, #tpu.memory_space<vmem>>, vector<16x64xbf16>,
    %c0_230 = arith.constant 0 : index
    %c0_231 = arith.constant 0 : index
    %342 = vector.load %arg6[%c0_230, %c0_231] : memref<224x256xbf16, #tpu.memory_space<vmem>>, vector<144x64xbf16>
    %cst_232 = arith.constant dense<0.000000e+00> : vector<16x64xf32>
    %343 = tpu.matmul %264, %342, %cst_232 {dimension_numbers = #tpu.dot_dimension_numbers<[1], [0], [0], [1], [0, 0, 1, 1], [], []>} : vector<16x144xbf16>, vector<144x64xbf16>, vector<16x64xf32> -> vector<16x64xf32>
    %344 = vector.broadcast %265 : vector<16x1xf32> to vector<16x64xf32>
    %345 = arith.addf %343, %344 : vector<16x64xf32>
    %cst_233 = arith.constant 0.000000e+00 : f32
    %346 = vector.broadcast %cst_233 : f32 to vector<16x64xf32>
    %347 = arith.maximumf %345, %346 : vector<16x64xf32>
    %348 = arith.truncf %347 : vector<16x64xf32> to vector<16x64xbf16>
    %c1072 = arith.constant 1072 : index
    %c0_234 = arith.constant 0 : index
    %349 = vector.load %arg2[%c1072, %c0_234] : memref<1512x256xbf16, #tpu.memory_space<vmem>>, vector<64x16xbf16>
    %cst_235 = arith.constant dense<0.000000e+00> : vector<16x16xf32>
    %350 = tpu.matmul %348, %349, %cst_235 {dimension_numbers = #tpu.dot_dimension_numbers<[1], [0], [0], [1], [0, 0, 1, 1], [], []>} : vector<16x64xbf16>, vector<64x16xbf16>, vector<16x16xf32> -> vector<16x16xf32>
    %c1136 = arith.constant 1136 : index
    %c0_236 = arith.constant 0 : index
    %351 = vector.load %arg2[%c1136, %c0_236] : memref<1512x256xbf16, #tpu.memory_space<vmem>>, vector<64x16xbf16>
    %cst_237 = arith.constant dense<0.000000e+00> : vector<16x16xf32>
    %352 = tpu.matmul %348, %351, %cst_237 {dimension_numbers = #tpu.dot_dimension_numbers<[1], [0], [0], [1], [0, 0, 1, 1], [], []>} : vector<16x64xbf16>, vector<64x16xbf16>, vector<16x16xf32> -> vector<16x16xf32>
    %353 = arith.maximumf %350, %352 : vector<16x16xf32>
    %c1200 = arith.constant 1200 : index
    %c0_238 = arith.constant 0 : index
    %354 = vector.load %arg2[%c1200, %c0_238] : memref<1512x256xbf16, #tpu.memory_space<vmem>>, vector<64x16xbf16>
    %cst_239 = arith.constant dense<0.000000e+00> : vector<16x16xf32>
    %355 = tpu.matmul %348, %354, %cst_239 {dimension_numbers = #tpu.dot_dimension_numbers<[1], [0], [0], [1], [0, 0, 1, 1], [], []>} : vector<16x64xbf16>, vector<64x16xbf16>, vector<16x16xf32> -> vector<16x16xf32>
    %356 = arith.maximumf %353, %355 : vector<16x16xf32>
    %c1264 = arith.constant 1264 : index
    %c0_240 = arith.constant 0 : index
    %357 = vector.load %arg2[%c1264, %c0_240] : memref<1512x256xbf16, #tpu.memory_space<vmem>>, vector<64x16xbf16>
    %cst_241 = arith.constant dense<0.000000e+00> : vector<16x16xf32>
    %358 = tpu.matmul %348, %357, %cst_241 {dimension_numbers = #tpu.dot_dimension_numbers<[1], [0], [0], [1], [0, 0, 1, 1], [], []>} : vector<16x64xbf16>, vector<64x16xbf16>, vector<16x16xf32> -> vector<16x16xf32>
    %359 = arith.maximumf %356, %358 : vector<16x16xf32>
    %c1328 = arith.constant 1328 : index
    %c0_242 = arith.constant 0 : index
    %360 = vector.load %arg2[%c1328, %c0_242] : memref<1512x256xbf16, #tpu.memory_space<vmem>>, vector<24x144xbf16>
    %c48_243 = arith.constant 48 : index
    %c0_244 = arith.constant 0 : index
    %361 = vector.load %arg3[%c48_243, %c0_244] : memref<152x1xf32, #tpu.memory_space<vmem>>, vector<24x1xf32>
    %cst_245 = arith.constant 0.000000e+00 : f32
    %362 = vector.broadcast %cst_245 : f32 to vector<16x5xf32>
    %c0_246 = arith.constant 0 : index
    %c123 = arith.constant 123 : index
    %363 = vector.load %arg5[%c0_246, %c123] : memref<24x512xf32, #tpu.memory_space<vmem>>, vector<16x5xf32>
    tpu.vector_store %arg5[%c0_246, %c123], %362 {strides = array<i32>} : memref<24x512xf32, #tpu.memory_space<vmem>>, vector<16x5xf32>,
    %c0_247 = arith.constant 0 : index
    %c144_248 = arith.constant 144 : index
    %364 = vector.load %arg5[%c0_247, %c144_248] : memref<24x512xf32, #tpu.memory_space<vmem>>, vector<16x5xf32>
    tpu.vector_store %arg5[%c0_247, %c144_248], %362 {strides = array<i32>} : memref<24x512xf32, #tpu.memory_space<vmem>>, vector<16x5xf32>,
    %c0_249 = arith.constant 0 : index
    %c128_250 = arith.constant 128 : index
    %365 = vector.load %arg5[%c0_249, %c128_250] : memref<24x512xf32, #tpu.memory_space<vmem>>, vector<16x16xf32>
    tpu.vector_store %arg5[%c0_249, %c128_250], %359 {strides = array<i32>} : memref<24x512xf32, #tpu.memory_space<vmem>>, vector<16x16xf32>,
    %366 = tpu.iota {dimensions = array<i32: 1>} : vector<1x16xi32>
    %c4_i32 = arith.constant 4 : i32
    %c0_i32_251 = arith.constant 0 : i32
    %367 = arith.cmpi eq, %c4_i32, %c0_i32_251 : i32
    %c1_i32_252 = arith.constant 1 : i32
    %368 = arith.select %367, %c1_i32_252, %c4_i32 : i32
    %369 = vector.broadcast %368 : i32 to vector<1x16xi32>
    %370 = arith.remsi %366, %369 : vector<1x16xi32>
    %c0_i32_253 = arith.constant 0 : i32
    %371 = vector.broadcast %c0_i32_253 : i32 to vector<1x16xi32>
    %372 = arith.cmpi ne, %370, %371 : vector<1x16xi32>
    %c0_i32_254 = arith.constant 0 : i32
    %373 = vector.broadcast %c0_i32_254 : i32 to vector<1x16xi32>
    %374 = arith.cmpi slt, %370, %373 : vector<1x16xi32>
    %c0_i32_255 = arith.constant 0 : i32
    %375 = arith.cmpi slt, %368, %c0_i32_255 : i32
    %376 = vector.broadcast %375 : i1 to vector<1x16xi1>
    %377 = vector.broadcast %376 : vector<1x16xi1> to vector<1x16xi1>
    %378 = arith.xori %374, %377 : vector<1x16xi1>
    %379 = arith.andi %378, %372 : vector<1x16xi1>
    %380 = vector.broadcast %368 : i32 to vector<1x16xi32>
    %381 = arith.addi %370, %380 : vector<1x16xi32>
    %382 = arith.select %379, %381, %370 : vector<1x16xi1>, vector<1x16xi32>
    %c1_i32_256 = arith.constant 1 : i32
    %383 = vector.broadcast %c1_i32_256 : i32 to vector<1x16xi32>
    %384 = arith.cmpi sge, %382, %383 : vector<1x16xi32>
    %c2_i32 = arith.constant 2 : i32
    %385 = vector.broadcast %c2_i32 : i32 to vector<1x16xi32>
    %386 = arith.cmpi sle, %382, %385 : vector<1x16xi32>
    %c0_257 = arith.constant 0 : index
    %c123_258 = arith.constant 123 : index
    %387 = vector.load %arg5[%c0_257, %c123_258] : memref<24x512xf32, #tpu.memory_space<vmem>>, vector<16x16xf32>
    %cst_259 = arith.constant 0.000000e+00 : f32
    %388 = vector.shape_cast %384 : vector<1x16xi1> to vector<1x16xi1>
    %389 = vector.broadcast %388 : vector<1x16xi1> to vector<16x16xi1>
    %390 = vector.broadcast %cst_259 : f32 to vector<16x16xf32>
    %391 = arith.select %389, %387, %390 : vector<16x16xi1>, vector<16x16xf32>
    %392 = arith.truncf %391 : vector<16x16xf32> to vector<16x16xbf16>
    %c0_260 = arith.constant 0 : index
    %c0_261 = arith.constant 0 : index
    %393 = vector.load %arg6[%c0_260, %c0_261] : memref<224x256xbf16, #tpu.memory_space<vmem>>, vector<16x16xbf16>
    tpu.vector_store %arg6[%c0_260, %c0_261], %392 {strides = array<i32>} : memref<224x256xbf16, #tpu.memory_space<vmem>>, vector<16x16xbf16>,
    %c0_262 = arith.constant 0 : index
    %c124 = arith.constant 124 : index
    %394 = vector.load %arg5[%c0_262, %c124] : memref<24x512xf32, #tpu.memory_space<vmem>>, vector<16x16xf32>
    %395 = arith.truncf %394 : vector<16x16xf32> to vector<16x16xbf16>
    %c16_263 = arith.constant 16 : index
    %c0_264 = arith.constant 0 : index
    %396 = vector.load %arg6[%c16_263, %c0_264] : memref<224x256xbf16, #tpu.memory_space<vmem>>, vector<16x16xbf16>
    tpu.vector_store %arg6[%c16_263, %c0_264], %395 {strides = array<i32>} : memref<224x256xbf16, #tpu.memory_space<vmem>>, vector<16x16xbf16>,
    %c0_265 = arith.constant 0 : index
    %c125 = arith.constant 125 : index
    %397 = vector.load %arg5[%c0_265, %c125] : memref<24x512xf32, #tpu.memory_space<vmem>>, vector<16x16xf32>
    %cst_266 = arith.constant 0.000000e+00 : f32
    %398 = vector.shape_cast %386 : vector<1x16xi1> to vector<1x16xi1>
    %399 = vector.broadcast %398 : vector<1x16xi1> to vector<16x16xi1>
    %400 = vector.broadcast %cst_266 : f32 to vector<16x16xf32>
    %401 = arith.select %399, %397, %400 : vector<16x16xi1>, vector<16x16xf32>
    %402 = arith.truncf %401 : vector<16x16xf32> to vector<16x16xbf16>
    %c32_267 = arith.constant 32 : index
    %c0_268 = arith.constant 0 : index
    %403 = vector.load %arg6[%c32_267, %c0_268] : memref<224x256xbf16, #tpu.memory_space<vmem>>, vector<16x16xbf16>
    tpu.vector_store %arg6[%c32_267, %c0_268], %402 {strides = array<i32>} : memref<224x256xbf16, #tpu.memory_space<vmem>>, vector<16x16xbf16>,
    %c0_269 = arith.constant 0 : index
    %c127_270 = arith.constant 127 : index
    %404 = vector.load %arg5[%c0_269, %c127_270] : memref<24x512xf32, #tpu.memory_space<vmem>>, vector<16x16xf32>
    %cst_271 = arith.constant 0.000000e+00 : f32
    %405 = vector.shape_cast %384 : vector<1x16xi1> to vector<1x16xi1>
    %406 = vector.broadcast %405 : vector<1x16xi1> to vector<16x16xi1>
    %407 = vector.broadcast %cst_271 : f32 to vector<16x16xf32>
    %408 = arith.select %406, %404, %407 : vector<16x16xi1>, vector<16x16xf32>
    %409 = arith.truncf %408 : vector<16x16xf32> to vector<16x16xbf16>
    %c48_272 = arith.constant 48 : index
    %c0_273 = arith.constant 0 : index
    %410 = vector.load %arg6[%c48_272, %c0_273] : memref<224x256xbf16, #tpu.memory_space<vmem>>, vector<16x16xbf16>
    tpu.vector_store %arg6[%c48_272, %c0_273], %409 {strides = array<i32>} : memref<224x256xbf16, #tpu.memory_space<vmem>>, vector<16x16xbf16>,
    %c0_274 = arith.constant 0 : index
    %c128_275 = arith.constant 128 : index
    %411 = vector.load %arg5[%c0_274, %c128_275] : memref<24x512xf32, #tpu.memory_space<vmem>>, vector<16x16xf32>
    %412 = arith.truncf %411 : vector<16x16xf32> to vector<16x16xbf16>
    %c64_276 = arith.constant 64 : index
    %c0_277 = arith.constant 0 : index
    %413 = vector.load %arg6[%c64_276, %c0_277] : memref<224x256xbf16, #tpu.memory_space<vmem>>, vector<16x16xbf16>
    tpu.vector_store %arg6[%c64_276, %c0_277], %412 {strides = array<i32>} : memref<224x256xbf16, #tpu.memory_space<vmem>>, vector<16x16xbf16>,
    %c0_278 = arith.constant 0 : index
    %c129_279 = arith.constant 129 : index
    %414 = vector.load %arg5[%c0_278, %c129_279] : memref<24x512xf32, #tpu.memory_space<vmem>>, vector<16x16xf32>
    %cst_280 = arith.constant 0.000000e+00 : f32
    %415 = vector.shape_cast %386 : vector<1x16xi1> to vector<1x16xi1>
    %416 = vector.broadcast %415 : vector<1x16xi1> to vector<16x16xi1>
    %417 = vector.broadcast %cst_280 : f32 to vector<16x16xf32>
    %418 = arith.select %416, %414, %417 : vector<16x16xi1>, vector<16x16xf32>
    %419 = arith.truncf %418 : vector<16x16xf32> to vector<16x16xbf16>
    %c80_281 = arith.constant 80 : index
    %c0_282 = arith.constant 0 : index
    %420 = vector.load %arg6[%c80_281, %c0_282] : memref<224x256xbf16, #tpu.memory_space<vmem>>, vector<16x16xbf16>
    tpu.vector_store %arg6[%c80_281, %c0_282], %419 {strides = array<i32>} : memref<224x256xbf16, #tpu.memory_space<vmem>>, vector<16x16xbf16>,
    %c0_283 = arith.constant 0 : index
    %c131 = arith.constant 131 : index
    %421 = vector.load %arg5[%c0_283, %c131] : memref<24x512xf32, #tpu.memory_space<vmem>>, vector<16x16xf32>
    %cst_284 = arith.constant 0.000000e+00 : f32
    %422 = vector.shape_cast %384 : vector<1x16xi1> to vector<1x16xi1>
    %423 = vector.broadcast %422 : vector<1x16xi1> to vector<16x16xi1>
    %424 = vector.broadcast %cst_284 : f32 to vector<16x16xf32>
    %425 = arith.select %423, %421, %424 : vector<16x16xi1>, vector<16x16xf32>
    %426 = arith.truncf %425 : vector<16x16xf32> to vector<16x16xbf16>
    %c96_285 = arith.constant 96 : index
    %c0_286 = arith.constant 0 : index
    %427 = vector.load %arg6[%c96_285, %c0_286] : memref<224x256xbf16, #tpu.memory_space<vmem>>, vector<16x16xbf16>
    tpu.vector_store %arg6[%c96_285, %c0_286], %426 {strides = array<i32>} : memref<224x256xbf16, #tpu.memory_space<vmem>>, vector<16x16xbf16>,
    %c0_287 = arith.constant 0 : index
    %c132 = arith.constant 132 : index
    %428 = vector.load %arg5[%c0_287, %c132] : memref<24x512xf32, #tpu.memory_space<vmem>>, vector<16x16xf32>
    %429 = arith.truncf %428 : vector<16x16xf32> to vector<16x16xbf16>
    %c112_288 = arith.constant 112 : index
    %c0_289 = arith.constant 0 : index
    %430 = vector.load %arg6[%c112_288, %c0_289] : memref<224x256xbf16, #tpu.memory_space<vmem>>, vector<16x16xbf16>
    tpu.vector_store %arg6[%c112_288, %c0_289], %429 {strides = array<i32>} : memref<224x256xbf16, #tpu.memory_space<vmem>>, vector<16x16xbf16>,
    %c0_290 = arith.constant 0 : index
    %c133 = arith.constant 133 : index
    %431 = vector.load %arg5[%c0_290, %c133] : memref<24x512xf32, #tpu.memory_space<vmem>>, vector<16x16xf32>
    %cst_291 = arith.constant 0.000000e+00 : f32
    %432 = vector.shape_cast %386 : vector<1x16xi1> to vector<1x16xi1>
    %433 = vector.broadcast %432 : vector<1x16xi1> to vector<16x16xi1>
    %434 = vector.broadcast %cst_291 : f32 to vector<16x16xf32>
    %435 = arith.select %433, %431, %434 : vector<16x16xi1>, vector<16x16xf32>
    %436 = arith.truncf %435 : vector<16x16xf32> to vector<16x16xbf16>
    %c128_292 = arith.constant 128 : index
    %c0_293 = arith.constant 0 : index
    %437 = vector.load %arg6[%c128_292, %c0_293] : memref<224x256xbf16, #tpu.memory_space<vmem>>, vector<16x16xbf16>
    tpu.vector_store %arg6[%c128_292, %c0_293], %436 {strides = array<i32>} : memref<224x256xbf16, #tpu.memory_space<vmem>>, vector<16x16xbf16>,
    %c0_294 = arith.constant 0 : index
    %c0_295 = arith.constant 0 : index
    %438 = vector.load %arg6[%c0_294, %c0_295] : memref<224x256xbf16, #tpu.memory_space<vmem>>, vector<144x16xbf16>
    %cst_296 = arith.constant dense<0.000000e+00> : vector<24x16xf32>
    %439 = tpu.matmul %360, %438, %cst_296 {dimension_numbers = #tpu.dot_dimension_numbers<[1], [0], [0], [1], [0, 0, 1, 1], [], []>} : vector<24x144xbf16>, vector<144x16xbf16>, vector<24x16xf32> -> vector<24x16xf32>
    %440 = vector.broadcast %361 : vector<24x1xf32> to vector<24x16xf32>
    %441 = arith.addf %439, %440 : vector<24x16xf32>
    %cst_297 = arith.constant 0.000000e+00 : f32
    %442 = vector.broadcast %cst_297 : f32 to vector<24x16xf32>
    %443 = arith.maximumf %441, %442 : vector<24x16xf32>
    %c1352 = arith.constant 1352 : index
    %c0_298 = arith.constant 0 : index
    %444 = vector.load %arg2[%c1352, %c0_298] : memref<1512x256xbf16, #tpu.memory_space<vmem>>, vector<24x216xbf16>
    %c72 = arith.constant 72 : index
    %c0_299 = arith.constant 0 : index
    %445 = vector.load %arg3[%c72, %c0_299] : memref<152x1xf32, #tpu.memory_space<vmem>>, vector<24x1xf32>
    %cst_300 = arith.constant 0.000000e+00 : f32
    %446 = vector.broadcast %cst_300 : f32 to vector<24x5xf32>
    %c0_301 = arith.constant 0 : index
    %c123_302 = arith.constant 123 : index
    %447 = vector.load %arg5[%c0_301, %c123_302] : memref<24x512xf32, #tpu.memory_space<vmem>>, vector<24x5xf32>
    tpu.vector_store %arg5[%c0_301, %c123_302], %446 {strides = array<i32>} : memref<24x512xf32, #tpu.memory_space<vmem>>, vector<24x5xf32>,
    %c0_303 = arith.constant 0 : index
    %c144_304 = arith.constant 144 : index
    %448 = vector.load %arg5[%c0_303, %c144_304] : memref<24x512xf32, #tpu.memory_space<vmem>>, vector<24x5xf32>
    tpu.vector_store %arg5[%c0_303, %c144_304], %446 {strides = array<i32>} : memref<24x512xf32, #tpu.memory_space<vmem>>, vector<24x5xf32>,
    %c0_305 = arith.constant 0 : index
    %c128_306 = arith.constant 128 : index
    %449 = vector.load %arg5[%c0_305, %c128_306] : memref<24x512xf32, #tpu.memory_space<vmem>>, vector<24x16xf32>
    tpu.vector_store %arg5[%c0_305, %c128_306], %443 {strides = array<i32>} : memref<24x512xf32, #tpu.memory_space<vmem>>, vector<24x16xf32>,
    %450 = tpu.iota {dimensions = array<i32: 1>} : vector<1x16xi32>
    %c4_i32_307 = arith.constant 4 : i32
    %c0_i32_308 = arith.constant 0 : i32
    %451 = arith.cmpi eq, %c4_i32_307, %c0_i32_308 : i32
    %c1_i32_309 = arith.constant 1 : i32
    %452 = arith.select %451, %c1_i32_309, %c4_i32_307 : i32
    %453 = vector.broadcast %452 : i32 to vector<1x16xi32>
    %454 = arith.remsi %450, %453 : vector<1x16xi32>
    %c0_i32_310 = arith.constant 0 : i32
    %455 = vector.broadcast %c0_i32_310 : i32 to vector<1x16xi32>
    %456 = arith.cmpi ne, %454, %455 : vector<1x16xi32>
    %c0_i32_311 = arith.constant 0 : i32
    %457 = vector.broadcast %c0_i32_311 : i32 to vector<1x16xi32>
    %458 = arith.cmpi slt, %454, %457 : vector<1x16xi32>
    %c0_i32_312 = arith.constant 0 : i32
    %459 = arith.cmpi slt, %452, %c0_i32_312 : i32
    %460 = vector.broadcast %459 : i1 to vector<1x16xi1>
    %461 = vector.broadcast %460 : vector<1x16xi1> to vector<1x16xi1>
    %462 = arith.xori %458, %461 : vector<1x16xi1>
    %463 = arith.andi %462, %456 : vector<1x16xi1>
    %464 = vector.broadcast %452 : i32 to vector<1x16xi32>
    %465 = arith.addi %454, %464 : vector<1x16xi32>
    %466 = arith.select %463, %465, %454 : vector<1x16xi1>, vector<1x16xi32>
    %c1_i32_313 = arith.constant 1 : i32
    %467 = vector.broadcast %c1_i32_313 : i32 to vector<1x16xi32>
    %468 = arith.cmpi sge, %466, %467 : vector<1x16xi32>
    %c2_i32_314 = arith.constant 2 : i32
    %469 = vector.broadcast %c2_i32_314 : i32 to vector<1x16xi32>
    %470 = arith.cmpi sle, %466, %469 : vector<1x16xi32>
    %c0_315 = arith.constant 0 : index
    %c123_316 = arith.constant 123 : index
    %471 = vector.load %arg5[%c0_315, %c123_316] : memref<24x512xf32, #tpu.memory_space<vmem>>, vector<24x16xf32>
    %cst_317 = arith.constant 0.000000e+00 : f32
    %472 = vector.shape_cast %468 : vector<1x16xi1> to vector<1x16xi1>
    %473 = vector.broadcast %472 : vector<1x16xi1> to vector<24x16xi1>
    %474 = vector.broadcast %cst_317 : f32 to vector<24x16xf32>
    %475 = arith.select %473, %471, %474 : vector<24x16xi1>, vector<24x16xf32>
    %476 = arith.truncf %475 : vector<24x16xf32> to vector<24x16xbf16>
    %c0_318 = arith.constant 0 : index
    %c0_319 = arith.constant 0 : index
    %477 = vector.load %arg6[%c0_318, %c0_319] : memref<224x256xbf16, #tpu.memory_space<vmem>>, vector<24x16xbf16>
    tpu.vector_store %arg6[%c0_318, %c0_319], %476 {strides = array<i32>} : memref<224x256xbf16, #tpu.memory_space<vmem>>, vector<24x16xbf16>,
    %c0_320 = arith.constant 0 : index
    %c124_321 = arith.constant 124 : index
    %478 = vector.load %arg5[%c0_320, %c124_321] : memref<24x512xf32, #tpu.memory_space<vmem>>, vector<24x16xf32>
    %479 = arith.truncf %478 : vector<24x16xf32> to vector<24x16xbf16>
    %c24_322 = arith.constant 24 : index
    %c0_323 = arith.constant 0 : index
    %480 = vector.load %arg6[%c24_322, %c0_323] : memref<224x256xbf16, #tpu.memory_space<vmem>>, vector<24x16xbf16>
    tpu.vector_store %arg6[%c24_322, %c0_323], %479 {strides = array<i32>} : memref<224x256xbf16, #tpu.memory_space<vmem>>, vector<24x16xbf16>,
    %c0_324 = arith.constant 0 : index
    %c125_325 = arith.constant 125 : index
    %481 = vector.load %arg5[%c0_324, %c125_325] : memref<24x512xf32, #tpu.memory_space<vmem>>, vector<24x16xf32>
    %cst_326 = arith.constant 0.000000e+00 : f32
    %482 = vector.shape_cast %470 : vector<1x16xi1> to vector<1x16xi1>
    %483 = vector.broadcast %482 : vector<1x16xi1> to vector<24x16xi1>
    %484 = vector.broadcast %cst_326 : f32 to vector<24x16xf32>
    %485 = arith.select %483, %481, %484 : vector<24x16xi1>, vector<24x16xf32>
    %486 = arith.truncf %485 : vector<24x16xf32> to vector<24x16xbf16>
    %c48_327 = arith.constant 48 : index
    %c0_328 = arith.constant 0 : index
    %487 = vector.load %arg6[%c48_327, %c0_328] : memref<224x256xbf16, #tpu.memory_space<vmem>>, vector<24x16xbf16>
    tpu.vector_store %arg6[%c48_327, %c0_328], %486 {strides = array<i32>} : memref<224x256xbf16, #tpu.memory_space<vmem>>, vector<24x16xbf16>,
    %c0_329 = arith.constant 0 : index
    %c127_330 = arith.constant 127 : index
    %488 = vector.load %arg5[%c0_329, %c127_330] : memref<24x512xf32, #tpu.memory_space<vmem>>, vector<24x16xf32>
    %cst_331 = arith.constant 0.000000e+00 : f32
    %489 = vector.shape_cast %468 : vector<1x16xi1> to vector<1x16xi1>
    %490 = vector.broadcast %489 : vector<1x16xi1> to vector<24x16xi1>
    %491 = vector.broadcast %cst_331 : f32 to vector<24x16xf32>
    %492 = arith.select %490, %488, %491 : vector<24x16xi1>, vector<24x16xf32>
    %493 = arith.truncf %492 : vector<24x16xf32> to vector<24x16xbf16>
    %c72_332 = arith.constant 72 : index
    %c0_333 = arith.constant 0 : index
    %494 = vector.load %arg6[%c72_332, %c0_333] : memref<224x256xbf16, #tpu.memory_space<vmem>>, vector<24x16xbf16>
    tpu.vector_store %arg6[%c72_332, %c0_333], %493 {strides = array<i32>} : memref<224x256xbf16, #tpu.memory_space<vmem>>, vector<24x16xbf16>,
    %c0_334 = arith.constant 0 : index
    %c128_335 = arith.constant 128 : index
    %495 = vector.load %arg5[%c0_334, %c128_335] : memref<24x512xf32, #tpu.memory_space<vmem>>, vector<24x16xf32>
    %496 = arith.truncf %495 : vector<24x16xf32> to vector<24x16xbf16>
    %c96_336 = arith.constant 96 : index
    %c0_337 = arith.constant 0 : index
    %497 = vector.load %arg6[%c96_336, %c0_337] : memref<224x256xbf16, #tpu.memory_space<vmem>>, vector<24x16xbf16>
    tpu.vector_store %arg6[%c96_336, %c0_337], %496 {strides = array<i32>} : memref<224x256xbf16, #tpu.memory_space<vmem>>, vector<24x16xbf16>,
    %c0_338 = arith.constant 0 : index
    %c129_339 = arith.constant 129 : index
    %498 = vector.load %arg5[%c0_338, %c129_339] : memref<24x512xf32, #tpu.memory_space<vmem>>, vector<24x16xf32>
    %cst_340 = arith.constant 0.000000e+00 : f32
    %499 = vector.shape_cast %470 : vector<1x16xi1> to vector<1x16xi1>
    %500 = vector.broadcast %499 : vector<1x16xi1> to vector<24x16xi1>
    %501 = vector.broadcast %cst_340 : f32 to vector<24x16xf32>
    %502 = arith.select %500, %498, %501 : vector<24x16xi1>, vector<24x16xf32>
    %503 = arith.truncf %502 : vector<24x16xf32> to vector<24x16xbf16>
    %c120_341 = arith.constant 120 : index
    %c0_342 = arith.constant 0 : index
    %504 = vector.load %arg6[%c120_341, %c0_342] : memref<224x256xbf16, #tpu.memory_space<vmem>>, vector<24x16xbf16>
    tpu.vector_store %arg6[%c120_341, %c0_342], %503 {strides = array<i32>} : memref<224x256xbf16, #tpu.memory_space<vmem>>, vector<24x16xbf16>,
    %c0_343 = arith.constant 0 : index
    %c131_344 = arith.constant 131 : index
    %505 = vector.load %arg5[%c0_343, %c131_344] : memref<24x512xf32, #tpu.memory_space<vmem>>, vector<24x16xf32>
    %cst_345 = arith.constant 0.000000e+00 : f32
    %506 = vector.shape_cast %468 : vector<1x16xi1> to vector<1x16xi1>
    %507 = vector.broadcast %506 : vector<1x16xi1> to vector<24x16xi1>
    %508 = vector.broadcast %cst_345 : f32 to vector<24x16xf32>
    %509 = arith.select %507, %505, %508 : vector<24x16xi1>, vector<24x16xf32>
    %510 = arith.truncf %509 : vector<24x16xf32> to vector<24x16xbf16>
    %c144_346 = arith.constant 144 : index
    %c0_347 = arith.constant 0 : index
    %511 = vector.load %arg6[%c144_346, %c0_347] : memref<224x256xbf16, #tpu.memory_space<vmem>>, vector<24x16xbf16>
    tpu.vector_store %arg6[%c144_346, %c0_347], %510 {strides = array<i32>} : memref<224x256xbf16, #tpu.memory_space<vmem>>, vector<24x16xbf16>,
    %c0_348 = arith.constant 0 : index
    %c132_349 = arith.constant 132 : index
    %512 = vector.load %arg5[%c0_348, %c132_349] : memref<24x512xf32, #tpu.memory_space<vmem>>, vector<24x16xf32>
    %513 = arith.truncf %512 : vector<24x16xf32> to vector<24x16xbf16>
    %c168 = arith.constant 168 : index
    %c0_350 = arith.constant 0 : index
    %514 = vector.load %arg6[%c168, %c0_350] : memref<224x256xbf16, #tpu.memory_space<vmem>>, vector<24x16xbf16>
    tpu.vector_store %arg6[%c168, %c0_350], %513 {strides = array<i32>} : memref<224x256xbf16, #tpu.memory_space<vmem>>, vector<24x16xbf16>,
    %c0_351 = arith.constant 0 : index
    %c133_352 = arith.constant 133 : index
    %515 = vector.load %arg5[%c0_351, %c133_352] : memref<24x512xf32, #tpu.memory_space<vmem>>, vector<24x16xf32>
    %cst_353 = arith.constant 0.000000e+00 : f32
    %516 = vector.shape_cast %470 : vector<1x16xi1> to vector<1x16xi1>
    %517 = vector.broadcast %516 : vector<1x16xi1> to vector<24x16xi1>
    %518 = vector.broadcast %cst_353 : f32 to vector<24x16xf32>
    %519 = arith.select %517, %515, %518 : vector<24x16xi1>, vector<24x16xf32>
    %520 = arith.truncf %519 : vector<24x16xf32> to vector<24x16xbf16>
    %c192_354 = arith.constant 192 : index
    %c0_355 = arith.constant 0 : index
    %521 = vector.load %arg6[%c192_354, %c0_355] : memref<224x256xbf16, #tpu.memory_space<vmem>>, vector<24x16xbf16>
    tpu.vector_store %arg6[%c192_354, %c0_355], %520 {strides = array<i32>} : memref<224x256xbf16, #tpu.memory_space<vmem>>, vector<24x16xbf16>,
    %c0_356 = arith.constant 0 : index
    %c0_357 = arith.constant 0 : index
    %522 = vector.load %arg6[%c0_356, %c0_357] : memref<224x256xbf16, #tpu.memory_space<vmem>>, vector<216x16xbf16>
    %cst_358 = arith.constant dense<0.000000e+00> : vector<24x16xf32>
    %523 = tpu.matmul %444, %522, %cst_358 {dimension_numbers = #tpu.dot_dimension_numbers<[1], [0], [0], [1], [0, 0, 1, 1], [], []>} : vector<24x216xbf16>, vector<216x16xbf16>, vector<24x16xf32> -> vector<24x16xf32>
    %524 = vector.broadcast %445 : vector<24x1xf32> to vector<24x16xf32>
    %525 = arith.addf %523, %524 : vector<24x16xf32>
    %cst_359 = arith.constant 0.000000e+00 : f32
    %526 = vector.broadcast %cst_359 : f32 to vector<24x16xf32>
    %527 = arith.maximumf %525, %526 : vector<24x16xf32>
    %c1376 = arith.constant 1376 : index
    %c0_360 = arith.constant 0 : index
    %528 = vector.load %arg2[%c1376, %c0_360] : memref<1512x256xbf16, #tpu.memory_space<vmem>>, vector<16x64xbf16>
    %529 = arith.truncf %527 : vector<24x16xf32> to vector<24x16xbf16>
    %cst_361 = arith.constant dense<0.000000e+00> : vector<24x64xf32>
    %530 = tpu.matmul %529, %528, %cst_361 {dimension_numbers = #tpu.dot_dimension_numbers<[1], [0], [0], [1], [0, 0, 1, 1], [], []>} : vector<24x16xbf16>, vector<16x64xbf16>, vector<24x64xf32> -> vector<24x64xf32>
    %c1392 = arith.constant 1392 : index
    %c0_362 = arith.constant 0 : index
    %531 = vector.load %arg2[%c1392, %c0_362] : memref<1512x256xbf16, #tpu.memory_space<vmem>>, vector<16x216xbf16>
    %c96_363 = arith.constant 96 : index
    %c0_364 = arith.constant 0 : index
    %532 = vector.load %arg3[%c96_363, %c0_364] : memref<152x1xf32, #tpu.memory_space<vmem>>, vector<16x1xf32>
    %cst_365 = arith.constant 0.000000e+00 : f32
    %533 = vector.broadcast %cst_365 : f32 to vector<24x9xf32>
    %c0_366 = arith.constant 0 : index
    %c119_367 = arith.constant 119 : index
    %534 = vector.load %arg5[%c0_366, %c119_367] : memref<24x512xf32, #tpu.memory_space<vmem>>, vector<24x9xf32>
    tpu.vector_store %arg5[%c0_366, %c119_367], %533 {strides = array<i32>} : memref<24x512xf32, #tpu.memory_space<vmem>>, vector<24x9xf32>,
    %c0_368 = arith.constant 0 : index
    %c192_369 = arith.constant 192 : index
    %535 = vector.load %arg5[%c0_368, %c192_369] : memref<24x512xf32, #tpu.memory_space<vmem>>, vector<24x9xf32>
    tpu.vector_store %arg5[%c0_368, %c192_369], %533 {strides = array<i32>} : memref<24x512xf32, #tpu.memory_space<vmem>>, vector<24x9xf32>,
    %c0_370 = arith.constant 0 : index
    %c128_371 = arith.constant 128 : index
    %536 = vector.load %arg5[%c0_370, %c128_371] : memref<24x512xf32, #tpu.memory_space<vmem>>, vector<24x64xf32>
    tpu.vector_store %arg5[%c0_370, %c128_371], %530 {strides = array<i32>} : memref<24x512xf32, #tpu.memory_space<vmem>>, vector<24x64xf32>,
    %537 = tpu.iota {dimensions = array<i32: 1>} : vector<1x64xi32>
    %c8_i32_372 = arith.constant 8 : i32
    %c0_i32_373 = arith.constant 0 : i32
    %538 = arith.cmpi eq, %c8_i32_372, %c0_i32_373 : i32
    %c1_i32_374 = arith.constant 1 : i32
    %539 = arith.select %538, %c1_i32_374, %c8_i32_372 : i32
    %540 = vector.broadcast %539 : i32 to vector<1x64xi32>
    %541 = arith.remsi %537, %540 : vector<1x64xi32>
    %c0_i32_375 = arith.constant 0 : i32
    %542 = vector.broadcast %c0_i32_375 : i32 to vector<1x64xi32>
    %543 = arith.cmpi ne, %541, %542 : vector<1x64xi32>
    %c0_i32_376 = arith.constant 0 : i32
    %544 = vector.broadcast %c0_i32_376 : i32 to vector<1x64xi32>
    %545 = arith.cmpi slt, %541, %544 : vector<1x64xi32>
    %c0_i32_377 = arith.constant 0 : i32
    %546 = arith.cmpi slt, %539, %c0_i32_377 : i32
    %547 = vector.broadcast %546 : i1 to vector<1x64xi1>
    %548 = vector.broadcast %547 : vector<1x64xi1> to vector<1x64xi1>
    %549 = arith.xori %545, %548 : vector<1x64xi1>
    %550 = arith.andi %549, %543 : vector<1x64xi1>
    %551 = vector.broadcast %539 : i32 to vector<1x64xi32>
    %552 = arith.addi %541, %551 : vector<1x64xi32>
    %553 = arith.select %550, %552, %541 : vector<1x64xi1>, vector<1x64xi32>
    %c1_i32_378 = arith.constant 1 : i32
    %554 = vector.broadcast %c1_i32_378 : i32 to vector<1x64xi32>
    %555 = arith.cmpi sge, %553, %554 : vector<1x64xi32>
    %c6_i32_379 = arith.constant 6 : i32
    %556 = vector.broadcast %c6_i32_379 : i32 to vector<1x64xi32>
    %557 = arith.cmpi sle, %553, %556 : vector<1x64xi32>
    %c0_380 = arith.constant 0 : index
    %c119_381 = arith.constant 119 : index
    %558 = vector.load %arg5[%c0_380, %c119_381] : memref<24x512xf32, #tpu.memory_space<vmem>>, vector<24x64xf32>
    %cst_382 = arith.constant 0.000000e+00 : f32
    %559 = vector.shape_cast %555 : vector<1x64xi1> to vector<1x64xi1>
    %560 = vector.broadcast %559 : vector<1x64xi1> to vector<24x64xi1>
    %561 = vector.broadcast %cst_382 : f32 to vector<24x64xf32>
    %562 = arith.select %560, %558, %561 : vector<24x64xi1>, vector<24x64xf32>
    %563 = arith.truncf %562 : vector<24x64xf32> to vector<24x64xbf16>
    %c0_383 = arith.constant 0 : index
    %c0_384 = arith.constant 0 : index
    %564 = vector.load %arg6[%c0_383, %c0_384] : memref<224x256xbf16, #tpu.memory_space<vmem>>, vector<24x64xbf16>
    tpu.vector_store %arg6[%c0_383, %c0_384], %563 {strides = array<i32>} : memref<224x256xbf16, #tpu.memory_space<vmem>>, vector<24x64xbf16>,
    %c0_385 = arith.constant 0 : index
    %c120_386 = arith.constant 120 : index
    %565 = vector.load %arg5[%c0_385, %c120_386] : memref<24x512xf32, #tpu.memory_space<vmem>>, vector<24x64xf32>
    %566 = arith.truncf %565 : vector<24x64xf32> to vector<24x64xbf16>
    %c24_387 = arith.constant 24 : index
    %c0_388 = arith.constant 0 : index
    %567 = vector.load %arg6[%c24_387, %c0_388] : memref<224x256xbf16, #tpu.memory_space<vmem>>, vector<24x64xbf16>
    tpu.vector_store %arg6[%c24_387, %c0_388], %566 {strides = array<i32>} : memref<224x256xbf16, #tpu.memory_space<vmem>>, vector<24x64xbf16>,
    %c0_389 = arith.constant 0 : index
    %c121_390 = arith.constant 121 : index
    %568 = vector.load %arg5[%c0_389, %c121_390] : memref<24x512xf32, #tpu.memory_space<vmem>>, vector<24x64xf32>
    %cst_391 = arith.constant 0.000000e+00 : f32
    %569 = vector.shape_cast %557 : vector<1x64xi1> to vector<1x64xi1>
    %570 = vector.broadcast %569 : vector<1x64xi1> to vector<24x64xi1>
    %571 = vector.broadcast %cst_391 : f32 to vector<24x64xf32>
    %572 = arith.select %570, %568, %571 : vector<24x64xi1>, vector<24x64xf32>
    %573 = arith.truncf %572 : vector<24x64xf32> to vector<24x64xbf16>
    %c48_392 = arith.constant 48 : index
    %c0_393 = arith.constant 0 : index
    %574 = vector.load %arg6[%c48_392, %c0_393] : memref<224x256xbf16, #tpu.memory_space<vmem>>, vector<24x64xbf16>
    tpu.vector_store %arg6[%c48_392, %c0_393], %573 {strides = array<i32>} : memref<224x256xbf16, #tpu.memory_space<vmem>>, vector<24x64xbf16>,
    %c0_394 = arith.constant 0 : index
    %c127_395 = arith.constant 127 : index
    %575 = vector.load %arg5[%c0_394, %c127_395] : memref<24x512xf32, #tpu.memory_space<vmem>>, vector<24x64xf32>
    %cst_396 = arith.constant 0.000000e+00 : f32
    %576 = vector.shape_cast %555 : vector<1x64xi1> to vector<1x64xi1>
    %577 = vector.broadcast %576 : vector<1x64xi1> to vector<24x64xi1>
    %578 = vector.broadcast %cst_396 : f32 to vector<24x64xf32>
    %579 = arith.select %577, %575, %578 : vector<24x64xi1>, vector<24x64xf32>
    %580 = arith.truncf %579 : vector<24x64xf32> to vector<24x64xbf16>
    %c72_397 = arith.constant 72 : index
    %c0_398 = arith.constant 0 : index
    %581 = vector.load %arg6[%c72_397, %c0_398] : memref<224x256xbf16, #tpu.memory_space<vmem>>, vector<24x64xbf16>
    tpu.vector_store %arg6[%c72_397, %c0_398], %580 {strides = array<i32>} : memref<224x256xbf16, #tpu.memory_space<vmem>>, vector<24x64xbf16>,
    %c0_399 = arith.constant 0 : index
    %c128_400 = arith.constant 128 : index
    %582 = vector.load %arg5[%c0_399, %c128_400] : memref<24x512xf32, #tpu.memory_space<vmem>>, vector<24x64xf32>
    %583 = arith.truncf %582 : vector<24x64xf32> to vector<24x64xbf16>
    %c96_401 = arith.constant 96 : index
    %c0_402 = arith.constant 0 : index
    %584 = vector.load %arg6[%c96_401, %c0_402] : memref<224x256xbf16, #tpu.memory_space<vmem>>, vector<24x64xbf16>
    tpu.vector_store %arg6[%c96_401, %c0_402], %583 {strides = array<i32>} : memref<224x256xbf16, #tpu.memory_space<vmem>>, vector<24x64xbf16>,
    %c0_403 = arith.constant 0 : index
    %c129_404 = arith.constant 129 : index
    %585 = vector.load %arg5[%c0_403, %c129_404] : memref<24x512xf32, #tpu.memory_space<vmem>>, vector<24x64xf32>
    %cst_405 = arith.constant 0.000000e+00 : f32
    %586 = vector.shape_cast %557 : vector<1x64xi1> to vector<1x64xi1>
    %587 = vector.broadcast %586 : vector<1x64xi1> to vector<24x64xi1>
    %588 = vector.broadcast %cst_405 : f32 to vector<24x64xf32>
    %589 = arith.select %587, %585, %588 : vector<24x64xi1>, vector<24x64xf32>
    %590 = arith.truncf %589 : vector<24x64xf32> to vector<24x64xbf16>
    %c120_406 = arith.constant 120 : index
    %c0_407 = arith.constant 0 : index
    %591 = vector.load %arg6[%c120_406, %c0_407] : memref<224x256xbf16, #tpu.memory_space<vmem>>, vector<24x64xbf16>
    tpu.vector_store %arg6[%c120_406, %c0_407], %590 {strides = array<i32>} : memref<224x256xbf16, #tpu.memory_space<vmem>>, vector<24x64xbf16>,
    %c0_408 = arith.constant 0 : index
    %c135_409 = arith.constant 135 : index
    %592 = vector.load %arg5[%c0_408, %c135_409] : memref<24x512xf32, #tpu.memory_space<vmem>>, vector<24x64xf32>
    %cst_410 = arith.constant 0.000000e+00 : f32
    %593 = vector.shape_cast %555 : vector<1x64xi1> to vector<1x64xi1>
    %594 = vector.broadcast %593 : vector<1x64xi1> to vector<24x64xi1>
    %595 = vector.broadcast %cst_410 : f32 to vector<24x64xf32>
    %596 = arith.select %594, %592, %595 : vector<24x64xi1>, vector<24x64xf32>
    %597 = arith.truncf %596 : vector<24x64xf32> to vector<24x64xbf16>
    %c144_411 = arith.constant 144 : index
    %c0_412 = arith.constant 0 : index
    %598 = vector.load %arg6[%c144_411, %c0_412] : memref<224x256xbf16, #tpu.memory_space<vmem>>, vector<24x64xbf16>
    tpu.vector_store %arg6[%c144_411, %c0_412], %597 {strides = array<i32>} : memref<224x256xbf16, #tpu.memory_space<vmem>>, vector<24x64xbf16>,
    %c0_413 = arith.constant 0 : index
    %c136_414 = arith.constant 136 : index
    %599 = vector.load %arg5[%c0_413, %c136_414] : memref<24x512xf32, #tpu.memory_space<vmem>>, vector<24x64xf32>
    %600 = arith.truncf %599 : vector<24x64xf32> to vector<24x64xbf16>
    %c168_415 = arith.constant 168 : index
    %c0_416 = arith.constant 0 : index
    %601 = vector.load %arg6[%c168_415, %c0_416] : memref<224x256xbf16, #tpu.memory_space<vmem>>, vector<24x64xbf16>
    tpu.vector_store %arg6[%c168_415, %c0_416], %600 {strides = array<i32>} : memref<224x256xbf16, #tpu.memory_space<vmem>>, vector<24x64xbf16>,
    %c0_417 = arith.constant 0 : index
    %c137_418 = arith.constant 137 : index
    %602 = vector.load %arg5[%c0_417, %c137_418] : memref<24x512xf32, #tpu.memory_space<vmem>>, vector<24x64xf32>
    %cst_419 = arith.constant 0.000000e+00 : f32
    %603 = vector.shape_cast %557 : vector<1x64xi1> to vector<1x64xi1>
    %604 = vector.broadcast %603 : vector<1x64xi1> to vector<24x64xi1>
    %605 = vector.broadcast %cst_419 : f32 to vector<24x64xf32>
    %606 = arith.select %604, %602, %605 : vector<24x64xi1>, vector<24x64xf32>
    %607 = arith.truncf %606 : vector<24x64xf32> to vector<24x64xbf16>
    %c192_420 = arith.constant 192 : index
    %c0_421 = arith.constant 0 : index
    %608 = vector.load %arg6[%c192_420, %c0_421] : memref<224x256xbf16, #tpu.memory_space<vmem>>, vector<24x64xbf16>
    tpu.vector_store %arg6[%c192_420, %c0_421], %607 {strides = array<i32>} : memref<224x256xbf16, #tpu.memory_space<vmem>>, vector<24x64xbf16>,
    %c0_422 = arith.constant 0 : index
    %c0_423 = arith.constant 0 : index
    %609 = vector.load %arg6[%c0_422, %c0_423] : memref<224x256xbf16, #tpu.memory_space<vmem>>, vector<216x64xbf16>
    %cst_424 = arith.constant dense<0.000000e+00> : vector<16x64xf32>
    %610 = tpu.matmul %531, %609, %cst_424 {dimension_numbers = #tpu.dot_dimension_numbers<[1], [0], [0], [1], [0, 0, 1, 1], [], []>} : vector<16x216xbf16>, vector<216x64xbf16>, vector<16x64xf32> -> vector<16x64xf32>
    %611 = vector.broadcast %532 : vector<16x1xf32> to vector<16x64xf32>
    %612 = arith.addf %610, %611 : vector<16x64xf32>
    %cst_425 = arith.constant 0.000000e+00 : f32
    %613 = vector.broadcast %cst_425 : f32 to vector<16x64xf32>
    %614 = arith.maximumf %612, %613 : vector<16x64xf32>
    %615 = arith.addf %614, %347 : vector<16x64xf32>
    %c1408 = arith.constant 1408 : index
    %c0_426 = arith.constant 0 : index
    %616 = vector.load %arg2[%c1408, %c0_426] : memref<1512x256xbf16, #tpu.memory_space<vmem>>, vector<16x144xbf16>
    %c112_427 = arith.constant 112 : index
    %c0_428 = arith.constant 0 : index
    %617 = vector.load %arg3[%c112_427, %c0_428] : memref<152x1xf32, #tpu.memory_space<vmem>>, vector<16x1xf32>
    %cst_429 = arith.constant 0.000000e+00 : f32
    %618 = vector.broadcast %cst_429 : f32 to vector<16x9xf32>
    %c0_430 = arith.constant 0 : index
    %c119_431 = arith.constant 119 : index
    %619 = vector.load %arg5[%c0_430, %c119_431] : memref<24x512xf32, #tpu.memory_space<vmem>>, vector<16x9xf32>
    tpu.vector_store %arg5[%c0_430, %c119_431], %618 {strides = array<i32>} : memref<24x512xf32, #tpu.memory_space<vmem>>, vector<16x9xf32>,
    %c0_432 = arith.constant 0 : index
    %c192_433 = arith.constant 192 : index
    %620 = vector.load %arg5[%c0_432, %c192_433] : memref<24x512xf32, #tpu.memory_space<vmem>>, vector<16x9xf32>
    tpu.vector_store %arg5[%c0_432, %c192_433], %618 {strides = array<i32>} : memref<24x512xf32, #tpu.memory_space<vmem>>, vector<16x9xf32>,
    %c0_434 = arith.constant 0 : index
    %c128_435 = arith.constant 128 : index
    %621 = vector.load %arg5[%c0_434, %c128_435] : memref<24x512xf32, #tpu.memory_space<vmem>>, vector<16x64xf32>
    tpu.vector_store %arg5[%c0_434, %c128_435], %615 {strides = array<i32>} : memref<24x512xf32, #tpu.memory_space<vmem>>, vector<16x64xf32>,
    %622 = tpu.iota {dimensions = array<i32: 1>} : vector<1x64xi32>
    %c8_i32_436 = arith.constant 8 : i32
    %c0_i32_437 = arith.constant 0 : i32
    %623 = arith.cmpi eq, %c8_i32_436, %c0_i32_437 : i32
    %c1_i32_438 = arith.constant 1 : i32
    %624 = arith.select %623, %c1_i32_438, %c8_i32_436 : i32
    %625 = vector.broadcast %624 : i32 to vector<1x64xi32>
    %626 = arith.remsi %622, %625 : vector<1x64xi32>
    %c0_i32_439 = arith.constant 0 : i32
    %627 = vector.broadcast %c0_i32_439 : i32 to vector<1x64xi32>
    %628 = arith.cmpi ne, %626, %627 : vector<1x64xi32>
    %c0_i32_440 = arith.constant 0 : i32
    %629 = vector.broadcast %c0_i32_440 : i32 to vector<1x64xi32>
    %630 = arith.cmpi slt, %626, %629 : vector<1x64xi32>
    %c0_i32_441 = arith.constant 0 : i32
    %631 = arith.cmpi slt, %624, %c0_i32_441 : i32
    %632 = vector.broadcast %631 : i1 to vector<1x64xi1>
    %633 = vector.broadcast %632 : vector<1x64xi1> to vector<1x64xi1>
    %634 = arith.xori %630, %633 : vector<1x64xi1>
    %635 = arith.andi %634, %628 : vector<1x64xi1>
    %636 = vector.broadcast %624 : i32 to vector<1x64xi32>
    %637 = arith.addi %626, %636 : vector<1x64xi32>
    %638 = arith.select %635, %637, %626 : vector<1x64xi1>, vector<1x64xi32>
    %c1_i32_442 = arith.constant 1 : i32
    %639 = vector.broadcast %c1_i32_442 : i32 to vector<1x64xi32>
    %640 = arith.cmpi sge, %638, %639 : vector<1x64xi32>
    %c6_i32_443 = arith.constant 6 : i32
    %641 = vector.broadcast %c6_i32_443 : i32 to vector<1x64xi32>
    %642 = arith.cmpi sle, %638, %641 : vector<1x64xi32>
    %c0_444 = arith.constant 0 : index
    %c119_445 = arith.constant 119 : index
    %643 = vector.load %arg5[%c0_444, %c119_445] : memref<24x512xf32, #tpu.memory_space<vmem>>, vector<16x64xf32>
    %cst_446 = arith.constant 0.000000e+00 : f32
    %644 = vector.shape_cast %640 : vector<1x64xi1> to vector<1x64xi1>
    %645 = vector.broadcast %644 : vector<1x64xi1> to vector<16x64xi1>
    %646 = vector.broadcast %cst_446 : f32 to vector<16x64xf32>
    %647 = arith.select %645, %643, %646 : vector<16x64xi1>, vector<16x64xf32>
    %648 = arith.truncf %647 : vector<16x64xf32> to vector<16x64xbf16>
    %c0_447 = arith.constant 0 : index
    %c0_448 = arith.constant 0 : index
    %649 = vector.load %arg6[%c0_447, %c0_448] : memref<224x256xbf16, #tpu.memory_space<vmem>>, vector<16x64xbf16>
    tpu.vector_store %arg6[%c0_447, %c0_448], %648 {strides = array<i32>} : memref<224x256xbf16, #tpu.memory_space<vmem>>, vector<16x64xbf16>,
    %c0_449 = arith.constant 0 : index
    %c120_450 = arith.constant 120 : index
    %650 = vector.load %arg5[%c0_449, %c120_450] : memref<24x512xf32, #tpu.memory_space<vmem>>, vector<16x64xf32>
    %651 = arith.truncf %650 : vector<16x64xf32> to vector<16x64xbf16>
    %c16_451 = arith.constant 16 : index
    %c0_452 = arith.constant 0 : index
    %652 = vector.load %arg6[%c16_451, %c0_452] : memref<224x256xbf16, #tpu.memory_space<vmem>>, vector<16x64xbf16>
    tpu.vector_store %arg6[%c16_451, %c0_452], %651 {strides = array<i32>} : memref<224x256xbf16, #tpu.memory_space<vmem>>, vector<16x64xbf16>,
    %c0_453 = arith.constant 0 : index
    %c121_454 = arith.constant 121 : index
    %653 = vector.load %arg5[%c0_453, %c121_454] : memref<24x512xf32, #tpu.memory_space<vmem>>, vector<16x64xf32>
    %cst_455 = arith.constant 0.000000e+00 : f32
    %654 = vector.shape_cast %642 : vector<1x64xi1> to vector<1x64xi1>
    %655 = vector.broadcast %654 : vector<1x64xi1> to vector<16x64xi1>
    %656 = vector.broadcast %cst_455 : f32 to vector<16x64xf32>
    %657 = arith.select %655, %653, %656 : vector<16x64xi1>, vector<16x64xf32>
    %658 = arith.truncf %657 : vector<16x64xf32> to vector<16x64xbf16>
    %c32_456 = arith.constant 32 : index
    %c0_457 = arith.constant 0 : index
    %659 = vector.load %arg6[%c32_456, %c0_457] : memref<224x256xbf16, #tpu.memory_space<vmem>>, vector<16x64xbf16>
    tpu.vector_store %arg6[%c32_456, %c0_457], %658 {strides = array<i32>} : memref<224x256xbf16, #tpu.memory_space<vmem>>, vector<16x64xbf16>,
    %c0_458 = arith.constant 0 : index
    %c127_459 = arith.constant 127 : index
    %660 = vector.load %arg5[%c0_458, %c127_459] : memref<24x512xf32, #tpu.memory_space<vmem>>, vector<16x64xf32>
    %cst_460 = arith.constant 0.000000e+00 : f32
    %661 = vector.shape_cast %640 : vector<1x64xi1> to vector<1x64xi1>
    %662 = vector.broadcast %661 : vector<1x64xi1> to vector<16x64xi1>
    %663 = vector.broadcast %cst_460 : f32 to vector<16x64xf32>
    %664 = arith.select %662, %660, %663 : vector<16x64xi1>, vector<16x64xf32>
    %665 = arith.truncf %664 : vector<16x64xf32> to vector<16x64xbf16>
    %c48_461 = arith.constant 48 : index
    %c0_462 = arith.constant 0 : index
    %666 = vector.load %arg6[%c48_461, %c0_462] : memref<224x256xbf16, #tpu.memory_space<vmem>>, vector<16x64xbf16>
    tpu.vector_store %arg6[%c48_461, %c0_462], %665 {strides = array<i32>} : memref<224x256xbf16, #tpu.memory_space<vmem>>, vector<16x64xbf16>,
    %c0_463 = arith.constant 0 : index
    %c128_464 = arith.constant 128 : index
    %667 = vector.load %arg5[%c0_463, %c128_464] : memref<24x512xf32, #tpu.memory_space<vmem>>, vector<16x64xf32>
    %668 = arith.truncf %667 : vector<16x64xf32> to vector<16x64xbf16>
    %c64_465 = arith.constant 64 : index
    %c0_466 = arith.constant 0 : index
    %669 = vector.load %arg6[%c64_465, %c0_466] : memref<224x256xbf16, #tpu.memory_space<vmem>>, vector<16x64xbf16>
    tpu.vector_store %arg6[%c64_465, %c0_466], %668 {strides = array<i32>} : memref<224x256xbf16, #tpu.memory_space<vmem>>, vector<16x64xbf16>,
    %c0_467 = arith.constant 0 : index
    %c129_468 = arith.constant 129 : index
    %670 = vector.load %arg5[%c0_467, %c129_468] : memref<24x512xf32, #tpu.memory_space<vmem>>, vector<16x64xf32>
    %cst_469 = arith.constant 0.000000e+00 : f32
    %671 = vector.shape_cast %642 : vector<1x64xi1> to vector<1x64xi1>
    %672 = vector.broadcast %671 : vector<1x64xi1> to vector<16x64xi1>
    %673 = vector.broadcast %cst_469 : f32 to vector<16x64xf32>
    %674 = arith.select %672, %670, %673 : vector<16x64xi1>, vector<16x64xf32>
    %675 = arith.truncf %674 : vector<16x64xf32> to vector<16x64xbf16>
    %c80_470 = arith.constant 80 : index
    %c0_471 = arith.constant 0 : index
    %676 = vector.load %arg6[%c80_470, %c0_471] : memref<224x256xbf16, #tpu.memory_space<vmem>>, vector<16x64xbf16>
    tpu.vector_store %arg6[%c80_470, %c0_471], %675 {strides = array<i32>} : memref<224x256xbf16, #tpu.memory_space<vmem>>, vector<16x64xbf16>,
    %c0_472 = arith.constant 0 : index
    %c135_473 = arith.constant 135 : index
    %677 = vector.load %arg5[%c0_472, %c135_473] : memref<24x512xf32, #tpu.memory_space<vmem>>, vector<16x64xf32>
    %cst_474 = arith.constant 0.000000e+00 : f32
    %678 = vector.shape_cast %640 : vector<1x64xi1> to vector<1x64xi1>
    %679 = vector.broadcast %678 : vector<1x64xi1> to vector<16x64xi1>
    %680 = vector.broadcast %cst_474 : f32 to vector<16x64xf32>
    %681 = arith.select %679, %677, %680 : vector<16x64xi1>, vector<16x64xf32>
    %682 = arith.truncf %681 : vector<16x64xf32> to vector<16x64xbf16>
    %c96_475 = arith.constant 96 : index
    %c0_476 = arith.constant 0 : index
    %683 = vector.load %arg6[%c96_475, %c0_476] : memref<224x256xbf16, #tpu.memory_space<vmem>>, vector<16x64xbf16>
    tpu.vector_store %arg6[%c96_475, %c0_476], %682 {strides = array<i32>} : memref<224x256xbf16, #tpu.memory_space<vmem>>, vector<16x64xbf16>,
    %c0_477 = arith.constant 0 : index
    %c136_478 = arith.constant 136 : index
    %684 = vector.load %arg5[%c0_477, %c136_478] : memref<24x512xf32, #tpu.memory_space<vmem>>, vector<16x64xf32>
    %685 = arith.truncf %684 : vector<16x64xf32> to vector<16x64xbf16>
    %c112_479 = arith.constant 112 : index
    %c0_480 = arith.constant 0 : index
    %686 = vector.load %arg6[%c112_479, %c0_480] : memref<224x256xbf16, #tpu.memory_space<vmem>>, vector<16x64xbf16>
    tpu.vector_store %arg6[%c112_479, %c0_480], %685 {strides = array<i32>} : memref<224x256xbf16, #tpu.memory_space<vmem>>, vector<16x64xbf16>,
    %c0_481 = arith.constant 0 : index
    %c137_482 = arith.constant 137 : index
    %687 = vector.load %arg5[%c0_481, %c137_482] : memref<24x512xf32, #tpu.memory_space<vmem>>, vector<16x64xf32>
    %cst_483 = arith.constant 0.000000e+00 : f32
    %688 = vector.shape_cast %642 : vector<1x64xi1> to vector<1x64xi1>
    %689 = vector.broadcast %688 : vector<1x64xi1> to vector<16x64xi1>
    %690 = vector.broadcast %cst_483 : f32 to vector<16x64xf32>
    %691 = arith.select %689, %687, %690 : vector<16x64xi1>, vector<16x64xf32>
    %692 = arith.truncf %691 : vector<16x64xf32> to vector<16x64xbf16>
    %c128_484 = arith.constant 128 : index
    %c0_485 = arith.constant 0 : index
    %693 = vector.load %arg6[%c128_484, %c0_485] : memref<224x256xbf16, #tpu.memory_space<vmem>>, vector<16x64xbf16>
    tpu.vector_store %arg6[%c128_484, %c0_485], %692 {strides = array<i32>} : memref<224x256xbf16, #tpu.memory_space<vmem>>, vector<16x64xbf16>,
    %c0_486 = arith.constant 0 : index
    %c0_487 = arith.constant 0 : index
    %694 = vector.load %arg6[%c0_486, %c0_487] : memref<224x256xbf16, #tpu.memory_space<vmem>>, vector<144x64xbf16>
    %cst_488 = arith.constant dense<0.000000e+00> : vector<16x64xf32>
    %695 = tpu.matmul %616, %694, %cst_488 {dimension_numbers = #tpu.dot_dimension_numbers<[1], [0], [0], [1], [0, 0, 1, 1], [], []>} : vector<16x144xbf16>, vector<144x64xbf16>, vector<16x64xf32> -> vector<16x64xf32>
    %696 = vector.broadcast %617 : vector<16x1xf32> to vector<16x64xf32>
    %697 = arith.addf %695, %696 : vector<16x64xf32>
    %cst_489 = arith.constant 0.000000e+00 : f32
    %698 = vector.broadcast %cst_489 : f32 to vector<16x64xf32>
    %699 = arith.maximumf %697, %698 : vector<16x64xf32>
    %c1424 = arith.constant 1424 : index
    %c0_490 = arith.constant 0 : index
    %700 = vector.load %arg2[%c1424, %c0_490] : memref<1512x256xbf16, #tpu.memory_space<vmem>>, vector<64x256xbf16>
    %701 = arith.truncf %699 : vector<16x64xf32> to vector<16x64xbf16>
    %cst_491 = arith.constant dense<0.000000e+00> : vector<16x256xf32>
    %702 = tpu.matmul %701, %700, %cst_491 {dimension_numbers = #tpu.dot_dimension_numbers<[1], [0], [0], [1], [0, 0, 1, 1], [], []>} : vector<16x64xbf16>, vector<64x256xbf16>, vector<16x256xf32> -> vector<16x256xf32>
    %c1488 = arith.constant 1488 : index
    %c0_492 = arith.constant 0 : index
    %703 = vector.load %arg2[%c1488, %c0_492] : memref<1512x256xbf16, #tpu.memory_space<vmem>>, vector<8x144xbf16>
    %c128_493 = arith.constant 128 : index
    %c0_494 = arith.constant 0 : index
    %704 = vector.load %arg3[%c128_493, %c0_494] : memref<152x1xf32, #tpu.memory_space<vmem>>, vector<8x1xf32>
    %cst_495 = arith.constant 0.000000e+00 : f32
    %705 = vector.broadcast %cst_495 : f32 to vector<16x17xf32>
    %c0_496 = arith.constant 0 : index
    %c111_497 = arith.constant 111 : index
    %706 = vector.load %arg5[%c0_496, %c111_497] : memref<24x512xf32, #tpu.memory_space<vmem>>, vector<16x17xf32>
    tpu.vector_store %arg5[%c0_496, %c111_497], %705 {strides = array<i32>} : memref<24x512xf32, #tpu.memory_space<vmem>>, vector<16x17xf32>,
    %c0_498 = arith.constant 0 : index
    %c384_499 = arith.constant 384 : index
    %707 = vector.load %arg5[%c0_498, %c384_499] : memref<24x512xf32, #tpu.memory_space<vmem>>, vector<16x17xf32>
    tpu.vector_store %arg5[%c0_498, %c384_499], %705 {strides = array<i32>} : memref<24x512xf32, #tpu.memory_space<vmem>>, vector<16x17xf32>,
    %c0_500 = arith.constant 0 : index
    %c128_501 = arith.constant 128 : index
    %708 = vector.load %arg5[%c0_500, %c128_501] : memref<24x512xf32, #tpu.memory_space<vmem>>, vector<16x256xf32>
    tpu.vector_store %arg5[%c0_500, %c128_501], %702 {strides = array<i32>} : memref<24x512xf32, #tpu.memory_space<vmem>>, vector<16x256xf32>,
    %709 = tpu.iota {dimensions = array<i32: 1>} : vector<1x256xi32>
    %c16_i32_502 = arith.constant 16 : i32
    %c0_i32_503 = arith.constant 0 : i32
    %710 = arith.cmpi eq, %c16_i32_502, %c0_i32_503 : i32
    %c1_i32_504 = arith.constant 1 : i32
    %711 = arith.select %710, %c1_i32_504, %c16_i32_502 : i32
    %712 = vector.broadcast %711 : i32 to vector<1x256xi32>
    %713 = arith.remsi %709, %712 : vector<1x256xi32>
    %c0_i32_505 = arith.constant 0 : i32
    %714 = vector.broadcast %c0_i32_505 : i32 to vector<1x256xi32>
    %715 = arith.cmpi ne, %713, %714 : vector<1x256xi32>
    %c0_i32_506 = arith.constant 0 : i32
    %716 = vector.broadcast %c0_i32_506 : i32 to vector<1x256xi32>
    %717 = arith.cmpi slt, %713, %716 : vector<1x256xi32>
    %c0_i32_507 = arith.constant 0 : i32
    %718 = arith.cmpi slt, %711, %c0_i32_507 : i32
    %719 = vector.broadcast %718 : i1 to vector<1x256xi1>
    %720 = vector.broadcast %719 : vector<1x256xi1> to vector<1x256xi1>
    %721 = arith.xori %717, %720 : vector<1x256xi1>
    %722 = arith.andi %721, %715 : vector<1x256xi1>
    %723 = vector.broadcast %711 : i32 to vector<1x256xi32>
    %724 = arith.addi %713, %723 : vector<1x256xi32>
    %725 = arith.select %722, %724, %713 : vector<1x256xi1>, vector<1x256xi32>
    %c1_i32_508 = arith.constant 1 : i32
    %726 = vector.broadcast %c1_i32_508 : i32 to vector<1x256xi32>
    %727 = arith.cmpi sge, %725, %726 : vector<1x256xi32>
    %c14_i32_509 = arith.constant 14 : i32
    %728 = vector.broadcast %c14_i32_509 : i32 to vector<1x256xi32>
    %729 = arith.cmpi sle, %725, %728 : vector<1x256xi32>
    %c0_510 = arith.constant 0 : index
    %c111_511 = arith.constant 111 : index
    %730 = vector.load %arg5[%c0_510, %c111_511] : memref<24x512xf32, #tpu.memory_space<vmem>>, vector<16x256xf32>
    %cst_512 = arith.constant 0.000000e+00 : f32
    %731 = vector.shape_cast %727 : vector<1x256xi1> to vector<1x256xi1>
    %732 = vector.broadcast %731 : vector<1x256xi1> to vector<16x256xi1>
    %733 = vector.broadcast %cst_512 : f32 to vector<16x256xf32>
    %734 = arith.select %732, %730, %733 : vector<16x256xi1>, vector<16x256xf32>
    %735 = arith.truncf %734 : vector<16x256xf32> to vector<16x256xbf16>
    %c0_513 = arith.constant 0 : index
    %c0_514 = arith.constant 0 : index
    %736 = vector.load %arg6[%c0_513, %c0_514] : memref<224x256xbf16, #tpu.memory_space<vmem>>, vector<16x256xbf16>
    tpu.vector_store %arg6[%c0_513, %c0_514], %735 {strides = array<i32>} : memref<224x256xbf16, #tpu.memory_space<vmem>>, vector<16x256xbf16>,
    %c0_515 = arith.constant 0 : index
    %c112_516 = arith.constant 112 : index
    %737 = vector.load %arg5[%c0_515, %c112_516] : memref<24x512xf32, #tpu.memory_space<vmem>>, vector<16x256xf32>
    %738 = arith.truncf %737 : vector<16x256xf32> to vector<16x256xbf16>
    %c16_517 = arith.constant 16 : index
    %c0_518 = arith.constant 0 : index
    %739 = vector.load %arg6[%c16_517, %c0_518] : memref<224x256xbf16, #tpu.memory_space<vmem>>, vector<16x256xbf16>
    tpu.vector_store %arg6[%c16_517, %c0_518], %738 {strides = array<i32>} : memref<224x256xbf16, #tpu.memory_space<vmem>>, vector<16x256xbf16>,
    %c0_519 = arith.constant 0 : index
    %c113_520 = arith.constant 113 : index
    %740 = vector.load %arg5[%c0_519, %c113_520] : memref<24x512xf32, #tpu.memory_space<vmem>>, vector<16x256xf32>
    %cst_521 = arith.constant 0.000000e+00 : f32
    %741 = vector.shape_cast %729 : vector<1x256xi1> to vector<1x256xi1>
    %742 = vector.broadcast %741 : vector<1x256xi1> to vector<16x256xi1>
    %743 = vector.broadcast %cst_521 : f32 to vector<16x256xf32>
    %744 = arith.select %742, %740, %743 : vector<16x256xi1>, vector<16x256xf32>
    %745 = arith.truncf %744 : vector<16x256xf32> to vector<16x256xbf16>
    %c32_522 = arith.constant 32 : index
    %c0_523 = arith.constant 0 : index
    %746 = vector.load %arg6[%c32_522, %c0_523] : memref<224x256xbf16, #tpu.memory_space<vmem>>, vector<16x256xbf16>
    tpu.vector_store %arg6[%c32_522, %c0_523], %745 {strides = array<i32>} : memref<224x256xbf16, #tpu.memory_space<vmem>>, vector<16x256xbf16>,
    %c0_524 = arith.constant 0 : index
    %c127_525 = arith.constant 127 : index
    %747 = vector.load %arg5[%c0_524, %c127_525] : memref<24x512xf32, #tpu.memory_space<vmem>>, vector<16x256xf32>
    %cst_526 = arith.constant 0.000000e+00 : f32
    %748 = vector.shape_cast %727 : vector<1x256xi1> to vector<1x256xi1>
    %749 = vector.broadcast %748 : vector<1x256xi1> to vector<16x256xi1>
    %750 = vector.broadcast %cst_526 : f32 to vector<16x256xf32>
    %751 = arith.select %749, %747, %750 : vector<16x256xi1>, vector<16x256xf32>
    %752 = arith.truncf %751 : vector<16x256xf32> to vector<16x256xbf16>
    %c48_527 = arith.constant 48 : index
    %c0_528 = arith.constant 0 : index
    %753 = vector.load %arg6[%c48_527, %c0_528] : memref<224x256xbf16, #tpu.memory_space<vmem>>, vector<16x256xbf16>
    tpu.vector_store %arg6[%c48_527, %c0_528], %752 {strides = array<i32>} : memref<224x256xbf16, #tpu.memory_space<vmem>>, vector<16x256xbf16>,
    %c0_529 = arith.constant 0 : index
    %c128_530 = arith.constant 128 : index
    %754 = vector.load %arg5[%c0_529, %c128_530] : memref<24x512xf32, #tpu.memory_space<vmem>>, vector<16x256xf32>
    %755 = arith.truncf %754 : vector<16x256xf32> to vector<16x256xbf16>
    %c64_531 = arith.constant 64 : index
    %c0_532 = arith.constant 0 : index
    %756 = vector.load %arg6[%c64_531, %c0_532] : memref<224x256xbf16, #tpu.memory_space<vmem>>, vector<16x256xbf16>
    tpu.vector_store %arg6[%c64_531, %c0_532], %755 {strides = array<i32>} : memref<224x256xbf16, #tpu.memory_space<vmem>>, vector<16x256xbf16>,
    %c0_533 = arith.constant 0 : index
    %c129_534 = arith.constant 129 : index
    %757 = vector.load %arg5[%c0_533, %c129_534] : memref<24x512xf32, #tpu.memory_space<vmem>>, vector<16x256xf32>
    %cst_535 = arith.constant 0.000000e+00 : f32
    %758 = vector.shape_cast %729 : vector<1x256xi1> to vector<1x256xi1>
    %759 = vector.broadcast %758 : vector<1x256xi1> to vector<16x256xi1>
    %760 = vector.broadcast %cst_535 : f32 to vector<16x256xf32>
    %761 = arith.select %759, %757, %760 : vector<16x256xi1>, vector<16x256xf32>
    %762 = arith.truncf %761 : vector<16x256xf32> to vector<16x256xbf16>
    %c80_536 = arith.constant 80 : index
    %c0_537 = arith.constant 0 : index
    %763 = vector.load %arg6[%c80_536, %c0_537] : memref<224x256xbf16, #tpu.memory_space<vmem>>, vector<16x256xbf16>
    tpu.vector_store %arg6[%c80_536, %c0_537], %762 {strides = array<i32>} : memref<224x256xbf16, #tpu.memory_space<vmem>>, vector<16x256xbf16>,
    %c0_538 = arith.constant 0 : index
    %c143_539 = arith.constant 143 : index
    %764 = vector.load %arg5[%c0_538, %c143_539] : memref<24x512xf32, #tpu.memory_space<vmem>>, vector<16x256xf32>
    %cst_540 = arith.constant 0.000000e+00 : f32
    %765 = vector.shape_cast %727 : vector<1x256xi1> to vector<1x256xi1>
    %766 = vector.broadcast %765 : vector<1x256xi1> to vector<16x256xi1>
    %767 = vector.broadcast %cst_540 : f32 to vector<16x256xf32>
    %768 = arith.select %766, %764, %767 : vector<16x256xi1>, vector<16x256xf32>
    %769 = arith.truncf %768 : vector<16x256xf32> to vector<16x256xbf16>
    %c96_541 = arith.constant 96 : index
    %c0_542 = arith.constant 0 : index
    %770 = vector.load %arg6[%c96_541, %c0_542] : memref<224x256xbf16, #tpu.memory_space<vmem>>, vector<16x256xbf16>
    tpu.vector_store %arg6[%c96_541, %c0_542], %769 {strides = array<i32>} : memref<224x256xbf16, #tpu.memory_space<vmem>>, vector<16x256xbf16>,
    %c0_543 = arith.constant 0 : index
    %c144_544 = arith.constant 144 : index
    %771 = vector.load %arg5[%c0_543, %c144_544] : memref<24x512xf32, #tpu.memory_space<vmem>>, vector<16x256xf32>
    %772 = arith.truncf %771 : vector<16x256xf32> to vector<16x256xbf16>
    %c112_545 = arith.constant 112 : index
    %c0_546 = arith.constant 0 : index
    %773 = vector.load %arg6[%c112_545, %c0_546] : memref<224x256xbf16, #tpu.memory_space<vmem>>, vector<16x256xbf16>
    tpu.vector_store %arg6[%c112_545, %c0_546], %772 {strides = array<i32>} : memref<224x256xbf16, #tpu.memory_space<vmem>>, vector<16x256xbf16>,
    %c0_547 = arith.constant 0 : index
    %c145_548 = arith.constant 145 : index
    %774 = vector.load %arg5[%c0_547, %c145_548] : memref<24x512xf32, #tpu.memory_space<vmem>>, vector<16x256xf32>
    %cst_549 = arith.constant 0.000000e+00 : f32
    %775 = vector.shape_cast %729 : vector<1x256xi1> to vector<1x256xi1>
    %776 = vector.broadcast %775 : vector<1x256xi1> to vector<16x256xi1>
    %777 = vector.broadcast %cst_549 : f32 to vector<16x256xf32>
    %778 = arith.select %776, %774, %777 : vector<16x256xi1>, vector<16x256xf32>
    %779 = arith.truncf %778 : vector<16x256xf32> to vector<16x256xbf16>
    %c128_550 = arith.constant 128 : index
    %c0_551 = arith.constant 0 : index
    %780 = vector.load %arg6[%c128_550, %c0_551] : memref<224x256xbf16, #tpu.memory_space<vmem>>, vector<16x256xbf16>
    tpu.vector_store %arg6[%c128_550, %c0_551], %779 {strides = array<i32>} : memref<224x256xbf16, #tpu.memory_space<vmem>>, vector<16x256xbf16>,
    %c0_552 = arith.constant 0 : index
    %c0_553 = arith.constant 0 : index
    %781 = vector.load %arg6[%c0_552, %c0_553] : memref<224x256xbf16, #tpu.memory_space<vmem>>, vector<144x256xbf16>
    %cst_554 = arith.constant dense<0.000000e+00> : vector<8x256xf32>
    %782 = tpu.matmul %703, %781, %cst_554 {dimension_numbers = #tpu.dot_dimension_numbers<[1], [0], [0], [1], [0, 0, 1, 1], [], []>} : vector<8x144xbf16>, vector<144x256xbf16>, vector<8x256xf32> -> vector<8x256xf32>
    %783 = vector.broadcast %704 : vector<8x1xf32> to vector<8x256xf32>
    %784 = arith.addf %782, %783 : vector<8x256xf32>
    %cst_555 = arith.constant 0.000000e+00 : f32
    %785 = vector.broadcast %cst_555 : f32 to vector<8x256xf32>
    %786 = arith.maximumf %784, %785 : vector<8x256xf32>
    %787 = arith.addf %786, %167 : vector<8x256xf32>
    %c1496 = arith.constant 1496 : index
    %c0_556 = arith.constant 0 : index
    %788 = vector.load %arg2[%c1496, %c0_556] : memref<1512x256xbf16, #tpu.memory_space<vmem>>, vector<8x72xbf16>
    %c136_557 = arith.constant 136 : index
    %c0_558 = arith.constant 0 : index
    %789 = vector.load %arg3[%c136_557, %c0_558] : memref<152x1xf32, #tpu.memory_space<vmem>>, vector<8x1xf32>
    %cst_559 = arith.constant 0.000000e+00 : f32
    %790 = vector.broadcast %cst_559 : f32 to vector<8x17xf32>
    %c0_560 = arith.constant 0 : index
    %c111_561 = arith.constant 111 : index
    %791 = vector.load %arg5[%c0_560, %c111_561] : memref<24x512xf32, #tpu.memory_space<vmem>>, vector<8x17xf32>
    tpu.vector_store %arg5[%c0_560, %c111_561], %790 {strides = array<i32>} : memref<24x512xf32, #tpu.memory_space<vmem>>, vector<8x17xf32>,
    %c0_562 = arith.constant 0 : index
    %c384_563 = arith.constant 384 : index
    %792 = vector.load %arg5[%c0_562, %c384_563] : memref<24x512xf32, #tpu.memory_space<vmem>>, vector<8x17xf32>
    tpu.vector_store %arg5[%c0_562, %c384_563], %790 {strides = array<i32>} : memref<24x512xf32, #tpu.memory_space<vmem>>, vector<8x17xf32>,
    %c0_564 = arith.constant 0 : index
    %c128_565 = arith.constant 128 : index
    %793 = vector.load %arg5[%c0_564, %c128_565] : memref<24x512xf32, #tpu.memory_space<vmem>>, vector<8x256xf32>
    tpu.vector_store %arg5[%c0_564, %c128_565], %787 {strides = array<i32>} : memref<24x512xf32, #tpu.memory_space<vmem>>, vector<8x256xf32>,
    %794 = tpu.iota {dimensions = array<i32: 1>} : vector<1x256xi32>
    %c16_i32_566 = arith.constant 16 : i32
    %c0_i32_567 = arith.constant 0 : i32
    %795 = arith.cmpi eq, %c16_i32_566, %c0_i32_567 : i32
    %c1_i32_568 = arith.constant 1 : i32
    %796 = arith.select %795, %c1_i32_568, %c16_i32_566 : i32
    %797 = vector.broadcast %796 : i32 to vector<1x256xi32>
    %798 = arith.remsi %794, %797 : vector<1x256xi32>
    %c0_i32_569 = arith.constant 0 : i32
    %799 = vector.broadcast %c0_i32_569 : i32 to vector<1x256xi32>
    %800 = arith.cmpi ne, %798, %799 : vector<1x256xi32>
    %c0_i32_570 = arith.constant 0 : i32
    %801 = vector.broadcast %c0_i32_570 : i32 to vector<1x256xi32>
    %802 = arith.cmpi slt, %798, %801 : vector<1x256xi32>
    %c0_i32_571 = arith.constant 0 : i32
    %803 = arith.cmpi slt, %796, %c0_i32_571 : i32
    %804 = vector.broadcast %803 : i1 to vector<1x256xi1>
    %805 = vector.broadcast %804 : vector<1x256xi1> to vector<1x256xi1>
    %806 = arith.xori %802, %805 : vector<1x256xi1>
    %807 = arith.andi %806, %800 : vector<1x256xi1>
    %808 = vector.broadcast %796 : i32 to vector<1x256xi32>
    %809 = arith.addi %798, %808 : vector<1x256xi32>
    %810 = arith.select %807, %809, %798 : vector<1x256xi1>, vector<1x256xi32>
    %c1_i32_572 = arith.constant 1 : i32
    %811 = vector.broadcast %c1_i32_572 : i32 to vector<1x256xi32>
    %812 = arith.cmpi sge, %810, %811 : vector<1x256xi32>
    %c14_i32_573 = arith.constant 14 : i32
    %813 = vector.broadcast %c14_i32_573 : i32 to vector<1x256xi32>
    %814 = arith.cmpi sle, %810, %813 : vector<1x256xi32>
    %c0_574 = arith.constant 0 : index
    %c111_575 = arith.constant 111 : index
    %815 = vector.load %arg5[%c0_574, %c111_575] : memref<24x512xf32, #tpu.memory_space<vmem>>, vector<8x256xf32>
    %cst_576 = arith.constant 0.000000e+00 : f32
    %816 = vector.shape_cast %812 : vector<1x256xi1> to vector<1x256xi1>
    %817 = vector.broadcast %816 : vector<1x256xi1> to vector<8x256xi1>
    %818 = vector.broadcast %cst_576 : f32 to vector<8x256xf32>
    %819 = arith.select %817, %815, %818 : vector<8x256xi1>, vector<8x256xf32>
    %820 = arith.truncf %819 : vector<8x256xf32> to vector<8x256xbf16>
    %c0_577 = arith.constant 0 : index
    %c0_578 = arith.constant 0 : index
    %821 = vector.load %arg6[%c0_577, %c0_578] : memref<224x256xbf16, #tpu.memory_space<vmem>>, vector<8x256xbf16>
    tpu.vector_store %arg6[%c0_577, %c0_578], %820 {strides = array<i32>} : memref<224x256xbf16, #tpu.memory_space<vmem>>, vector<8x256xbf16>,
    %c0_579 = arith.constant 0 : index
    %c112_580 = arith.constant 112 : index
    %822 = vector.load %arg5[%c0_579, %c112_580] : memref<24x512xf32, #tpu.memory_space<vmem>>, vector<8x256xf32>
    %823 = arith.truncf %822 : vector<8x256xf32> to vector<8x256xbf16>
    %c8_581 = arith.constant 8 : index
    %c0_582 = arith.constant 0 : index
    %824 = vector.load %arg6[%c8_581, %c0_582] : memref<224x256xbf16, #tpu.memory_space<vmem>>, vector<8x256xbf16>
    tpu.vector_store %arg6[%c8_581, %c0_582], %823 {strides = array<i32>} : memref<224x256xbf16, #tpu.memory_space<vmem>>, vector<8x256xbf16>,
    %c0_583 = arith.constant 0 : index
    %c113_584 = arith.constant 113 : index
    %825 = vector.load %arg5[%c0_583, %c113_584] : memref<24x512xf32, #tpu.memory_space<vmem>>, vector<8x256xf32>
    %cst_585 = arith.constant 0.000000e+00 : f32
    %826 = vector.shape_cast %814 : vector<1x256xi1> to vector<1x256xi1>
    %827 = vector.broadcast %826 : vector<1x256xi1> to vector<8x256xi1>
    %828 = vector.broadcast %cst_585 : f32 to vector<8x256xf32>
    %829 = arith.select %827, %825, %828 : vector<8x256xi1>, vector<8x256xf32>
    %830 = arith.truncf %829 : vector<8x256xf32> to vector<8x256xbf16>
    %c16_586 = arith.constant 16 : index
    %c0_587 = arith.constant 0 : index
    %831 = vector.load %arg6[%c16_586, %c0_587] : memref<224x256xbf16, #tpu.memory_space<vmem>>, vector<8x256xbf16>
    tpu.vector_store %arg6[%c16_586, %c0_587], %830 {strides = array<i32>} : memref<224x256xbf16, #tpu.memory_space<vmem>>, vector<8x256xbf16>,
    %c0_588 = arith.constant 0 : index
    %c127_589 = arith.constant 127 : index
    %832 = vector.load %arg5[%c0_588, %c127_589] : memref<24x512xf32, #tpu.memory_space<vmem>>, vector<8x256xf32>
    %cst_590 = arith.constant 0.000000e+00 : f32
    %833 = vector.shape_cast %812 : vector<1x256xi1> to vector<1x256xi1>
    %834 = vector.broadcast %833 : vector<1x256xi1> to vector<8x256xi1>
    %835 = vector.broadcast %cst_590 : f32 to vector<8x256xf32>
    %836 = arith.select %834, %832, %835 : vector<8x256xi1>, vector<8x256xf32>
    %837 = arith.truncf %836 : vector<8x256xf32> to vector<8x256xbf16>
    %c24_591 = arith.constant 24 : index
    %c0_592 = arith.constant 0 : index
    %838 = vector.load %arg6[%c24_591, %c0_592] : memref<224x256xbf16, #tpu.memory_space<vmem>>, vector<8x256xbf16>
    tpu.vector_store %arg6[%c24_591, %c0_592], %837 {strides = array<i32>} : memref<224x256xbf16, #tpu.memory_space<vmem>>, vector<8x256xbf16>,
    %c0_593 = arith.constant 0 : index
    %c128_594 = arith.constant 128 : index
    %839 = vector.load %arg5[%c0_593, %c128_594] : memref<24x512xf32, #tpu.memory_space<vmem>>, vector<8x256xf32>
    %840 = arith.truncf %839 : vector<8x256xf32> to vector<8x256xbf16>
    %c32_595 = arith.constant 32 : index
    %c0_596 = arith.constant 0 : index
    %841 = vector.load %arg6[%c32_595, %c0_596] : memref<224x256xbf16, #tpu.memory_space<vmem>>, vector<8x256xbf16>
    tpu.vector_store %arg6[%c32_595, %c0_596], %840 {strides = array<i32>} : memref<224x256xbf16, #tpu.memory_space<vmem>>, vector<8x256xbf16>,
    %c0_597 = arith.constant 0 : index
    %c129_598 = arith.constant 129 : index
    %842 = vector.load %arg5[%c0_597, %c129_598] : memref<24x512xf32, #tpu.memory_space<vmem>>, vector<8x256xf32>
    %cst_599 = arith.constant 0.000000e+00 : f32
    %843 = vector.shape_cast %814 : vector<1x256xi1> to vector<1x256xi1>
    %844 = vector.broadcast %843 : vector<1x256xi1> to vector<8x256xi1>
    %845 = vector.broadcast %cst_599 : f32 to vector<8x256xf32>
    %846 = arith.select %844, %842, %845 : vector<8x256xi1>, vector<8x256xf32>
    %847 = arith.truncf %846 : vector<8x256xf32> to vector<8x256xbf16>
    %c40_600 = arith.constant 40 : index
    %c0_601 = arith.constant 0 : index
    %848 = vector.load %arg6[%c40_600, %c0_601] : memref<224x256xbf16, #tpu.memory_space<vmem>>, vector<8x256xbf16>
    tpu.vector_store %arg6[%c40_600, %c0_601], %847 {strides = array<i32>} : memref<224x256xbf16, #tpu.memory_space<vmem>>, vector<8x256xbf16>,
    %c0_602 = arith.constant 0 : index
    %c143_603 = arith.constant 143 : index
    %849 = vector.load %arg5[%c0_602, %c143_603] : memref<24x512xf32, #tpu.memory_space<vmem>>, vector<8x256xf32>
    %cst_604 = arith.constant 0.000000e+00 : f32
    %850 = vector.shape_cast %812 : vector<1x256xi1> to vector<1x256xi1>
    %851 = vector.broadcast %850 : vector<1x256xi1> to vector<8x256xi1>
    %852 = vector.broadcast %cst_604 : f32 to vector<8x256xf32>
    %853 = arith.select %851, %849, %852 : vector<8x256xi1>, vector<8x256xf32>
    %854 = arith.truncf %853 : vector<8x256xf32> to vector<8x256xbf16>
    %c48_605 = arith.constant 48 : index
    %c0_606 = arith.constant 0 : index
    %855 = vector.load %arg6[%c48_605, %c0_606] : memref<224x256xbf16, #tpu.memory_space<vmem>>, vector<8x256xbf16>
    tpu.vector_store %arg6[%c48_605, %c0_606], %854 {strides = array<i32>} : memref<224x256xbf16, #tpu.memory_space<vmem>>, vector<8x256xbf16>,
    %c0_607 = arith.constant 0 : index
    %c144_608 = arith.constant 144 : index
    %856 = vector.load %arg5[%c0_607, %c144_608] : memref<24x512xf32, #tpu.memory_space<vmem>>, vector<8x256xf32>
    %857 = arith.truncf %856 : vector<8x256xf32> to vector<8x256xbf16>
    %c56_609 = arith.constant 56 : index
    %c0_610 = arith.constant 0 : index
    %858 = vector.load %arg6[%c56_609, %c0_610] : memref<224x256xbf16, #tpu.memory_space<vmem>>, vector<8x256xbf16>
    tpu.vector_store %arg6[%c56_609, %c0_610], %857 {strides = array<i32>} : memref<224x256xbf16, #tpu.memory_space<vmem>>, vector<8x256xbf16>,
    %c0_611 = arith.constant 0 : index
    %c145_612 = arith.constant 145 : index
    %859 = vector.load %arg5[%c0_611, %c145_612] : memref<24x512xf32, #tpu.memory_space<vmem>>, vector<8x256xf32>
    %cst_613 = arith.constant 0.000000e+00 : f32
    %860 = vector.shape_cast %814 : vector<1x256xi1> to vector<1x256xi1>
    %861 = vector.broadcast %860 : vector<1x256xi1> to vector<8x256xi1>
    %862 = vector.broadcast %cst_613 : f32 to vector<8x256xf32>
    %863 = arith.select %861, %859, %862 : vector<8x256xi1>, vector<8x256xf32>
    %864 = arith.truncf %863 : vector<8x256xf32> to vector<8x256xbf16>
    %c64_614 = arith.constant 64 : index
    %c0_615 = arith.constant 0 : index
    %865 = vector.load %arg6[%c64_614, %c0_615] : memref<224x256xbf16, #tpu.memory_space<vmem>>, vector<8x256xbf16>
    tpu.vector_store %arg6[%c64_614, %c0_615], %864 {strides = array<i32>} : memref<224x256xbf16, #tpu.memory_space<vmem>>, vector<8x256xbf16>,
    %c0_616 = arith.constant 0 : index
    %c0_617 = arith.constant 0 : index
    %866 = vector.load %arg6[%c0_616, %c0_617] : memref<224x256xbf16, #tpu.memory_space<vmem>>, vector<72x256xbf16>
    %cst_618 = arith.constant dense<0.000000e+00> : vector<8x256xf32>
    %867 = tpu.matmul %788, %866, %cst_618 {dimension_numbers = #tpu.dot_dimension_numbers<[1], [0], [0], [1], [0, 0, 1, 1], [], []>} : vector<8x72xbf16>, vector<72x256xbf16>, vector<8x256xf32> -> vector<8x256xf32>
    %868 = vector.broadcast %789 : vector<8x1xf32> to vector<8x256xf32>
    %869 = arith.addf %867, %868 : vector<8x256xf32>
    %cst_619 = arith.constant 0.000000e+00 : f32
    %870 = vector.broadcast %cst_619 : f32 to vector<8x256xf32>
    %871 = arith.maximumf %869, %870 : vector<8x256xf32>
    %c1504 = arith.constant 1504 : index
    %c0_620 = arith.constant 0 : index
    %872 = vector.load %arg2[%c1504, %c0_620] : memref<1512x256xbf16, #tpu.memory_space<vmem>>, vector<2x8xbf16>
    %c144_621 = arith.constant 144 : index
    %c0_622 = arith.constant 0 : index
    %873 = vector.load %arg3[%c144_621, %c0_622] : memref<152x1xf32, #tpu.memory_space<vmem>>, vector<2x1xf32>
    %874 = arith.truncf %871 : vector<8x256xf32> to vector<8x256xbf16>
    %cst_623 = arith.constant dense<0.000000e+00> : vector<2x256xf32>
    %875 = tpu.matmul %872, %874, %cst_623 {dimension_numbers = #tpu.dot_dimension_numbers<[1], [0], [0], [1], [0, 0, 1, 1], [], []>} : vector<2x8xbf16>, vector<8x256xbf16>, vector<2x256xf32> -> vector<2x256xf32>
    %876 = vector.broadcast %873 : vector<2x1xf32> to vector<2x256xf32>
    %877 = arith.addf %875, %876 : vector<2x256xf32>
    %c0_624 = arith.constant 0 : index
    %c0_625 = arith.constant 0 : index
    %c0_626 = arith.constant 0 : index
    %878 = vector.load %arg4[%c0_624, %c0_625, %c0_626] : memref<1x2x256xf32, #tpu.memory_space<vmem>>, vector<1x2x256xf32>
    %879 = vector.shape_cast %878 : vector<1x2x256xf32> to vector<2x256xf32>
    %880 = vector.shape_cast %877 : vector<2x256xf32> to vector<1x2x256xf32>
    tpu.vector_store %arg4[%c0_624, %c0_625, %c0_626], %880 {strides = array<i32>} : memref<1x2x256xf32, #tpu.memory_space<vmem>>, vector<1x2x256xf32>,
    return
  }
  func.func @transform_0(%arg0: i32) -> (i32, i32, i32) {
    %c0_i32 = arith.constant 0 : i32
    %c0_i32_0 = arith.constant 0 : i32
    %c0_i32_1 = arith.constant 0 : i32
    return %arg0, %c0_i32, %c0_i32_0 : i32, i32, i32
  }
  func.func @transform_1(%arg0: i32) -> (i32, i32) {
    %c0_i32 = arith.constant 0 : i32
    %c0_i32_0 = arith.constant 0 : i32
    %c0_i32_1 = arith.constant 0 : i32
    return %c0_i32, %c0_i32_0 : i32, i32
  }
  func.func @transform_2(%arg0: i32) -> (i32, i32) {
    %c0_i32 = arith.constant 0 : i32
    %c0_i32_0 = arith.constant 0 : i32
    %c0_i32_1 = arith.constant 0 : i32
    return %c0_i32, %c0_i32_0 : i32, i32
  }
  func.func @transform_3(%arg0: i32) -> (i32, i32, i32) {
    %c0_i32 = arith.constant 0 : i32
    %c0_i32_0 = arith.constant 0 : i32
    %c0_i32_1 = arith.constant 0 : i32
    return %arg0, %c0_i32, %c0_i32_0 : i32, i32, i32
  }
}

</mosaic_0001>

<llo_original>
// kernel: ladder_forward.1
$region0: #{ladder_forward.1}
  #allocation0 [shape = 'u32[]', space=smem, size = 0x4, offset = 0x4, fixed_abs, tag = 'smem constant byte address 0x4 - core index']
  #allocation1 [shape = 'u32[144,128]{1,0:T(1,128)}', space=vmem, size = 0x12000, scoped, tag = 'internal scratch']
  #allocation2 [shape = 'f32[24,512]{1,0:T(8,128)}', space=vmem, size = 0xc000, scoped, tag = 'scratch operand']
  #allocation3 [shape = 'bf16[224,256]{1,0:T(8,128)(2,1)}', space=vmem, size = 0x1c000, scoped, tag = 'scratch operand']
  %s0 = inlined_call_operand.vmem [shape: f32[2,8,256], index: 0, kind: input, shape index: {}]
  %s1 = inlined_call_operand.vmem [shape: bf16[1512,256], index: 1, kind: input, shape index: {}]
  %s2 = inlined_call_operand.vmem [shape: f32[152,1], index: 2, kind: input, shape index: {}]
  %s3 = inlined_call_operand.vmem [shape: f32[2,2,256], index: 3, kind: output, shape index: {}]
  %s4 = sld [smem:[#allocation0]]
  $region45: #{ladder_forward.1} parent=0
    _
  %s6 = ssub.s32 1, %s4
  %s7 = scalar_select 0, %s6, %s4
  loop: start=0, step=1, limit=4
  $region2: #{ladder_forward.1} parent=0 // loop_pre_header
    _
  $region3: #{ladder_forward.1} parent=0 // loop_header
    %s9 = sphi 0, %s13
    %p10 = scmp.ge.s32.totalorder %s9, 4
    %s19 = sphi 0, %s21
    %s22 = sphi 0, %s19
    %s23 = sphi 0, %s22
    %s39 = sphi 0, %s23
    %s43 = sphi 0, %s43
    %s45 = sphi 0, %s43
    %s46 = sphi 0, %s45
    %s60 = sphi 0, %s46
    %s64 = sphi 0, %s64
    %s66 = sphi 0, %s64
    %s67 = sphi 0, %s66
    %s81 = sphi 0, %s67
    %s87 = sphi 0, %s89
    %s90 = sphi 0, %s87
    %s91 = sphi 0, %s90
    %s107 = sphi 0, %s91
  $region4: #{ladder_forward.1} parent=0 // loop_header_branch
    %12 = sbr.rel (%p10) target = $region8
  $region5: #{ladder_forward.1} parent=0 // loop_body
    %s14 = ssub.s32 %s9, 1
    %s15 = ssub.s32 %s9, 2
    %s16 = sadd.s32 %s9, 1
    %s17 = ssub.s32 %s9, %s16
    %p18 = scmp.eq.s32.totalorder %s17, 0
    %s20 = sadd.s32 %s19, 1
    %s21 = scalar_select %p18, %s19, %s20
    %p24 = pneg %p18
    %p25 = scmp.eq.s32.totalorder %s9, 1
    %p26 = por %p24, %p25
    %p27 = scmp.ne.s32.totalorder %s19, %s22
    %p28 = scmp.eq.s32.totalorder %s9, 0
    %p29 = por %p27, %p28
    %p30 = scmp.ne.s32.totalorder %s19, %s22
    %p31 = scmp.eq.s32.totalorder %s14, 1
    %p32 = por %p30, %p31
    %p33 = scmp.ne.s32.totalorder %s22, %s23
    %p34 = scmp.eq.s32.totalorder %s14, 0
    %p35 = por %p33, %p34
    %p36 = scmp.ne.s32.totalorder %s22, %s23
    %p37 = scmp.eq.s32.totalorder %s15, 1
    %p38 = por %p36, %p37
    %p40 = scmp.ne.s32.totalorder %s23, %s39
    %p41 = scmp.eq.s32.totalorder %s15, 0
    %p42 = por %p40, %p41
    %s44 = sadd.s32 %s43, 1
    %p47 = scmp.eq.s32.totalorder %s9, 1
    %p48 = scmp.ne.s32.totalorder %s43, %s45
    %p49 = scmp.eq.s32.totalorder %s9, 0
    %p50 = por %p48, %p49
    %p51 = scmp.ne.s32.totalorder %s43, %s45
    %p52 = scmp.eq.s32.totalorder %s14, 1
    %p53 = por %p51, %p52
    %p54 = scmp.ne.s32.totalorder %s45, %s46
    %p55 = scmp.eq.s32.totalorder %s14, 0
    %p56 = por %p54, %p55
    %p57 = scmp.ne.s32.totalorder %s45, %s46
    %p58 = scmp.eq.s32.totalorder %s15, 1
    %p59 = por %p57, %p58
    %p61 = scmp.ne.s32.totalorder %s46, %s60
    %p62 = scmp.eq.s32.totalorder %s15, 0
    %p63 = por %p61, %p62
    %s65 = sadd.s32 %s64, 1
    %p68 = scmp.eq.s32.totalorder %s9, 1
    %p69 = scmp.ne.s32.totalorder %s64, %s66
    %p70 = scmp.eq.s32.totalorder %s9, 0
    %p71 = por %p69, %p70
    %p72 = scmp.ne.s32.totalorder %s64, %s66
    %p73 = scmp.eq.s32.totalorder %s14, 1
    %p74 = por %p72, %p73
    %p75 = scmp.ne.s32.totalorder %s66, %s67
    %p76 = scmp.eq.s32.totalorder %s14, 0
    %p77 = por %p75, %p76
    %p78 = scmp.ne.s32.totalorder %s66, %s67
    %p79 = scmp.eq.s32.totalorder %s15, 1
    %p80 = por %p78, %p79
    %p82 = scmp.ne.s32.totalorder %s67, %s81
    %p83 = scmp.eq.s32.totalorder %s15, 0
    %p84 = por %p82, %p83
    %s85 = ssub.s32 %s9, %s16
    %p86 = scmp.eq.s32.totalorder %s85, 0
    %s88 = sadd.s32 %s87, 1
    %s89 = scalar_select %p86, %s87, %s88
    %p92 = pneg %p86
    %p93 = scmp.eq.s32.totalorder %s9, 1
    %p94 = por %p92, %p93
    %p95 = scmp.ne.s32.totalorder %s87, %s90
    %p96 = scmp.eq.s32.totalorder %s9, 0
    %p97 = por %p95, %p96
    %p98 = scmp.ne.s32.totalorder %s87, %s90
    %p99 = scmp.eq.s32.totalorder %s14, 1
    %p100 = por %p98, %p99
    %p101 = scmp.ne.s32.totalorder %s90, %s91
    %p102 = scmp.eq.s32.totalorder %s14, 0
    %p103 = por %p101, %p102
    %p104 = scmp.ne.s32.totalorder %s90, %s91
    %p105 = scmp.eq.s32.totalorder %s15, 1
    %p106 = por %p104, %p105
    %p108 = scmp.ne.s32.totalorder %s91, %s107
    %p109 = scmp.eq.s32.totalorder %s15, 0
    %p110 = por %p108, %p109
    %p111 = scmp.le.s32.totalorder 1, %s9
    %p112 = scmp.lt.s32.totalorder %s9, 3
    %p113 = pnand %p111, %p112
    %p114 = pneg %p113
    // Predicated region
    $region9: #{ladder_forward.1} parent=5 // pred_check
      _
    $region10: #{ladder_forward.1} parent=5 // pred_check_branch
      %116 = sbr.rel (%p113) target = $region12
    $region11: #{ladder_forward.1} parent=5 // pred_region
      %s117 = ssub.s32 %s9, 1
      // Predicated region
      $region13: #{ladder_forward.1} parent=11 // pred_check
        %p118 = pneg %p56
      $region14: #{ladder_forward.1} parent=11 // pred_check_branch
        %120 = sbr.rel (%p118) target = $region16
      $region15: #{ladder_forward.1} parent=11 // pred_region
        _
      $region16: #{ladder_forward.1} parent=11 // pred_fallthru
        _
      // Predicated region
      $region17: #{ladder_forward.1} parent=11 // pred_check
        %p121 = pneg %p77
      $region18: #{ladder_forward.1} parent=11 // pred_check_branch
        %123 = sbr.rel (%p121) target = $region20
      $region19: #{ladder_forward.1} parent=11 // pred_region
        _
      $region20: #{ladder_forward.1} parent=11 // pred_fallthru
        _
    $region12: #{ladder_forward.1} parent=5 // pred_fallthru
      _
    %p124 = scmp.lt.s32.totalorder %s9, 2
    // Predicated region
    $region21: #{ladder_forward.1} parent=5 // pred_check
      %p125 = pneg %p124
    $region22: #{ladder_forward.1} parent=5 // pred_check_branch
      %127 = sbr.rel (%p125) target = $region24
    $region23: #{ladder_forward.1} parent=5 // pred_region
      // Predicated region
      $region25: #{ladder_forward.1} parent=23 // pred_check
        %p128 = pneg %p29
      $region26: #{ladder_forward.1} parent=23 // pred_check_branch
        %130 = sbr.rel (%p128) target = $region28
      $region27: #{ladder_forward.1} parent=23 // pred_region
        %p131 = scmp.lt.s32.totalorder %s9, 1
        %s132 = scalar_select %p131, %s9, 1
        %s133 = smul.addr %s132, 2
        %s134 = smul.addr %s133, 8
        %s135 = scalar_lea.vmem %s0, %s134
      $region28: #{ladder_forward.1} parent=23 // pred_fallthru
        _
    $region24: #{ladder_forward.1} parent=5 // pred_fallthru
      _
    %p136 = scmp.le.s32.totalorder 1, %s9
    %p137 = scmp.lt.s32.totalorder %s9, 3
    %p138 = pnand %p136, %p137
    %p139 = pneg %p138
    // Predicated region
    $region29: #{ladder_forward.1} parent=5 // pred_check
      _
    $region30: #{ladder_forward.1} parent=5 // pred_check_branch
      %141 = sbr.rel (%p138) target = $region32
    $region31: #{ladder_forward.1} parent=5 // pred_region
      %s142 = ssub.s32 %s9, 1
      %p143 = scmp.lt.s32.totalorder %s14, 1
      %s144 = scalar_select %p143, %s14, 1
      %s145 = smul.addr %s144, 2
      %s146 = smul.addr %s145, 8
      %s147 = scalar_lea.vmem %s0, %s146
      %p148 = pneg %p35
      %p149 = pneg %p32
      %p150 = pneg %p56
      %p151 = pneg %p53
      %p152 = pneg %p77
      %p153 = pneg %p74
      %p154 = pneg %p103
      %p155 = pneg %p100
      %p156 = scmp.lt.s32.totalorder %s14, 1
      %s157 = scalar_select %p156, %s14, 1
      %s158 = smul.addr %s157, 2
      %s159 = smul.addr %s158, 2
      %s160 = scalar_lea.vmem %s3, %s159
      %p161 = scmp.lt.s32.totalorder %s14, 1
      %s162 = scalar_select %p161, %s14, 1
      %s163 = smul.addr %s162, 2
      %s164 = smul.addr %s163, 8
      %s165 = scalar_lea.vmem %s0, %s164
      %p166 = scmp.lt.s32.totalorder %s14, 1
      %s167 = scalar_select %p166, %s14, 1
      %s168 = smul.addr %s167, 2
      %s169 = smul.addr %s168, 2
      %s170 = scalar_lea.vmem %s3, %s169
      %v172 = vld [vmem:[%s165] sm:$0xff]
      %v173 = vld [vmem:[%s165 + $0x8] sm:$0xff]
      %v174 = vld [vmem:[%s1] sm:$0xf]
      %v175 = vld [vmem:[%s2] sm:$0xff]
      %vm176 = vcmask 1048440
      %177 = vst.msk [vmem:[#allocation2] sm:$0xff] %vm176, 0.0
      %vm178 = vcmask 138240
      %179 = vst.msk [vmem:[#allocation2 + $0x18] sm:$0xff] %vm178, 0.0
      %180 = vst [vmem:[#allocation2 + $0x8] sm:$0xff] %v172
      %181 = vst [vmem:[#allocation2 + $0x10] sm:$0xff] %v173
      %v182 = vlaneseq
      %v183 = vand.u32 %v182, 127
      %v184 = vadd.s32 %v183, 128
      %vm185 = vcmp.lt.s32.totalorder %v183, 0
      %v186 = vsub.s32 0, %v183
      %v187 = vsel %vm185, %v186, %v183
      %v188 = vshrl.u32 %v187, 4
      %v189 = vand.u32 %v187, 15
      %v190 = vsub.s32 0, %v189
      %v191 = vsel %vm185, %v190, %v189
      %vm192 = vcmp.lt.s32.totalorder %v184, 0
      %v193 = vsub.s32 0, %v184
      %v194 = vsel %vm192, %v193, %v184
      %v195 = vshrl.u32 %v194, 4
      %v196 = vand.u32 %v194, 15
      %v197 = vsub.s32 0, %v196
      %v198 = vsel %vm192, %v197, %v196
      %vm199 = vcmp.ne.s32.totalorder %v191, 0
      %vm200 = vcmp.ne.s32.totalorder %v198, 0
      %vm201 = vcmp.lt.s32.totalorder %v191, 0
      %vm202 = vcmp.lt.s32.totalorder %v198, 0
      %vm203 = vmand %vm201, %vm199
      %vm204 = vmand %vm202, %vm200
      %v205 = vadd.s32 %v191, 16
      %v206 = vadd.s32 %v198, 16
      %v207 = vsel %vm203, %v205, %v191
      %v208 = vsel %vm204, %v206, %v198
      %vm209 = vcmp.ge.s32.totalorder %v207, 1
      %vm210 = vcmp.ge.s32.totalorder %v208, 1
      %vm211 = vcmp.le.s32.totalorder %v207, 14
      %vm212 = vcmp.le.s32.totalorder %v208, 14
      %v213 = vld [vmem:[#allocation2] sm:$0xff]
      %v214 = vld [vmem:[#allocation2 + $0x8] sm:$0xff]
      %v215 = vld [vmem:[#allocation2 + $0x10] sm:$0xff]
      %v216 = vsel %vm209, 1, 0
      %v217 = vsel %vm210, 1, 0
      %vm218 = vcmp.eq.s32.totalorder %v216, 1
      %vm219 = vcmp.eq.s32.totalorder %v217, 1
      %223 = vrot.lane.b32.xlu0 %v213, 17
      %v224 = vpop.permute.xlu0 %223
      %225 = vrot.lane.b32.xlu0 %v214, 17
      %v226 = vpop.permute.xlu0 %225
      %227 = vrot.lane.b32.xlu0 %v215, 17
      %v228 = vpop.permute.xlu0 %227
      %v229 = vsel %vm178, %v224, %v226
      %v230 = vsel %vm178, %v226, %v228
      %v233 = vsel %vm218, %v229, 0.0
      %v234 = vsel %vm219, %v230, 0.0
      %v235 = vpack.c.bf16 %v233, %v233
      %v236 = vpack.c.bf16 %v234, %v234
      %v239 = vunpack.c.l.b16 %v235
      %v240 = vunpack.c.l.b16 %v236
      %v241 = vpack.c.b16 %v240, %v239
      %243 = vst [vmem:[#allocation3] sm:$0xff] %v241
      %v244 = vld [vmem:[#allocation2] sm:$0xff]
      %v245 = vld [vmem:[#allocation2 + $0x8] sm:$0xff]
      %v246 = vld [vmem:[#allocation2 + $0x10] sm:$0xff]
      %v247 = vpack.c.bf16 %v244, %v244
      %v248 = vpack.c.bf16 %v245, %v245
      %v249 = vpack.c.bf16 %v246, %v246
      %v253 = vunpack.c.l.b16 %v247
      %v254 = vunpack.c.l.b16 %v248
      %v255 = vunpack.c.l.b16 %v249
      %v256 = vpack.c.b16 %v254, %v253
      %v257 = vpack.c.b16 %v255, %v255
      %258 = vrot.lane.b32.xlu0 %v256, 16
      %v259 = vpop.permute.xlu0 %258
      %260 = vrot.lane.b32.xlu0 %v257, 16
      %v261 = vpop.permute.xlu0 %260
      %v262 = vrot.slane %v259, 4
      %v263 = vrot.slane %v261, 4
      %vm264 = vcmask 1043456
      %v265 = vsel %vm264, %v262, %v263
      %vm266 = vcmask 130048
      %v267 = vsel %vm266, %v259, %v265
      %269 = vst [vmem:[#allocation3 + $0x8] sm:$0xff] %v267
      %v270 = vld [vmem:[#allocation2] sm:$0xff]
      %v271 = vld [vmem:[#allocation2 + $0x8] sm:$0xff]
      %v272 = vld [vmem:[#allocation2 + $0x10] sm:$0xff]
      %v273 = vsel %vm211, 1, 0
      %v274 = vsel %vm212, 1, 0
      %vm275 = vcmp.eq.s32.totalorder %v273, 1
      %vm276 = vcmp.eq.s32.totalorder %v274, 1
      %280 = vrot.lane.b32.xlu0 %v270, 15
      %v281 = vpop.permute.xlu0 %280
      %282 = vrot.lane.b32.xlu0 %v271, 15
      %v283 = vpop.permute.xlu0 %282
      %284 = vrot.lane.b32.xlu0 %v272, 15
      %v285 = vpop.permute.xlu0 %284
      %vm286 = vcmask 121856
      %v287 = vsel %vm286, %v281, %v283
      %v288 = vsel %vm286, %v283, %v285
      %v291 = vsel %vm275, %v287, 0.0
      %v292 = vsel %vm276, %v288, 0.0
      %v293 = vpack.c.bf16 %v291, %v291
      %v294 = vpack.c.bf16 %v292, %v292
      %v297 = vunpack.c.l.b16 %v293
      %v298 = vunpack.c.l.b16 %v294
      %v299 = vpack.c.b16 %v298, %v297
      %301 = vst [vmem:[#allocation3 + $0x10] sm:$0xff] %v299
      %v302 = vld [vmem:[#allocation2] sm:$0xff]
      %v303 = vld [vmem:[#allocation2 + $0x8] sm:$0xff]
      %v304 = vld [vmem:[#allocation2 + $0x10] sm:$0xff]
      %308 = vrot.lane.b32.xlu0 %v302, 1
      %v309 = vpop.permute.xlu0 %308
      %310 = vrot.lane.b32.xlu0 %v303, 1
      %v311 = vpop.permute.xlu0 %310
      %312 = vrot.lane.b32.xlu0 %v304, 1
      %v313 = vpop.permute.xlu0 %312
      %vm314 = vcmask 7168
      %v315 = vsel %vm314, %v309, %v311
      %v316 = vsel %vm314, %v311, %v313
      %v319 = vsel %vm218, %v315, 0.0
      %v320 = vsel %vm219, %v316, 0.0
      %v321 = vpack.c.bf16 %v319, %v319
      %v322 = vpack.c.bf16 %v320, %v320
      %v325 = vunpack.c.l.b16 %v321
      %v326 = vunpack.c.l.b16 %v322
      %v327 = vpack.c.b16 %v326, %v325
      %329 = vst [vmem:[#allocation3 + $0x18] sm:$0xff] %v327
      %v330 = vld [vmem:[#allocation2 + $0x8] sm:$0xff]
      %v331 = vld [vmem:[#allocation2 + $0x10] sm:$0xff]
      %v332 = vpack.c.bf16 %v330, %v330
      %v333 = vpack.c.bf16 %v331, %v331
      %v336 = vunpack.c.l.b16 %v332
      %v337 = vunpack.c.l.b16 %v333
      %v338 = vpack.c.b16 %v337, %v336
      %340 = vst [vmem:[#allocation3 + $0x20] sm:$0xff] %v338
      %v341 = vld [vmem:[#allocation2 + $0x8] sm:$0xff]
      %v342 = vld [vmem:[#allocation2 + $0x10] sm:$0xff]
      %v343 = vld [vmem:[#allocation2 + $0x18] sm:$0xff]
      %347 = vrot.lane.b32.xlu0 %v341, 127
      %v348 = vpop.permute.xlu0 %347
      %349 = vrot.lane.b32.xlu0 %v342, 127
      %v350 = vpop.permute.xlu0 %349
      %351 = vrot.lane.b32.xlu0 %v343, 127
      %v352 = vpop.permute.xlu0 %351
      %vm353 = vcmask 1039360
      %v354 = vsel %vm353, %v348, %v350
      %v355 = vsel %vm353, %v350, %v352
      %v358 = vsel %vm275, %v354, 0.0
      %v359 = vsel %vm276, %v355, 0.0
      %v360 = vpack.c.bf16 %v358, %v358
      %v361 = vpack.c.bf16 %v359, %v359
      %v364 = vunpack.c.l.b16 %v360
      %v365 = vunpack.c.l.b16 %v361
      %v366 = vpack.c.b16 %v365, %v364
      %368 = vst [vmem:[#allocation3 + $0x28] sm:$0xff] %v366
      %v369 = vld [vmem:[#allocation2 + $0x8] sm:$0xff]
      %v370 = vld [vmem:[#allocation2 + $0x10] sm:$0xff]
      %v371 = vld [vmem:[#allocation2 + $0x18] sm:$0xff]
      %375 = vrot.lane.b32.xlu0 %v369, 113
      %v376 = vpop.permute.xlu0 %375
      %377 = vrot.lane.b32.xlu0 %v370, 113
      %v378 = vpop.permute.xlu0 %377
      %379 = vrot.lane.b32.xlu0 %v371, 113
      %v380 = vpop.permute.xlu0 %379
      %vm381 = vcmask 924672
      %v382 = vsel %vm381, %v376, %v378
      %v383 = vsel %vm381, %v378, %v380
      %v386 = vsel %vm218, %v382, 0.0
      %v387 = vsel %vm219, %v383, 0.0
      %v388 = vpack.c.bf16 %v386, %v386
      %v389 = vpack.c.bf16 %v387, %v387
      %v392 = vunpack.c.l.b16 %v388
      %v393 = vunpack.c.l.b16 %v389
      %v394 = vpack.c.b16 %v393, %v392
      %396 = vst [vmem:[#allocation3 + $0x30] sm:$0xff] %v394
      %v397 = vld [vmem:[#allocation2 + $0x8] sm:$0xff]
      %v398 = vld [vmem:[#allocation2 + $0x10] sm:$0xff]
      %v399 = vld [vmem:[#allocation2 + $0x18] sm:$0xff]
      %v400 = vpack.c.bf16 %v397, %v397
      %v401 = vpack.c.bf16 %v398, %v398
      %v402 = vpack.c.bf16 %v399, %v399
      %v406 = vunpack.c.l.b16 %v400
      %v407 = vunpack.c.l.b16 %v401
      %v408 = vunpack.c.l.b16 %v402
      %v409 = vpack.c.b16 %v407, %v406
      %v410 = vpack.c.b16 %v408, %v408
      %411 = vrot.lane.b32.xlu0 %v409, 112
      %v412 = vpop.permute.xlu0 %411
      %413 = vrot.lane.b32.xlu0 %v410, 112
      %v414 = vpop.permute.xlu0 %413
      %v415 = vrot.slane %v412, 4
      %v416 = vrot.slane %v414, 4
      %v417 = vsel %vm264, %v415, %v416
      %vm418 = vcmask 916480
      %v419 = vsel %vm418, %v412, %v417
      %421 = vst [vmem:[#allocation3 + $0x38] sm:$0xff] %v419
      %v422 = vld [vmem:[#allocation2 + $0x8] sm:$0xff]
      %v423 = vld [vmem:[#allocation2 + $0x10] sm:$0xff]
      %v424 = vld [vmem:[#allocation2 + $0x18] sm:$0xff]
      %428 = vrot.lane.b32.xlu0 %v422, 111
      %v429 = vpop.permute.xlu0 %428
      %430 = vrot.lane.b32.xlu0 %v423, 111
      %v431 = vpop.permute.xlu0 %430
      %432 = vrot.lane.b32.xlu0 %v424, 111
      %v433 = vpop.permute.xlu0 %432
      %vm434 = vcmask 908288
      %v435 = vsel %vm434, %v429, %v431
      %v436 = vsel %vm434, %v431, %v433
      %v439 = vsel %vm275, %v435, 0.0
      %v440 = vsel %vm276, %v436, 0.0
      %v441 = vpack.c.bf16 %v439, %v439
      %v442 = vpack.c.bf16 %v440, %v440
      %v445 = vunpack.c.l.b16 %v441
      %v446 = vunpack.c.l.b16 %v442
      %v447 = vpack.c.b16 %v446, %v445
      %449 = vst [vmem:[#allocation3 + $0x40] sm:$0xff] %v447
      %v450 = vld [vmem:[#allocation3] sm:$0xff]
      %v451 = vld [vmem:[#allocation3 + $0x8] sm:$0xff]
      %v452 = vld [vmem:[#allocation3 + $0x10] sm:$0xff]
      %v453 = vld [vmem:[#allocation3 + $0x18] sm:$0xff]
      %v454 = vld [vmem:[#allocation3 + $0x20] sm:$0xff]
      %v455 = vld [vmem:[#allocation3 + $0x28] sm:$0xff]
      %v456 = vld [vmem:[#allocation3 + $0x30] sm:$0xff]
      %v457 = vld [vmem:[#allocation3 + $0x38] sm:$0xff]
      %v458 = vld [vmem:[#allocation3 + $0x40] sm:$0xff]
      %460 = vset.pattern.permute.xlu0 0
      %461 = vperm.xlu0 %460, %v175
      %v462 = vpop.permute.xlu0 %461
      %v473 = vunpack.c.l.b16 %v450
      %v474 = vunpack.c.h.b16 %v450
      %v475 = vunpack.c.l.b16 %v451
      %v476 = vunpack.c.h.b16 %v451
      %v477 = vunpack.c.l.b16 %v452
      %v478 = vunpack.c.h.b16 %v452
      %v479 = vunpack.c.l.b16 %v453
      %v480 = vunpack.c.h.b16 %v453
      %v481 = vunpack.c.l.b16 %v454
      %v482 = vunpack.c.h.b16 %v454
      %v483 = vunpack.c.l.b16 %v455
      %v484 = vunpack.c.h.b16 %v455
      %v485 = vunpack.c.l.b16 %v456
      %v486 = vunpack.c.h.b16 %v456
      %v487 = vunpack.c.l.b16 %v457
      %v488 = vunpack.c.h.b16 %v457
      %v489 = vunpack.c.l.b16 %v458
      %v490 = vunpack.c.h.b16 %v458
      %v491 = vpack.c.b16 %v475, %v473
      %v492 = vpack.c.b16 %v476, %v474
      %v493 = vpack.c.b16 %v479, %v477
      %v494 = vpack.c.b16 %v480, %v478
      %v495 = vpack.c.b16 %v483, %v481
      %v496 = vpack.c.b16 %v484, %v482
      %v497 = vpack.c.b16 %v487, %v485
      %v498 = vpack.c.b16 %v488, %v486
      %v499 = vpack.c.b16 %v489, %v489
      %v500 = vpack.c.b16 %v490, %v490
      %vm509 = vcmask 588800
      %v511 = vsel %vm509, %v174, 0
      %vm513 = vcmask 1043456
      %v515 = vsel %vm513, %v499, 0
      %v518 = vsel %vm513, %v500, 0
      %520 = vmatprep.subr.bf16.mxu0 0
      %521 = vmatpush1.bf16.msra.mxu0 0
      %522 = vmatprep.subr.bf16.mxu0 0
      %523 = vmatpush1.bf16.msra.mxu0 0
      %524 = vmatprep.subr.bf16.mxu0 0
      %525 = vmatpush1.bf16.msra.mxu0 0
      %526 = vmatprep.subr.bf16.mxu0 %v518
      %527 = vmatpush1.bf16.msra.mxu0 %v515
      %528 = vmatprep.subr.bf16.mxu0 %v498
      %529 = vmatpush1.bf16.msra.mxu0 %v497
      %530 = vmatprep.subr.bf16.mxu0 %v496
      %531 = vmatpush1.bf16.msra.mxu0 %v495
      %532 = vmatprep.subr.bf16.mxu0 %v494
      %533 = vmatpush1.bf16.msra.mxu0 %v493
      %534 = vmatprep.subr.bf16.mxu0 %v492
      %535 = vmatpush1.bf16.msra.mxu0 %v491
      %536 = vmatprep.subr.bf16.mxu0 0
      %537 = vmatpush2.bf16.msra.mxu0 0
      %538 = vmatprep.subr.bf16.mxu0 0
      %539 = vmatpush2.bf16.msra.mxu0 0
      %540 = vmatprep.subr.bf16.mxu0 0
      %541 = vmatpush2.bf16.msra.mxu0 0
      %542 = vmatprep.subr.bf16.mxu0 0
      %543 = vmatpush2.bf16.msra.mxu0 0
      %544 = vmatprep.subr.bf16.mxu0 0
      %545 = vmatpush2.bf16.msra.mxu0 0
      %546 = vmatprep.subr.bf16.mxu0 0
      %547 = vmatpush2.bf16.msra.mxu0 0
      %548 = vmatprep.subr.bf16.mxu0 0
      %549 = vmatpush2.bf16.msra.mxu0 0
      %550 = vmatprep.subr.bf16.mxu0 0
      %551 = vmatpush2.bf16.msra.mxu0 0
      %552 = vmatprep.mubr.bf16.mxu0 0
      %553 = vmatmul.mubr.bf16.gmra.mxu0 %v511
      %v554 = vpop.f32.mrf.mxu0
      %v555 = vadd.f32 %v462, %v554
      %v556 = vpop.f32.mrf.mxu0
      %v557 = vadd.f32 %v462, %v556
      %v558 = vpop.f32.mrf.mxu0
      %v559 = vpop.f32.mrf.mxu0
      %560 = vdwg.mxu0
      %v561 = vld [vmem:[%s1 + $0x8] sm:$0xf]
      %v562 = vld [vmem:[%s2 + $0x8] sm:$0xff]
      %563 = vst.msk [vmem:[#allocation2] sm:$0xff] %vm176, 0.0
      %564 = vst.msk [vmem:[#allocation2 + $0x18] sm:$0xff] %vm178, 0.0
      %565 = vst [vmem:[#allocation2 + $0x8] sm:$0xff] %v555
      %566 = vst [vmem:[#allocation2 + $0x10] sm:$0xff] %v557
      %v567 = vld [vmem:[#allocation2] sm:$0xff]
      %v568 = vld [vmem:[#allocation2 + $0x8] sm:$0xff]
      %v569 = vld [vmem:[#allocation2 + $0x10] sm:$0xff]
      %573 = vrot.lane.b32.xlu0 %v567, 17
      %v574 = vpop.permute.xlu0 %573
      %575 = vrot.lane.b32.xlu0 %v568, 17
      %v576 = vpop.permute.xlu0 %575
      %577 = vrot.lane.b32.xlu0 %v569, 17
      %v578 = vpop.permute.xlu0 %577
      %v579 = vsel %vm178, %v574, %v576
      %v580 = vsel %vm178, %v576, %v578
      %v583 = vsel %vm218, %v579, 0.0
      %v584 = vsel %vm219, %v580, 0.0
      %v585 = vpack.c.bf16 %v583, %v583
      %v586 = vpack.c.bf16 %v584, %v584
      %v589 = vunpack.c.l.b16 %v585
      %v590 = vunpack.c.l.b16 %v586
      %v591 = vpack.c.b16 %v590, %v589
      %593 = vst [vmem:[#allocation3] sm:$0xff] %v591
      %v594 = vld [vmem:[#allocation2] sm:$0xff]
      %v595 = vld [vmem:[#allocation2 + $0x8] sm:$0xff]
      %v596 = vld [vmem:[#allocation2 + $0x10] sm:$0xff]
      %v597 = vpack.c.bf16 %v594, %v594
      %v598 = vpack.c.bf16 %v595, %v595
      %v599 = vpack.c.bf16 %v596, %v596
      %v603 = vunpack.c.l.b16 %v597
      %v604 = vunpack.c.l.b16 %v598
      %v605 = vunpack.c.l.b16 %v599
      %v606 = vpack.c.b16 %v604, %v603
      %v607 = vpack.c.b16 %v605, %v605
      %608 = vrot.lane.b32.xlu0 %v606, 16
      %v609 = vpop.permute.xlu0 %608
      %610 = vrot.lane.b32.xlu0 %v607, 16
      %v611 = vpop.permute.xlu0 %610
      %v612 = vrot.slane %v609, 4
      %v613 = vrot.slane %v611, 4
      %v614 = vsel %vm264, %v612, %v613
      %v615 = vsel %vm266, %v609, %v614
      %617 = vst [vmem:[#allocation3 + $0x8] sm:$0xff] %v615
      %v618 = vld [vmem:[#allocation2] sm:$0xff]
      %v619 = vld [vmem:[#allocation2 + $0x8] sm:$0xff]
      %v620 = vld [vmem:[#allocation2 + $0x10] sm:$0xff]
      %624 = vrot.lane.b32.xlu0 %v618, 15
      %v625 = vpop.permute.xlu0 %624
      %626 = vrot.lane.b32.xlu0 %v619, 15
      %v627 = vpop.permute.xlu0 %626
      %628 = vrot.lane.b32.xlu0 %v620, 15
      %v629 = vpop.permute.xlu0 %628
      %v630 = vsel %vm286, %v625, %v627
      %v631 = vsel %vm286, %v627, %v629
      %v634 = vsel %vm275, %v630, 0.0
      %v635 = vsel %vm276, %v631, 0.0
      %v636 = vpack.c.bf16 %v634, %v634
      %v637 = vpack.c.bf16 %v635, %v635
      %v640 = vunpack.c.l.b16 %v636
      %v641 = vunpack.c.l.b16 %v637
      %v642 = vpack.c.b16 %v641, %v640
      %644 = vst [vmem:[#allocation3 + $0x10] sm:$0xff] %v642
      %v645 = vld [vmem:[#allocation2] sm:$0xff]
      %v646 = vld [vmem:[#allocation2 + $0x8] sm:$0xff]
      %v647 = vld [vmem:[#allocation2 + $0x10] sm:$0xff]
      %651 = vrot.lane.b32.xlu0 %v645, 1
      %v652 = vpop.permute.xlu0 %651
      %653 = vrot.lane.b32.xlu0 %v646, 1
      %v654 = vpop.permute.xlu0 %653
      %655 = vrot.lane.b32.xlu0 %v647, 1
      %v656 = vpop.permute.xlu0 %655
      %v657 = vsel %vm314, %v652, %v654
      %v658 = vsel %vm314, %v654, %v656
      %v661 = vsel %vm218, %v657, 0.0
      %v662 = vsel %vm219, %v658, 0.0
      %v663 = vpack.c.bf16 %v661, %v661
      %v664 = vpack.c.bf16 %v662, %v662
      %v667 = vunpack.c.l.b16 %v663
      %v668 = vunpack.c.l.b16 %v664
      %v669 = vpack.c.b16 %v668, %v667
      %671 = vst [vmem:[#allocation3 + $0x18] sm:$0xff] %v669
      %v672 = vld [vmem:[#allocation2 + $0x8] sm:$0xff]
      %v673 = vld [vmem:[#allocation2 + $0x10] sm:$0xff]
      %v674 = vpack.c.bf16 %v672, %v672
      %v675 = vpack.c.bf16 %v673, %v673
      %v678 = vunpack.c.l.b16 %v674
      %v679 = vunpack.c.l.b16 %v675
      %v680 = vpack.c.b16 %v679, %v678
      %682 = vst [vmem:[#allocation3 + $0x20] sm:$0xff] %v680
      %v683 = vld [vmem:[#allocation2 + $0x8] sm:$0xff]
      %v684 = vld [vmem:[#allocation2 + $0x10] sm:$0xff]
      %v685 = vld [vmem:[#allocation2 + $0x18] sm:$0xff]
      %689 = vrot.lane.b32.xlu0 %v683, 127
      %v690 = vpop.permute.xlu0 %689
      %691 = vrot.lane.b32.xlu0 %v684, 127
      %v692 = vpop.permute.xlu0 %691
      %693 = vrot.lane.b32.xlu0 %v685, 127
      %v694 = vpop.permute.xlu0 %693
      %v695 = vsel %vm353, %v690, %v692
      %v696 = vsel %vm353, %v692, %v694
      %v699 = vsel %vm275, %v695, 0.0
      %v700 = vsel %vm276, %v696, 0.0
      %v701 = vpack.c.bf16 %v699, %v699
      %v702 = vpack.c.bf16 %v700, %v700
      %v705 = vunpack.c.l.b16 %v701
      %v706 = vunpack.c.l.b16 %v702
      %v707 = vpack.c.b16 %v706, %v705
      %709 = vst [vmem:[#allocation3 + $0x28] sm:$0xff] %v707
      %v710 = vld [vmem:[#allocation2 + $0x8] sm:$0xff]
      %v711 = vld [vmem:[#allocation2 + $0x10] sm:$0xff]
      %v712 = vld [vmem:[#allocation2 + $0x18] sm:$0xff]
      %716 = vrot.lane.b32.xlu0 %v710, 113
      %v717 = vpop.permute.xlu0 %716
      %718 = vrot.lane.b32.xlu0 %v711, 113
      %v719 = vpop.permute.xlu0 %718
      %720 = vrot.lane.b32.xlu0 %v712, 113
      %v721 = vpop.permute.xlu0 %720
      %v722 = vsel %vm381, %v717, %v719
      %v723 = vsel %vm381, %v719, %v721
      %v726 = vsel %vm218, %v722, 0.0
      %v727 = vsel %vm219, %v723, 0.0
      %v728 = vpack.c.bf16 %v726, %v726
      %v729 = vpack.c.bf16 %v727, %v727
      %v732 = vunpack.c.l.b16 %v728
      %v733 = vunpack.c.l.b16 %v729
      %v734 = vpack.c.b16 %v733, %v732
      %736 = vst [vmem:[#allocation3 + $0x30] sm:$0xff] %v734
      %v737 = vld [vmem:[#allocation2 + $0x8] sm:$0xff]
      %v738 = vld [vmem:[#allocation2 + $0x10] sm:$0xff]
      %v739 = vld [vmem:[#allocation2 + $0x18] sm:$0xff]
      %v740 = vpack.c.bf16 %v737, %v737
      %v741 = vpack.c.bf16 %v738, %v738
      %v742 = vpack.c.bf16 %v739, %v739
      %v746 = vunpack.c.l.b16 %v740
      %v747 = vunpack.c.l.b16 %v741
      %v748 = vunpack.c.l.b16 %v742
      %v749 = vpack.c.b16 %v747, %v746
      %v750 = vpack.c.b16 %v748, %v748
      %751 = vrot.lane.b32.xlu0 %v749, 112
      %v752 = vpop.permute.xlu0 %751
      %753 = vrot.lane.b32.xlu0 %v750, 112
      %v754 = vpop.permute.xlu0 %753
      %v755 = vrot.slane %v752, 4
      %v756 = vrot.slane %v754, 4
      %v757 = vsel %vm264, %v755, %v756
      %v758 = vsel %vm418, %v752, %v757
      %760 = vst [vmem:[#allocation3 + $0x38] sm:$0xff] %v758
      %v761 = vld [vmem:[#allocation2 + $0x8] sm:$0xff]
      %v762 = vld [vmem:[#allocation2 + $0x10] sm:$0xff]
      %v763 = vld [vmem:[#allocation2 + $0x18] sm:$0xff]
      %767 = vrot.lane.b32.xlu0 %v761, 111
      %v768 = vpop.permute.xlu0 %767
      %769 = vrot.lane.b32.xlu0 %v762, 111
      %v770 = vpop.permute.xlu0 %769
      %771 = vrot.lane.b32.xlu0 %v763, 111
      %v772 = vpop.permute.xlu0 %771
      %v773 = vsel %vm434, %v768, %v770
      %v774 = vsel %vm434, %v770, %v772
      %v777 = vsel %vm275, %v773, 0.0
      %v778 = vsel %vm276, %v774, 0.0
      %v779 = vpack.c.bf16 %v777, %v777
      %v780 = vpack.c.bf16 %v778, %v778
      %v783 = vunpack.c.l.b16 %v779
      %v784 = vunpack.c.l.b16 %v780
      %v785 = vpack.c.b16 %v784, %v783
      %787 = vst [vmem:[#allocation3 + $0x40] sm:$0xff] %v785
      %v788 = vld [vmem:[#allocation3] sm:$0xff]
      %v789 = vld [vmem:[#allocation3 + $0x8] sm:$0xff]
      %v790 = vld [vmem:[#allocation3 + $0x10] sm:$0xff]
      %v791 = vld [vmem:[#allocation3 + $0x18] sm:$0xff]
      %v792 = vld [vmem:[#allocation3 + $0x20] sm:$0xff]
      %v793 = vld [vmem:[#allocation3 + $0x28] sm:$0xff]
      %v794 = vld [vmem:[#allocation3 + $0x30] sm:$0xff]
      %v795 = vld [vmem:[#allocation3 + $0x38] sm:$0xff]
      %v796 = vld [vmem:[#allocation3 + $0x40] sm:$0xff]
      %798 = vset.pattern.permute.xlu0 0
      %799 = vperm.xlu0 %798, %v562
      %v800 = vpop.permute.xlu0 %799
      %v811 = vunpack.c.l.b16 %v788
      %v812 = vunpack.c.h.b16 %v788
      %v813 = vunpack.c.l.b16 %v789
      %v814 = vunpack.c.h.b16 %v789
      %v815 = vunpack.c.l.b16 %v790
      %v816 = vunpack.c.h.b16 %v790
      %v817 = vunpack.c.l.b16 %v791
      %v818 = vunpack.c.h.b16 %v791
      %v819 = vunpack.c.l.b16 %v792
      %v820 = vunpack.c.h.b16 %v792
      %v821 = vunpack.c.l.b16 %v793
      %v822 = vunpack.c.h.b16 %v793
      %v823 = vunpack.c.l.b16 %v794
      %v824 = vunpack.c.h.b16 %v794
      %v825 = vunpack.c.l.b16 %v795
      %v826 = vunpack.c.h.b16 %v795
      %v827 = vunpack.c.l.b16 %v796
      %v828 = vunpack.c.h.b16 %v796
      %v829 = vpack.c.b16 %v813, %v811
      %v830 = vpack.c.b16 %v814, %v812
      %v831 = vpack.c.b16 %v817, %v815
      %v832 = vpack.c.b16 %v818, %v816
      %v833 = vpack.c.b16 %v821, %v819
      %v834 = vpack.c.b16 %v822, %v820
      %v835 = vpack.c.b16 %v825, %v823
      %v836 = vpack.c.b16 %v826, %v824
      %v837 = vpack.c.b16 %v827, %v827
      %v838 = vpack.c.b16 %v828, %v828
      %v848 = vsel %vm509, %v561, 0
      %v851 = vsel %vm513, %v837, 0
      %v854 = vsel %vm513, %v838, 0
      %856 = vmatprep.subr.bf16.mxu0 0
      %857 = vmatpush1.bf16.msra.mxu0 0
      %858 = vmatprep.subr.bf16.mxu0 0
      %859 = vmatpush1.bf16.msra.mxu0 0
      %860 = vmatprep.subr.bf16.mxu0 0
      %861 = vmatpush1.bf16.msra.mxu0 0
      %862 = vmatprep.subr.bf16.mxu0 %v854
      %863 = vmatpush1.bf16.msra.mxu0 %v851
      %864 = vmatprep.subr.bf16.mxu0 %v836
      %865 = vmatpush1.bf16.msra.mxu0 %v835
      %866 = vmatprep.subr.bf16.mxu0 %v834
      %867 = vmatpush1.bf16.msra.mxu0 %v833
      %868 = vmatprep.subr.bf16.mxu0 %v832
      %869 = vmatpush1.bf16.msra.mxu0 %v831
      %870 = vmatprep.subr.bf16.mxu0 %v830
      %871 = vmatpush1.bf16.msra.mxu0 %v829
      %872 = vmatprep.subr.bf16.mxu0 0
      %873 = vmatpush2.bf16.msra.mxu0 0
      %874 = vmatprep.subr.bf16.mxu0 0
      %875 = vmatpush2.bf16.msra.mxu0 0
      %876 = vmatprep.subr.bf16.mxu0 0
      %877 = vmatpush2.bf16.msra.mxu0 0
      %878 = vmatprep.subr.bf16.mxu0 0
      %879 = vmatpush2.bf16.msra.mxu0 0
      %880 = vmatprep.subr.bf16.mxu0 0
      %881 = vmatpush2.bf16.msra.mxu0 0
      %882 = vmatprep.subr.bf16.mxu0 0
      %883 = vmatpush2.bf16.msra.mxu0 0
      %884 = vmatprep.subr.bf16.mxu0 0
      %885 = vmatpush2.bf16.msra.mxu0 0
      %886 = vmatprep.subr.bf16.mxu0 0
      %887 = vmatpush2.bf16.msra.mxu0 0
      %888 = vmatprep.mubr.bf16.mxu0 0
      %889 = vmatmul.mubr.bf16.gmra.mxu0 %v848
      %v890 = vpop.f32.mrf.mxu0
      %v891 = vadd.f32 %v800, %v890
      %v892 = vpop.f32.mrf.mxu0
      %v893 = vadd.f32 %v800, %v892
      %v894 = vpop.f32.mrf.mxu0
      %v895 = vpop.f32.mrf.mxu0
      %896 = vdwg.mxu0
      %v897 = vmax.f32 %v891, 0.0
      %v898 = vmax.f32 %v893, 0.0
      %v899 = vpack.c.bf16 %v897, %v897
      %v900 = vpack.c.bf16 %v898, %v898
      %v901 = vld [vmem:[%s1 + $0x10] sm:$0xf]
      %v902 = vld [vmem:[%s1 + $0x18] sm:$0xf]
      %v903 = vld [vmem:[%s1 + $0x20] sm:$0xf]
      %v904 = vld [vmem:[%s1 + $0x28] sm:$0xf]
      %v905 = vld [vmem:[%s1 + $0x30] sm:$0xf]
      %v906 = vld [vmem:[%s1 + $0x38] sm:$0xf]
      %v907 = vld [vmem:[%s1 + $0x40] sm:$0xf]
      %v908 = vld [vmem:[%s1 + $0x48] sm:$0xf]
      %v909 = vld [vmem:[%s1 + $0x50] sm:$0xf]
      %v910 = vld [vmem:[%s1 + $0x58] sm:$0xf]
      %v911 = vld [vmem:[%s1 + $0x60] sm:$0xf]
      %v912 = vld [vmem:[%s1 + $0x68] sm:$0xf]
      %v913 = vld [vmem:[%s1 + $0x70] sm:$0xf]
      %v914 = vld [vmem:[%s1 + $0x78] sm:$0xf]
      %v915 = vld [vmem:[%s1 + $0x80] sm:$0xf]
      %v916 = vld [vmem:[%s1 + $0x88] sm:$0xf]
      %v917 = vld [vmem:[%s1 + $0x90] sm:$0xf]
      %v918 = vld [vmem:[%s1 + $0x98] sm:$0xf]
      %v919 = vld [vmem:[%s1 + $0xa0] sm:$0xf]
      %v920 = vld [vmem:[%s1 + $0xa8] sm:$0xf]
      %v921 = vld [vmem:[%s1 + $0xb0] sm:$0xf]
      %v922 = vld [vmem:[%s1 + $0xb8] sm:$0xf]
      %v923 = vld [vmem:[%s1 + $0xc0] sm:$0xf]
      %v924 = vld [vmem:[%s1 + $0xc8] sm:$0xf]
      %v925 = vld [vmem:[%s1 + $0xd0] sm:$0xf]
      %v926 = vld [vmem:[%s1 + $0xd8] sm:$0xf]
      %v927 = vld [vmem:[%s1 + $0xe0] sm:$0xf]
      %v928 = vld [vmem:[%s1 + $0xe8] sm:$0xf]
      %v929 = vld [vmem:[%s1 + $0xf0] sm:$0xf]
      %v930 = vld [vmem:[%s1 + $0xf8] sm:$0xf]
      %v931 = vld [vmem:[%s1 + $0x100] sm:$0xf]
      %v932 = vld [vmem:[%s1 + $0x108] sm:$0xf]
      %v965 = vunpack.c.l.b16 %v901
      %v966 = vunpack.c.l.b16 %v902
      %v967 = vunpack.c.l.b16 %v903
      %v968 = vunpack.c.l.b16 %v904
      %v969 = vunpack.c.l.b16 %v905
      %v970 = vunpack.c.l.b16 %v906
      %v971 = vunpack.c.l.b16 %v907
      %v972 = vunpack.c.l.b16 %v908
      %v973 = vunpack.c.l.b16 %v909
      %v974 = vunpack.c.l.b16 %v910
      %v975 = vunpack.c.l.b16 %v911
      %v976 = vunpack.c.l.b16 %v912
      %v977 = vunpack.c.l.b16 %v913
      %v978 = vunpack.c.l.b16 %v914
      %v979 = vunpack.c.l.b16 %v915
      %v980 = vunpack.c.l.b16 %v916
      %v981 = vunpack.c.l.b16 %v917
      %v982 = vunpack.c.l.b16 %v918
      %v983 = vunpack.c.l.b16 %v919
      %v984 = vunpack.c.l.b16 %v920
      %v985 = vunpack.c.l.b16 %v921
      %v986 = vunpack.c.l.b16 %v922
      %v987 = vunpack.c.l.b16 %v923
      %v988 = vunpack.c.l.b16 %v924
      %v989 = vunpack.c.l.b16 %v925
      %v990 = vunpack.c.l.b16 %v926
      %v991 = vunpack.c.l.b16 %v927
      %v992 = vunpack.c.l.b16 %v928
      %v993 = vunpack.c.l.b16 %v929
      %v994 = vunpack.c.l.b16 %v930
      %v995 = vunpack.c.l.b16 %v931
      %v996 = vunpack.c.l.b16 %v932
      %v997 = vpack.c.b16 %v966, %v965
      %v998 = vpack.c.b16 %v968, %v967
      %v999 = vpack.c.b16 %v970, %v969
      %v1000 = vpack.c.b16 %v972, %v971
      %v1001 = vpack.c.b16 %v974, %v973
      %v1002 = vpack.c.b16 %v976, %v975
      %v1003 = vpack.c.b16 %v978, %v977
      %v1004 = vpack.c.b16 %v980, %v979
      %v1005 = vpack.c.b16 %v982, %v981
      %v1006 = vpack.c.b16 %v984, %v983
      %v1007 = vpack.c.b16 %v986, %v985
      %v1008 = vpack.c.b16 %v988, %v987
      %v1009 = vpack.c.b16 %v990, %v989
      %v1010 = vpack.c.b16 %v992, %v991
      %v1011 = vpack.c.b16 %v994, %v993
      %v1012 = vpack.c.b16 %v996, %v995
      %1029 = vmatprep.subr.bf16.mxu0 0
      %1030 = vmatpush1.bf16.msra.mxu0 %v1004
      %1031 = vmatprep.subr.bf16.mxu0 0
      %1032 = vmatpush1.bf16.msra.mxu0 %v1003
      %1033 = vmatprep.subr.bf16.mxu0 0
      %1034 = vmatpush1.bf16.msra.mxu0 %v1002
      %1035 = vmatprep.subr.bf16.mxu0 0
      %1036 = vmatpush1.bf16.msra.mxu0 %v1001
      %1037 = vmatprep.subr.bf16.mxu0 0
      %1038 = vmatpush1.bf16.msra.mxu0 %v1000
      %1039 = vmatprep.subr.bf16.mxu0 0
      %1040 = vmatpush1.bf16.msra.mxu0 %v999
      %1041 = vmatprep.subr.bf16.mxu0 0
      %1042 = vmatpush1.bf16.msra.mxu0 %v998
      %1043 = vmatprep.subr.bf16.mxu0 0
      %1044 = vmatpush1.bf16.msra.mxu0 %v997
      %1045 = vmatprep.subr.bf16.mxu0 0
      %1046 = vmatpush2.bf16.msra.mxu0 %v1012
      %1047 = vmatprep.subr.bf16.mxu0 0
      %1048 = vmatpush2.bf16.msra.mxu0 %v1011
      %1049 = vmatprep.subr.bf16.mxu0 0
      %1050 = vmatpush2.bf16.msra.mxu0 %v1010
      %1051 = vmatprep.subr.bf16.mxu0 0
      %1052 = vmatpush2.bf16.msra.mxu0 %v1009
      %1053 = vmatprep.subr.bf16.mxu0 0
      %1054 = vmatpush2.bf16.msra.mxu0 %v1008
      %1055 = vmatprep.subr.bf16.mxu0 0
      %1056 = vmatpush2.bf16.msra.mxu0 %v1007
      %1057 = vmatprep.subr.bf16.mxu0 0
      %1058 = vmatpush2.bf16.msra.mxu0 %v1006
      %1059 = vmatprep.subr.bf16.mxu0 0
      %1060 = vmatpush2.bf16.msra.mxu0 %v1005
      %1061 = vmatprep.mubr.bf16.mxu0 %v900
      %1062 = vmatmul.mubr.bf16.gmra.mxu0 %v899
      %v1063 = vpop.f32.mrf.mxu0
      %v1064 = vadd.f32 0.0, %v1063
      %v1065 = vpop.f32.mrf.mxu0
      %v1066 = vpop.f32.mrf.mxu0
      %v1067 = vpop.f32.mrf.mxu0
      %1068 = vdwg.mxu0
      %v1069 = vld [vmem:[%s1 + $0x110] sm:$0xf]
      %v1070 = vld [vmem:[%s1 + $0x118] sm:$0xf]
      %v1071 = vld [vmem:[%s1 + $0x120] sm:$0xf]
      %v1072 = vld [vmem:[%s1 + $0x128] sm:$0xf]
      %v1073 = vld [vmem:[%s1 + $0x130] sm:$0xf]
      %v1074 = vld [vmem:[%s1 + $0x138] sm:$0xf]
      %v1075 = vld [vmem:[%s1 + $0x140] sm:$0xf]
      %v1076 = vld [vmem:[%s1 + $0x148] sm:$0xf]
      %v1077 = vld [vmem:[%s1 + $0x150] sm:$0xf]
      %v1078 = vld [vmem:[%s1 + $0x158] sm:$0xf]
      %v1079 = vld [vmem:[%s1 + $0x160] sm:$0xf]
      %v1080 = vld [vmem:[%s1 + $0x168] sm:$0xf]
      %v1081 = vld [vmem:[%s1 + $0x170] sm:$0xf]
      %v1082 = vld [vmem:[%s1 + $0x178] sm:$0xf]
      %v1083 = vld [vmem:[%s1 + $0x180] sm:$0xf]
      %v1084 = vld [vmem:[%s1 + $0x188] sm:$0xf]
      %v1085 = vld [vmem:[%s1 + $0x190] sm:$0xf]
      %v1086 = vld [vmem:[%s1 + $0x198] sm:$0xf]
      %v1087 = vld [vmem:[%s1 + $0x1a0] sm:$0xf]
      %v1088 = vld [vmem:[%s1 + $0x1a8] sm:$0xf]
      %v1089 = vld [vmem:[%s1 + $0x1b0] sm:$0xf]
      %v1090 = vld [vmem:[%s1 + $0x1b8] sm:$0xf]
      %v1091 = vld [vmem:[%s1 + $0x1c0] sm:$0xf]
      %v1092 = vld [vmem:[%s1 + $0x1c8] sm:$0xf]
      %v1093 = vld [vmem:[%s1 + $0x1d0] sm:$0xf]
      %v1094 = vld [vmem:[%s1 + $0x1d8] sm:$0xf]
      %v1095 = vld [vmem:[%s1 + $0x1e0] sm:$0xf]
      %v1096 = vld [vmem:[%s1 + $0x1e8] sm:$0xf]
      %v1097 = vld [vmem:[%s1 + $0x1f0] sm:$0xf]
      %v1098 = vld [vmem:[%s1 + $0x1f8] sm:$0xf]
      %v1099 = vld [vmem:[%s1 + $0x200] sm:$0xf]
      %v1100 = vld [vmem:[%s1 + $0x208] sm:$0xf]
      %v1133 = vunpack.c.l.b16 %v1069
      %v1134 = vunpack.c.l.b16 %v1070
      %v1135 = vunpack.c.l.b16 %v1071
      %v1136 = vunpack.c.l.b16 %v1072
      %v1137 = vunpack.c.l.b16 %v1073
      %v1138 = vunpack.c.l.b16 %v1074
      %v1139 = vunpack.c.l.b16 %v1075
      %v1140 = vunpack.c.l.b16 %v1076
      %v1141 = vunpack.c.l.b16 %v1077
      %v1142 = vunpack.c.l.b16 %v1078
      %v1143 = vunpack.c.l.b16 %v1079
      %v1144 = vunpack.c.l.b16 %v1080
      %v1145 = vunpack.c.l.b16 %v1081
      %v1146 = vunpack.c.l.b16 %v1082
      %v1147 = vunpack.c.l.b16 %v1083
      %v1148 = vunpack.c.l.b16 %v1084
      %v1149 = vunpack.c.l.b16 %v1085
      %v1150 = vunpack.c.l.b16 %v1086
      %v1151 = vunpack.c.l.b16 %v1087
      %v1152 = vunpack.c.l.b16 %v1088
      %v1153 = vunpack.c.l.b16 %v1089
      %v1154 = vunpack.c.l.b16 %v1090
      %v1155 = vunpack.c.l.b16 %v1091
      %v1156 = vunpack.c.l.b16 %v1092
      %v1157 = vunpack.c.l.b16 %v1093
      %v1158 = vunpack.c.l.b16 %v1094
      %v1159 = vunpack.c.l.b16 %v1095
      %v1160 = vunpack.c.l.b16 %v1096
      %v1161 = vunpack.c.l.b16 %v1097
      %v1162 = vunpack.c.l.b16 %v1098
      %v1163 = vunpack.c.l.b16 %v1099
      %v1164 = vunpack.c.l.b16 %v1100
      %v1165 = vpack.c.b16 %v1134, %v1133
      %v1166 = vpack.c.b16 %v1136, %v1135
      %v1167 = vpack.c.b16 %v1138, %v1137
      %v1168 = vpack.c.b16 %v1140, %v1139
      %v1169 = vpack.c.b16 %v1142, %v1141
      %v1170 = vpack.c.b16 %v1144, %v1143
      %v1171 = vpack.c.b16 %v1146, %v1145
      %v1172 = vpack.c.b16 %v1148, %v1147
      %v1173 = vpack.c.b16 %v1150, %v1149
      %v1174 = vpack.c.b16 %v1152, %v1151
      %v1175 = vpack.c.b16 %v1154, %v1153
      %v1176 = vpack.c.b16 %v1156, %v1155
      %v1177 = vpack.c.b16 %v1158, %v1157
      %v1178 = vpack.c.b16 %v1160, %v1159
      %v1179 = vpack.c.b16 %v1162, %v1161
      %v1180 = vpack.c.b16 %v1164, %v1163
      %1197 = vmatprep.subr.bf16.mxu0 0
      %1198 = vmatpush1.bf16.msra.mxu0 %v1172
      %1199 = vmatprep.subr.bf16.mxu0 0
      %1200 = vmatpush1.bf16.msra.mxu0 %v1171
      %1201 = vmatprep.subr.bf16.mxu0 0
      %1202 = vmatpush1.bf16.msra.mxu0 %v1170
      %1203 = vmatprep.subr.bf16.mxu0 0
      %1204 = vmatpush1.bf16.msra.mxu0 %v1169
      %1205 = vmatprep.subr.bf16.mxu0 0
      %1206 = vmatpush1.bf16.msra.mxu0 %v1168
      %1207 = vmatprep.subr.bf16.mxu0 0
      %1208 = vmatpush1.bf16.msra.mxu0 %v1167
      %1209 = vmatprep.subr.bf16.mxu0 0
      %1210 = vmatpush1.bf16.msra.mxu0 %v1166
      %1211 = vmatprep.subr.bf16.mxu0 0
      %1212 = vmatpush1.bf16.msra.mxu0 %v1165
      %1213 = vmatprep.subr.bf16.mxu0 0
      %1214 = vmatpush2.bf16.msra.mxu0 %v1180
      %1215 = vmatprep.subr.bf16.mxu0 0
      %1216 = vmatpush2.bf16.msra.mxu0 %v1179
      %1217 = vmatprep.subr.bf16.mxu0 0
      %1218 = vmatpush2.bf16.msra.mxu0 %v1178
      %1219 = vmatprep.subr.bf16.mxu0 0
      %1220 = vmatpush2.bf16.msra.mxu0 %v1177
      %1221 = vmatprep.subr.bf16.mxu0 0
      %1222 = vmatpush2.bf16.msra.mxu0 %v1176
      %1223 = vmatprep.subr.bf16.mxu0 0
      %1224 = vmatpush2.bf16.msra.mxu0 %v1175
      %1225 = vmatprep.subr.bf16.mxu0 0
      %1226 = vmatpush2.bf16.msra.mxu0 %v1174
      %1227 = vmatprep.subr.bf16.mxu0 0
      %1228 = vmatpush2.bf16.msra.mxu0 %v1173
      %1229 = vmatprep.mubr.bf16.mxu0 %v900
      %1230 = vmatmul.mubr.bf16.gmra.mxu0 %v899
      %v1231 = vpop.f32.mrf.mxu0
      %v1232 = vadd.f32 0.0, %v1231
      %v1233 = vpop.f32.mrf.mxu0
      %v1234 = vpop.f32.mrf.mxu0
      %v1235 = vpop.f32.mrf.mxu0
      %1236 = vdwg.mxu0
      %v1237 = vmax.f32 %v1064, %v1232
      %v1238 = vld [vmem:[%s1 + $0x210] sm:$0xf]
      %v1239 = vld [vmem:[%s1 + $0x218] sm:$0xf]
      %v1240 = vld [vmem:[%s1 + $0x220] sm:$0xf]
      %v1241 = vld [vmem:[%s1 + $0x228] sm:$0xf]
      %v1242 = vld [vmem:[%s1 + $0x230] sm:$0xf]
      %v1243 = vld [vmem:[%s1 + $0x238] sm:$0xf]
      %v1244 = vld [vmem:[%s1 + $0x240] sm:$0xf]
      %v1245 = vld [vmem:[%s1 + $0x248] sm:$0xf]
      %v1246 = vld [vmem:[%s1 + $0x250] sm:$0xf]
      %v1247 = vld [vmem:[%s1 + $0x258] sm:$0xf]
      %v1248 = vld [vmem:[%s1 + $0x260] sm:$0xf]
      %v1249 = vld [vmem:[%s1 + $0x268] sm:$0xf]
      %v1250 = vld [vmem:[%s1 + $0x270] sm:$0xf]
      %v1251 = vld [vmem:[%s1 + $0x278] sm:$0xf]
      %v1252 = vld [vmem:[%s1 + $0x280] sm:$0xf]
      %v1253 = vld [vmem:[%s1 + $0x288] sm:$0xf]
      %v1254 = vld [vmem:[%s1 + $0x290] sm:$0xf]
      %v1255 = vld [vmem:[%s1 + $0x298] sm:$0xf]
      %v1256 = vld [vmem:[%s1 + $0x2a0] sm:$0xf]
      %v1257 = vld [vmem:[%s1 + $0x2a8] sm:$0xf]
      %v1258 = vld [vmem:[%s1 + $0x2b0] sm:$0xf]
      %v1259 = vld [vmem:[%s1 + $0x2b8] sm:$0xf]
      %v1260 = vld [vmem:[%s1 + $0x2c0] sm:$0xf]
      %v1261 = vld [vmem:[%s1 + $0x2c8] sm:$0xf]
      %v1262 = vld [vmem:[%s1 + $0x2d0] sm:$0xf]
      %v1263 = vld [vmem:[%s1 + $0x2d8] sm:$0xf]
      %v1264 = vld [vmem:[%s1 + $0x2e0] sm:$0xf]
      %v1265 = vld [vmem:[%s1 + $0x2e8] sm:$0xf]
      %v1266 = vld [vmem:[%s1 + $0x2f0] sm:$0xf]
      %v1267 = vld [vmem:[%s1 + $0x2f8] sm:$0xf]
      %v1268 = vld [vmem:[%s1 + $0x300] sm:$0xf]
      %v1269 = vld [vmem:[%s1 + $0x308] sm:$0xf]
      %v1302 = vunpack.c.l.b16 %v1238
      %v1303 = vunpack.c.l.b16 %v1239
      %v1304 = vunpack.c.l.b16 %v1240
      %v1305 = vunpack.c.l.b16 %v1241
      %v1306 = vunpack.c.l.b16 %v1242
      %v1307 = vunpack.c.l.b16 %v1243
      %v1308 = vunpack.c.l.b16 %v1244
      %v1309 = vunpack.c.l.b16 %v1245
      %v1310 = vunpack.c.l.b16 %v1246
      %v1311 = vunpack.c.l.b16 %v1247
      %v1312 = vunpack.c.l.b16 %v1248
      %v1313 = vunpack.c.l.b16 %v1249
      %v1314 = vunpack.c.l.b16 %v1250
      %v1315 = vunpack.c.l.b16 %v1251
      %v1316 = vunpack.c.l.b16 %v1252
      %v1317 = vunpack.c.l.b16 %v1253
      %v1318 = vunpack.c.l.b16 %v1254
      %v1319 = vunpack.c.l.b16 %v1255
      %v1320 = vunpack.c.l.b16 %v1256
      %v1321 = vunpack.c.l.b16 %v1257
      %v1322 = vunpack.c.l.b16 %v1258
      %v1323 = vunpack.c.l.b16 %v1259
      %v1324 = vunpack.c.l.b16 %v1260
      %v1325 = vunpack.c.l.b16 %v1261
      %v1326 = vunpack.c.l.b16 %v1262
      %v1327 = vunpack.c.l.b16 %v1263
      %v1328 = vunpack.c.l.b16 %v1264
      %v1329 = vunpack.c.l.b16 %v1265
      %v1330 = vunpack.c.l.b16 %v1266
      %v1331 = vunpack.c.l.b16 %v1267
      %v1332 = vunpack.c.l.b16 %v1268
      %v1333 = vunpack.c.l.b16 %v1269
      %v1334 = vpack.c.b16 %v1303, %v1302
      %v1335 = vpack.c.b16 %v1305, %v1304
      %v1336 = vpack.c.b16 %v1307, %v1306
      %v1337 = vpack.c.b16 %v1309, %v1308
      %v1338 = vpack.c.b16 %v1311, %v1310
      %v1339 = vpack.c.b16 %v1313, %v1312
      %v1340 = vpack.c.b16 %v1315, %v1314
      %v1341 = vpack.c.b16 %v1317, %v1316
      %v1342 = vpack.c.b16 %v1319, %v1318
      %v1343 = vpack.c.b16 %v1321, %v1320
      %v1344 = vpack.c.b16 %v1323, %v1322
      %v1345 = vpack.c.b16 %v1325, %v1324
      %v1346 = vpack.c.b16 %v1327, %v1326
      %v1347 = vpack.c.b16 %v1329, %v1328
      %v1348 = vpack.c.b16 %v1331, %v1330
      %v1349 = vpack.c.b16 %v1333, %v1332
      %1366 = vmatprep.subr.bf16.mxu0 0
      %1367 = vmatpush1.bf16.msra.mxu0 %v1341
      %1368 = vmatprep.subr.bf16.mxu0 0
      %1369 = vmatpush1.bf16.msra.mxu0 %v1340
      %1370 = vmatprep.subr.bf16.mxu0 0
      %1371 = vmatpush1.bf16.msra.mxu0 %v1339
      %1372 = vmatprep.subr.bf16.mxu0 0
      %1373 = vmatpush1.bf16.msra.mxu0 %v1338
      %1374 = vmatprep.subr.bf16.mxu0 0
      %1375 = vmatpush1.bf16.msra.mxu0 %v1337
      %1376 = vmatprep.subr.bf16.mxu0 0
      %1377 = vmatpush1.bf16.msra.mxu0 %v1336
      %1378 = vmatprep.subr.bf16.mxu0 0
      %1379 = vmatpush1.bf16.msra.mxu0 %v1335
      %1380 = vmatprep.subr.bf16.mxu0 0
      %1381 = vmatpush1.bf16.msra.mxu0 %v1334
      %1382 = vmatprep.subr.bf16.mxu0 0
      %1383 = vmatpush2.bf16.msra.mxu0 %v1349
      %1384 = vmatprep.subr.bf16.mxu0 0
      %1385 = vmatpush2.bf16.msra.mxu0 %v1348
      %1386 = vmatprep.subr.bf16.mxu0 0
      %1387 = vmatpush2.bf16.msra.mxu0 %v1347
      %1388 = vmatprep.subr.bf16.mxu0 0
      %1389 = vmatpush2.bf16.msra.mxu0 %v1346
      %1390 = vmatprep.subr.bf16.mxu0 0
      %1391 = vmatpush2.bf16.msra.mxu0 %v1345
      %1392 = vmatprep.subr.bf16.mxu0 0
      %1393 = vmatpush2.bf16.msra.mxu0 %v1344
      %1394 = vmatprep.subr.bf16.mxu0 0
      %1395 = vmatpush2.bf16.msra.mxu0 %v1343
      %1396 = vmatprep.subr.bf16.mxu0 0
      %1397 = vmatpush2.bf16.msra.mxu0 %v1342
      %1398 = vmatprep.mubr.bf16.mxu0 %v900
      %1399 = vmatmul.mubr.bf16.gmra.mxu0 %v899
      %v1400 = vpop.f32.mrf.mxu0
      %v1401 = vadd.f32 0.0, %v1400
      %v1402 = vpop.f32.mrf.mxu0
      %v1403 = vpop.f32.mrf.mxu0
      %v1404 = vpop.f32.mrf.mxu0
      %1405 = vdwg.mxu0
      %v1406 = vmax.f32 %v1237, %v1401
      %v1407 = vld [vmem:[%s1 + $0x310] sm:$0xf]
      %v1408 = vld [vmem:[%s1 + $0x318] sm:$0xf]
      %v1409 = vld [vmem:[%s1 + $0x320] sm:$0xf]
      %v1410 = vld [vmem:[%s1 + $0x328] sm:$0xf]
      %v1411 = vld [vmem:[%s1 + $0x330] sm:$0xf]
      %v1412 = vld [vmem:[%s1 + $0x338] sm:$0xf]
      %v1413 = vld [vmem:[%s1 + $0x340] sm:$0xf]
      %v1414 = vld [vmem:[%s1 + $0x348] sm:$0xf]
      %v1415 = vld [vmem:[%s1 + $0x350] sm:$0xf]
      %v1416 = vld [vmem:[%s1 + $0x358] sm:$0xf]
      %v1417 = vld [vmem:[%s1 + $0x360] sm:$0xf]
      %v1418 = vld [vmem:[%s1 + $0x368] sm:$0xf]
      %v1419 = vld [vmem:[%s1 + $0x370] sm:$0xf]
      %v1420 = vld [vmem:[%s1 + $0x378] sm:$0xf]
      %v1421 = vld [vmem:[%s1 + $0x380] sm:$0xf]
      %v1422 = vld [vmem:[%s1 + $0x388] sm:$0xf]
      %v1423 = vld [vmem:[%s1 + $0x390] sm:$0xf]
      %v1424 = vld [vmem:[%s1 + $0x398] sm:$0xf]
      %v1425 = vld [vmem:[%s1 + $0x3a0] sm:$0xf]
      %v1426 = vld [vmem:[%s1 + $0x3a8] sm:$0xf]
      %v1427 = vld [vmem:[%s1 + $0x3b0] sm:$0xf]
      %v1428 = vld [vmem:[%s1 + $0x3b8] sm:$0xf]
      %v1429 = vld [vmem:[%s1 + $0x3c0] sm:$0xf]
      %v1430 = vld [vmem:[%s1 + $0x3c8] sm:$0xf]
      %v1431 = vld [vmem:[%s1 + $0x3d0] sm:$0xf]
      %v1432 = vld [vmem:[%s1 + $0x3d8] sm:$0xf]
      %v1433 = vld [vmem:[%s1 + $0x3e0] sm:$0xf]
      %v1434 = vld [vmem:[%s1 + $0x3e8] sm:$0xf]
      %v1435 = vld [vmem:[%s1 + $0x3f0] sm:$0xf]
      %v1436 = vld [vmem:[%s1 + $0x3f8] sm:$0xf]
      %v1437 = vld [vmem:[%s1 + $0x400] sm:$0xf]
      %v1438 = vld [vmem:[%s1 + $0x408] sm:$0xf]
      %v1471 = vunpack.c.l.b16 %v1407
      %v1472 = vunpack.c.l.b16 %v1408
      %v1473 = vunpack.c.l.b16 %v1409
      %v1474 = vunpack.c.l.b16 %v1410
      %v1475 = vunpack.c.l.b16 %v1411
      %v1476 = vunpack.c.l.b16 %v1412
      %v1477 = vunpack.c.l.b16 %v1413
      %v1478 = vunpack.c.l.b16 %v1414
      %v1479 = vunpack.c.l.b16 %v1415
      %v1480 = vunpack.c.l.b16 %v1416
      %v1481 = vunpack.c.l.b16 %v1417
      %v1482 = vunpack.c.l.b16 %v1418
      %v1483 = vunpack.c.l.b16 %v1419
      %v1484 = vunpack.c.l.b16 %v1420
      %v1485 = vunpack.c.l.b16 %v1421
      %v1486 = vunpack.c.l.b16 %v1422
      %v1487 = vunpack.c.l.b16 %v1423
      %v1488 = vunpack.c.l.b16 %v1424
      %v1489 = vunpack.c.l.b16 %v1425
      %v1490 = vunpack.c.l.b16 %v1426
      %v1491 = vunpack.c.l.b16 %v1427
      %v1492 = vunpack.c.l.b16 %v1428
      %v1493 = vunpack.c.l.b16 %v1429
      %v1494 = vunpack.c.l.b16 %v1430
      %v1495 = vunpack.c.l.b16 %v1431
      %v1496 = vunpack.c.l.b16 %v1432
      %v1497 = vunpack.c.l.b16 %v1433
      %v1498 = vunpack.c.l.b16 %v1434
      %v1499 = vunpack.c.l.b16 %v1435
      %v1500 = vunpack.c.l.b16 %v1436
      %v1501 = vunpack.c.l.b16 %v1437
      %v1502 = vunpack.c.l.b16 %v1438
      %v1503 = vpack.c.b16 %v1472, %v1471
      %v1504 = vpack.c.b16 %v1474, %v1473
      %v1505 = vpack.c.b16 %v1476, %v1475
      %v1506 = vpack.c.b16 %v1478, %v1477
      %v1507 = vpack.c.b16 %v1480, %v1479
      %v1508 = vpack.c.b16 %v1482, %v1481
      %v1509 = vpack.c.b16 %v1484, %v1483
      %v1510 = vpack.c.b16 %v1486, %v1485
      %v1511 = vpack.c.b16 %v1488, %v1487
      %v1512 = vpack.c.b16 %v1490, %v1489
      %v1513 = vpack.c.b16 %v1492, %v1491
      %v1514 = vpack.c.b16 %v1494, %v1493
      %v1515 = vpack.c.b16 %v1496, %v1495
      %v1516 = vpack.c.b16 %v1498, %v1497
      %v1517 = vpack.c.b16 %v1500, %v1499
      %v1518 = vpack.c.b16 %v1502, %v1501
      %1535 = vmatprep.subr.bf16.mxu0 0
      %1536 = vmatpush1.bf16.msra.mxu0 %v1510
      %1537 = vmatprep.subr.bf16.mxu0 0
      %1538 = vmatpush1.bf16.msra.mxu0 %v1509
      %1539 = vmatprep.subr.bf16.mxu0 0
      %1540 = vmatpush1.bf16.msra.mxu0 %v1508
      %1541 = vmatprep.subr.bf16.mxu0 0
      %1542 = vmatpush1.bf16.msra.mxu0 %v1507
      %1543 = vmatprep.subr.bf16.mxu0 0
      %1544 = vmatpush1.bf16.msra.mxu0 %v1506
      %1545 = vmatprep.subr.bf16.mxu0 0
      %1546 = vmatpush1.bf16.msra.mxu0 %v1505
      %1547 = vmatprep.subr.bf16.mxu0 0
      %1548 = vmatpush1.bf16.msra.mxu0 %v1504
      %1549 = vmatprep.subr.bf16.mxu0 0
      %1550 = vmatpush1.bf16.msra.mxu0 %v1503
      %1551 = vmatprep.subr.bf16.mxu0 0
      %1552 = vmatpush2.bf16.msra.mxu0 %v1518
      %1553 = vmatprep.subr.bf16.mxu0 0
      %1554 = vmatpush2.bf16.msra.mxu0 %v1517
      %1555 = vmatprep.subr.bf16.mxu0 0
      %1556 = vmatpush2.bf16.msra.mxu0 %v1516
      %1557 = vmatprep.subr.bf16.mxu0 0
      %1558 = vmatpush2.bf16.msra.mxu0 %v1515
      %1559 = vmatprep.subr.bf16.mxu0 0
      %1560 = vmatpush2.bf16.msra.mxu0 %v1514
      %1561 = vmatprep.subr.bf16.mxu0 0
      %1562 = vmatpush2.bf16.msra.mxu0 %v1513
      %1563 = vmatprep.subr.bf16.mxu0 0
      %1564 = vmatpush2.bf16.msra.mxu0 %v1512
      %1565 = vmatprep.subr.bf16.mxu0 0
      %1566 = vmatpush2.bf16.msra.mxu0 %v1511
      %1567 = vmatprep.mubr.bf16.mxu0 %v900
      %1568 = vmatmul.mubr.bf16.gmra.mxu0 %v899
      %v1569 = vpop.f32.mrf.mxu0
      %v1570 = vadd.f32 0.0, %v1569
      %v1571 = vpop.f32.mrf.mxu0
      %v1572 = vpop.f32.mrf.mxu0
      %v1573 = vpop.f32.mrf.mxu0
      %1574 = vdwg.mxu0
      %v1575 = vmax.f32 %v1406, %v1570
      %v1576 = vld [vmem:[%s1 + $0x410] sm:$0xf]
      %v1577 = vld [vmem:[%s1 + $0x418] sm:$0xf]
      %v1578 = vld [vmem:[%s2 + $0x10] sm:$0xff]
      %v1579 = vld [vmem:[%s2 + $0x18] sm:$0xff]
      %vm1580 = vcmask 1048504
      %1581 = vst.msk [vmem:[#allocation2] sm:$0xff] %vm1580, 0.0
      %vm1582 = vcmask 597504
      %1583 = vst.msk [vmem:[#allocation2 + $0x8] sm:$0xff] %vm1582, 0.0
      %vm1584 = vcmask 523264
      %1585 = vst.msk [vmem:[#allocation2 + $0x8] sm:$0xff] %vm1584, %v1575
      %vm1586 = vcmp.lt.s32.totalorder %v183, 0
      %v1587 = vsub.s32 0, %v183
      %v1588 = vsel %vm1586, %v1587, %v183
      %v1589 = vshrl.u32 %v1588, 3
      %v1590 = vand.u32 %v1588, 7
      %v1591 = vsub.s32 0, %v1590
      %v1592 = vsel %vm1586, %v1591, %v1590
      %vm1593 = vcmp.ne.s32.totalorder %v1592, 0
      %vm1594 = vcmp.lt.s32.totalorder %v1592, 0
      %vm1595 = vmand %vm1594, %vm1593
      %v1596 = vadd.s32 %v1592, 8
      %v1597 = vsel %vm1595, %v1596, %v1592
      %vm1598 = vcmp.ge.s32.totalorder %v1597, 1
      %vm1599 = vcmp.le.s32.totalorder %v1597, 6
      %v1600 = vld [vmem:[#allocation2] sm:$0xff]
      %v1601 = vld [vmem:[#allocation2 + $0x8] sm:$0xff]
      %v1602 = vsel %vm1598, 1, 0
      %vm1603 = vcmp.eq.s32.totalorder %v1602, 1
      %1606 = vrot.lane.b32.xlu0 %v1600, 9
      %v1607 = vpop.permute.xlu0 %1606
      %1608 = vrot.lane.b32.xlu0 %v1601, 9
      %v1609 = vpop.permute.xlu0 %1608
      %vm1610 = vcmask 72704
      %v1611 = vsel %vm1610, %v1607, %v1609
      %v1613 = vsel %vm1603, %v1611, 0.0
      %v1614 = vpack.c.bf16 %v1613, %v1613
      %vm1615 = vcmask 519168
      %1616 = vst.msk [vmem:[#allocation3] sm:$0xf] %vm1615, %v1614
      %v1617 = vld [vmem:[#allocation2] sm:$0xff]
      %v1618 = vld [vmem:[#allocation2 + $0x8] sm:$0xff]
      %v1619 = vpack.c.bf16 %v1617, %v1617
      %v1620 = vpack.c.bf16 %v1618, %v1618
      %v1623 = vunpack.c.l.b16 %v1619
      %v1624 = vunpack.c.l.b16 %v1620
      %v1625 = vpack.c.b16 %v1624, %v1623
      %1626 = vrot.lane.b32.xlu0 %v1625, 8
      %v1627 = vpop.permute.xlu0 %1626
      %v1628 = vrot.slane %v1627, 4
      %vm1629 = vcmask 64512
      %v1630 = vsel %vm1629, %v1627, %v1628
      %1632 = vst.msk [vmem:[#allocation3 + $0x8] sm:$0xf] %vm1615, %v1630
      %v1633 = vld [vmem:[#allocation2] sm:$0xff]
      %v1634 = vld [vmem:[#allocation2 + $0x8] sm:$0xff]
      %v1635 = vsel %vm1599, 1, 0
      %vm1636 = vcmp.eq.s32.totalorder %v1635, 1
      %1639 = vrot.lane.b32.xlu0 %v1633, 7
      %v1640 = vpop.permute.xlu0 %1639
      %1641 = vrot.lane.b32.xlu0 %v1634, 7
      %v1642 = vpop.permute.xlu0 %1641
      %vm1643 = vcmask 56320
      %v1644 = vsel %vm1643, %v1640, %v1642
      %v1646 = vsel %vm1636, %v1644, 0.0
      %v1647 = vpack.c.bf16 %v1646, %v1646
      %1648 = vst.msk [vmem:[#allocation3 + $0x10] sm:$0xf] %vm1615, %v1647
      %v1649 = vld [vmem:[#allocation2] sm:$0xff]
      %v1650 = vld [vmem:[#allocation2 + $0x8] sm:$0xff]
      %1653 = vrot.lane.b32.xlu0 %v1649, 1
      %v1654 = vpop.permute.xlu0 %1653
      %1655 = vrot.lane.b32.xlu0 %v1650, 1
      %v1656 = vpop.permute.xlu0 %1655
      %v1657 = vsel %vm314, %v1654, %v1656
      %v1659 = vsel %vm1603, %v1657, 0.0
      %v1660 = vpack.c.bf16 %v1659, %v1659
      %1661 = vst.msk [vmem:[#allocation3 + $0x18] sm:$0xf] %vm1615, %v1660
      %v1662 = vld [vmem:[#allocation2 + $0x8] sm:$0xff]
      %v1663 = vpack.c.bf16 %v1662, %v1662
      %1664 = vst.msk [vmem:[#allocation3 + $0x20] sm:$0xf] %vm1615, %v1663
      %v1665 = vld [vmem:[#allocation2 + $0x8] sm:$0xff]
      %1667 = vrot.lane.b32.xlu0 %v1665, 127
      %v1668 = vpop.permute.xlu0 %1667
      %v1670 = vsel %vm1636, %v1668, 0.0
      %v1671 = vpack.c.bf16 %v1670, %v1670
      %1672 = vst.msk [vmem:[#allocation3 + $0x28] sm:$0xf] %vm1615, %v1671
      %v1673 = vld [vmem:[#allocation2 + $0x8] sm:$0xff]
      %1675 = vrot.lane.b32.xlu0 %v1673, 121
      %v1676 = vpop.permute.xlu0 %1675
      %v1678 = vsel %vm1603, %v1676, 0.0
      %v1679 = vpack.c.bf16 %v1678, %v1678
      %1680 = vst.msk [vmem:[#allocation3 + $0x30] sm:$0xf] %vm1615, %v1679
      %v1681 = vld [vmem:[#allocation2 + $0x8] sm:$0xff]
      %v1682 = vpack.c.bf16 %v1681, %v1681
      %v1684 = vunpack.c.l.b16 %v1682
      %v1685 = vpack.c.b16 %v1684, %v1684
      %1686 = vrot.lane.b32.xlu0 %v1685, 120
      %v1687 = vpop.permute.xlu0 %1686
      %1689 = vst.msk [vmem:[#allocation3 + $0x38] sm:$0xf] %vm1615, %v1687
      %v1690 = vld [vmem:[#allocation2 + $0x8] sm:$0xff]
      %1692 = vrot.lane.b32.xlu0 %v1690, 119
      %v1693 = vpop.permute.xlu0 %1692
      %v1695 = vsel %vm1636, %v1693, 0.0
      %v1696 = vpack.c.bf16 %v1695, %v1695
      %1697 = vst.msk [vmem:[#allocation3 + $0x40] sm:$0xf] %vm1615, %v1696
      %v1698 = vld [vmem:[#allocation3] sm:$0xf]
      %v1699 = vld [vmem:[#allocation3 + $0x8] sm:$0xf]
      %v1700 = vld [vmem:[#allocation3 + $0x10] sm:$0xf]
      %v1701 = vld [vmem:[#allocation3 + $0x18] sm:$0xf]
      %v1702 = vld [vmem:[#allocation3 + $0x20] sm:$0xf]
      %v1703 = vld [vmem:[#allocation3 + $0x28] sm:$0xf]
      %v1704 = vld [vmem:[#allocation3 + $0x30] sm:$0xf]
      %v1705 = vld [vmem:[#allocation3 + $0x38] sm:$0xf]
      %v1706 = vld [vmem:[#allocation3 + $0x40] sm:$0xf]
      %1708 = vset.pattern.permute.xlu0 0
      %1709 = vperm.xlu0 %1708, %v1578
      %v1710 = vpop.permute.xlu0 %1709
      %1713 = vset.pattern.permute.xlu0 0
      %1714 = vperm.xlu0 %1713, %v1579
      %v1715 = vpop.permute.xlu0 %1714
      %v1719 = vunpack.c.l.b16 %v1576
      %v1720 = vunpack.c.l.b16 %v1577
      %v1721 = vpack.c.b16 %v1720, %v1719
      %v1731 = vunpack.c.l.b16 %v1698
      %v1732 = vunpack.c.l.b16 %v1699
      %v1733 = vunpack.c.l.b16 %v1700
      %v1734 = vunpack.c.l.b16 %v1701
      %v1735 = vunpack.c.l.b16 %v1702
      %v1736 = vunpack.c.l.b16 %v1703
      %v1737 = vunpack.c.l.b16 %v1704
      %v1738 = vunpack.c.l.b16 %v1705
      %v1739 = vunpack.c.l.b16 %v1706
      %v1740 = vpack.c.b16 %v1732, %v1731
      %v1741 = vpack.c.b16 %v1734, %v1733
      %v1742 = vpack.c.b16 %v1736, %v1735
      %v1743 = vpack.c.b16 %v1738, %v1737
      %v1744 = vpack.c.b16 %v1739, %v1739
      %v1750 = vsel %vm509, %v1721, 0
      %v1753 = vsel %vm513, %v1744, 0
      %1755 = vmatprep.subr.bf16.mxu0 0
      %1756 = vmatpush1.bf16.msra.mxu0 0
      %1757 = vmatprep.subr.bf16.mxu0 0
      %1758 = vmatpush1.bf16.msra.mxu0 0
      %1759 = vmatprep.subr.bf16.mxu0 0
      %1760 = vmatpush1.bf16.msra.mxu0 0
      %1761 = vmatprep.subr.bf16.mxu0 0
      %1762 = vmatpush1.bf16.msra.mxu0 %v1753
      %1763 = vmatprep.subr.bf16.mxu0 0
      %1764 = vmatpush1.bf16.msra.mxu0 %v1743
      %1765 = vmatprep.subr.bf16.mxu0 0
      %1766 = vmatpush1.bf16.msra.mxu0 %v1742
      %1767 = vmatprep.subr.bf16.mxu0 0
      %1768 = vmatpush1.bf16.msra.mxu0 %v1741
      %1769 = vmatprep.subr.bf16.mxu0 0
      %1770 = vmatpush1.bf16.msra.mxu0 %v1740
      %1771 = vmatprep.subr.bf16.mxu0 0
      %1772 = vmatpush2.bf16.msra.mxu0 0
      %1773 = vmatprep.subr.bf16.mxu0 0
      %1774 = vmatpush2.bf16.msra.mxu0 0
      %1775 = vmatprep.subr.bf16.mxu0 0
      %1776 = vmatpush2.bf16.msra.mxu0 0
      %1777 = vmatprep.subr.bf16.mxu0 0
      %1778 = vmatpush2.bf16.msra.mxu0 0
      %1779 = vmatprep.subr.bf16.mxu0 0
      %1780 = vmatpush2.bf16.msra.mxu0 0
      %1781 = vmatprep.subr.bf16.mxu0 0
      %1782 = vmatpush2.bf16.msra.mxu0 0
      %1783 = vmatprep.subr.bf16.mxu0 0
      %1784 = vmatpush2.bf16.msra.mxu0 0
      %1785 = vmatprep.subr.bf16.mxu0 0
      %1786 = vmatpush2.bf16.msra.mxu0 0
      %1787 = vmatprep.mubr.bf16.mxu0 0
      %1788 = vmatmul.mubr.bf16.gmra.mxu0 %v1750
      %v1789 = vpop.f32.mrf.mxu0
      %v1790 = vadd.f32 %v1710, %v1789
      %v1791 = vpop.f32.mrf.mxu0
      %v1792 = vpop.f32.mrf.mxu0
      %v1793 = vadd.f32 %v1715, %v1792
      %v1794 = vpop.f32.mrf.mxu0
      %1795 = vdwg.mxu0
      %v1796 = vmax.f32 %v1790, 0.0
      %v1797 = vmax.f32 %v1793, 0.0
      %v1798 = vld [vmem:[%s1 + $0x420] sm:$0xff]
      %v1799 = vld [vmem:[%s1 + $0x428] sm:$0xff]
      %v1800 = vld [vmem:[%s2 + $0x20] sm:$0xff]
      %v1801 = vld [vmem:[%s2 + $0x28] sm:$0xff]
      %1802 = vst.msk [vmem:[#allocation2] sm:$0xff] %vm1580, 0.0
      %1803 = vst.msk [vmem:[#allocation2 + $0x20] sm:$0xff] %vm1580, 0.0
      %1804 = vst.msk [vmem:[#allocation2 + $0x8] sm:$0xff] %vm1582, 0.0
      %1805 = vst.msk [vmem:[#allocation2 + $0x28] sm:$0xff] %vm1582, 0.0
      %1806 = vst.msk [vmem:[#allocation2 + $0x8] sm:$0xff] %vm1584, %v1796
      %1807 = vst.msk [vmem:[#allocation2 + $0x28] sm:$0xff] %vm1584, %v1797
      %v1808 = vld [vmem:[#allocation2] sm:$0xff]
      %v1809 = vld [vmem:[#allocation2 + $0x8] sm:$0xff]
      %v1810 = vld [vmem:[#allocation2 + $0x20] sm:$0xff]
      %v1811 = vld [vmem:[#allocation2 + $0x28] sm:$0xff]
      %1816 = vrot.lane.b32.xlu0 %v1808, 9
      %v1817 = vpop.permute.xlu0 %1816
      %1818 = vrot.lane.b32.xlu0 %v1809, 9
      %v1819 = vpop.permute.xlu0 %1818
      %1820 = vrot.lane.b32.xlu0 %v1810, 9
      %v1821 = vpop.permute.xlu0 %1820
      %1822 = vrot.lane.b32.xlu0 %v1811, 9
      %v1823 = vpop.permute.xlu0 %1822
      %v1824 = vsel %vm1610, %v1817, %v1819
      %v1825 = vsel %vm1610, %v1821, %v1823
      %v1828 = vsel %vm1603, %v1824, 0.0
      %v1829 = vsel %vm1603, %v1825, 0.0
      %v1830 = vpack.c.bf16 %v1829, %v1828
      %v1832 = vunpack.c.l.b16 %v1830
      %v1833 = vunpack.c.h.b16 %v1830
      %v1834 = vpack.c.b16 %v1832, %v1832
      %v1835 = vpack.c.b16 %v1833, %v1833
      %1838 = vst.msk [vmem:[#allocation3] sm:$0xf] %vm1615, %v1834
      %1839 = vst.msk [vmem:[#allocation3 + $0x8] sm:$0xf] %vm1615, %v1835
      %v1840 = vld [vmem:[#allocation2] sm:$0xff]
      %v1841 = vld [vmem:[#allocation2 + $0x8] sm:$0xff]
      %v1842 = vld [vmem:[#allocation2 + $0x20] sm:$0xff]
      %v1843 = vld [vmem:[#allocation2 + $0x28] sm:$0xff]
      %v1844 = vpack.c.bf16 %v1842, %v1840
      %v1845 = vpack.c.bf16 %v1843, %v1841
      %v1848 = vunpack.c.l.b16 %v1844
      %v1849 = vunpack.c.l.b16 %v1845
      %v1850 = vunpack.c.h.b16 %v1844
      %v1851 = vunpack.c.h.b16 %v1845
      %v1852 = vpack.c.b16 %v1849, %v1848
      %v1853 = vpack.c.b16 %v1851, %v1850
      %1854 = vrot.lane.b32.xlu0 %v1852, 8
      %v1855 = vpop.permute.xlu0 %1854
      %1856 = vrot.lane.b32.xlu0 %v1853, 8
      %v1857 = vpop.permute.xlu0 %1856
      %v1858 = vrot.slane %v1855, 4
      %v1859 = vrot.slane %v1857, 4
      %v1860 = vsel %vm1629, %v1855, %v1858
      %v1861 = vsel %vm1629, %v1857, %v1859
      %1864 = vst.msk [vmem:[#allocation3 + $0x10] sm:$0xf] %vm1615, %v1860
      %1865 = vst.msk [vmem:[#allocation3 + $0x18] sm:$0xf] %vm1615, %v1861
      %v1866 = vld [vmem:[#allocation2] sm:$0xff]
      %v1867 = vld [vmem:[#allocation2 + $0x8] sm:$0xff]
      %v1868 = vld [vmem:[#allocation2 + $0x20] sm:$0xff]
      %v1869 = vld [vmem:[#allocation2 + $0x28] sm:$0xff]
      %1874 = vrot.lane.b32.xlu0 %v1866, 7
      %v1875 = vpop.permute.xlu0 %1874
      %1876 = vrot.lane.b32.xlu0 %v1867, 7
      %v1877 = vpop.permute.xlu0 %1876
      %1878 = vrot.lane.b32.xlu0 %v1868, 7
      %v1879 = vpop.permute.xlu0 %1878
      %1880 = vrot.lane.b32.xlu0 %v1869, 7
      %v1881 = vpop.permute.xlu0 %1880
      %v1882 = vsel %vm1643, %v1875, %v1877
      %v1883 = vsel %vm1643, %v1879, %v1881
      %v1886 = vsel %vm1636, %v1882, 0.0
      %v1887 = vsel %vm1636, %v1883, 0.0
      %v1888 = vpack.c.bf16 %v1887, %v1886
      %v1890 = vunpack.c.l.b16 %v1888
      %v1891 = vunpack.c.h.b16 %v1888
      %v1892 = vpack.c.b16 %v1890, %v1890
      %v1893 = vpack.c.b16 %v1891, %v1891
      %1896 = vst.msk [vmem:[#allocation3 + $0x20] sm:$0xf] %vm1615, %v1892
      %1897 = vst.msk [vmem:[#allocation3 + $0x28] sm:$0xf] %vm1615, %v1893
      %v1898 = vld [vmem:[#allocation2] sm:$0xff]
      %v1899 = vld [vmem:[#allocation2 + $0x8] sm:$0xff]
      %v1900 = vld [vmem:[#allocation2 + $0x20] sm:$0xff]
      %v1901 = vld [vmem:[#allocation2 + $0x28] sm:$0xff]
      %1906 = vrot.lane.b32.xlu0 %v1898, 1
      %v1907 = vpop.permute.xlu0 %1906
      %1908 = vrot.lane.b32.xlu0 %v1899, 1
      %v1909 = vpop.permute.xlu0 %1908
      %1910 = vrot.lane.b32.xlu0 %v1900, 1
      %v1911 = vpop.permute.xlu0 %1910
      %1912 = vrot.lane.b32.xlu0 %v1901, 1
      %v1913 = vpop.permute.xlu0 %1912
      %v1914 = vsel %vm314, %v1907, %v1909
      %v1915 = vsel %vm314, %v1911, %v1913
      %v1918 = vsel %vm1603, %v1914, 0.0
      %v1919 = vsel %vm1603, %v1915, 0.0
      %v1920 = vpack.c.bf16 %v1919, %v1918
      %v1922 = vunpack.c.l.b16 %v1920
      %v1923 = vunpack.c.h.b16 %v1920
      %v1924 = vpack.c.b16 %v1922, %v1922
      %v1925 = vpack.c.b16 %v1923, %v1923
      %1928 = vst.msk [vmem:[#allocation3 + $0x30] sm:$0xf] %vm1615, %v1924
      %1929 = vst.msk [vmem:[#allocation3 + $0x38] sm:$0xf] %vm1615, %v1925
      %v1930 = vld [vmem:[#allocation2 + $0x8] sm:$0xff]
      %v1931 = vld [vmem:[#allocation2 + $0x28] sm:$0xff]
      %v1932 = vpack.c.bf16 %v1931, %v1930
      %v1934 = vunpack.c.l.b16 %v1932
      %v1935 = vunpack.c.h.b16 %v1932
      %v1936 = vpack.c.b16 %v1934, %v1934
      %v1937 = vpack.c.b16 %v1935, %v1935
      %1940 = vst.msk [vmem:[#allocation3 + $0x40] sm:$0xf] %vm1615, %v1936
      %1941 = vst.msk [vmem:[#allocation3 + $0x48] sm:$0xf] %vm1615, %v1937
      %v1942 = vld [vmem:[#allocation2 + $0x8] sm:$0xff]
      %v1943 = vld [vmem:[#allocation2 + $0x28] sm:$0xff]
      %1946 = vrot.lane.b32.xlu0 %v1942, 127
      %v1947 = vpop.permute.xlu0 %1946
      %1948 = vrot.lane.b32.xlu0 %v1943, 127
      %v1949 = vpop.permute.xlu0 %1948
      %v1952 = vsel %vm1636, %v1947, 0.0
      %v1953 = vsel %vm1636, %v1949, 0.0
      %v1954 = vpack.c.bf16 %v1953, %v1952
      %v1956 = vunpack.c.l.b16 %v1954
      %v1957 = vunpack.c.h.b16 %v1954
      %v1958 = vpack.c.b16 %v1956, %v1956
      %v1959 = vpack.c.b16 %v1957, %v1957
      %1962 = vst.msk [vmem:[#allocation3 + $0x50] sm:$0xf] %vm1615, %v1958
      %1963 = vst.msk [vmem:[#allocation3 + $0x58] sm:$0xf] %vm1615, %v1959
      %v1964 = vld [vmem:[#allocation2 + $0x8] sm:$0xff]
      %v1965 = vld [vmem:[#allocation2 + $0x28] sm:$0xff]
      %1968 = vrot.lane.b32.xlu0 %v1964, 121
      %v1969 = vpop.permute.xlu0 %1968
      %1970 = vrot.lane.b32.xlu0 %v1965, 121
      %v1971 = vpop.permute.xlu0 %1970
      %v1974 = vsel %vm1603, %v1969, 0.0
      %v1975 = vsel %vm1603, %v1971, 0.0
      %v1976 = vpack.c.bf16 %v1975, %v1974
      %v1978 = vunpack.c.l.b16 %v1976
      %v1979 = vunpack.c.h.b16 %v1976
      %v1980 = vpack.c.b16 %v1978, %v1978
      %v1981 = vpack.c.b16 %v1979, %v1979
      %1984 = vst.msk [vmem:[#allocation3 + $0x60] sm:$0xf] %vm1615, %v1980
      %1985 = vst.msk [vmem:[#allocation3 + $0x68] sm:$0xf] %vm1615, %v1981
      %v1986 = vld [vmem:[#allocation2 + $0x8] sm:$0xff]
      %v1987 = vld [vmem:[#allocation2 + $0x28] sm:$0xff]
      %v1988 = vpack.c.bf16 %v1987, %v1986
      %v1990 = vunpack.c.l.b16 %v1988
      %v1991 = vunpack.c.h.b16 %v1988
      %v1992 = vpack.c.b16 %v1990, %v1990
      %v1993 = vpack.c.b16 %v1991, %v1991
      %1994 = vrot.lane.b32.xlu0 %v1992, 120
      %v1995 = vpop.permute.xlu0 %1994
      %1996 = vrot.lane.b32.xlu0 %v1993, 120
      %v1997 = vpop.permute.xlu0 %1996
      %2000 = vst.msk [vmem:[#allocation3 + $0x70] sm:$0xf] %vm1615, %v1995
      %2001 = vst.msk [vmem:[#allocation3 + $0x78] sm:$0xf] %vm1615, %v1997
      %v2002 = vld [vmem:[#allocation2 + $0x8] sm:$0xff]
      %v2003 = vld [vmem:[#allocation2 + $0x28] sm:$0xff]
      %2006 = vrot.lane.b32.xlu0 %v2002, 119
      %v2007 = vpop.permute.xlu0 %2006
      %2008 = vrot.lane.b32.xlu0 %v2003, 119
      %v2009 = vpop.permute.xlu0 %2008
      %v2012 = vsel %vm1636, %v2007, 0.0
      %v2013 = vsel %vm1636, %v2009, 0.0
      %v2014 = vpack.c.bf16 %v2013, %v2012
      %v2016 = vunpack.c.l.b16 %v2014
      %v2017 = vunpack.c.h.b16 %v2014
      %v2018 = vpack.c.b16 %v2016, %v2016
      %v2019 = vpack.c.b16 %v2017, %v2017
      %2022 = vst.msk [vmem:[#allocation3 + $0x80] sm:$0xf] %vm1615, %v2018
      %2023 = vst.msk [vmem:[#allocation3 + $0x88] sm:$0xf] %vm1615, %v2019
      %v2024 = vld [vmem:[#allocation3] sm:$0xf]
      %v2025 = vld [vmem:[#allocation3 + $0x8] sm:$0xf]
      %v2026 = vld [vmem:[#allocation3 + $0x10] sm:$0xf]
      %v2027 = vld [vmem:[#allocation3 + $0x18] sm:$0xf]
      %v2028 = vld [vmem:[#allocation3 + $0x20] sm:$0xf]
      %v2029 = vld [vmem:[#allocation3 + $0x28] sm:$0xf]
      %v2030 = vld [vmem:[#allocation3 + $0x30] sm:$0xf]
      %v2031 = vld [vmem:[#allocation3 + $0x38] sm:$0xf]
      %v2032 = vld [vmem:[#allocation3 + $0x40] sm:$0xf]
      %v2033 = vld [vmem:[#allocation3 + $0x48] sm:$0xf]
      %v2034 = vld [vmem:[#allocation3 + $0x50] sm:$0xf]
      %v2035 = vld [vmem:[#allocation3 + $0x58] sm:$0xf]
      %v2036 = vld [vmem:[#allocation3 + $0x60] sm:$0xf]
      %v2037 = vld [vmem:[#allocation3 + $0x68] sm:$0xf]
      %v2038 = vld [vmem:[#allocation3 + $0x70] sm:$0xf]
      %v2039 = vld [vmem:[#allocation3 + $0x78] sm:$0xf]
      %v2040 = vld [vmem:[#allocation3 + $0x80] sm:$0xf]
      %v2041 = vld [vmem:[#allocation3 + $0x88] sm:$0xf]
      %2043 = vset.pattern.permute.xlu0 0
      %2044 = vperm.xlu0 %2043, %v1800
      %v2045 = vpop.permute.xlu0 %2044
      %2048 = vset.pattern.permute.xlu0 0
      %2049 = vperm.xlu0 %2048, %v1801
      %v2050 = vpop.permute.xlu0 %2049
      %v2054 = vunpack.c.l.b16 %v1798
      %v2055 = vunpack.c.h.b16 %v1798
      %v2056 = vunpack.c.l.b16 %v1799
      %v2057 = vunpack.c.h.b16 %v1799
      %v2058 = vpack.c.b16 %v2056, %v2054
      %v2059 = vpack.c.b16 %v2057, %v2055
      %v2079 = vunpack.c.l.b16 %v2024
      %v2080 = vunpack.c.l.b16 %v2025
      %v2081 = vunpack.c.l.b16 %v2026
      %v2082 = vunpack.c.l.b16 %v2027
      %v2083 = vunpack.c.l.b16 %v2028
      %v2084 = vunpack.c.l.b16 %v2029
      %v2085 = vunpack.c.l.b16 %v2030
      %v2086 = vunpack.c.l.b16 %v2031
      %v2087 = vunpack.c.l.b16 %v2032
      %v2088 = vunpack.c.l.b16 %v2033
      %v2089 = vunpack.c.l.b16 %v2034
      %v2090 = vunpack.c.l.b16 %v2035
      %v2091 = vunpack.c.l.b16 %v2036
      %v2092 = vunpack.c.l.b16 %v2037
      %v2093 = vunpack.c.l.b16 %v2038
      %v2094 = vunpack.c.l.b16 %v2039
      %v2095 = vunpack.c.l.b16 %v2040
      %v2096 = vunpack.c.l.b16 %v2041
      %v2097 = vpack.c.b16 %v2080, %v2079
      %v2098 = vpack.c.b16 %v2082, %v2081
      %v2099 = vpack.c.b16 %v2084, %v2083
      %v2100 = vpack.c.b16 %v2086, %v2085
      %v2101 = vpack.c.b16 %v2088, %v2087
      %v2102 = vpack.c.b16 %v2090, %v2089
      %v2103 = vpack.c.b16 %v2092, %v2091
      %v2104 = vpack.c.b16 %v2094, %v2093
      %v2105 = vpack.c.b16 %v2096, %v2095
      %vm2115 = vcmask 130048
      %v2117 = vsel %vm2115, %v2059, 0
      %2119 = vmatprep.subr.bf16.mxu0 0
      %2120 = vmatpush1.bf16.msra.mxu0 %v2104
      %2121 = vmatprep.subr.bf16.mxu0 0
      %2122 = vmatpush1.bf16.msra.mxu0 %v2103
      %2123 = vmatprep.subr.bf16.mxu0 0
      %2124 = vmatpush1.bf16.msra.mxu0 %v2102
      %2125 = vmatprep.subr.bf16.mxu0 0
      %2126 = vmatpush1.bf16.msra.mxu0 %v2101
      %2127 = vmatprep.subr.bf16.mxu0 0
      %2128 = vmatpush1.bf16.msra.mxu0 %v2100
      %2129 = vmatprep.subr.bf16.mxu0 0
      %2130 = vmatpush1.bf16.msra.mxu0 %v2099
      %2131 = vmatprep.subr.bf16.mxu0 0
      %2132 = vmatpush1.bf16.msra.mxu0 %v2098
      %2133 = vmatprep.subr.bf16.mxu0 0
      %2134 = vmatpush1.bf16.msra.mxu0 %v2097
      %2135 = vmatprep.subr.bf16.mxu0 0
      %2136 = vmatpush2.bf16.msra.mxu0 0
      %2137 = vmatprep.subr.bf16.mxu0 0
      %2138 = vmatpush2.bf16.msra.mxu0 0
      %2139 = vmatprep.subr.bf16.mxu0 0
      %2140 = vmatpush2.bf16.msra.mxu0 0
      %2141 = vmatprep.subr.bf16.mxu0 0
      %2142 = vmatpush2.bf16.msra.mxu0 0
      %2143 = vmatprep.subr.bf16.mxu0 0
      %2144 = vmatpush2.bf16.msra.mxu0 0
      %2145 = vmatprep.subr.bf16.mxu0 0
      %2146 = vmatpush2.bf16.msra.mxu0 0
      %2147 = vmatprep.subr.bf16.mxu0 0
      %2148 = vmatpush2.bf16.msra.mxu0 0
      %2149 = vmatprep.subr.bf16.mxu0 0
      %2150 = vmatpush2.bf16.msra.mxu0 %v2105
      %2151 = vmatprep.mubr.bf16.mxu0 %v2117
      %2152 = vmatmul.mubr.bf16.gmra.mxu0 %v2058
      %v2153 = vpop.f32.mrf.mxu0
      %v2154 = vadd.f32 %v2045, %v2153
      %v2155 = vpop.f32.mrf.mxu0
      %v2156 = vpop.f32.mrf.mxu0
      %v2157 = vadd.f32 %v2050, %v2156
      %v2158 = vpop.f32.mrf.mxu0
      %2159 = vdwg.mxu0
      %v2160 = vmax.f32 %v2154, 0.0
      %v2161 = vmax.f32 %v2157, 0.0
      %v2162 = vpack.c.bf16 %v2161, %v2160
      %v2163 = vld [vmem:[%s1 + $0x430] sm:$0xf]
      %v2164 = vld [vmem:[%s1 + $0x438] sm:$0xf]
      %v2165 = vld [vmem:[%s1 + $0x440] sm:$0xf]
      %v2166 = vld [vmem:[%s1 + $0x448] sm:$0xf]
      %v2167 = vld [vmem:[%s1 + $0x450] sm:$0xf]
      %v2168 = vld [vmem:[%s1 + $0x458] sm:$0xf]
      %v2169 = vld [vmem:[%s1 + $0x460] sm:$0xf]
      %v2170 = vld [vmem:[%s1 + $0x468] sm:$0xf]
      %v2179 = vunpack.c.l.b16 %v2163
      %v2180 = vunpack.c.l.b16 %v2164
      %v2181 = vunpack.c.l.b16 %v2165
      %v2182 = vunpack.c.l.b16 %v2166
      %v2183 = vunpack.c.l.b16 %v2167
      %v2184 = vunpack.c.l.b16 %v2168
      %v2185 = vunpack.c.l.b16 %v2169
      %v2186 = vunpack.c.l.b16 %v2170
      %v2187 = vpack.c.b16 %v2180, %v2179
      %v2188 = vpack.c.b16 %v2182, %v2181
      %v2189 = vpack.c.b16 %v2184, %v2183
      %v2190 = vpack.c.b16 %v2186, %v2185
      %v2196 = vsel %vm1584, %v2162, 0
      %2198 = vmatprep.subr.bf16.mxu0 0
      %2199 = vmatpush1.bf16.msra.mxu0 0
      %2200 = vmatprep.subr.bf16.mxu0 0
      %2201 = vmatpush1.bf16.msra.mxu0 0
      %2202 = vmatprep.subr.bf16.mxu0 0
      %2203 = vmatpush1.bf16.msra.mxu0 0
      %2204 = vmatprep.subr.bf16.mxu0 0
      %2205 = vmatpush1.bf16.msra.mxu0 0
      %2206 = vmatprep.subr.bf16.mxu0 0
      %2207 = vmatpush1.bf16.msra.mxu0 %v2190
      %2208 = vmatprep.subr.bf16.mxu0 0
      %2209 = vmatpush1.bf16.msra.mxu0 %v2189
      %2210 = vmatprep.subr.bf16.mxu0 0
      %2211 = vmatpush1.bf16.msra.mxu0 %v2188
      %2212 = vmatprep.subr.bf16.mxu0 0
      %2213 = vmatpush1.bf16.msra.mxu0 %v2187
      %2214 = vmatprep.subr.bf16.mxu0 0
      %2215 = vmatpush2.bf16.msra.mxu0 0
      %2216 = vmatprep.subr.bf16.mxu0 0
      %2217 = vmatpush2.bf16.msra.mxu0 0
      %2218 = vmatprep.subr.bf16.mxu0 0
      %2219 = vmatpush2.bf16.msra.mxu0 0
      %2220 = vmatprep.subr.bf16.mxu0 0
      %2221 = vmatpush2.bf16.msra.mxu0 0
      %2222 = vmatprep.subr.bf16.mxu0 0
      %2223 = vmatpush2.bf16.msra.mxu0 0
      %2224 = vmatprep.subr.bf16.mxu0 0
      %2225 = vmatpush2.bf16.msra.mxu0 0
      %2226 = vmatprep.subr.bf16.mxu0 0
      %2227 = vmatpush2.bf16.msra.mxu0 0
      %2228 = vmatprep.subr.bf16.mxu0 0
      %2229 = vmatpush2.bf16.msra.mxu0 0
      %2230 = vmatprep.mubr.bf16.mxu0 0
      %2231 = vmatmul.mubr.bf16.gmra.mxu0 %v2196
      %v2232 = vpop.f32.mrf.mxu0
      %v2233 = vadd.f32 0.0, %v2232
      %v2234 = vpop.f32.mrf.mxu0
      %v2235 = vpop.f32.mrf.mxu0
      %v2236 = vadd.f32 0.0, %v2235
      %v2237 = vpop.f32.mrf.mxu0
      %2238 = vdwg.mxu0
      %v2239 = vld [vmem:[%s1 + $0x470] sm:$0xf]
      %v2240 = vld [vmem:[%s1 + $0x478] sm:$0xf]
      %v2241 = vld [vmem:[%s1 + $0x480] sm:$0xf]
      %v2242 = vld [vmem:[%s1 + $0x488] sm:$0xf]
      %v2243 = vld [vmem:[%s1 + $0x490] sm:$0xf]
      %v2244 = vld [vmem:[%s1 + $0x498] sm:$0xf]
      %v2245 = vld [vmem:[%s1 + $0x4a0] sm:$0xf]
      %v2246 = vld [vmem:[%s1 + $0x4a8] sm:$0xf]
      %v2255 = vunpack.c.l.b16 %v2239
      %v2256 = vunpack.c.l.b16 %v2240
      %v2257 = vunpack.c.l.b16 %v2241
      %v2258 = vunpack.c.l.b16 %v2242
      %v2259 = vunpack.c.l.b16 %v2243
      %v2260 = vunpack.c.l.b16 %v2244
      %v2261 = vunpack.c.l.b16 %v2245
      %v2262 = vunpack.c.l.b16 %v2246
      %v2263 = vpack.c.b16 %v2256, %v2255
      %v2264 = vpack.c.b16 %v2258, %v2257
      %v2265 = vpack.c.b16 %v2260, %v2259
      %v2266 = vpack.c.b16 %v2262, %v2261
      %2271 = vmatprep.subr.bf16.mxu0 0
      %2272 = vmatpush1.bf16.msra.mxu0 0
      %2273 = vmatprep.subr.bf16.mxu0 0
      %2274 = vmatpush1.bf16.msra.mxu0 0
      %2275 = vmatprep.subr.bf16.mxu0 0
      %2276 = vmatpush1.bf16.msra.mxu0 0
      %2277 = vmatprep.subr.bf16.mxu0 0
      %2278 = vmatpush1.bf16.msra.mxu0 0
      %2279 = vmatprep.subr.bf16.mxu0 0
      %2280 = vmatpush1.bf16.msra.mxu0 %v2266
      %2281 = vmatprep.subr.bf16.mxu0 0
      %2282 = vmatpush1.bf16.msra.mxu0 %v2265
      %2283 = vmatprep.subr.bf16.mxu0 0
      %2284 = vmatpush1.bf16.msra.mxu0 %v2264
      %2285 = vmatprep.subr.bf16.mxu0 0
      %2286 = vmatpush1.bf16.msra.mxu0 %v2263
      %2287 = vmatprep.subr.bf16.mxu0 0
      %2288 = vmatpush2.bf16.msra.mxu0 0
      %2289 = vmatprep.subr.bf16.mxu0 0
      %2290 = vmatpush2.bf16.msra.mxu0 0
      %2291 = vmatprep.subr.bf16.mxu0 0
      %2292 = vmatpush2.bf16.msra.mxu0 0
      %2293 = vmatprep.subr.bf16.mxu0 0
      %2294 = vmatpush2.bf16.msra.mxu0 0
      %2295 = vmatprep.subr.bf16.mxu0 0
      %2296 = vmatpush2.bf16.msra.mxu0 0
      %2297 = vmatprep.subr.bf16.mxu0 0
      %2298 = vmatpush2.bf16.msra.mxu0 0
      %2299 = vmatprep.subr.bf16.mxu0 0
      %2300 = vmatpush2.bf16.msra.mxu0 0
      %2301 = vmatprep.subr.bf16.mxu0 0
      %2302 = vmatpush2.bf16.msra.mxu0 0
      %2303 = vmatprep.mubr.bf16.mxu0 0
      %2304 = vmatmul.mubr.bf16.gmra.mxu0 %v2196
      %v2305 = vpop.f32.mrf.mxu0
      %v2306 = vadd.f32 0.0, %v2305
      %v2307 = vpop.f32.mrf.mxu0
      %v2308 = vpop.f32.mrf.mxu0
      %v2309 = vadd.f32 0.0, %v2308
      %v2310 = vpop.f32.mrf.mxu0
      %2311 = vdwg.mxu0
      %v2312 = vmax.f32 %v2233, %v2306
      %v2313 = vmax.f32 %v2236, %v2309
      %v2314 = vld [vmem:[%s1 + $0x4b0] sm:$0xf]
      %v2315 = vld [vmem:[%s1 + $0x4b8] sm:$0xf]
      %v2316 = vld [vmem:[%s1 + $0x4c0] sm:$0xf]
      %v2317 = vld [vmem:[%s1 + $0x4c8] sm:$0xf]
      %v2318 = vld [vmem:[%s1 + $0x4d0] sm:$0xf]
      %v2319 = vld [vmem:[%s1 + $0x4d8] sm:$0xf]
      %v2320 = vld [vmem:[%s1 + $0x4e0] sm:$0xf]
      %v2321 = vld [vmem:[%s1 + $0x4e8] sm:$0xf]
      %v2330 = vunpack.c.l.b16 %v2314
      %v2331 = vunpack.c.l.b16 %v2315
      %v2332 = vunpack.c.l.b16 %v2316
      %v2333 = vunpack.c.l.b16 %v2317
      %v2334 = vunpack.c.l.b16 %v2318
      %v2335 = vunpack.c.l.b16 %v2319
      %v2336 = vunpack.c.l.b16 %v2320
      %v2337 = vunpack.c.l.b16 %v2321
      %v2338 = vpack.c.b16 %v2331, %v2330
      %v2339 = vpack.c.b16 %v2333, %v2332
      %v2340 = vpack.c.b16 %v2335, %v2334
      %v2341 = vpack.c.b16 %v2337, %v2336
      %2346 = vmatprep.subr.bf16.mxu0 0
      %2347 = vmatpush1.bf16.msra.mxu0 0
      %2348 = vmatprep.subr.bf16.mxu0 0
      %2349 = vmatpush1.bf16.msra.mxu0 0
      %2350 = vmatprep.subr.bf16.mxu0 0
      %2351 = vmatpush1.bf16.msra.mxu0 0
      %2352 = vmatprep.subr.bf16.mxu0 0
      %2353 = vmatpush1.bf16.msra.mxu0 0
      %2354 = vmatprep.subr.bf16.mxu0 0
      %2355 = vmatpush1.bf16.msra.mxu0 %v2341
      %2356 = vmatprep.subr.bf16.mxu0 0
      %2357 = vmatpush1.bf16.msra.mxu0 %v2340
      %2358 = vmatprep.subr.bf16.mxu0 0
      %2359 = vmatpush1.bf16.msra.mxu0 %v2339
      %2360 = vmatprep.subr.bf16.mxu0 0
      %2361 = vmatpush1.bf16.msra.mxu0 %v2338
      %2362 = vmatprep.subr.bf16.mxu0 0
      %2363 = vmatpush2.bf16.msra.mxu0 0
      %2364 = vmatprep.subr.bf16.mxu0 0
      %2365 = vmatpush2.bf16.msra.mxu0 0
      %2366 = vmatprep.subr.bf16.mxu0 0
      %2367 = vmatpush2.bf16.msra.mxu0 0
      %2368 = vmatprep.subr.bf16.mxu0 0
      %2369 = vmatpush2.bf16.msra.mxu0 0
      %2370 = vmatprep.subr.bf16.mxu0 0
      %2371 = vmatpush2.bf16.msra.mxu0 0
      %2372 = vmatprep.subr.bf16.mxu0 0
      %2373 = vmatpush2.bf16.msra.mxu0 0
      %2374 = vmatprep.subr.bf16.mxu0 0
      %2375 = vmatpush2.bf16.msra.mxu0 0
      %2376 = vmatprep.subr.bf16.mxu0 0
      %2377 = vmatpush2.bf16.msra.mxu0 0
      %2378 = vmatprep.mubr.bf16.mxu0 0
      %2379 = vmatmul.mubr.bf16.gmra.mxu0 %v2196
      %v2380 = vpop.f32.mrf.mxu0
      %v2381 = vadd.f32 0.0, %v2380
      %v2382 = vpop.f32.mrf.mxu0
      %v2383 = vpop.f32.mrf.mxu0
      %v2384 = vadd.f32 0.0, %v2383
      %v2385 = vpop.f32.mrf.mxu0
      %2386 = vdwg.mxu0
      %v2387 = vmax.f32 %v2312, %v2381
      %v2388 = vmax.f32 %v2313, %v2384
      %v2389 = vld [vmem:[%s1 + $0x4f0] sm:$0xf]
      %v2390 = vld [vmem:[%s1 + $0x4f8] sm:$0xf]
      %v2391 = vld [vmem:[%s1 + $0x500] sm:$0xf]
      %v2392 = vld [vmem:[%s1 + $0x508] sm:$0xf]
      %v2393 = vld [vmem:[%s1 + $0x510] sm:$0xf]
      %v2394 = vld [vmem:[%s1 + $0x518] sm:$0xf]
      %v2395 = vld [vmem:[%s1 + $0x520] sm:$0xf]
      %v2396 = vld [vmem:[%s1 + $0x528] sm:$0xf]
      %v2405 = vunpack.c.l.b16 %v2389
      %v2406 = vunpack.c.l.b16 %v2390
      %v2407 = vunpack.c.l.b16 %v2391
      %v2408 = vunpack.c.l.b16 %v2392
      %v2409 = vunpack.c.l.b16 %v2393
      %v2410 = vunpack.c.l.b16 %v2394
      %v2411 = vunpack.c.l.b16 %v2395
      %v2412 = vunpack.c.l.b16 %v2396
      %v2413 = vpack.c.b16 %v2406, %v2405
      %v2414 = vpack.c.b16 %v2408, %v2407
      %v2415 = vpack.c.b16 %v2410, %v2409
      %v2416 = vpack.c.b16 %v2412, %v2411
      %2421 = vmatprep.subr.bf16.mxu0 0
      %2422 = vmatpush1.bf16.msra.mxu0 0
      %2423 = vmatprep.subr.bf16.mxu0 0
      %2424 = vmatpush1.bf16.msra.mxu0 0
      %2425 = vmatprep.subr.bf16.mxu0 0
      %2426 = vmatpush1.bf16.msra.mxu0 0
      %2427 = vmatprep.subr.bf16.mxu0 0
      %2428 = vmatpush1.bf16.msra.mxu0 0
      %2429 = vmatprep.subr.bf16.mxu0 0
      %2430 = vmatpush1.bf16.msra.mxu0 %v2416
      %2431 = vmatprep.subr.bf16.mxu0 0
      %2432 = vmatpush1.bf16.msra.mxu0 %v2415
      %2433 = vmatprep.subr.bf16.mxu0 0
      %2434 = vmatpush1.bf16.msra.mxu0 %v2414
      %2435 = vmatprep.subr.bf16.mxu0 0
      %2436 = vmatpush1.bf16.msra.mxu0 %v2413
      %2437 = vmatprep.subr.bf16.mxu0 0
      %2438 = vmatpush2.bf16.msra.mxu0 0
      %2439 = vmatprep.subr.bf16.mxu0 0
      %2440 = vmatpush2.bf16.msra.mxu0 0
      %2441 = vmatprep.subr.bf16.mxu0 0
      %2442 = vmatpush2.bf16.msra.mxu0 0
      %2443 = vmatprep.subr.bf16.mxu0 0
      %2444 = vmatpush2.bf16.msra.mxu0 0
      %2445 = vmatprep.subr.bf16.mxu0 0
      %2446 = vmatpush2.bf16.msra.mxu0 0
      %2447 = vmatprep.subr.bf16.mxu0 0
      %2448 = vmatpush2.bf16.msra.mxu0 0
      %2449 = vmatprep.subr.bf16.mxu0 0
      %2450 = vmatpush2.bf16.msra.mxu0 0
      %2451 = vmatprep.subr.bf16.mxu0 0
      %2452 = vmatpush2.bf16.msra.mxu0 0
      %2453 = vmatprep.mubr.bf16.mxu0 0
      %2454 = vmatmul.mubr.bf16.gmra.mxu0 %v2196
      %v2455 = vpop.f32.mrf.mxu0
      %v2456 = vadd.f32 0.0, %v2455
      %v2457 = vpop.f32.mrf.mxu0
      %v2458 = vpop.f32.mrf.mxu0
      %v2459 = vadd.f32 0.0, %v2458
      %v2460 = vpop.f32.mrf.mxu0
      %2461 = vdwg.mxu0
      %v2462 = vmax.f32 %v2387, %v2456
      %v2463 = vmax.f32 %v2388, %v2459
      %v2464 = vld [vmem:[%s1 + $0x530] sm:$0xff]
      %v2465 = vld [vmem:[%s1 + $0x538] sm:$0xff]
      %v2466 = vld [vmem:[%s1 + $0x540] sm:$0xff]
      %v2467 = vld [vmem:[%s2 + $0x30] sm:$0xff]
      %v2468 = vld [vmem:[%s2 + $0x38] sm:$0xff]
      %v2469 = vld [vmem:[%s2 + $0x40] sm:$0xff]
      %vm2470 = vcmask 1048536
      %2471 = vst.msk [vmem:[#allocation2] sm:$0xff] %vm2470, 0.0
      %2472 = vst.msk [vmem:[#allocation2 + $0x20] sm:$0xff] %vm2470, 0.0
      %vm2473 = vcmask 171136
      %2474 = vst.msk [vmem:[#allocation2 + $0x8] sm:$0xff] %vm2473, 0.0
      %2475 = vst.msk [vmem:[#allocation2 + $0x28] sm:$0xff] %vm2473, 0.0
      %2476 = vst.msk [vmem:[#allocation2 + $0x8] sm:$0xff] %vm2115, %v2462
      %2477 = vst.msk [vmem:[#allocation2 + $0x28] sm:$0xff] %vm2115, %v2463
      %vm2478 = vcmp.lt.s32.totalorder %v183, 0
      %v2479 = vsub.s32 0, %v183
      %v2480 = vsel %vm2478, %v2479, %v183
      %v2481 = vshrl.u32 %v2480, 2
      %v2482 = vand.u32 %v2480, 3
      %v2483 = vsub.s32 0, %v2482
      %v2484 = vsel %vm2478, %v2483, %v2482
      %vm2485 = vcmp.ne.s32.totalorder %v2484, 0
      %vm2486 = vcmp.lt.s32.totalorder %v2484, 0
      %vm2487 = vmand %vm2486, %vm2485
      %v2488 = vadd.s32 %v2484, 4
      %v2489 = vsel %vm2487, %v2488, %v2484
      %vm2490 = vcmp.ge.s32.totalorder %v2489, 1
      %vm2491 = vcmp.le.s32.totalorder %v2489, 2
      %v2492 = vld [vmem:[#allocation2] sm:$0xff]
      %v2493 = vld [vmem:[#allocation2 + $0x8] sm:$0xff]
      %v2494 = vld [vmem:[#allocation2 + $0x20] sm:$0xff]
      %v2495 = vld [vmem:[#allocation2 + $0x28] sm:$0xff]
      %v2496 = vsel %vm2490, 1, 0
      %vm2497 = vcmp.eq.s32.totalorder %v2496, 1
      %2502 = vrot.lane.b32.xlu0 %v2492, 5
      %v2503 = vpop.permute.xlu0 %2502
      %2504 = vrot.lane.b32.xlu0 %v2493, 5
      %v2505 = vpop.permute.xlu0 %2504
      %2506 = vrot.lane.b32.xlu0 %v2494, 5
      %v2507 = vpop.permute.xlu0 %2506
      %2508 = vrot.lane.b32.xlu0 %v2495, 5
      %v2509 = vpop.permute.xlu0 %2508
      %vm2510 = vcmask 39936
      %v2511 = vsel %vm2510, %v2503, %v2505
      %v2512 = vsel %vm2510, %v2507, %v2509
      %v2515 = vsel %vm2497, %v2511, 0.0
      %v2516 = vsel %vm2497, %v2512, 0.0
      %v2517 = vpack.c.bf16 %v2516, %v2515
      %v2519 = vunpack.c.l.b16 %v2517
      %v2520 = vunpack.c.h.b16 %v2517
      %v2521 = vpack.c.b16 %v2519, %v2519
      %v2522 = vpack.c.b16 %v2520, %v2520
      %vm2525 = vcmask 125952
      %2526 = vst.msk [vmem:[#allocation3] sm:$0xf] %vm2525, %v2521
      %2527 = vst.msk [vmem:[#allocation3 + $0x8] sm:$0xf] %vm2525, %v2522
      %v2528 = vld [vmem:[#allocation2] sm:$0xff]
      %v2529 = vld [vmem:[#allocation2 + $0x8] sm:$0xff]
      %v2530 = vld [vmem:[#allocation2 + $0x20] sm:$0xff]
      %v2531 = vld [vmem:[#allocation2 + $0x28] sm:$0xff]
      %v2532 = vpack.c.bf16 %v2530, %v2528
      %v2533 = vpack.c.bf16 %v2531, %v2529
      %v2536 = vunpack.c.l.b16 %v2532
      %v2537 = vunpack.c.l.b16 %v2533
      %v2538 = vunpack.c.h.b16 %v2532
      %v2539 = vunpack.c.h.b16 %v2533
      %v2540 = vpack.c.b16 %v2537, %v2536
      %v2541 = vpack.c.b16 %v2539, %v2538
      %2542 = vrot.lane.b32.xlu0 %v2540, 4
      %v2543 = vpop.permute.xlu0 %2542
      %2544 = vrot.lane.b32.xlu0 %v2541, 4
      %v2545 = vpop.permute.xlu0 %2544
      %v2546 = vrot.slane %v2543, 4
      %v2547 = vrot.slane %v2545, 4
      %vm2548 = vcmask 31744
      %v2549 = vsel %vm2548, %v2543, %v2546
      %v2550 = vsel %vm2548, %v2545, %v2547
      %2553 = vst.msk [vmem:[#allocation3 + $0x10] sm:$0xf] %vm2525, %v2549
      %2554 = vst.msk [vmem:[#allocation3 + $0x18] sm:$0xf] %vm2525, %v2550
      %v2555 = vld [vmem:[#allocation2] sm:$0xff]
      %v2556 = vld [vmem:[#allocation2 + $0x8] sm:$0xff]
      %v2557 = vld [vmem:[#allocation2 + $0x20] sm:$0xff]
      %v2558 = vld [vmem:[#allocation2 + $0x28] sm:$0xff]
      %v2559 = vsel %vm2491, 1, 0
      %vm2560 = vcmp.eq.s32.totalorder %v2559, 1
      %2565 = vrot.lane.b32.xlu0 %v2555, 3
      %v2566 = vpop.permute.xlu0 %2565
      %2567 = vrot.lane.b32.xlu0 %v2556, 3
      %v2568 = vpop.permute.xlu0 %2567
      %2569 = vrot.lane.b32.xlu0 %v2557, 3
      %v2570 = vpop.permute.xlu0 %2569
      %2571 = vrot.lane.b32.xlu0 %v2558, 3
      %v2572 = vpop.permute.xlu0 %2571
      %vm2573 = vcmask 23552
      %v2574 = vsel %vm2573, %v2566, %v2568
      %v2575 = vsel %vm2573, %v2570, %v2572
      %v2578 = vsel %vm2560, %v2574, 0.0
      %v2579 = vsel %vm2560, %v2575, 0.0
      %v2580 = vpack.c.bf16 %v2579, %v2578
      %v2582 = vunpack.c.l.b16 %v2580
      %v2583 = vunpack.c.h.b16 %v2580
      %v2584 = vpack.c.b16 %v2582, %v2582
      %v2585 = vpack.c.b16 %v2583, %v2583
      %2588 = vst.msk [vmem:[#allocation3 + $0x20] sm:$0xf] %vm2525, %v2584
      %2589 = vst.msk [vmem:[#allocation3 + $0x28] sm:$0xf] %vm2525, %v2585
      %v2590 = vld [vmem:[#allocation2] sm:$0xff]
      %v2591 = vld [vmem:[#allocation2 + $0x8] sm:$0xff]
      %v2592 = vld [vmem:[#allocation2 + $0x20] sm:$0xff]
      %v2593 = vld [vmem:[#allocation2 + $0x28] sm:$0xff]
      %2598 = vrot.lane.b32.xlu0 %v2590, 1
      %v2599 = vpop.permute.xlu0 %2598
      %2600 = vrot.lane.b32.xlu0 %v2591, 1
      %v2601 = vpop.permute.xlu0 %2600
      %2602 = vrot.lane.b32.xlu0 %v2592, 1
      %v2603 = vpop.permute.xlu0 %2602
      %2604 = vrot.lane.b32.xlu0 %v2593, 1
      %v2605 = vpop.permute.xlu0 %2604
      %v2606 = vsel %vm314, %v2599, %v2601
      %v2607 = vsel %vm314, %v2603, %v2605
      %v2610 = vsel %vm2497, %v2606, 0.0
      %v2611 = vsel %vm2497, %v2607, 0.0
      %v2612 = vpack.c.bf16 %v2611, %v2610
      %v2614 = vunpack.c.l.b16 %v2612
      %v2615 = vunpack.c.h.b16 %v2612
      %v2616 = vpack.c.b16 %v2614, %v2614
      %v2617 = vpack.c.b16 %v2615, %v2615
      %2620 = vst.msk [vmem:[#allocation3 + $0x30] sm:$0xf] %vm2525, %v2616
      %2621 = vst.msk [vmem:[#allocation3 + $0x38] sm:$0xf] %vm2525, %v2617
      %v2622 = vld [vmem:[#allocation2 + $0x8] sm:$0xff]
      %v2623 = vld [vmem:[#allocation2 + $0x28] sm:$0xff]
      %v2624 = vpack.c.bf16 %v2623, %v2622
      %v2626 = vunpack.c.l.b16 %v2624
      %v2627 = vunpack.c.h.b16 %v2624
      %v2628 = vpack.c.b16 %v2626, %v2626
      %v2629 = vpack.c.b16 %v2627, %v2627
      %2632 = vst.msk [vmem:[#allocation3 + $0x40] sm:$0xf] %vm2525, %v2628
      %2633 = vst.msk [vmem:[#allocation3 + $0x48] sm:$0xf] %vm2525, %v2629
      %v2634 = vld [vmem:[#allocation2 + $0x8] sm:$0xff]
      %v2635 = vld [vmem:[#allocation2 + $0x28] sm:$0xff]
      %2638 = vrot.lane.b32.xlu0 %v2634, 127
      %v2639 = vpop.permute.xlu0 %2638
      %2640 = vrot.lane.b32.xlu0 %v2635, 127
      %v2641 = vpop.permute.xlu0 %2640
      %v2644 = vsel %vm2560, %v2639, 0.0
      %v2645 = vsel %vm2560, %v2641, 0.0
      %v2646 = vpack.c.bf16 %v2645, %v2644
      %v2648 = vunpack.c.l.b16 %v2646
      %v2649 = vunpack.c.h.b16 %v2646
      %v2650 = vpack.c.b16 %v2648, %v2648
      %v2651 = vpack.c.b16 %v2649, %v2649
      %2654 = vst.msk [vmem:[#allocation3 + $0x50] sm:$0xf] %vm2525, %v2650
      %2655 = vst.msk [vmem:[#allocation3 + $0x58] sm:$0xf] %vm2525, %v2651
      %v2656 = vld [vmem:[#allocation2 + $0x8] sm:$0xff]
      %v2657 = vld [vmem:[#allocation2 + $0x28] sm:$0xff]
      %2660 = vrot.lane.b32.xlu0 %v2656, 125
      %v2661 = vpop.permute.xlu0 %2660
      %2662 = vrot.lane.b32.xlu0 %v2657, 125
      %v2663 = vpop.permute.xlu0 %2662
      %v2666 = vsel %vm2497, %v2661, 0.0
      %v2667 = vsel %vm2497, %v2663, 0.0
      %v2668 = vpack.c.bf16 %v2667, %v2666
      %v2670 = vunpack.c.l.b16 %v2668
      %v2671 = vunpack.c.h.b16 %v2668
      %v2672 = vpack.c.b16 %v2670, %v2670
      %v2673 = vpack.c.b16 %v2671, %v2671
      %2676 = vst.msk [vmem:[#allocation3 + $0x60] sm:$0xf] %vm2525, %v2672
      %2677 = vst.msk [vmem:[#allocation3 + $0x68] sm:$0xf] %vm2525, %v2673
      %v2678 = vld [vmem:[#allocation2 + $0x8] sm:$0xff]
      %v2679 = vld [vmem:[#allocation2 + $0x28] sm:$0xff]
      %v2680 = vpack.c.bf16 %v2679, %v2678
      %v2682 = vunpack.c.l.b16 %v2680
      %v2683 = vunpack.c.h.b16 %v2680
      %v2684 = vpack.c.b16 %v2682, %v2682
      %v2685 = vpack.c.b16 %v2683, %v2683
      %2686 = vrot.lane.b32.xlu0 %v2684, 124
      %v2687 = vpop.permute.xlu0 %2686
      %2688 = vrot.lane.b32.xlu0 %v2685, 124
      %v2689 = vpop.permute.xlu0 %2688
      %2692 = vst.msk [vmem:[#allocation3 + $0x70] sm:$0xf] %vm2525, %v2687
      %2693 = vst.msk [vmem:[#allocation3 + $0x78] sm:$0xf] %vm2525, %v2689
      %v2694 = vld [vmem:[#allocation2 + $0x8] sm:$0xff]
      %v2695 = vld [vmem:[#allocation2 + $0x28] sm:$0xff]
      %2698 = vrot.lane.b32.xlu0 %v2694, 123
      %v2699 = vpop.permute.xlu0 %2698
      %2700 = vrot.lane.b32.xlu0 %v2695, 123
      %v2701 = vpop.permute.xlu0 %2700
      %v2704 = vsel %vm2560, %v2699, 0.0
      %v2705 = vsel %vm2560, %v2701, 0.0
      %v2706 = vpack.c.bf16 %v2705, %v2704
      %v2708 = vunpack.c.l.b16 %v2706
      %v2709 = vunpack.c.h.b16 %v2706
      %v2710 = vpack.c.b16 %v2708, %v2708
      %v2711 = vpack.c.b16 %v2709, %v2709
      %2714 = vst.msk [vmem:[#allocation3 + $0x80] sm:$0xf] %vm2525, %v2710
      %2715 = vst.msk [vmem:[#allocation3 + $0x88] sm:$0xf] %vm2525, %v2711
      %v2716 = vld [vmem:[#allocation3] sm:$0xf]
      %v2717 = vld [vmem:[#allocation3 + $0x8] sm:$0xf]
      %v2718 = vld [vmem:[#allocation3 + $0x10] sm:$0xf]
      %v2719 = vld [vmem:[#allocation3 + $0x18] sm:$0xf]
      %v2720 = vld [vmem:[#allocation3 + $0x20] sm:$0xf]
      %v2721 = vld [vmem:[#allocation3 + $0x28] sm:$0xf]
      %v2722 = vld [vmem:[#allocation3 + $0x30] sm:$0xf]
      %v2723 = vld [vmem:[#allocation3 + $0x38] sm:$0xf]
      %v2724 = vld [vmem:[#allocation3 + $0x40] sm:$0xf]
      %v2725 = vld [vmem:[#allocation3 + $0x48] sm:$0xf]
      %v2726 = vld [vmem:[#allocation3 + $0x50] sm:$0xf]
      %v2727 = vld [vmem:[#allocation3 + $0x58] sm:$0xf]
      %v2728 = vld [vmem:[#allocation3 + $0x60] sm:$0xf]
      %v2729 = vld [vmem:[#allocation3 + $0x68] sm:$0xf]
      %v2730 = vld [vmem:[#allocation3 + $0x70] sm:$0xf]
      %v2731 = vld [vmem:[#allocation3 + $0x78] sm:$0xf]
      %v2732 = vld [vmem:[#allocation3 + $0x80] sm:$0xf]
      %v2733 = vld [vmem:[#allocation3 + $0x88] sm:$0xf]
      %2735 = vset.pattern.permute.xlu0 0
      %2736 = vperm.xlu0 %2735, %v2467
      %v2737 = vpop.permute.xlu0 %2736
      %2740 = vset.pattern.permute.xlu0 0
      %2741 = vperm.xlu0 %2740, %v2468
      %v2742 = vpop.permute.xlu0 %2741
      %2745 = vset.pattern.permute.xlu0 0
      %2746 = vperm.xlu0 %2745, %v2469
      %v2747 = vpop.permute.xlu0 %2746
      %v2752 = vunpack.c.l.b16 %v2464
      %v2753 = vunpack.c.h.b16 %v2464
      %v2754 = vunpack.c.l.b16 %v2465
      %v2755 = vunpack.c.h.b16 %v2465
      %v2756 = vunpack.c.l.b16 %v2466
      %v2757 = vunpack.c.h.b16 %v2466
      %v2758 = vpack.c.b16 %v2754, %v2752
      %v2759 = vpack.c.b16 %v2755, %v2753
      %v2760 = vpack.c.b16 %v2756, %v2756
      %v2761 = vpack.c.b16 %v2757, %v2757
      %v2782 = vunpack.c.l.b16 %v2716
      %v2783 = vunpack.c.l.b16 %v2717
      %v2784 = vunpack.c.l.b16 %v2718
      %v2785 = vunpack.c.l.b16 %v2719
      %v2786 = vunpack.c.l.b16 %v2720
      %v2787 = vunpack.c.l.b16 %v2721
      %v2788 = vunpack.c.l.b16 %v2722
      %v2789 = vunpack.c.l.b16 %v2723
      %v2790 = vunpack.c.l.b16 %v2724
      %v2791 = vunpack.c.l.b16 %v2725
      %v2792 = vunpack.c.l.b16 %v2726
      %v2793 = vunpack.c.l.b16 %v2727
      %v2794 = vunpack.c.l.b16 %v2728
      %v2795 = vunpack.c.l.b16 %v2729
      %v2796 = vunpack.c.l.b16 %v2730
      %v2797 = vunpack.c.l.b16 %v2731
      %v2798 = vunpack.c.l.b16 %v2732
      %v2799 = vunpack.c.l.b16 %v2733
      %v2800 = vpack.c.b16 %v2783, %v2782
      %v2801 = vpack.c.b16 %v2785, %v2784
      %v2802 = vpack.c.b16 %v2787, %v2786
      %v2803 = vpack.c.b16 %v2789, %v2788
      %v2804 = vpack.c.b16 %v2791, %v2790
      %v2805 = vpack.c.b16 %v2793, %v2792
      %v2806 = vpack.c.b16 %v2795, %v2794
      %v2807 = vpack.c.b16 %v2797, %v2796
      %v2808 = vpack.c.b16 %v2799, %v2798
      %v2819 = vsel %vm2115, %v2759, 0
      %v2822 = vsel %vm2115, %v2761, 0
      %2824 = vmatprep.subr.bf16.mxu0 0
      %2825 = vmatpush1.bf16.msra.mxu0 %v2807
      %2826 = vmatprep.subr.bf16.mxu0 0
      %2827 = vmatpush1.bf16.msra.mxu0 %v2806
      %2828 = vmatprep.subr.bf16.mxu0 0
      %2829 = vmatpush1.bf16.msra.mxu0 %v2805
      %2830 = vmatprep.subr.bf16.mxu0 0
      %2831 = vmatpush1.bf16.msra.mxu0 %v2804
      %2832 = vmatprep.subr.bf16.mxu0 0
      %2833 = vmatpush1.bf16.msra.mxu0 %v2803
      %2834 = vmatprep.subr.bf16.mxu0 0
      %2835 = vmatpush1.bf16.msra.mxu0 %v2802
      %2836 = vmatprep.subr.bf16.mxu0 0
      %2837 = vmatpush1.bf16.msra.mxu0 %v2801
      %2838 = vmatprep.subr.bf16.mxu0 0
      %2839 = vmatpush1.bf16.msra.mxu0 %v2800
      %2840 = vmatprep.subr.bf16.mxu0 0
      %2841 = vmatpush2.bf16.msra.mxu0 0
      %2842 = vmatprep.subr.bf16.mxu0 0
      %2843 = vmatpush2.bf16.msra.mxu0 0
      %2844 = vmatprep.subr.bf16.mxu0 0
      %2845 = vmatpush2.bf16.msra.mxu0 0
      %2846 = vmatprep.subr.bf16.mxu0 0
      %2847 = vmatpush2.bf16.msra.mxu0 0
      %2848 = vmatprep.subr.bf16.mxu0 0
      %2849 = vmatpush2.bf16.msra.mxu0 0
      %2850 = vmatprep.subr.bf16.mxu0 0
      %2851 = vmatpush2.bf16.msra.mxu0 0
      %2852 = vmatprep.subr.bf16.mxu0 0
      %2853 = vmatpush2.bf16.msra.mxu0 0
      %2854 = vmatprep.subr.bf16.mxu0 0
      %2855 = vmatpush2.bf16.msra.mxu0 %v2808
      %2856 = vmatprep.mubr.bf16.mxu0 %v2819
      %2857 = vmatmul.mubr.bf16.gmra.mxu0 %v2758
      %v2858 = vpop.f32.mrf.mxu0
      %v2859 = vadd.f32 %v2737, %v2858
      %v2860 = vpop.f32.mrf.mxu0
      %v2861 = vpop.f32.mrf.mxu0
      %v2862 = vadd.f32 %v2742, %v2861
      %v2863 = vpop.f32.mrf.mxu0
      %2864 = vmatprep.mubr.bf16.mxu0 %v2822
      %2865 = vmatmul.mubr.bf16.gmra.mxu0 %v2760
      %v2866 = vpop.f32.mrf.mxu0
      %v2867 = vadd.f32 %v2747, %v2866
      %v2868 = vpop.f32.mrf.mxu0
      %v2869 = vpop.f32.mrf.mxu0
      %v2870 = vpop.f32.mrf.mxu0
      %2871 = vdwg.mxu0
      %v2872 = vmax.f32 %v2859, 0.0
      %v2873 = vmax.f32 %v2862, 0.0
      %v2874 = vmax.f32 %v2867, 0.0
      %v2875 = vld [vmem:[%s1 + $0x548] sm:$0xff]
      %v2876 = vld [vmem:[%s1 + $0x550] sm:$0xff]
      %v2877 = vld [vmem:[%s1 + $0x558] sm:$0xff]
      %v2878 = vld [vmem:[%s2 + $0x48] sm:$0xff]
      %v2879 = vld [vmem:[%s2 + $0x50] sm:$0xff]
      %v2880 = vld [vmem:[%s2 + $0x58] sm:$0xff]
      %2881 = vst.msk [vmem:[#allocation2] sm:$0xff] %vm2470, 0.0
      %2882 = vst.msk [vmem:[#allocation2 + $0x20] sm:$0xff] %vm2470, 0.0
      %2883 = vst.msk [vmem:[#allocation2 + $0x40] sm:$0xff] %vm2470, 0.0
      %2884 = vst.msk [vmem:[#allocation2 + $0x8] sm:$0xff] %vm2473, 0.0
      %2885 = vst.msk [vmem:[#allocation2 + $0x28] sm:$0xff] %vm2473, 0.0
      %2886 = vst.msk [vmem:[#allocation2 + $0x48] sm:$0xff] %vm2473, 0.0
      %2887 = vst.msk [vmem:[#allocation2 + $0x8] sm:$0xff] %vm2115, %v2872
      %2888 = vst.msk [vmem:[#allocation2 + $0x28] sm:$0xff] %vm2115, %v2873
      %2889 = vst.msk [vmem:[#allocation2 + $0x48] sm:$0xff] %vm2115, %v2874
      %v2890 = vld [vmem:[#allocation2] sm:$0xff]
      %v2891 = vld [vmem:[#allocation2 + $0x8] sm:$0xff]
      %v2892 = vld [vmem:[#allocation2 + $0x20] sm:$0xff]
      %v2893 = vld [vmem:[#allocation2 + $0x28] sm:$0xff]
      %v2894 = vld [vmem:[#allocation2 + $0x40] sm:$0xff]
      %v2895 = vld [vmem:[#allocation2 + $0x48] sm:$0xff]
      %2902 = vrot.lane.b32.xlu0 %v2890, 5
      %v2903 = vpop.permute.xlu0 %2902
      %2904 = vrot.lane.b32.xlu0 %v2891, 5
      %v2905 = vpop.permute.xlu0 %2904
      %2906 = vrot.lane.b32.xlu0 %v2892, 5
      %v2907 = vpop.permute.xlu0 %2906
      %2908 = vrot.lane.b32.xlu0 %v2893, 5
      %v2909 = vpop.permute.xlu0 %2908
      %2910 = vrot.lane.b32.xlu0 %v2894, 5
      %v2911 = vpop.permute.xlu0 %2910
      %2912 = vrot.lane.b32.xlu0 %v2895, 5
      %v2913 = vpop.permute.xlu0 %2912
      %v2914 = vsel %vm2510, %v2903, %v2905
      %v2915 = vsel %vm2510, %v2907, %v2909
      %v2916 = vsel %vm2510, %v2911, %v2913
      %v2920 = vsel %vm2497, %v2914, 0.0
      %v2921 = vsel %vm2497, %v2915, 0.0
      %v2922 = vsel %vm2497, %v2916, 0.0
      %v2923 = vpack.c.bf16 %v2921, %v2920
      %v2924 = vpack.c.bf16 %v2922, %v2922
      %v2927 = vunpack.c.l.b16 %v2923
      %v2928 = vunpack.c.h.b16 %v2923
      %v2929 = vunpack.c.l.b16 %v2924
      %v2930 = vpack.c.b16 %v2927, %v2927
      %v2931 = vpack.c.b16 %v2928, %v2928
      %v2932 = vpack.c.b16 %v2929, %v2929
      %2936 = vst.msk [vmem:[#allocation3] sm:$0xf] %vm2525, %v2930
      %2937 = vst.msk [vmem:[#allocation3 + $0x8] sm:$0xf] %vm2525, %v2931
      %2938 = vst.msk [vmem:[#allocation3 + $0x10] sm:$0xf] %vm2525, %v2932
      %v2939 = vld [vmem:[#allocation2] sm:$0xff]
      %v2940 = vld [vmem:[#allocation2 + $0x8] sm:$0xff]
      %v2941 = vld [vmem:[#allocation2 + $0x20] sm:$0xff]
      %v2942 = vld [vmem:[#allocation2 + $0x28] sm:$0xff]
      %v2943 = vld [vmem:[#allocation2 + $0x40] sm:$0xff]
      %v2944 = vld [vmem:[#allocation2 + $0x48] sm:$0xff]
      %v2945 = vpack.c.bf16 %v2941, %v2939
      %v2946 = vpack.c.bf16 %v2942, %v2940
      %v2947 = vpack.c.bf16 %v2943, %v2943
      %v2948 = vpack.c.bf16 %v2944, %v2944
      %v2953 = vunpack.c.l.b16 %v2945
      %v2954 = vunpack.c.l.b16 %v2946
      %v2955 = vunpack.c.h.b16 %v2945
      %v2956 = vunpack.c.h.b16 %v2946
      %v2957 = vunpack.c.l.b16 %v2947
      %v2958 = vunpack.c.l.b16 %v2948
      %v2959 = vpack.c.b16 %v2954, %v2953
      %v2960 = vpack.c.b16 %v2956, %v2955
      %v2961 = vpack.c.b16 %v2958, %v2957
      %2962 = vrot.lane.b32.xlu0 %v2959, 4
      %v2963 = vpop.permute.xlu0 %2962
      %2964 = vrot.lane.b32.xlu0 %v2960, 4
      %v2965 = vpop.permute.xlu0 %2964
      %2966 = vrot.lane.b32.xlu0 %v2961, 4
      %v2967 = vpop.permute.xlu0 %2966
      %v2968 = vrot.slane %v2963, 4
      %v2969 = vrot.slane %v2965, 4
      %v2970 = vrot.slane %v2967, 4
      %v2971 = vsel %vm2548, %v2963, %v2968
      %v2972 = vsel %vm2548, %v2965, %v2969
      %v2973 = vsel %vm2548, %v2967, %v2970
      %2977 = vst.msk [vmem:[#allocation3 + $0x18] sm:$0xf] %vm2525, %v2971
      %2978 = vst.msk [vmem:[#allocation3 + $0x20] sm:$0xf] %vm2525, %v2972
      %2979 = vst.msk [vmem:[#allocation3 + $0x28] sm:$0xf] %vm2525, %v2973
      %v2980 = vld [vmem:[#allocation2] sm:$0xff]
      %v2981 = vld [vmem:[#allocation2 + $0x8] sm:$0xff]
      %v2982 = vld [vmem:[#allocation2 + $0x20] sm:$0xff]
      %v2983 = vld [vmem:[#allocation2 + $0x28] sm:$0xff]
      %v2984 = vld [vmem:[#allocation2 + $0x40] sm:$0xff]
      %v2985 = vld [vmem:[#allocation2 + $0x48] sm:$0xff]
      %2992 = vrot.lane.b32.xlu0 %v2980, 3
      %v2993 = vpop.permute.xlu0 %2992
      %2994 = vrot.lane.b32.xlu0 %v2981, 3
      %v2995 = vpop.permute.xlu0 %2994
      %2996 = vrot.lane.b32.xlu0 %v2982, 3
      %v2997 = vpop.permute.xlu0 %2996
      %2998 = vrot.lane.b32.xlu0 %v2983, 3
      %v2999 = vpop.permute.xlu0 %2998
      %3000 = vrot.lane.b32.xlu0 %v2984, 3
      %v3001 = vpop.permute.xlu0 %3000
      %3002 = vrot.lane.b32.xlu0 %v2985, 3
      %v3003 = vpop.permute.xlu0 %3002
      %v3004 = vsel %vm2573, %v2993, %v2995
      %v3005 = vsel %vm2573, %v2997, %v2999
      %v3006 = vsel %vm2573, %v3001, %v3003
      %v3010 = vsel %vm2560, %v3004, 0.0
      %v3011 = vsel %vm2560, %v3005, 0.0
      %v3012 = vsel %vm2560, %v3006, 0.0
      %v3013 = vpack.c.bf16 %v3011, %v3010
      %v3014 = vpack.c.bf16 %v3012, %v3012
      %v3017 = vunpack.c.l.b16 %v3013
      %v3018 = vunpack.c.h.b16 %v3013
      %v3019 = vunpack.c.l.b16 %v3014
      %v3020 = vpack.c.b16 %v3017, %v3017
      %v3021 = vpack.c.b16 %v3018, %v3018
      %v3022 = vpack.c.b16 %v3019, %v3019
      %3026 = vst.msk [vmem:[#allocation3 + $0x30] sm:$0xf] %vm2525, %v3020
      %3027 = vst.msk [vmem:[#allocation3 + $0x38] sm:$0xf] %vm2525, %v3021
      %3028 = vst.msk [vmem:[#allocation3 + $0x40] sm:$0xf] %vm2525, %v3022
      %v3029 = vld [vmem:[#allocation2] sm:$0xff]
      %v3030 = vld [vmem:[#allocation2 + $0x8] sm:$0xff]
      %v3031 = vld [vmem:[#allocation2 + $0x20] sm:$0xff]
      %v3032 = vld [vmem:[#allocation2 + $0x28] sm:$0xff]
      %v3033 = vld [vmem:[#allocation2 + $0x40] sm:$0xff]
      %v3034 = vld [vmem:[#allocation2 + $0x48] sm:$0xff]
      %3041 = vrot.lane.b32.xlu0 %v3029, 1
      %v3042 = vpop.permute.xlu0 %3041
      %3043 = vrot.lane.b32.xlu0 %v3030, 1
      %v3044 = vpop.permute.xlu0 %3043
      %3045 = vrot.lane.b32.xlu0 %v3031, 1
      %v3046 = vpop.permute.xlu0 %3045
      %3047 = vrot.lane.b32.xlu0 %v3032, 1
      %v3048 = vpop.permute.xlu0 %3047
      %3049 = vrot.lane.b32.xlu0 %v3033, 1
      %v3050 = vpop.permute.xlu0 %3049
      %3051 = vrot.lane.b32.xlu0 %v3034, 1
      %v3052 = vpop.permute.xlu0 %3051
      %v3053 = vsel %vm314, %v3042, %v3044
      %v3054 = vsel %vm314, %v3046, %v3048
      %v3055 = vsel %vm314, %v3050, %v3052
      %v3059 = vsel %vm2497, %v3053, 0.0
      %v3060 = vsel %vm2497, %v3054, 0.0
      %v3061 = vsel %vm2497, %v3055, 0.0
      %v3062 = vpack.c.bf16 %v3060, %v3059
      %v3063 = vpack.c.bf16 %v3061, %v3061
      %v3066 = vunpack.c.l.b16 %v3062
      %v3067 = vunpack.c.h.b16 %v3062
      %v3068 = vunpack.c.l.b16 %v3063
      %v3069 = vpack.c.b16 %v3066, %v3066
      %v3070 = vpack.c.b16 %v3067, %v3067
      %v3071 = vpack.c.b16 %v3068, %v3068
      %3075 = vst.msk [vmem:[#allocation3 + $0x48] sm:$0xf] %vm2525, %v3069
      %3076 = vst.msk [vmem:[#allocation3 + $0x50] sm:$0xf] %vm2525, %v3070
      %3077 = vst.msk [vmem:[#allocation3 + $0x58] sm:$0xf] %vm2525, %v3071
      %v3078 = vld [vmem:[#allocation2 + $0x8] sm:$0xff]
      %v3079 = vld [vmem:[#allocation2 + $0x28] sm:$0xff]
      %v3080 = vld [vmem:[#allocation2 + $0x48] sm:$0xff]
      %v3081 = vpack.c.bf16 %v3079, %v3078
      %v3082 = vpack.c.bf16 %v3080, %v3080
      %v3085 = vunpack.c.l.b16 %v3081
      %v3086 = vunpack.c.h.b16 %v3081
      %v3087 = vunpack.c.l.b16 %v3082
      %v3088 = vpack.c.b16 %v3085, %v3085
      %v3089 = vpack.c.b16 %v3086, %v3086
      %v3090 = vpack.c.b16 %v3087, %v3087
      %3094 = vst.msk [vmem:[#allocation3 + $0x60] sm:$0xf] %vm2525, %v3088
      %3095 = vst.msk [vmem:[#allocation3 + $0x68] sm:$0xf] %vm2525, %v3089
      %3096 = vst.msk [vmem:[#allocation3 + $0x70] sm:$0xf] %vm2525, %v3090
      %v3097 = vld [vmem:[#allocation2 + $0x8] sm:$0xff]
      %v3098 = vld [vmem:[#allocation2 + $0x28] sm:$0xff]
      %v3099 = vld [vmem:[#allocation2 + $0x48] sm:$0xff]
      %3103 = vrot.lane.b32.xlu0 %v3097, 127
      %v3104 = vpop.permute.xlu0 %3103
      %3105 = vrot.lane.b32.xlu0 %v3098, 127
      %v3106 = vpop.permute.xlu0 %3105
      %3107 = vrot.lane.b32.xlu0 %v3099, 127
      %v3108 = vpop.permute.xlu0 %3107
      %v3112 = vsel %vm2560, %v3104, 0.0
      %v3113 = vsel %vm2560, %v3106, 0.0
      %v3114 = vsel %vm2560, %v3108, 0.0
      %v3115 = vpack.c.bf16 %v3113, %v3112
      %v3116 = vpack.c.bf16 %v3114, %v3114
      %v3119 = vunpack.c.l.b16 %v3115
      %v3120 = vunpack.c.h.b16 %v3115
      %v3121 = vunpack.c.l.b16 %v3116
      %v3122 = vpack.c.b16 %v3119, %v3119
      %v3123 = vpack.c.b16 %v3120, %v3120
      %v3124 = vpack.c.b16 %v3121, %v3121
      %3128 = vst.msk [vmem:[#allocation3 + $0x78] sm:$0xf] %vm2525, %v3122
      %3129 = vst.msk [vmem:[#allocation3 + $0x80] sm:$0xf] %vm2525, %v3123
      %3130 = vst.msk [vmem:[#allocation3 + $0x88] sm:$0xf] %vm2525, %v3124
      %v3131 = vld [vmem:[#allocation2 + $0x8] sm:$0xff]
      %v3132 = vld [vmem:[#allocation2 + $0x28] sm:$0xff]
      %v3133 = vld [vmem:[#allocation2 + $0x48] sm:$0xff]
      %3137 = vrot.lane.b32.xlu0 %v3131, 125
      %v3138 = vpop.permute.xlu0 %3137
      %3139 = vrot.lane.b32.xlu0 %v3132, 125
      %v3140 = vpop.permute.xlu0 %3139
      %3141 = vrot.lane.b32.xlu0 %v3133, 125
      %v3142 = vpop.permute.xlu0 %3141
      %v3146 = vsel %vm2497, %v3138, 0.0
      %v3147 = vsel %vm2497, %v3140, 0.0
      %v3148 = vsel %vm2497, %v3142, 0.0
      %v3149 = vpack.c.bf16 %v3147, %v3146
      %v3150 = vpack.c.bf16 %v3148, %v3148
      %v3153 = vunpack.c.l.b16 %v3149
      %v3154 = vunpack.c.h.b16 %v3149
      %v3155 = vunpack.c.l.b16 %v3150
      %v3156 = vpack.c.b16 %v3153, %v3153
      %v3157 = vpack.c.b16 %v3154, %v3154
      %v3158 = vpack.c.b16 %v3155, %v3155
      %3162 = vst.msk [vmem:[#allocation3 + $0x90] sm:$0xf] %vm2525, %v3156
      %3163 = vst.msk [vmem:[#allocation3 + $0x98] sm:$0xf] %vm2525, %v3157
      %3164 = vst.msk [vmem:[#allocation3 + $0xa0] sm:$0xf] %vm2525, %v3158
      %v3165 = vld [vmem:[#allocation2 + $0x8] sm:$0xff]
      %v3166 = vld [vmem:[#allocation2 + $0x28] sm:$0xff]
      %v3167 = vld [vmem:[#allocation2 + $0x48] sm:$0xff]
      %v3168 = vpack.c.bf16 %v3166, %v3165
      %v3169 = vpack.c.bf16 %v3167, %v3167
      %v3172 = vunpack.c.l.b16 %v3168
      %v3173 = vunpack.c.h.b16 %v3168
      %v3174 = vunpack.c.l.b16 %v3169
      %v3175 = vpack.c.b16 %v3172, %v3172
      %v3176 = vpack.c.b16 %v3173, %v3173
      %v3177 = vpack.c.b16 %v3174, %v3174
      %3178 = vrot.lane.b32.xlu0 %v3175, 124
      %v3179 = vpop.permute.xlu0 %3178
      %3180 = vrot.lane.b32.xlu0 %v3176, 124
      %v3181 = vpop.permute.xlu0 %3180
      %3182 = vrot.lane.b32.xlu0 %v3177, 124
      %v3183 = vpop.permute.xlu0 %3182
      %3187 = vst.msk [vmem:[#allocation3 + $0xa8] sm:$0xf] %vm2525, %v3179
      %3188 = vst.msk [vmem:[#allocation3 + $0xb0] sm:$0xf] %vm2525, %v3181
      %3189 = vst.msk [vmem:[#allocation3 + $0xb8] sm:$0xf] %vm2525, %v3183
      %v3190 = vld [vmem:[#allocation2 + $0x8] sm:$0xff]
      %v3191 = vld [vmem:[#allocation2 + $0x28] sm:$0xff]
      %v3192 = vld [vmem:[#allocation2 + $0x48] sm:$0xff]
      %3196 = vrot.lane.b32.xlu0 %v3190, 123
      %v3197 = vpop.permute.xlu0 %3196
      %3198 = vrot.lane.b32.xlu0 %v3191, 123
      %v3199 = vpop.permute.xlu0 %3198
      %3200 = vrot.lane.b32.xlu0 %v3192, 123
      %v3201 = vpop.permute.xlu0 %3200
      %v3205 = vsel %vm2560, %v3197, 0.0
      %v3206 = vsel %vm2560, %v3199, 0.0
      %v3207 = vsel %vm2560, %v3201, 0.0
      %v3208 = vpack.c.bf16 %v3206, %v3205
      %v3209 = vpack.c.bf16 %v3207, %v3207
      %v3212 = vunpack.c.l.b16 %v3208
      %v3213 = vunpack.c.h.b16 %v3208
      %v3214 = vunpack.c.l.b16 %v3209
      %v3215 = vpack.c.b16 %v3212, %v3212
      %v3216 = vpack.c.b16 %v3213, %v3213
      %v3217 = vpack.c.b16 %v3214, %v3214
      %3221 = vst.msk [vmem:[#allocation3 + $0xc0] sm:$0xf] %vm2525, %v3215
      %3222 = vst.msk [vmem:[#allocation3 + $0xc8] sm:$0xf] %vm2525, %v3216
      %3223 = vst.msk [vmem:[#allocation3 + $0xd0] sm:$0xf] %vm2525, %v3217
      %v3224 = vld [vmem:[#allocation3] sm:$0xf]
      %v3225 = vld [vmem:[#allocation3 + $0x8] sm:$0xf]
      %v3226 = vld [vmem:[#allocation3 + $0x10] sm:$0xf]
      %v3227 = vld [vmem:[#allocation3 + $0x18] sm:$0xf]
      %v3228 = vld [vmem:[#allocation3 + $0x20] sm:$0xf]
      %v3229 = vld [vmem:[#allocation3 + $0x28] sm:$0xf]
      %v3230 = vld [vmem:[#allocation3 + $0x30] sm:$0xf]
      %v3231 = vld [vmem:[#allocation3 + $0x38] sm:$0xf]
      %v3232 = vld [vmem:[#allocation3 + $0x40] sm:$0xf]
      %v3233 = vld [vmem:[#allocation3 + $0x48] sm:$0xf]
      %v3234 = vld [vmem:[#allocation3 + $0x50] sm:$0xf]
      %v3235 = vld [vmem:[#allocation3 + $0x58] sm:$0xf]
      %v3236 = vld [vmem:[#allocation3 + $0x60] sm:$0xf]
      %v3237 = vld [vmem:[#allocation3 + $0x68] sm:$0xf]
      %v3238 = vld [vmem:[#allocation3 + $0x70] sm:$0xf]
      %v3239 = vld [vmem:[#allocation3 + $0x78] sm:$0xf]
      %v3240 = vld [vmem:[#allocation3 + $0x80] sm:$0xf]
      %v3241 = vld [vmem:[#allocation3 + $0x88] sm:$0xf]
      %v3242 = vld [vmem:[#allocation3 + $0x90] sm:$0xf]
      %v3243 = vld [vmem:[#allocation3 + $0x98] sm:$0xf]
      %v3244 = vld [vmem:[#allocation3 + $0xa0] sm:$0xf]
      %v3245 = vld [vmem:[#allocation3 + $0xa8] sm:$0xf]
      %v3246 = vld [vmem:[#allocation3 + $0xb0] sm:$0xf]
      %v3247 = vld [vmem:[#allocation3 + $0xb8] sm:$0xf]
      %v3248 = vld [vmem:[#allocation3 + $0xc0] sm:$0xf]
      %v3249 = vld [vmem:[#allocation3 + $0xc8] sm:$0xf]
      %v3250 = vld [vmem:[#allocation3 + $0xd0] sm:$0xf]
      %3252 = vset.pattern.permute.xlu0 0
      %3253 = vperm.xlu0 %3252, %v2878
      %v3254 = vpop.permute.xlu0 %3253
      %3257 = vset.pattern.permute.xlu0 0
      %3258 = vperm.xlu0 %3257, %v2879
      %v3259 = vpop.permute.xlu0 %3258
      %3262 = vset.pattern.permute.xlu0 0
      %3263 = vperm.xlu0 %3262, %v2880
      %v3264 = vpop.permute.xlu0 %3263
      %v3269 = vunpack.c.l.b16 %v2875
      %v3270 = vunpack.c.h.b16 %v2875
      %v3271 = vunpack.c.l.b16 %v2876
      %v3272 = vunpack.c.h.b16 %v2876
      %v3273 = vunpack.c.l.b16 %v2877
      %v3274 = vunpack.c.h.b16 %v2877
      %v3275 = vpack.c.b16 %v3271, %v3269
      %v3276 = vpack.c.b16 %v3272, %v3270
      %v3277 = vpack.c.b16 %v3273, %v3273
      %v3278 = vpack.c.b16 %v3274, %v3274
      %v3308 = vunpack.c.l.b16 %v3224
      %v3309 = vunpack.c.l.b16 %v3225
      %v3310 = vunpack.c.l.b16 %v3226
      %v3311 = vunpack.c.l.b16 %v3227
      %v3312 = vunpack.c.l.b16 %v3228
      %v3313 = vunpack.c.l.b16 %v3229
      %v3314 = vunpack.c.l.b16 %v3230
      %v3315 = vunpack.c.l.b16 %v3231
      %v3316 = vunpack.c.l.b16 %v3232
      %v3317 = vunpack.c.l.b16 %v3233
      %v3318 = vunpack.c.l.b16 %v3234
      %v3319 = vunpack.c.l.b16 %v3235
      %v3320 = vunpack.c.l.b16 %v3236
      %v3321 = vunpack.c.l.b16 %v3237
      %v3322 = vunpack.c.l.b16 %v3238
      %v3323 = vunpack.c.l.b16 %v3239
      %v3324 = vunpack.c.l.b16 %v3240
      %v3325 = vunpack.c.l.b16 %v3241
      %v3326 = vunpack.c.l.b16 %v3242
      %v3327 = vunpack.c.l.b16 %v3243
      %v3328 = vunpack.c.l.b16 %v3244
      %v3329 = vunpack.c.l.b16 %v3245
      %v3330 = vunpack.c.l.b16 %v3246
      %v3331 = vunpack.c.l.b16 %v3247
      %v3332 = vunpack.c.l.b16 %v3248
      %v3333 = vunpack.c.l.b16 %v3249
      %v3334 = vunpack.c.l.b16 %v3250
      %v3335 = vpack.c.b16 %v3309, %v3308
      %v3336 = vpack.c.b16 %v3311, %v3310
      %v3337 = vpack.c.b16 %v3313, %v3312
      %v3338 = vpack.c.b16 %v3315, %v3314
      %v3339 = vpack.c.b16 %v3317, %v3316
      %v3340 = vpack.c.b16 %v3319, %v3318
      %v3341 = vpack.c.b16 %v3321, %v3320
      %v3342 = vpack.c.b16 %v3323, %v3322
      %v3343 = vpack.c.b16 %v3325, %v3324
      %v3344 = vpack.c.b16 %v3327, %v3326
      %v3345 = vpack.c.b16 %v3329, %v3328
      %v3346 = vpack.c.b16 %v3331, %v3330
      %v3347 = vpack.c.b16 %v3333, %v3332
      %v3348 = vpack.c.b16 %v3334, %v3334
      %vm3362 = vcmask 719872
      %v3364 = vsel %vm3362, %v3276, 0
      %v3367 = vsel %vm3362, %v3278, 0
      %v3370 = vsel %vm513, %v3348, 0
      %3372 = vmatprep.subr.bf16.mxu0 0
      %3373 = vmatpush1.bf16.msra.mxu0 %v3342
      %3374 = vmatprep.subr.bf16.mxu0 0
      %3375 = vmatpush1.bf16.msra.mxu0 %v3341
      %3376 = vmatprep.subr.bf16.mxu0 0
      %3377 = vmatpush1.bf16.msra.mxu0 %v3340
      %3378 = vmatprep.subr.bf16.mxu0 0
      %3379 = vmatpush1.bf16.msra.mxu0 %v3339
      %3380 = vmatprep.subr.bf16.mxu0 0
      %3381 = vmatpush1.bf16.msra.mxu0 %v3338
      %3382 = vmatprep.subr.bf16.mxu0 0
      %3383 = vmatpush1.bf16.msra.mxu0 %v3337
      %3384 = vmatprep.subr.bf16.mxu0 0
      %3385 = vmatpush1.bf16.msra.mxu0 %v3336
      %3386 = vmatprep.subr.bf16.mxu0 0
      %3387 = vmatpush1.bf16.msra.mxu0 %v3335
      %3388 = vmatprep.subr.bf16.mxu0 0
      %3389 = vmatpush2.bf16.msra.mxu0 0
      %3390 = vmatprep.subr.bf16.mxu0 0
      %3391 = vmatpush2.bf16.msra.mxu0 0
      %3392 = vmatprep.subr.bf16.mxu0 0
      %3393 = vmatpush2.bf16.msra.mxu0 %v3370
      %3394 = vmatprep.subr.bf16.mxu0 0
      %3395 = vmatpush2.bf16.msra.mxu0 %v3347
      %3396 = vmatprep.subr.bf16.mxu0 0
      %3397 = vmatpush2.bf16.msra.mxu0 %v3346
      %3398 = vmatprep.subr.bf16.mxu0 0
      %3399 = vmatpush2.bf16.msra.mxu0 %v3345
      %3400 = vmatprep.subr.bf16.mxu0 0
      %3401 = vmatpush2.bf16.msra.mxu0 %v3344
      %3402 = vmatprep.subr.bf16.mxu0 0
      %3403 = vmatpush2.bf16.msra.mxu0 %v3343
      %3404 = vmatprep.mubr.bf16.mxu0 %v3364
      %3405 = vmatmul.mubr.bf16.gmra.mxu0 %v3275
      %v3406 = vpop.f32.mrf.mxu0
      %v3407 = vadd.f32 %v3254, %v3406
      %v3408 = vpop.f32.mrf.mxu0
      %v3409 = vpop.f32.mrf.mxu0
      %v3410 = vadd.f32 %v3259, %v3409
      %v3411 = vpop.f32.mrf.mxu0
      %3412 = vmatprep.mubr.bf16.mxu0 %v3367
      %3413 = vmatmul.mubr.bf16.gmra.mxu0 %v3277
      %v3414 = vpop.f32.mrf.mxu0
      %v3415 = vadd.f32 %v3264, %v3414
      %v3416 = vpop.f32.mrf.mxu0
      %v3417 = vpop.f32.mrf.mxu0
      %v3418 = vpop.f32.mrf.mxu0
      %3419 = vdwg.mxu0
      %v3420 = vmax.f32 %v3407, 0.0
      %v3421 = vmax.f32 %v3410, 0.0
      %v3422 = vmax.f32 %v3415, 0.0
      %v3423 = vld [vmem:[%s1 + $0x560] sm:$0xf]
      %v3424 = vld [vmem:[%s1 + $0x568] sm:$0xf]
      %v3425 = vpack.c.bf16 %v3421, %v3420
      %v3426 = vpack.c.bf16 %v3422, %v3422
      %v3429 = vunpack.c.l.b16 %v3423
      %v3430 = vunpack.c.l.b16 %v3424
      %v3431 = vpack.c.b16 %v3430, %v3429
      %v3434 = vsel %vm2115, %v3425, 0
      %v3437 = vsel %vm2115, %v3426, 0
      %3439 = vmatprep.subr.bf16.mxu0 0
      %3440 = vmatpush1.bf16.msra.mxu0 0
      %3441 = vmatprep.subr.bf16.mxu0 0
      %3442 = vmatpush1.bf16.msra.mxu0 0
      %3443 = vmatprep.subr.bf16.mxu0 0
      %3444 = vmatpush1.bf16.msra.mxu0 0
      %3445 = vmatprep.subr.bf16.mxu0 0
      %3446 = vmatpush1.bf16.msra.mxu0 0
      %3447 = vmatprep.subr.bf16.mxu0 0
      %3448 = vmatpush1.bf16.msra.mxu0 0
      %3449 = vmatprep.subr.bf16.mxu0 0
      %3450 = vmatpush1.bf16.msra.mxu0 0
      %3451 = vmatprep.subr.bf16.mxu0 0
      %3452 = vmatpush1.bf16.msra.mxu0 0
      %3453 = vmatprep.subr.bf16.mxu0 0
      %3454 = vmatpush1.bf16.msra.mxu0 %v3431
      %3455 = vmatprep.subr.bf16.mxu0 0
      %3456 = vmatpush2.bf16.msra.mxu0 0
      %3457 = vmatprep.subr.bf16.mxu0 0
      %3458 = vmatpush2.bf16.msra.mxu0 0
      %3459 = vmatprep.subr.bf16.mxu0 0
      %3460 = vmatpush2.bf16.msra.mxu0 0
      %3461 = vmatprep.subr.bf16.mxu0 0
      %3462 = vmatpush2.bf16.msra.mxu0 0
      %3463 = vmatprep.subr.bf16.mxu0 0
      %3464 = vmatpush2.bf16.msra.mxu0 0
      %3465 = vmatprep.subr.bf16.mxu0 0
      %3466 = vmatpush2.bf16.msra.mxu0 0
      %3467 = vmatprep.subr.bf16.mxu0 0
      %3468 = vmatpush2.bf16.msra.mxu0 0
      %3469 = vmatprep.subr.bf16.mxu0 0
      %3470 = vmatpush2.bf16.msra.mxu0 0
      %3471 = vmatprep.mubr.bf16.mxu0 0
      %3472 = vmatmul.mubr.bf16.gmra.mxu0 %v3434
      %v3473 = vpop.f32.mrf.mxu0
      %v3474 = vadd.f32 0.0, %v3473
      %v3475 = vpop.f32.mrf.mxu0
      %v3476 = vpop.f32.mrf.mxu0
      %v3477 = vadd.f32 0.0, %v3476
      %v3478 = vpop.f32.mrf.mxu0
      %3479 = vmatprep.mubr.bf16.mxu0 0
      %3480 = vmatmul.mubr.bf16.gmra.mxu0 %v3437
      %v3481 = vpop.f32.mrf.mxu0
      %v3482 = vadd.f32 0.0, %v3481
      %v3483 = vpop.f32.mrf.mxu0
      %v3484 = vpop.f32.mrf.mxu0
      %v3485 = vpop.f32.mrf.mxu0
      %3486 = vdwg.mxu0
      %v3487 = vld [vmem:[%s1 + $0x570] sm:$0xff]
      %v3488 = vld [vmem:[%s1 + $0x578] sm:$0xff]
      %v3489 = vld [vmem:[%s2 + $0x60] sm:$0xff]
      %v3490 = vld [vmem:[%s2 + $0x68] sm:$0xff]
      %3491 = vst.msk [vmem:[#allocation2] sm:$0xff] %vm1580, 0.0
      %3492 = vst.msk [vmem:[#allocation2 + $0x20] sm:$0xff] %vm1580, 0.0
      %3493 = vst.msk [vmem:[#allocation2 + $0x40] sm:$0xff] %vm1580, 0.0
      %3494 = vst.msk [vmem:[#allocation2 + $0x8] sm:$0xff] %vm1582, 0.0
      %3495 = vst.msk [vmem:[#allocation2 + $0x28] sm:$0xff] %vm1582, 0.0
      %3496 = vst.msk [vmem:[#allocation2 + $0x48] sm:$0xff] %vm1582, 0.0
      %3497 = vst.msk [vmem:[#allocation2 + $0x8] sm:$0xff] %vm1584, %v3474
      %3498 = vst.msk [vmem:[#allocation2 + $0x28] sm:$0xff] %vm1584, %v3477
      %3499 = vst.msk [vmem:[#allocation2 + $0x48] sm:$0xff] %vm1584, %v3482
      %v3500 = vld [vmem:[#allocation2] sm:$0xff]
      %v3501 = vld [vmem:[#allocation2 + $0x8] sm:$0xff]
      %v3502 = vld [vmem:[#allocation2 + $0x20] sm:$0xff]
      %v3503 = vld [vmem:[#allocation2 + $0x28] sm:$0xff]
      %v3504 = vld [vmem:[#allocation2 + $0x40] sm:$0xff]
      %v3505 = vld [vmem:[#allocation2 + $0x48] sm:$0xff]
      %3512 = vrot.lane.b32.xlu0 %v3500, 9
      %v3513 = vpop.permute.xlu0 %3512
      %3514 = vrot.lane.b32.xlu0 %v3501, 9
      %v3515 = vpop.permute.xlu0 %3514
      %3516 = vrot.lane.b32.xlu0 %v3502, 9
      %v3517 = vpop.permute.xlu0 %3516
      %3518 = vrot.lane.b32.xlu0 %v3503, 9
      %v3519 = vpop.permute.xlu0 %3518
      %3520 = vrot.lane.b32.xlu0 %v3504, 9
      %v3521 = vpop.permute.xlu0 %3520
      %3522 = vrot.lane.b32.xlu0 %v3505, 9
      %v3523 = vpop.permute.xlu0 %3522
      %v3524 = vsel %vm1610, %v3513, %v3515
      %v3525 = vsel %vm1610, %v3517, %v3519
      %v3526 = vsel %vm1610, %v3521, %v3523
      %v3530 = vsel %vm1603, %v3524, 0.0
      %v3531 = vsel %vm1603, %v3525, 0.0
      %v3532 = vsel %vm1603, %v3526, 0.0
      %v3533 = vpack.c.bf16 %v3531, %v3530
      %v3534 = vpack.c.bf16 %v3532, %v3532
      %v3537 = vunpack.c.l.b16 %v3533
      %v3538 = vunpack.c.h.b16 %v3533
      %v3539 = vunpack.c.l.b16 %v3534
      %v3540 = vpack.c.b16 %v3537, %v3537
      %v3541 = vpack.c.b16 %v3538, %v3538
      %v3542 = vpack.c.b16 %v3539, %v3539
      %3546 = vst.msk [vmem:[#allocation3] sm:$0xf] %vm1615, %v3540
      %3547 = vst.msk [vmem:[#allocation3 + $0x8] sm:$0xf] %vm1615, %v3541
      %3548 = vst.msk [vmem:[#allocation3 + $0x10] sm:$0xf] %vm1615, %v3542
      %v3549 = vld [vmem:[#allocation2] sm:$0xff]
      %v3550 = vld [vmem:[#allocation2 + $0x8] sm:$0xff]
      %v3551 = vld [vmem:[#allocation2 + $0x20] sm:$0xff]
      %v3552 = vld [vmem:[#allocation2 + $0x28] sm:$0xff]
      %v3553 = vld [vmem:[#allocation2 + $0x40] sm:$0xff]
      %v3554 = vld [vmem:[#allocation2 + $0x48] sm:$0xff]
      %v3555 = vpack.c.bf16 %v3551, %v3549
      %v3556 = vpack.c.bf16 %v3552, %v3550
      %v3557 = vpack.c.bf16 %v3553, %v3553
      %v3558 = vpack.c.bf16 %v3554, %v3554
      %v3563 = vunpack.c.l.b16 %v3555
      %v3564 = vunpack.c.l.b16 %v3556
      %v3565 = vunpack.c.h.b16 %v3555
      %v3566 = vunpack.c.h.b16 %v3556
      %v3567 = vunpack.c.l.b16 %v3557
      %v3568 = vunpack.c.l.b16 %v3558
      %v3569 = vpack.c.b16 %v3564, %v3563
      %v3570 = vpack.c.b16 %v3566, %v3565
      %v3571 = vpack.c.b16 %v3568, %v3567
      %3572 = vrot.lane.b32.xlu0 %v3569, 8
      %v3573 = vpop.permute.xlu0 %3572
      %3574 = vrot.lane.b32.xlu0 %v3570, 8
      %v3575 = vpop.permute.xlu0 %3574
      %3576 = vrot.lane.b32.xlu0 %v3571, 8
      %v3577 = vpop.permute.xlu0 %3576
      %v3578 = vrot.slane %v3573, 4
      %v3579 = vrot.slane %v3575, 4
      %v3580 = vrot.slane %v3577, 4
      %v3581 = vsel %vm1629, %v3573, %v3578
      %v3582 = vsel %vm1629, %v3575, %v3579
      %v3583 = vsel %vm1629, %v3577, %v3580
      %3587 = vst.msk [vmem:[#allocation3 + $0x18] sm:$0xf] %vm1615, %v3581
      %3588 = vst.msk [vmem:[#allocation3 + $0x20] sm:$0xf] %vm1615, %v3582
      %3589 = vst.msk [vmem:[#allocation3 + $0x28] sm:$0xf] %vm1615, %v3583
      %v3590 = vld [vmem:[#allocation2] sm:$0xff]
      %v3591 = vld [vmem:[#allocation2 + $0x8] sm:$0xff]
      %v3592 = vld [vmem:[#allocation2 + $0x20] sm:$0xff]
      %v3593 = vld [vmem:[#allocation2 + $0x28] sm:$0xff]
      %v3594 = vld [vmem:[#allocation2 + $0x40] sm:$0xff]
      %v3595 = vld [vmem:[#allocation2 + $0x48] sm:$0xff]
      %3602 = vrot.lane.b32.xlu0 %v3590, 7
      %v3603 = vpop.permute.xlu0 %3602
      %3604 = vrot.lane.b32.xlu0 %v3591, 7
      %v3605 = vpop.permute.xlu0 %3604
      %3606 = vrot.lane.b32.xlu0 %v3592, 7
      %v3607 = vpop.permute.xlu0 %3606
      %3608 = vrot.lane.b32.xlu0 %v3593, 7
      %v3609 = vpop.permute.xlu0 %3608
      %3610 = vrot.lane.b32.xlu0 %v3594, 7
      %v3611 = vpop.permute.xlu0 %3610
      %3612 = vrot.lane.b32.xlu0 %v3595, 7
      %v3613 = vpop.permute.xlu0 %3612
      %v3614 = vsel %vm1643, %v3603, %v3605
      %v3615 = vsel %vm1643, %v3607, %v3609
      %v3616 = vsel %vm1643, %v3611, %v3613
      %v3620 = vsel %vm1636, %v3614, 0.0
      %v3621 = vsel %vm1636, %v3615, 0.0
      %v3622 = vsel %vm1636, %v3616, 0.0
      %v3623 = vpack.c.bf16 %v3621, %v3620
      %v3624 = vpack.c.bf16 %v3622, %v3622
      %v3627 = vunpack.c.l.b16 %v3623
      %v3628 = vunpack.c.h.b16 %v3623
      %v3629 = vunpack.c.l.b16 %v3624
      %v3630 = vpack.c.b16 %v3627, %v3627
      %v3631 = vpack.c.b16 %v3628, %v3628
      %v3632 = vpack.c.b16 %v3629, %v3629
      %3636 = vst.msk [vmem:[#allocation3 + $0x30] sm:$0xf] %vm1615, %v3630
      %3637 = vst.msk [vmem:[#allocation3 + $0x38] sm:$0xf] %vm1615, %v3631
      %3638 = vst.msk [vmem:[#allocation3 + $0x40] sm:$0xf] %vm1615, %v3632
      %v3639 = vld [vmem:[#allocation2] sm:$0xff]
      %v3640 = vld [vmem:[#allocation2 + $0x8] sm:$0xff]
      %v3641 = vld [vmem:[#allocation2 + $0x20] sm:$0xff]
      %v3642 = vld [vmem:[#allocation2 + $0x28] sm:$0xff]
      %v3643 = vld [vmem:[#allocation2 + $0x40] sm:$0xff]
      %v3644 = vld [vmem:[#allocation2 + $0x48] sm:$0xff]
      %3651 = vrot.lane.b32.xlu0 %v3639, 1
      %v3652 = vpop.permute.xlu0 %3651
      %3653 = vrot.lane.b32.xlu0 %v3640, 1
      %v3654 = vpop.permute.xlu0 %3653
      %3655 = vrot.lane.b32.xlu0 %v3641, 1
      %v3656 = vpop.permute.xlu0 %3655
      %3657 = vrot.lane.b32.xlu0 %v3642, 1
      %v3658 = vpop.permute.xlu0 %3657
      %3659 = vrot.lane.b32.xlu0 %v3643, 1
      %v3660 = vpop.permute.xlu0 %3659
      %3661 = vrot.lane.b32.xlu0 %v3644, 1
      %v3662 = vpop.permute.xlu0 %3661
      %v3663 = vsel %vm314, %v3652, %v3654
      %v3664 = vsel %vm314, %v3656, %v3658
      %v3665 = vsel %vm314, %v3660, %v3662
      %v3669 = vsel %vm1603, %v3663, 0.0
      %v3670 = vsel %vm1603, %v3664, 0.0
      %v3671 = vsel %vm1603, %v3665, 0.0
      %v3672 = vpack.c.bf16 %v3670, %v3669
      %v3673 = vpack.c.bf16 %v3671, %v3671
      %v3676 = vunpack.c.l.b16 %v3672
      %v3677 = vunpack.c.h.b16 %v3672
      %v3678 = vunpack.c.l.b16 %v3673
      %v3679 = vpack.c.b16 %v3676, %v3676
      %v3680 = vpack.c.b16 %v3677, %v3677
      %v3681 = vpack.c.b16 %v3678, %v3678
      %3685 = vst.msk [vmem:[#allocation3 + $0x48] sm:$0xf] %vm1615, %v3679
      %3686 = vst.msk [vmem:[#allocation3 + $0x50] sm:$0xf] %vm1615, %v3680
      %3687 = vst.msk [vmem:[#allocation3 + $0x58] sm:$0xf] %vm1615, %v3681
      %v3688 = vld [vmem:[#allocation2 + $0x8] sm:$0xff]
      %v3689 = vld [vmem:[#allocation2 + $0x28] sm:$0xff]
      %v3690 = vld [vmem:[#allocation2 + $0x48] sm:$0xff]
      %v3691 = vpack.c.bf16 %v3689, %v3688
      %v3692 = vpack.c.bf16 %v3690, %v3690
      %v3695 = vunpack.c.l.b16 %v3691
      %v3696 = vunpack.c.h.b16 %v3691
      %v3697 = vunpack.c.l.b16 %v3692
      %v3698 = vpack.c.b16 %v3695, %v3695
      %v3699 = vpack.c.b16 %v3696, %v3696
      %v3700 = vpack.c.b16 %v3697, %v3697
      %3704 = vst.msk [vmem:[#allocation3 + $0x60] sm:$0xf] %vm1615, %v3698
      %3705 = vst.msk [vmem:[#allocation3 + $0x68] sm:$0xf] %vm1615, %v3699
      %3706 = vst.msk [vmem:[#allocation3 + $0x70] sm:$0xf] %vm1615, %v3700
      %v3707 = vld [vmem:[#allocation2 + $0x8] sm:$0xff]
      %v3708 = vld [vmem:[#allocation2 + $0x28] sm:$0xff]
      %v3709 = vld [vmem:[#allocation2 + $0x48] sm:$0xff]
      %3713 = vrot.lane.b32.xlu0 %v3707, 127
      %v3714 = vpop.permute.xlu0 %3713
      %3715 = vrot.lane.b32.xlu0 %v3708, 127
      %v3716 = vpop.permute.xlu0 %3715
      %3717 = vrot.lane.b32.xlu0 %v3709, 127
      %v3718 = vpop.permute.xlu0 %3717
      %v3722 = vsel %vm1636, %v3714, 0.0
      %v3723 = vsel %vm1636, %v3716, 0.0
      %v3724 = vsel %vm1636, %v3718, 0.0
      %v3725 = vpack.c.bf16 %v3723, %v3722
      %v3726 = vpack.c.bf16 %v3724, %v3724
      %v3729 = vunpack.c.l.b16 %v3725
      %v3730 = vunpack.c.h.b16 %v3725
      %v3731 = vunpack.c.l.b16 %v3726
      %v3732 = vpack.c.b16 %v3729, %v3729
      %v3733 = vpack.c.b16 %v3730, %v3730
      %v3734 = vpack.c.b16 %v3731, %v3731
      %3738 = vst.msk [vmem:[#allocation3 + $0x78] sm:$0xf] %vm1615, %v3732
      %3739 = vst.msk [vmem:[#allocation3 + $0x80] sm:$0xf] %vm1615, %v3733
      %3740 = vst.msk [vmem:[#allocation3 + $0x88] sm:$0xf] %vm1615, %v3734
      %v3741 = vld [vmem:[#allocation2 + $0x8] sm:$0xff]
      %v3742 = vld [vmem:[#allocation2 + $0x28] sm:$0xff]
      %v3743 = vld [vmem:[#allocation2 + $0x48] sm:$0xff]
      %3747 = vrot.lane.b32.xlu0 %v3741, 121
      %v3748 = vpop.permute.xlu0 %3747
      %3749 = vrot.lane.b32.xlu0 %v3742, 121
      %v3750 = vpop.permute.xlu0 %3749
      %3751 = vrot.lane.b32.xlu0 %v3743, 121
      %v3752 = vpop.permute.xlu0 %3751
      %v3756 = vsel %vm1603, %v3748, 0.0
      %v3757 = vsel %vm1603, %v3750, 0.0
      %v3758 = vsel %vm1603, %v3752, 0.0
      %v3759 = vpack.c.bf16 %v3757, %v3756
      %v3760 = vpack.c.bf16 %v3758, %v3758
      %v3763 = vunpack.c.l.b16 %v3759
      %v3764 = vunpack.c.h.b16 %v3759
      %v3765 = vunpack.c.l.b16 %v3760
      %v3766 = vpack.c.b16 %v3763, %v3763
      %v3767 = vpack.c.b16 %v3764, %v3764
      %v3768 = vpack.c.b16 %v3765, %v3765
      %3772 = vst.msk [vmem:[#allocation3 + $0x90] sm:$0xf] %vm1615, %v3766
      %3773 = vst.msk [vmem:[#allocation3 + $0x98] sm:$0xf] %vm1615, %v3767
      %3774 = vst.msk [vmem:[#allocation3 + $0xa0] sm:$0xf] %vm1615, %v3768
      %v3775 = vld [vmem:[#allocation2 + $0x8] sm:$0xff]
      %v3776 = vld [vmem:[#allocation2 + $0x28] sm:$0xff]
      %v3777 = vld [vmem:[#allocation2 + $0x48] sm:$0xff]
      %v3778 = vpack.c.bf16 %v3776, %v3775
      %v3779 = vpack.c.bf16 %v3777, %v3777
      %v3782 = vunpack.c.l.b16 %v3778
      %v3783 = vunpack.c.h.b16 %v3778
      %v3784 = vunpack.c.l.b16 %v3779
      %v3785 = vpack.c.b16 %v3782, %v3782
      %v3786 = vpack.c.b16 %v3783, %v3783
      %v3787 = vpack.c.b16 %v3784, %v3784
      %3788 = vrot.lane.b32.xlu0 %v3785, 120
      %v3789 = vpop.permute.xlu0 %3788
      %3790 = vrot.lane.b32.xlu0 %v3786, 120
      %v3791 = vpop.permute.xlu0 %3790
      %3792 = vrot.lane.b32.xlu0 %v3787, 120
      %v3793 = vpop.permute.xlu0 %3792
      %3797 = vst.msk [vmem:[#allocation3 + $0xa8] sm:$0xf] %vm1615, %v3789
      %3798 = vst.msk [vmem:[#allocation3 + $0xb0] sm:$0xf] %vm1615, %v3791
      %3799 = vst.msk [vmem:[#allocation3 + $0xb8] sm:$0xf] %vm1615, %v3793
      %v3800 = vld [vmem:[#allocation2 + $0x8] sm:$0xff]
      %v3801 = vld [vmem:[#allocation2 + $0x28] sm:$0xff]
      %v3802 = vld [vmem:[#allocation2 + $0x48] sm:$0xff]
      %3806 = vrot.lane.b32.xlu0 %v3800, 119
      %v3807 = vpop.permute.xlu0 %3806
      %3808 = vrot.lane.b32.xlu0 %v3801, 119
      %v3809 = vpop.permute.xlu0 %3808
      %3810 = vrot.lane.b32.xlu0 %v3802, 119
      %v3811 = vpop.permute.xlu0 %3810
      %v3815 = vsel %vm1636, %v3807, 0.0
      %v3816 = vsel %vm1636, %v3809, 0.0
      %v3817 = vsel %vm1636, %v3811, 0.0
      %v3818 = vpack.c.bf16 %v3816, %v3815
      %v3819 = vpack.c.bf16 %v3817, %v3817
      %v3822 = vunpack.c.l.b16 %v3818
      %v3823 = vunpack.c.h.b16 %v3818
      %v3824 = vunpack.c.l.b16 %v3819
      %v3825 = vpack.c.b16 %v3822, %v3822
      %v3826 = vpack.c.b16 %v3823, %v3823
      %v3827 = vpack.c.b16 %v3824, %v3824
      %3831 = vst.msk [vmem:[#allocation3 + $0xc0] sm:$0xf] %vm1615, %v3825
      %3832 = vst.msk [vmem:[#allocation3 + $0xc8] sm:$0xf] %vm1615, %v3826
      %3833 = vst.msk [vmem:[#allocation3 + $0xd0] sm:$0xf] %vm1615, %v3827
      %v3834 = vld [vmem:[#allocation3] sm:$0xf]
      %v3835 = vld [vmem:[#allocation3 + $0x8] sm:$0xf]
      %v3836 = vld [vmem:[#allocation3 + $0x10] sm:$0xf]
      %v3837 = vld [vmem:[#allocation3 + $0x18] sm:$0xf]
      %v3838 = vld [vmem:[#allocation3 + $0x20] sm:$0xf]
      %v3839 = vld [vmem:[#allocation3 + $0x28] sm:$0xf]
      %v3840 = vld [vmem:[#allocation3 + $0x30] sm:$0xf]
      %v3841 = vld [vmem:[#allocation3 + $0x38] sm:$0xf]
      %v3842 = vld [vmem:[#allocation3 + $0x40] sm:$0xf]
      %v3843 = vld [vmem:[#allocation3 + $0x48] sm:$0xf]
      %v3844 = vld [vmem:[#allocation3 + $0x50] sm:$0xf]
      %v3845 = vld [vmem:[#allocation3 + $0x58] sm:$0xf]
      %v3846 = vld [vmem:[#allocation3 + $0x60] sm:$0xf]
      %v3847 = vld [vmem:[#allocation3 + $0x68] sm:$0xf]
      %v3848 = vld [vmem:[#allocation3 + $0x70] sm:$0xf]
      %v3849 = vld [vmem:[#allocation3 + $0x78] sm:$0xf]
      %v3850 = vld [vmem:[#allocation3 + $0x80] sm:$0xf]
      %v3851 = vld [vmem:[#allocation3 + $0x88] sm:$0xf]
      %v3852 = vld [vmem:[#allocation3 + $0x90] sm:$0xf]
      %v3853 = vld [vmem:[#allocation3 + $0x98] sm:$0xf]
      %v3854 = vld [vmem:[#allocation3 + $0xa0] sm:$0xf]
      %v3855 = vld [vmem:[#allocation3 + $0xa8] sm:$0xf]
      %v3856 = vld [vmem:[#allocation3 + $0xb0] sm:$0xf]
      %v3857 = vld [vmem:[#allocation3 + $0xb8] sm:$0xf]
      %v3858 = vld [vmem:[#allocation3 + $0xc0] sm:$0xf]
      %v3859 = vld [vmem:[#allocation3 + $0xc8] sm:$0xf]
      %v3860 = vld [vmem:[#allocation3 + $0xd0] sm:$0xf]
      %3862 = vset.pattern.permute.xlu0 0
      %3863 = vperm.xlu0 %3862, %v3489
      %v3864 = vpop.permute.xlu0 %3863
      %3867 = vset.pattern.permute.xlu0 0
      %3868 = vperm.xlu0 %3867, %v3490
      %v3869 = vpop.permute.xlu0 %3868
      %v3873 = vunpack.c.l.b16 %v3487
      %v3874 = vunpack.c.h.b16 %v3487
      %v3875 = vunpack.c.l.b16 %v3488
      %v3876 = vunpack.c.h.b16 %v3488
      %v3877 = vpack.c.b16 %v3875, %v3873
      %v3878 = vpack.c.b16 %v3876, %v3874
      %v3907 = vunpack.c.l.b16 %v3834
      %v3908 = vunpack.c.l.b16 %v3835
      %v3909 = vunpack.c.l.b16 %v3836
      %v3910 = vunpack.c.l.b16 %v3837
      %v3911 = vunpack.c.l.b16 %v3838
      %v3912 = vunpack.c.l.b16 %v3839
      %v3913 = vunpack.c.l.b16 %v3840
      %v3914 = vunpack.c.l.b16 %v3841
      %v3915 = vunpack.c.l.b16 %v3842
      %v3916 = vunpack.c.l.b16 %v3843
      %v3917 = vunpack.c.l.b16 %v3844
      %v3918 = vunpack.c.l.b16 %v3845
      %v3919 = vunpack.c.l.b16 %v3846
      %v3920 = vunpack.c.l.b16 %v3847
      %v3921 = vunpack.c.l.b16 %v3848
      %v3922 = vunpack.c.l.b16 %v3849
      %v3923 = vunpack.c.l.b16 %v3850
      %v3924 = vunpack.c.l.b16 %v3851
      %v3925 = vunpack.c.l.b16 %v3852
      %v3926 = vunpack.c.l.b16 %v3853
      %v3927 = vunpack.c.l.b16 %v3854
      %v3928 = vunpack.c.l.b16 %v3855
      %v3929 = vunpack.c.l.b16 %v3856
      %v3930 = vunpack.c.l.b16 %v3857
      %v3931 = vunpack.c.l.b16 %v3858
      %v3932 = vunpack.c.l.b16 %v3859
      %v3933 = vunpack.c.l.b16 %v3860
      %v3934 = vpack.c.b16 %v3908, %v3907
      %v3935 = vpack.c.b16 %v3910, %v3909
      %v3936 = vpack.c.b16 %v3912, %v3911
      %v3937 = vpack.c.b16 %v3914, %v3913
      %v3938 = vpack.c.b16 %v3916, %v3915
      %v3939 = vpack.c.b16 %v3918, %v3917
      %v3940 = vpack.c.b16 %v3920, %v3919
      %v3941 = vpack.c.b16 %v3922, %v3921
      %v3942 = vpack.c.b16 %v3924, %v3923
      %v3943 = vpack.c.b16 %v3926, %v3925
      %v3944 = vpack.c.b16 %v3928, %v3927
      %v3945 = vpack.c.b16 %v3930, %v3929
      %v3946 = vpack.c.b16 %v3932, %v3931
      %v3947 = vpack.c.b16 %v3933, %v3933
      %v3962 = vsel %vm3362, %v3878, 0
      %v3965 = vsel %vm513, %v3947, 0
      %3967 = vmatprep.subr.bf16.mxu0 0
      %3968 = vmatpush1.bf16.msra.mxu0 %v3941
      %3969 = vmatprep.subr.bf16.mxu0 0
      %3970 = vmatpush1.bf16.msra.mxu0 %v3940
      %3971 = vmatprep.subr.bf16.mxu0 0
      %3972 = vmatpush1.bf16.msra.mxu0 %v3939
      %3973 = vmatprep.subr.bf16.mxu0 0
      %3974 = vmatpush1.bf16.msra.mxu0 %v3938
      %3975 = vmatprep.subr.bf16.mxu0 0
      %3976 = vmatpush1.bf16.msra.mxu0 %v3937
      %3977 = vmatprep.subr.bf16.mxu0 0
      %3978 = vmatpush1.bf16.msra.mxu0 %v3936
      %3979 = vmatprep.subr.bf16.mxu0 0
      %3980 = vmatpush1.bf16.msra.mxu0 %v3935
      %3981 = vmatprep.subr.bf16.mxu0 0
      %3982 = vmatpush1.bf16.msra.mxu0 %v3934
      %3983 = vmatprep.subr.bf16.mxu0 0
      %3984 = vmatpush2.bf16.msra.mxu0 0
      %3985 = vmatprep.subr.bf16.mxu0 0
      %3986 = vmatpush2.bf16.msra.mxu0 0
      %3987 = vmatprep.subr.bf16.mxu0 0
      %3988 = vmatpush2.bf16.msra.mxu0 %v3965
      %3989 = vmatprep.subr.bf16.mxu0 0
      %3990 = vmatpush2.bf16.msra.mxu0 %v3946
      %3991 = vmatprep.subr.bf16.mxu0 0
      %3992 = vmatpush2.bf16.msra.mxu0 %v3945
      %3993 = vmatprep.subr.bf16.mxu0 0
      %3994 = vmatpush2.bf16.msra.mxu0 %v3944
      %3995 = vmatprep.subr.bf16.mxu0 0
      %3996 = vmatpush2.bf16.msra.mxu0 %v3943
      %3997 = vmatprep.subr.bf16.mxu0 0
      %3998 = vmatpush2.bf16.msra.mxu0 %v3942
      %3999 = vmatprep.mubr.bf16.mxu0 %v3962
      %4000 = vmatmul.mubr.bf16.gmra.mxu0 %v3877
      %v4001 = vpop.f32.mrf.mxu0
      %v4002 = vadd.f32 %v3864, %v4001
      %v4003 = vpop.f32.mrf.mxu0
      %v4004 = vpop.f32.mrf.mxu0
      %v4005 = vadd.f32 %v3869, %v4004
      %v4006 = vpop.f32.mrf.mxu0
      %4007 = vdwg.mxu0
      %v4008 = vmax.f32 %v4002, 0.0
      %v4009 = vmax.f32 %v4005, 0.0
      %v4010 = vadd.f32 %v4008, %v2160
      %v4011 = vadd.f32 %v4009, %v2161
      %v4012 = vld [vmem:[%s1 + $0x580] sm:$0xff]
      %v4013 = vld [vmem:[%s1 + $0x588] sm:$0xff]
      %v4014 = vld [vmem:[%s2 + $0x70] sm:$0xff]
      %v4015 = vld [vmem:[%s2 + $0x78] sm:$0xff]
      %4016 = vst.msk [vmem:[#allocation2] sm:$0xff] %vm1580, 0.0
      %4017 = vst.msk [vmem:[#allocation2 + $0x20] sm:$0xff] %vm1580, 0.0
      %4018 = vst.msk [vmem:[#allocation2 + $0x8] sm:$0xff] %vm1582, 0.0
      %4019 = vst.msk [vmem:[#allocation2 + $0x28] sm:$0xff] %vm1582, 0.0
      %4020 = vst.msk [vmem:[#allocation2 + $0x8] sm:$0xff] %vm1584, %v4010
      %4021 = vst.msk [vmem:[#allocation2 + $0x28] sm:$0xff] %vm1584, %v4011
      %v4022 = vld [vmem:[#allocation2] sm:$0xff]
      %v4023 = vld [vmem:[#allocation2 + $0x8] sm:$0xff]
      %v4024 = vld [vmem:[#allocation2 + $0x20] sm:$0xff]
      %v4025 = vld [vmem:[#allocation2 + $0x28] sm:$0xff]
      %4030 = vrot.lane.b32.xlu0 %v4022, 9
      %v4031 = vpop.permute.xlu0 %4030
      %4032 = vrot.lane.b32.xlu0 %v4023, 9
      %v4033 = vpop.permute.xlu0 %4032
      %4034 = vrot.lane.b32.xlu0 %v4024, 9
      %v4035 = vpop.permute.xlu0 %4034
      %4036 = vrot.lane.b32.xlu0 %v4025, 9
      %v4037 = vpop.permute.xlu0 %4036
      %v4038 = vsel %vm1610, %v4031, %v4033
      %v4039 = vsel %vm1610, %v4035, %v4037
      %v4042 = vsel %vm1603, %v4038, 0.0
      %v4043 = vsel %vm1603, %v4039, 0.0
      %v4044 = vpack.c.bf16 %v4043, %v4042
      %v4046 = vunpack.c.l.b16 %v4044
      %v4047 = vunpack.c.h.b16 %v4044
      %v4048 = vpack.c.b16 %v4046, %v4046
      %v4049 = vpack.c.b16 %v4047, %v4047
      %4052 = vst.msk [vmem:[#allocation3] sm:$0xf] %vm1615, %v4048
      %4053 = vst.msk [vmem:[#allocation3 + $0x8] sm:$0xf] %vm1615, %v4049
      %v4054 = vld [vmem:[#allocation2] sm:$0xff]
      %v4055 = vld [vmem:[#allocation2 + $0x8] sm:$0xff]
      %v4056 = vld [vmem:[#allocation2 + $0x20] sm:$0xff]
      %v4057 = vld [vmem:[#allocation2 + $0x28] sm:$0xff]
      %v4058 = vpack.c.bf16 %v4056, %v4054
      %v4059 = vpack.c.bf16 %v4057, %v4055
      %v4062 = vunpack.c.l.b16 %v4058
      %v4063 = vunpack.c.l.b16 %v4059
      %v4064 = vunpack.c.h.b16 %v4058
      %v4065 = vunpack.c.h.b16 %v4059
      %v4066 = vpack.c.b16 %v4063, %v4062
      %v4067 = vpack.c.b16 %v4065, %v4064
      %4068 = vrot.lane.b32.xlu0 %v4066, 8
      %v4069 = vpop.permute.xlu0 %4068
      %4070 = vrot.lane.b32.xlu0 %v4067, 8
      %v4071 = vpop.permute.xlu0 %4070
      %v4072 = vrot.slane %v4069, 4
      %v4073 = vrot.slane %v4071, 4
      %v4074 = vsel %vm1629, %v4069, %v4072
      %v4075 = vsel %vm1629, %v4071, %v4073
      %4078 = vst.msk [vmem:[#allocation3 + $0x10] sm:$0xf] %vm1615, %v4074
      %4079 = vst.msk [vmem:[#allocation3 + $0x18] sm:$0xf] %vm1615, %v4075
      %v4080 = vld [vmem:[#allocation2] sm:$0xff]
      %v4081 = vld [vmem:[#allocation2 + $0x8] sm:$0xff]
      %v4082 = vld [vmem:[#allocation2 + $0x20] sm:$0xff]
      %v4083 = vld [vmem:[#allocation2 + $0x28] sm:$0xff]
      %4088 = vrot.lane.b32.xlu0 %v4080, 7
      %v4089 = vpop.permute.xlu0 %4088
      %4090 = vrot.lane.b32.xlu0 %v4081, 7
      %v4091 = vpop.permute.xlu0 %4090
      %4092 = vrot.lane.b32.xlu0 %v4082, 7
      %v4093 = vpop.permute.xlu0 %4092
      %4094 = vrot.lane.b32.xlu0 %v4083, 7
      %v4095 = vpop.permute.xlu0 %4094
      %v4096 = vsel %vm1643, %v4089, %v4091
      %v4097 = vsel %vm1643, %v4093, %v4095
      %v4100 = vsel %vm1636, %v4096, 0.0
      %v4101 = vsel %vm1636, %v4097, 0.0
      %v4102 = vpack.c.bf16 %v4101, %v4100
      %v4104 = vunpack.c.l.b16 %v4102
      %v4105 = vunpack.c.h.b16 %v4102
      %v4106 = vpack.c.b16 %v4104, %v4104
      %v4107 = vpack.c.b16 %v4105, %v4105
      %4110 = vst.msk [vmem:[#allocation3 + $0x20] sm:$0xf] %vm1615, %v4106
      %4111 = vst.msk [vmem:[#allocation3 + $0x28] sm:$0xf] %vm1615, %v4107
      %v4112 = vld [vmem:[#allocation2] sm:$0xff]
      %v4113 = vld [vmem:[#allocation2 + $0x8] sm:$0xff]
      %v4114 = vld [vmem:[#allocation2 + $0x20] sm:$0xff]
      %v4115 = vld [vmem:[#allocation2 + $0x28] sm:$0xff]
      %4120 = vrot.lane.b32.xlu0 %v4112, 1
      %v4121 = vpop.permute.xlu0 %4120
      %4122 = vrot.lane.b32.xlu0 %v4113, 1
      %v4123 = vpop.permute.xlu0 %4122
      %4124 = vrot.lane.b32.xlu0 %v4114, 1
      %v4125 = vpop.permute.xlu0 %4124
      %4126 = vrot.lane.b32.xlu0 %v4115, 1
      %v4127 = vpop.permute.xlu0 %4126
      %v4128 = vsel %vm314, %v4121, %v4123
      %v4129 = vsel %vm314, %v4125, %v4127
      %v4132 = vsel %vm1603, %v4128, 0.0
      %v4133 = vsel %vm1603, %v4129, 0.0
      %v4134 = vpack.c.bf16 %v4133, %v4132
      %v4136 = vunpack.c.l.b16 %v4134
      %v4137 = vunpack.c.h.b16 %v4134
      %v4138 = vpack.c.b16 %v4136, %v4136
      %v4139 = vpack.c.b16 %v4137, %v4137
      %4142 = vst.msk [vmem:[#allocation3 + $0x30] sm:$0xf] %vm1615, %v4138
      %4143 = vst.msk [vmem:[#allocation3 + $0x38] sm:$0xf] %vm1615, %v4139
      %v4144 = vld [vmem:[#allocation2 + $0x8] sm:$0xff]
      %v4145 = vld [vmem:[#allocation2 + $0x28] sm:$0xff]
      %v4146 = vpack.c.bf16 %v4145, %v4144
      %v4148 = vunpack.c.l.b16 %v4146
      %v4149 = vunpack.c.h.b16 %v4146
      %v4150 = vpack.c.b16 %v4148, %v4148
      %v4151 = vpack.c.b16 %v4149, %v4149
      %4154 = vst.msk [vmem:[#allocation3 + $0x40] sm:$0xf] %vm1615, %v4150
      %4155 = vst.msk [vmem:[#allocation3 + $0x48] sm:$0xf] %vm1615, %v4151
      %v4156 = vld [vmem:[#allocation2 + $0x8] sm:$0xff]
      %v4157 = vld [vmem:[#allocation2 + $0x28] sm:$0xff]
      %4160 = vrot.lane.b32.xlu0 %v4156, 127
      %v4161 = vpop.permute.xlu0 %4160
      %4162 = vrot.lane.b32.xlu0 %v4157, 127
      %v4163 = vpop.permute.xlu0 %4162
      %v4166 = vsel %vm1636, %v4161, 0.0
      %v4167 = vsel %vm1636, %v4163, 0.0
      %v4168 = vpack.c.bf16 %v4167, %v4166
      %v4170 = vunpack.c.l.b16 %v4168
      %v4171 = vunpack.c.h.b16 %v4168
      %v4172 = vpack.c.b16 %v4170, %v4170
      %v4173 = vpack.c.b16 %v4171, %v4171
      %4176 = vst.msk [vmem:[#allocation3 + $0x50] sm:$0xf] %vm1615, %v4172
      %4177 = vst.msk [vmem:[#allocation3 + $0x58] sm:$0xf] %vm1615, %v4173
      %v4178 = vld [vmem:[#allocation2 + $0x8] sm:$0xff]
      %v4179 = vld [vmem:[#allocation2 + $0x28] sm:$0xff]
      %4182 = vrot.lane.b32.xlu0 %v4178, 121
      %v4183 = vpop.permute.xlu0 %4182
      %4184 = vrot.lane.b32.xlu0 %v4179, 121
      %v4185 = vpop.permute.xlu0 %4184
      %v4188 = vsel %vm1603, %v4183, 0.0
      %v4189 = vsel %vm1603, %v4185, 0.0
      %v4190 = vpack.c.bf16 %v4189, %v4188
      %v4192 = vunpack.c.l.b16 %v4190
      %v4193 = vunpack.c.h.b16 %v4190
      %v4194 = vpack.c.b16 %v4192, %v4192
      %v4195 = vpack.c.b16 %v4193, %v4193
      %4198 = vst.msk [vmem:[#allocation3 + $0x60] sm:$0xf] %vm1615, %v4194
      %4199 = vst.msk [vmem:[#allocation3 + $0x68] sm:$0xf] %vm1615, %v4195
      %v4200 = vld [vmem:[#allocation2 + $0x8] sm:$0xff]
      %v4201 = vld [vmem:[#allocation2 + $0x28] sm:$0xff]
      %v4202 = vpack.c.bf16 %v4201, %v4200
      %v4204 = vunpack.c.l.b16 %v4202
      %v4205 = vunpack.c.h.b16 %v4202
      %v4206 = vpack.c.b16 %v4204, %v4204
      %v4207 = vpack.c.b16 %v4205, %v4205
      %4208 = vrot.lane.b32.xlu0 %v4206, 120
      %v4209 = vpop.permute.xlu0 %4208
      %4210 = vrot.lane.b32.xlu0 %v4207, 120
      %v4211 = vpop.permute.xlu0 %4210
      %4214 = vst.msk [vmem:[#allocation3 + $0x70] sm:$0xf] %vm1615, %v4209
      %4215 = vst.msk [vmem:[#allocation3 + $0x78] sm:$0xf] %vm1615, %v4211
      %v4216 = vld [vmem:[#allocation2 + $0x8] sm:$0xff]
      %v4217 = vld [vmem:[#allocation2 + $0x28] sm:$0xff]
      %4220 = vrot.lane.b32.xlu0 %v4216, 119
      %v4221 = vpop.permute.xlu0 %4220
      %4222 = vrot.lane.b32.xlu0 %v4217, 119
      %v4223 = vpop.permute.xlu0 %4222
      %v4226 = vsel %vm1636, %v4221, 0.0
      %v4227 = vsel %vm1636, %v4223, 0.0
      %v4228 = vpack.c.bf16 %v4227, %v4226
      %v4230 = vunpack.c.l.b16 %v4228
      %v4231 = vunpack.c.h.b16 %v4228
      %v4232 = vpack.c.b16 %v4230, %v4230
      %v4233 = vpack.c.b16 %v4231, %v4231
      %4236 = vst.msk [vmem:[#allocation3 + $0x80] sm:$0xf] %vm1615, %v4232
      %4237 = vst.msk [vmem:[#allocation3 + $0x88] sm:$0xf] %vm1615, %v4233
      %v4238 = vld [vmem:[#allocation3] sm:$0xf]
      %v4239 = vld [vmem:[#allocation3 + $0x8] sm:$0xf]
      %v4240 = vld [vmem:[#allocation3 + $0x10] sm:$0xf]
      %v4241 = vld [vmem:[#allocation3 + $0x18] sm:$0xf]
      %v4242 = vld [vmem:[#allocation3 + $0x20] sm:$0xf]
      %v4243 = vld [vmem:[#allocation3 + $0x28] sm:$0xf]
      %v4244 = vld [vmem:[#allocation3 + $0x30] sm:$0xf]
      %v4245 = vld [vmem:[#allocation3 + $0x38] sm:$0xf]
      %v4246 = vld [vmem:[#allocation3 + $0x40] sm:$0xf]
      %v4247 = vld [vmem:[#allocation3 + $0x48] sm:$0xf]
      %v4248 = vld [vmem:[#allocation3 + $0x50] sm:$0xf]
      %v4249 = vld [vmem:[#allocation3 + $0x58] sm:$0xf]
      %v4250 = vld [vmem:[#allocation3 + $0x60] sm:$0xf]
      %v4251 = vld [vmem:[#allocation3 + $0x68] sm:$0xf]
      %v4252 = vld [vmem:[#allocation3 + $0x70] sm:$0xf]
      %v4253 = vld [vmem:[#allocation3 + $0x78] sm:$0xf]
      %v4254 = vld [vmem:[#allocation3 + $0x80] sm:$0xf]
      %v4255 = vld [vmem:[#allocation3 + $0x88] sm:$0xf]
      %4257 = vset.pattern.permute.xlu0 0
      %4258 = vperm.xlu0 %4257, %v4014
      %v4259 = vpop.permute.xlu0 %4258
      %4262 = vset.pattern.permute.xlu0 0
      %4263 = vperm.xlu0 %4262, %v4015
      %v4264 = vpop.permute.xlu0 %4263
      %v4268 = vunpack.c.l.b16 %v4012
      %v4269 = vunpack.c.h.b16 %v4012
      %v4270 = vunpack.c.l.b16 %v4013
      %v4271 = vunpack.c.h.b16 %v4013
      %v4272 = vpack.c.b16 %v4270, %v4268
      %v4273 = vpack.c.b16 %v4271, %v4269
      %v4293 = vunpack.c.l.b16 %v4238
      %v4294 = vunpack.c.l.b16 %v4239
      %v4295 = vunpack.c.l.b16 %v4240
      %v4296 = vunpack.c.l.b16 %v4241
      %v4297 = vunpack.c.l.b16 %v4242
      %v4298 = vunpack.c.l.b16 %v4243
      %v4299 = vunpack.c.l.b16 %v4244
      %v4300 = vunpack.c.l.b16 %v4245
      %v4301 = vunpack.c.l.b16 %v4246
      %v4302 = vunpack.c.l.b16 %v4247
      %v4303 = vunpack.c.l.b16 %v4248
      %v4304 = vunpack.c.l.b16 %v4249
      %v4305 = vunpack.c.l.b16 %v4250
      %v4306 = vunpack.c.l.b16 %v4251
      %v4307 = vunpack.c.l.b16 %v4252
      %v4308 = vunpack.c.l.b16 %v4253
      %v4309 = vunpack.c.l.b16 %v4254
      %v4310 = vunpack.c.l.b16 %v4255
      %v4311 = vpack.c.b16 %v4294, %v4293
      %v4312 = vpack.c.b16 %v4296, %v4295
      %v4313 = vpack.c.b16 %v4298, %v4297
      %v4314 = vpack.c.b16 %v4300, %v4299
      %v4315 = vpack.c.b16 %v4302, %v4301
      %v4316 = vpack.c.b16 %v4304, %v4303
      %v4317 = vpack.c.b16 %v4306, %v4305
      %v4318 = vpack.c.b16 %v4308, %v4307
      %v4319 = vpack.c.b16 %v4310, %v4309
      %v4330 = vsel %vm2115, %v4273, 0
      %4332 = vmatprep.subr.bf16.mxu0 0
      %4333 = vmatpush1.bf16.msra.mxu0 %v4318
      %4334 = vmatprep.subr.bf16.mxu0 0
      %4335 = vmatpush1.bf16.msra.mxu0 %v4317
      %4336 = vmatprep.subr.bf16.mxu0 0
      %4337 = vmatpush1.bf16.msra.mxu0 %v4316
      %4338 = vmatprep.subr.bf16.mxu0 0
      %4339 = vmatpush1.bf16.msra.mxu0 %v4315
      %4340 = vmatprep.subr.bf16.mxu0 0
      %4341 = vmatpush1.bf16.msra.mxu0 %v4314
      %4342 = vmatprep.subr.bf16.mxu0 0
      %4343 = vmatpush1.bf16.msra.mxu0 %v4313
      %4344 = vmatprep.subr.bf16.mxu0 0
      %4345 = vmatpush1.bf16.msra.mxu0 %v4312
      %4346 = vmatprep.subr.bf16.mxu0 0
      %4347 = vmatpush1.bf16.msra.mxu0 %v4311
      %4348 = vmatprep.subr.bf16.mxu0 0
      %4349 = vmatpush2.bf16.msra.mxu0 0
      %4350 = vmatprep.subr.bf16.mxu0 0
      %4351 = vmatpush2.bf16.msra.mxu0 0
      %4352 = vmatprep.subr.bf16.mxu0 0
      %4353 = vmatpush2.bf16.msra.mxu0 0
      %4354 = vmatprep.subr.bf16.mxu0 0
      %4355 = vmatpush2.bf16.msra.mxu0 0
      %4356 = vmatprep.subr.bf16.mxu0 0
      %4357 = vmatpush2.bf16.msra.mxu0 0
      %4358 = vmatprep.subr.bf16.mxu0 0
      %4359 = vmatpush2.bf16.msra.mxu0 0
      %4360 = vmatprep.subr.bf16.mxu0 0
      %4361 = vmatpush2.bf16.msra.mxu0 0
      %4362 = vmatprep.subr.bf16.mxu0 0
      %4363 = vmatpush2.bf16.msra.mxu0 %v4319
      %4364 = vmatprep.mubr.bf16.mxu0 %v4330
      %4365 = vmatmul.mubr.bf16.gmra.mxu0 %v4272
      %v4366 = vpop.f32.mrf.mxu0
      %v4367 = vadd.f32 %v4259, %v4366
      %v4368 = vpop.f32.mrf.mxu0
      %v4369 = vpop.f32.mrf.mxu0
      %v4370 = vadd.f32 %v4264, %v4369
      %v4371 = vpop.f32.mrf.mxu0
      %4372 = vdwg.mxu0
      %v4373 = vmax.f32 %v4367, 0.0
      %v4374 = vmax.f32 %v4370, 0.0
      %v4375 = vld [vmem:[%s1 + $0x590] sm:$0xff]
      %v4376 = vld [vmem:[%s1 + $0x598] sm:$0xff]
      %v4377 = vld [vmem:[%s1 + $0x5a0] sm:$0xff]
      %v4378 = vld [vmem:[%s1 + $0x5a8] sm:$0xff]
      %v4379 = vld [vmem:[%s1 + $0x5b0] sm:$0xff]
      %v4380 = vld [vmem:[%s1 + $0x5b8] sm:$0xff]
      %v4381 = vld [vmem:[%s1 + $0x5c0] sm:$0xff]
      %v4382 = vld [vmem:[%s1 + $0x5c8] sm:$0xff]
      %v4383 = vpack.c.bf16 %v4374, %v4373
      %v4392 = vunpack.c.l.b16 %v4375
      %v4393 = vunpack.c.h.b16 %v4375
      %v4394 = vunpack.c.l.b16 %v4376
      %v4395 = vunpack.c.h.b16 %v4376
      %v4396 = vunpack.c.l.b16 %v4377
      %v4397 = vunpack.c.h.b16 %v4377
      %v4398 = vunpack.c.l.b16 %v4378
      %v4399 = vunpack.c.h.b16 %v4378
      %v4400 = vunpack.c.l.b16 %v4379
      %v4401 = vunpack.c.h.b16 %v4379
      %v4402 = vunpack.c.l.b16 %v4380
      %v4403 = vunpack.c.h.b16 %v4380
      %v4404 = vunpack.c.l.b16 %v4381
      %v4405 = vunpack.c.h.b16 %v4381
      %v4406 = vunpack.c.l.b16 %v4382
      %v4407 = vunpack.c.h.b16 %v4382
      %v4408 = vpack.c.b16 %v4394, %v4392
      %v4409 = vpack.c.b16 %v4395, %v4393
      %v4410 = vpack.c.b16 %v4398, %v4396
      %v4411 = vpack.c.b16 %v4399, %v4397
      %v4412 = vpack.c.b16 %v4402, %v4400
      %v4413 = vpack.c.b16 %v4403, %v4401
      %v4414 = vpack.c.b16 %v4406, %v4404
      %v4415 = vpack.c.b16 %v4407, %v4405
      %v4425 = vsel %vm1584, %v4383, 0
      %4427 = vmatprep.subr.bf16.mxu0 0
      %4428 = vmatpush1.bf16.msra.mxu0 0
      %4429 = vmatprep.subr.bf16.mxu0 0
      %4430 = vmatpush1.bf16.msra.mxu0 0
      %4431 = vmatprep.subr.bf16.mxu0 0
      %4432 = vmatpush1.bf16.msra.mxu0 0
      %4433 = vmatprep.subr.bf16.mxu0 0
      %4434 = vmatpush1.bf16.msra.mxu0 0
      %4435 = vmatprep.subr.bf16.mxu0 %v4415
      %4436 = vmatpush1.bf16.msra.mxu0 %v4414
      %4437 = vmatprep.subr.bf16.mxu0 %v4413
      %4438 = vmatpush1.bf16.msra.mxu0 %v4412
      %4439 = vmatprep.subr.bf16.mxu0 %v4411
      %4440 = vmatpush1.bf16.msra.mxu0 %v4410
      %4441 = vmatprep.subr.bf16.mxu0 %v4409
      %4442 = vmatpush1.bf16.msra.mxu0 %v4408
      %4443 = vmatprep.subr.bf16.mxu0 0
      %4444 = vmatpush2.bf16.msra.mxu0 0
      %4445 = vmatprep.subr.bf16.mxu0 0
      %4446 = vmatpush2.bf16.msra.mxu0 0
      %4447 = vmatprep.subr.bf16.mxu0 0
      %4448 = vmatpush2.bf16.msra.mxu0 0
      %4449 = vmatprep.subr.bf16.mxu0 0
      %4450 = vmatpush2.bf16.msra.mxu0 0
      %4451 = vmatprep.subr.bf16.mxu0 0
      %4452 = vmatpush2.bf16.msra.mxu0 0
      %4453 = vmatprep.subr.bf16.mxu0 0
      %4454 = vmatpush2.bf16.msra.mxu0 0
      %4455 = vmatprep.subr.bf16.mxu0 0
      %4456 = vmatpush2.bf16.msra.mxu0 0
      %4457 = vmatprep.subr.bf16.mxu0 0
      %4458 = vmatpush2.bf16.msra.mxu0 0
      %4459 = vmatprep.mubr.bf16.mxu0 0
      %4460 = vmatmul.mubr.bf16.gmra.mxu0 %v4425
      %v4461 = vpop.f32.mrf.mxu0
      %v4462 = vadd.f32 0.0, %v4461
      %v4463 = vpop.f32.mrf.mxu0
      %v4464 = vadd.f32 0.0, %v4463
      %v4465 = vpop.f32.mrf.mxu0
      %v4466 = vadd.f32 0.0, %v4465
      %v4467 = vpop.f32.mrf.mxu0
      %v4468 = vadd.f32 0.0, %v4467
      %4469 = vdwg.mxu0
      %v4470 = vld [vmem:[%s1 + $0x5d0] sm:$0xff]
      %v4471 = vld [vmem:[%s2 + $0x80] sm:$0xff]
      %4472 = vst.msk [vmem:[#allocation2] sm:$0xff] %vm176, 0.0
      %4473 = vst.msk [vmem:[#allocation2 + $0x20] sm:$0xff] %vm176, 0.0
      %4474 = vst.msk [vmem:[#allocation2 + $0x18] sm:$0xff] %vm178, 0.0
      %4475 = vst.msk [vmem:[#allocation2 + $0x38] sm:$0xff] %vm178, 0.0
      %4476 = vst [vmem:[#allocation2 + $0x8] sm:$0xff] %v4462
      %4477 = vst [vmem:[#allocation2 + $0x10] sm:$0xff] %v4464
      %4478 = vst [vmem:[#allocation2 + $0x28] sm:$0xff] %v4466
      %4479 = vst [vmem:[#allocation2 + $0x30] sm:$0xff] %v4468
      %v4480 = vld [vmem:[#allocation2] sm:$0xff]
      %v4481 = vld [vmem:[#allocation2 + $0x8] sm:$0xff]
      %v4482 = vld [vmem:[#allocation2 + $0x10] sm:$0xff]
      %v4483 = vld [vmem:[#allocation2 + $0x20] sm:$0xff]
      %v4484 = vld [vmem:[#allocation2 + $0x28] sm:$0xff]
      %v4485 = vld [vmem:[#allocation2 + $0x30] sm:$0xff]
      %4492 = vrot.lane.b32.xlu0 %v4480, 17
      %v4493 = vpop.permute.xlu0 %4492
      %4494 = vrot.lane.b32.xlu0 %v4481, 17
      %v4495 = vpop.permute.xlu0 %4494
      %4496 = vrot.lane.b32.xlu0 %v4482, 17
      %v4497 = vpop.permute.xlu0 %4496
      %4498 = vrot.lane.b32.xlu0 %v4483, 17
      %v4499 = vpop.permute.xlu0 %4498
      %4500 = vrot.lane.b32.xlu0 %v4484, 17
      %v4501 = vpop.permute.xlu0 %4500
      %4502 = vrot.lane.b32.xlu0 %v4485, 17
      %v4503 = vpop.permute.xlu0 %4502
      %v4504 = vsel %vm178, %v4493, %v4495
      %v4505 = vsel %vm178, %v4495, %v4497
      %v4506 = vsel %vm178, %v4499, %v4501
      %v4507 = vsel %vm178, %v4501, %v4503
      %v4512 = vsel %vm218, %v4504, 0.0
      %v4513 = vsel %vm219, %v4505, 0.0
      %v4514 = vsel %vm218, %v4506, 0.0
      %v4515 = vsel %vm219, %v4507, 0.0
      %v4516 = vpack.c.bf16 %v4514, %v4512
      %v4517 = vpack.c.bf16 %v4515, %v4513
      %v4520 = vunpack.c.l.b16 %v4516
      %v4521 = vunpack.c.l.b16 %v4517
      %v4522 = vunpack.c.h.b16 %v4516
      %v4523 = vunpack.c.h.b16 %v4517
      %v4524 = vpack.c.b16 %v4521, %v4520
      %v4525 = vpack.c.b16 %v4523, %v4522
      %4528 = vst [vmem:[#allocation3] sm:$0xff] %v4524
      %4529 = vst [vmem:[#allocation3 + $0x8] sm:$0xff] %v4525
      %v4530 = vld [vmem:[#allocation2] sm:$0xff]
      %v4531 = vld [vmem:[#allocation2 + $0x8] sm:$0xff]
      %v4532 = vld [vmem:[#allocation2 + $0x10] sm:$0xff]
      %v4533 = vld [vmem:[#allocation2 + $0x20] sm:$0xff]
      %v4534 = vld [vmem:[#allocation2 + $0x28] sm:$0xff]
      %v4535 = vld [vmem:[#allocation2 + $0x30] sm:$0xff]
      %v4536 = vpack.c.bf16 %v4533, %v4530
      %v4537 = vpack.c.bf16 %v4534, %v4531
      %v4538 = vpack.c.bf16 %v4535, %v4532
      %v4542 = vunpack.c.l.b16 %v4536
      %v4543 = vunpack.c.l.b16 %v4537
      %v4544 = vunpack.c.l.b16 %v4538
      %v4545 = vunpack.c.h.b16 %v4536
      %v4546 = vunpack.c.h.b16 %v4537
      %v4547 = vunpack.c.h.b16 %v4538
      %v4548 = vpack.c.b16 %v4543, %v4542
      %v4549 = vpack.c.b16 %v4544, %v4544
      %v4550 = vpack.c.b16 %v4546, %v4545
      %v4551 = vpack.c.b16 %v4547, %v4547
      %4552 = vrot.lane.b32.xlu0 %v4548, 16
      %v4553 = vpop.permute.xlu0 %4552
      %4554 = vrot.lane.b32.xlu0 %v4549, 16
      %v4555 = vpop.permute.xlu0 %4554
      %4556 = vrot.lane.b32.xlu0 %v4550, 16
      %v4557 = vpop.permute.xlu0 %4556
      %4558 = vrot.lane.b32.xlu0 %v4551, 16
      %v4559 = vpop.permute.xlu0 %4558
      %v4560 = vrot.slane %v4553, 4
      %v4561 = vrot.slane %v4555, 4
      %v4562 = vrot.slane %v4557, 4
      %v4563 = vrot.slane %v4559, 4
      %v4564 = vsel %vm264, %v4560, %v4561
      %v4565 = vsel %vm266, %v4553, %v4564
      %v4566 = vsel %vm264, %v4562, %v4563
      %v4567 = vsel %vm266, %v4557, %v4566
      %4570 = vst [vmem:[#allocation3 + $0x10] sm:$0xff] %v4565
      %4571 = vst [vmem:[#allocation3 + $0x18] sm:$0xff] %v4567
      %v4572 = vld [vmem:[#allocation2] sm:$0xff]
      %v4573 = vld [vmem:[#allocation2 + $0x8] sm:$0xff]
      %v4574 = vld [vmem:[#allocation2 + $0x10] sm:$0xff]
      %v4575 = vld [vmem:[#allocation2 + $0x20] sm:$0xff]
      %v4576 = vld [vmem:[#allocation2 + $0x28] sm:$0xff]
      %v4577 = vld [vmem:[#allocation2 + $0x30] sm:$0xff]
      %4584 = vrot.lane.b32.xlu0 %v4572, 15
      %v4585 = vpop.permute.xlu0 %4584
      %4586 = vrot.lane.b32.xlu0 %v4573, 15
      %v4587 = vpop.permute.xlu0 %4586
      %4588 = vrot.lane.b32.xlu0 %v4574, 15
      %v4589 = vpop.permute.xlu0 %4588
      %4590 = vrot.lane.b32.xlu0 %v4575, 15
      %v4591 = vpop.permute.xlu0 %4590
      %4592 = vrot.lane.b32.xlu0 %v4576, 15
      %v4593 = vpop.permute.xlu0 %4592
      %4594 = vrot.lane.b32.xlu0 %v4577, 15
      %v4595 = vpop.permute.xlu0 %4594
      %v4596 = vsel %vm286, %v4585, %v4587
      %v4597 = vsel %vm286, %v4587, %v4589
      %v4598 = vsel %vm286, %v4591, %v4593
      %v4599 = vsel %vm286, %v4593, %v4595
      %v4604 = vsel %vm275, %v4596, 0.0
      %v4605 = vsel %vm276, %v4597, 0.0
      %v4606 = vsel %vm275, %v4598, 0.0
      %v4607 = vsel %vm276, %v4599, 0.0
      %v4608 = vpack.c.bf16 %v4606, %v4604
      %v4609 = vpack.c.bf16 %v4607, %v4605
      %v4612 = vunpack.c.l.b16 %v4608
      %v4613 = vunpack.c.l.b16 %v4609
      %v4614 = vunpack.c.h.b16 %v4608
      %v4615 = vunpack.c.h.b16 %v4609
      %v4616 = vpack.c.b16 %v4613, %v4612
      %v4617 = vpack.c.b16 %v4615, %v4614
      %4620 = vst [vmem:[#allocation3 + $0x20] sm:$0xff] %v4616
      %4621 = vst [vmem:[#allocation3 + $0x28] sm:$0xff] %v4617
      %v4622 = vld [vmem:[#allocation2] sm:$0xff]
      %v4623 = vld [vmem:[#allocation2 + $0x8] sm:$0xff]
      %v4624 = vld [vmem:[#allocation2 + $0x10] sm:$0xff]
      %v4625 = vld [vmem:[#allocation2 + $0x20] sm:$0xff]
      %v4626 = vld [vmem:[#allocation2 + $0x28] sm:$0xff]
      %v4627 = vld [vmem:[#allocation2 + $0x30] sm:$0xff]
      %4634 = vrot.lane.b32.xlu0 %v4622, 1
      %v4635 = vpop.permute.xlu0 %4634
      %4636 = vrot.lane.b32.xlu0 %v4623, 1
      %v4637 = vpop.permute.xlu0 %4636
      %4638 = vrot.lane.b32.xlu0 %v4624, 1
      %v4639 = vpop.permute.xlu0 %4638
      %4640 = vrot.lane.b32.xlu0 %v4625, 1
      %v4641 = vpop.permute.xlu0 %4640
      %4642 = vrot.lane.b32.xlu0 %v4626, 1
      %v4643 = vpop.permute.xlu0 %4642
      %4644 = vrot.lane.b32.xlu0 %v4627, 1
      %v4645 = vpop.permute.xlu0 %4644
      %v4646 = vsel %vm314, %v4635, %v4637
      %v4647 = vsel %vm314, %v4637, %v4639
      %v4648 = vsel %vm314, %v4641, %v4643
      %v4649 = vsel %vm314, %v4643, %v4645
      %v4654 = vsel %vm218, %v4646, 0.0
      %v4655 = vsel %vm219, %v4647, 0.0
      %v4656 = vsel %vm218, %v4648, 0.0
      %v4657 = vsel %vm219, %v4649, 0.0
      %v4658 = vpack.c.bf16 %v4656, %v4654
      %v4659 = vpack.c.bf16 %v4657, %v4655
      %v4662 = vunpack.c.l.b16 %v4658
      %v4663 = vunpack.c.l.b16 %v4659
      %v4664 = vunpack.c.h.b16 %v4658
      %v4665 = vunpack.c.h.b16 %v4659
      %v4666 = vpack.c.b16 %v4663, %v4662
      %v4667 = vpack.c.b16 %v4665, %v4664
      %4670 = vst [vmem:[#allocation3 + $0x30] sm:$0xff] %v4666
      %4671 = vst [vmem:[#allocation3 + $0x38] sm:$0xff] %v4667
      %v4672 = vld [vmem:[#allocation2 + $0x8] sm:$0xff]
      %v4673 = vld [vmem:[#allocation2 + $0x10] sm:$0xff]
      %v4674 = vld [vmem:[#allocation2 + $0x28] sm:$0xff]
      %v4675 = vld [vmem:[#allocation2 + $0x30] sm:$0xff]
      %v4676 = vpack.c.bf16 %v4674, %v4672
      %v4677 = vpack.c.bf16 %v4675, %v4673
      %v4680 = vunpack.c.l.b16 %v4676
      %v4681 = vunpack.c.l.b16 %v4677
      %v4682 = vunpack.c.h.b16 %v4676
      %v4683 = vunpack.c.h.b16 %v4677
      %v4684 = vpack.c.b16 %v4681, %v4680
      %v4685 = vpack.c.b16 %v4683, %v4682
      %4688 = vst [vmem:[#allocation3 + $0x40] sm:$0xff] %v4684
      %4689 = vst [vmem:[#allocation3 + $0x48] sm:$0xff] %v4685
      %v4690 = vld [vmem:[#allocation2 + $0x8] sm:$0xff]
      %v4691 = vld [vmem:[#allocation2 + $0x10] sm:$0xff]
      %v4692 = vld [vmem:[#allocation2 + $0x18] sm:$0xff]
      %v4693 = vld [vmem:[#allocation2 + $0x28] sm:$0xff]
      %v4694 = vld [vmem:[#allocation2 + $0x30] sm:$0xff]
      %v4695 = vld [vmem:[#allocation2 + $0x38] sm:$0xff]
      %4702 = vrot.lane.b32.xlu0 %v4690, 127
      %v4703 = vpop.permute.xlu0 %4702
      %4704 = vrot.lane.b32.xlu0 %v4691, 127
      %v4705 = vpop.permute.xlu0 %4704
      %4706 = vrot.lane.b32.xlu0 %v4692, 127
      %v4707 = vpop.permute.xlu0 %4706
      %4708 = vrot.lane.b32.xlu0 %v4693, 127
      %v4709 = vpop.permute.xlu0 %4708
      %4710 = vrot.lane.b32.xlu0 %v4694, 127
      %v4711 = vpop.permute.xlu0 %4710
      %4712 = vrot.lane.b32.xlu0 %v4695, 127
      %v4713 = vpop.permute.xlu0 %4712
      %v4714 = vsel %vm353, %v4703, %v4705
      %v4715 = vsel %vm353, %v4705, %v4707
      %v4716 = vsel %vm353, %v4709, %v4711
      %v4717 = vsel %vm353, %v4711, %v4713
      %v4722 = vsel %vm275, %v4714, 0.0
      %v4723 = vsel %vm276, %v4715, 0.0
      %v4724 = vsel %vm275, %v4716, 0.0
      %v4725 = vsel %vm276, %v4717, 0.0
      %v4726 = vpack.c.bf16 %v4724, %v4722
      %v4727 = vpack.c.bf16 %v4725, %v4723
      %v4730 = vunpack.c.l.b16 %v4726
      %v4731 = vunpack.c.l.b16 %v4727
      %v4732 = vunpack.c.h.b16 %v4726
      %v4733 = vunpack.c.h.b16 %v4727
      %v4734 = vpack.c.b16 %v4731, %v4730
      %v4735 = vpack.c.b16 %v4733, %v4732
      %4738 = vst [vmem:[#allocation3 + $0x50] sm:$0xff] %v4734
      %4739 = vst [vmem:[#allocation3 + $0x58] sm:$0xff] %v4735
      %v4740 = vld [vmem:[#allocation2 + $0x8] sm:$0xff]
      %v4741 = vld [vmem:[#allocation2 + $0x10] sm:$0xff]
      %v4742 = vld [vmem:[#allocation2 + $0x18] sm:$0xff]
      %v4743 = vld [vmem:[#allocation2 + $0x28] sm:$0xff]
      %v4744 = vld [vmem:[#allocation2 + $0x30] sm:$0xff]
      %v4745 = vld [vmem:[#allocation2 + $0x38] sm:$0xff]
      %4752 = vrot.lane.b32.xlu0 %v4740, 113
      %v4753 = vpop.permute.xlu0 %4752
      %4754 = vrot.lane.b32.xlu0 %v4741, 113
      %v4755 = vpop.permute.xlu0 %4754
      %4756 = vrot.lane.b32.xlu0 %v4742, 113
      %v4757 = vpop.permute.xlu0 %4756
      %4758 = vrot.lane.b32.xlu0 %v4743, 113
      %v4759 = vpop.permute.xlu0 %4758
      %4760 = vrot.lane.b32.xlu0 %v4744, 113
      %v4761 = vpop.permute.xlu0 %4760
      %4762 = vrot.lane.b32.xlu0 %v4745, 113
      %v4763 = vpop.permute.xlu0 %4762
      %v4764 = vsel %vm381, %v4753, %v4755
      %v4765 = vsel %vm381, %v4755, %v4757
      %v4766 = vsel %vm381, %v4759, %v4761
      %v4767 = vsel %vm381, %v4761, %v4763
      %v4772 = vsel %vm218, %v4764, 0.0
      %v4773 = vsel %vm219, %v4765, 0.0
      %v4774 = vsel %vm218, %v4766, 0.0
      %v4775 = vsel %vm219, %v4767, 0.0
      %v4776 = vpack.c.bf16 %v4774, %v4772
      %v4777 = vpack.c.bf16 %v4775, %v4773
      %v4780 = vunpack.c.l.b16 %v4776
      %v4781 = vunpack.c.l.b16 %v4777
      %v4782 = vunpack.c.h.b16 %v4776
      %v4783 = vunpack.c.h.b16 %v4777
      %v4784 = vpack.c.b16 %v4781, %v4780
      %v4785 = vpack.c.b16 %v4783, %v4782
      %4788 = vst [vmem:[#allocation3 + $0x60] sm:$0xff] %v4784
      %4789 = vst [vmem:[#allocation3 + $0x68] sm:$0xff] %v4785
      %v4790 = vld [vmem:[#allocation2 + $0x8] sm:$0xff]
      %v4791 = vld [vmem:[#allocation2 + $0x10] sm:$0xff]
      %v4792 = vld [vmem:[#allocation2 + $0x18] sm:$0xff]
      %v4793 = vld [vmem:[#allocation2 + $0x28] sm:$0xff]
      %v4794 = vld [vmem:[#allocation2 + $0x30] sm:$0xff]
      %v4795 = vld [vmem:[#allocation2 + $0x38] sm:$0xff]
      %v4796 = vpack.c.bf16 %v4793, %v4790
      %v4797 = vpack.c.bf16 %v4794, %v4791
      %v4798 = vpack.c.bf16 %v4795, %v4792
      %v4802 = vunpack.c.l.b16 %v4796
      %v4803 = vunpack.c.l.b16 %v4797
      %v4804 = vunpack.c.l.b16 %v4798
      %v4805 = vunpack.c.h.b16 %v4796
      %v4806 = vunpack.c.h.b16 %v4797
      %v4807 = vunpack.c.h.b16 %v4798
      %v4808 = vpack.c.b16 %v4803, %v4802
      %v4809 = vpack.c.b16 %v4804, %v4804
      %v4810 = vpack.c.b16 %v4806, %v4805
      %v4811 = vpack.c.b16 %v4807, %v4807
      %4812 = vrot.lane.b32.xlu0 %v4808, 112
      %v4813 = vpop.permute.xlu0 %4812
      %4814 = vrot.lane.b32.xlu0 %v4809, 112
      %v4815 = vpop.permute.xlu0 %4814
      %4816 = vrot.lane.b32.xlu0 %v4810, 112
      %v4817 = vpop.permute.xlu0 %4816
      %4818 = vrot.lane.b32.xlu0 %v4811, 112
      %v4819 = vpop.permute.xlu0 %4818
      %v4820 = vrot.slane %v4813, 4
      %v4821 = vrot.slane %v4815, 4
      %v4822 = vrot.slane %v4817, 4
      %v4823 = vrot.slane %v4819, 4
      %v4824 = vsel %vm264, %v4820, %v4821
      %v4825 = vsel %vm418, %v4813, %v4824
      %v4826 = vsel %vm264, %v4822, %v4823
      %v4827 = vsel %vm418, %v4817, %v4826
      %4830 = vst [vmem:[#allocation3 + $0x70] sm:$0xff] %v4825
      %4831 = vst [vmem:[#allocation3 + $0x78] sm:$0xff] %v4827
      %v4832 = vld [vmem:[#allocation2 + $0x8] sm:$0xff]
      %v4833 = vld [vmem:[#allocation2 + $0x10] sm:$0xff]
      %v4834 = vld [vmem:[#allocation2 + $0x18] sm:$0xff]
      %v4835 = vld [vmem:[#allocation2 + $0x28] sm:$0xff]
      %v4836 = vld [vmem:[#allocation2 + $0x30] sm:$0xff]
      %v4837 = vld [vmem:[#allocation2 + $0x38] sm:$0xff]
      %4844 = vrot.lane.b32.xlu0 %v4832, 111
      %v4845 = vpop.permute.xlu0 %4844
      %4846 = vrot.lane.b32.xlu0 %v4833, 111
      %v4847 = vpop.permute.xlu0 %4846
      %4848 = vrot.lane.b32.xlu0 %v4834, 111
      %v4849 = vpop.permute.xlu0 %4848
      %4850 = vrot.lane.b32.xlu0 %v4835, 111
      %v4851 = vpop.permute.xlu0 %4850
      %4852 = vrot.lane.b32.xlu0 %v4836, 111
      %v4853 = vpop.permute.xlu0 %4852
      %4854 = vrot.lane.b32.xlu0 %v4837, 111
      %v4855 = vpop.permute.xlu0 %4854
      %v4856 = vsel %vm434, %v4845, %v4847
      %v4857 = vsel %vm434, %v4847, %v4849
      %v4858 = vsel %vm434, %v4851, %v4853
      %v4859 = vsel %vm434, %v4853, %v4855
      %v4864 = vsel %vm275, %v4856, 0.0
      %v4865 = vsel %vm276, %v4857, 0.0
      %v4866 = vsel %vm275, %v4858, 0.0
      %v4867 = vsel %vm276, %v4859, 0.0
      %v4868 = vpack.c.bf16 %v4866, %v4864
      %v4869 = vpack.c.bf16 %v4867, %v4865
      %v4872 = vunpack.c.l.b16 %v4868
      %v4873 = vunpack.c.l.b16 %v4869
      %v4874 = vunpack.c.h.b16 %v4868
      %v4875 = vunpack.c.h.b16 %v4869
      %v4876 = vpack.c.b16 %v4873, %v4872
      %v4877 = vpack.c.b16 %v4875, %v4874
      %4880 = vst [vmem:[#allocation3 + $0x80] sm:$0xff] %v4876
      %4881 = vst [vmem:[#allocation3 + $0x88] sm:$0xff] %v4877
      %v4882 = vld [vmem:[#allocation3] sm:$0xff]
      %v4883 = vld [vmem:[#allocation3 + $0x8] sm:$0xff]
      %v4884 = vld [vmem:[#allocation3 + $0x10] sm:$0xff]
      %v4885 = vld [vmem:[#allocation3 + $0x18] sm:$0xff]
      %v4886 = vld [vmem:[#allocation3 + $0x20] sm:$0xff]
      %v4887 = vld [vmem:[#allocation3 + $0x28] sm:$0xff]
      %v4888 = vld [vmem:[#allocation3 + $0x30] sm:$0xff]
      %v4889 = vld [vmem:[#allocation3 + $0x38] sm:$0xff]
      %v4890 = vld [vmem:[#allocation3 + $0x40] sm:$0xff]
      %v4891 = vld [vmem:[#allocation3 + $0x48] sm:$0xff]
      %v4892 = vld [vmem:[#allocation3 + $0x50] sm:$0xff]
      %v4893 = vld [vmem:[#allocation3 + $0x58] sm:$0xff]
      %v4894 = vld [vmem:[#allocation3 + $0x60] sm:$0xff]
      %v4895 = vld [vmem:[#allocation3 + $0x68] sm:$0xff]
      %v4896 = vld [vmem:[#allocation3 + $0x70] sm:$0xff]
      %v4897 = vld [vmem:[#allocation3 + $0x78] sm:$0xff]
      %v4898 = vld [vmem:[#allocation3 + $0x80] sm:$0xff]
      %v4899 = vld [vmem:[#allocation3 + $0x88] sm:$0xff]
      %4901 = vset.pattern.permute.xlu0 0
      %4902 = vperm.xlu0 %4901, %v4471
      %v4903 = vpop.permute.xlu0 %4902
      %v4906 = vunpack.c.l.b16 %v4470
      %v4907 = vunpack.c.h.b16 %v4470
      %v4908 = vpack.c.b16 %v4906, %v4906
      %v4909 = vpack.c.b16 %v4907, %v4907
      %v4929 = vunpack.c.l.b16 %v4882
      %v4930 = vunpack.c.h.b16 %v4882
      %v4931 = vunpack.c.l.b16 %v4883
      %v4932 = vunpack.c.h.b16 %v4883
      %v4933 = vunpack.c.l.b16 %v4884
      %v4934 = vunpack.c.h.b16 %v4884
      %v4935 = vunpack.c.l.b16 %v4885
      %v4936 = vunpack.c.h.b16 %v4885
      %v4937 = vunpack.c.l.b16 %v4886
      %v4938 = vunpack.c.h.b16 %v4886
      %v4939 = vunpack.c.l.b16 %v4887
      %v4940 = vunpack.c.h.b16 %v4887
      %v4941 = vunpack.c.l.b16 %v4888
      %v4942 = vunpack.c.h.b16 %v4888
      %v4943 = vunpack.c.l.b16 %v4889
      %v4944 = vunpack.c.h.b16 %v4889
      %v4945 = vunpack.c.l.b16 %v4890
      %v4946 = vunpack.c.h.b16 %v4890
      %v4947 = vunpack.c.l.b16 %v4891
      %v4948 = vunpack.c.h.b16 %v4891
      %v4949 = vunpack.c.l.b16 %v4892
      %v4950 = vunpack.c.h.b16 %v4892
      %v4951 = vunpack.c.l.b16 %v4893
      %v4952 = vunpack.c.h.b16 %v4893
      %v4953 = vunpack.c.l.b16 %v4894
      %v4954 = vunpack.c.h.b16 %v4894
      %v4955 = vunpack.c.l.b16 %v4895
      %v4956 = vunpack.c.h.b16 %v4895
      %v4957 = vunpack.c.l.b16 %v4896
      %v4958 = vunpack.c.h.b16 %v4896
      %v4959 = vunpack.c.l.b16 %v4897
      %v4960 = vunpack.c.h.b16 %v4897
      %v4961 = vunpack.c.l.b16 %v4898
      %v4962 = vunpack.c.h.b16 %v4898
      %v4963 = vunpack.c.l.b16 %v4899
      %v4964 = vunpack.c.h.b16 %v4899
      %v4965 = vpack.c.b16 %v4931, %v4929
      %v4966 = vpack.c.b16 %v4932, %v4930
      %v4967 = vpack.c.b16 %v4935, %v4933
      %v4968 = vpack.c.b16 %v4936, %v4934
      %v4969 = vpack.c.b16 %v4939, %v4937
      %v4970 = vpack.c.b16 %v4940, %v4938
      %v4971 = vpack.c.b16 %v4943, %v4941
      %v4972 = vpack.c.b16 %v4944, %v4942
      %v4973 = vpack.c.b16 %v4947, %v4945
      %v4974 = vpack.c.b16 %v4948, %v4946
      %v4975 = vpack.c.b16 %v4951, %v4949
      %v4976 = vpack.c.b16 %v4952, %v4950
      %v4977 = vpack.c.b16 %v4955, %v4953
      %v4978 = vpack.c.b16 %v4956, %v4954
      %v4979 = vpack.c.b16 %v4959, %v4957
      %v4980 = vpack.c.b16 %v4960, %v4958
      %v4981 = vpack.c.b16 %v4963, %v4961
      %v4982 = vpack.c.b16 %v4964, %v4962
      %v5002 = vsel %vm2115, %v4909, 0
      %5004 = vmatprep.subr.bf16.mxu0 %v4980
      %5005 = vmatpush1.bf16.msra.mxu0 %v4979
      %5006 = vmatprep.subr.bf16.mxu0 %v4978
      %5007 = vmatpush1.bf16.msra.mxu0 %v4977
      %5008 = vmatprep.subr.bf16.mxu0 %v4976
      %5009 = vmatpush1.bf16.msra.mxu0 %v4975
      %5010 = vmatprep.subr.bf16.mxu0 %v4974
      %5011 = vmatpush1.bf16.msra.mxu0 %v4973
      %5012 = vmatprep.subr.bf16.mxu0 %v4972
      %5013 = vmatpush1.bf16.msra.mxu0 %v4971
      %5014 = vmatprep.subr.bf16.mxu0 %v4970
      %5015 = vmatpush1.bf16.msra.mxu0 %v4969
      %5016 = vmatprep.subr.bf16.mxu0 %v4968
      %5017 = vmatpush1.bf16.msra.mxu0 %v4967
      %5018 = vmatprep.subr.bf16.mxu0 %v4966
      %5019 = vmatpush1.bf16.msra.mxu0 %v4965
      %5020 = vmatprep.subr.bf16.mxu0 0
      %5021 = vmatpush2.bf16.msra.mxu0 0
      %5022 = vmatprep.subr.bf16.mxu0 0
      %5023 = vmatpush2.bf16.msra.mxu0 0
      %5024 = vmatprep.subr.bf16.mxu0 0
      %5025 = vmatpush2.bf16.msra.mxu0 0
      %5026 = vmatprep.subr.bf16.mxu0 0
      %5027 = vmatpush2.bf16.msra.mxu0 0
      %5028 = vmatprep.subr.bf16.mxu0 0
      %5029 = vmatpush2.bf16.msra.mxu0 0
      %5030 = vmatprep.subr.bf16.mxu0 0
      %5031 = vmatpush2.bf16.msra.mxu0 0
      %5032 = vmatprep.subr.bf16.mxu0 0
      %5033 = vmatpush2.bf16.msra.mxu0 0
      %5034 = vmatprep.subr.bf16.mxu0 %v4982
      %5035 = vmatpush2.bf16.msra.mxu0 %v4981
      %5036 = vmatprep.mubr.bf16.mxu0 %v5002
      %5037 = vmatmul.mubr.bf16.gmra.mxu0 %v4908
      %v5038 = vpop.f32.mrf.mxu0
      %v5039 = vadd.f32 %v4903, %v5038
      %v5040 = vpop.f32.mrf.mxu0
      %v5041 = vadd.f32 %v4903, %v5040
      %v5042 = vpop.f32.mrf.mxu0
      %v5043 = vpop.f32.mrf.mxu0
      %5044 = vdwg.mxu0
      %v5045 = vmax.f32 %v5039, 0.0
      %v5046 = vmax.f32 %v5041, 0.0
      %v5047 = vadd.f32 %v5045, %v897
      %v5048 = vadd.f32 %v5046, %v898
      %v5049 = vld [vmem:[%s1 + $0x5d8] sm:$0xf]
      %v5050 = vld [vmem:[%s2 + $0x88] sm:$0xff]
      %5051 = vst.msk [vmem:[#allocation2] sm:$0xff] %vm176, 0.0
      %5052 = vst.msk [vmem:[#allocation2 + $0x18] sm:$0xff] %vm178, 0.0
      %5053 = vst [vmem:[#allocation2 + $0x8] sm:$0xff] %v5047
      %5054 = vst [vmem:[#allocation2 + $0x10] sm:$0xff] %v5048
      %v5055 = vld [vmem:[#allocation2] sm:$0xff]
      %v5056 = vld [vmem:[#allocation2 + $0x8] sm:$0xff]
      %v5057 = vld [vmem:[#allocation2 + $0x10] sm:$0xff]
      %5061 = vrot.lane.b32.xlu0 %v5055, 17
      %v5062 = vpop.permute.xlu0 %5061
      %5063 = vrot.lane.b32.xlu0 %v5056, 17
      %v5064 = vpop.permute.xlu0 %5063
      %5065 = vrot.lane.b32.xlu0 %v5057, 17
      %v5066 = vpop.permute.xlu0 %5065
      %v5067 = vsel %vm178, %v5062, %v5064
      %v5068 = vsel %vm178, %v5064, %v5066
      %v5071 = vsel %vm218, %v5067, 0.0
      %v5072 = vsel %vm219, %v5068, 0.0
      %v5073 = vpack.c.bf16 %v5071, %v5071
      %v5074 = vpack.c.bf16 %v5072, %v5072
      %v5077 = vunpack.c.l.b16 %v5073
      %v5078 = vunpack.c.l.b16 %v5074
      %v5079 = vpack.c.b16 %v5078, %v5077
      %5081 = vst [vmem:[#allocation3] sm:$0xff] %v5079
      %v5082 = vld [vmem:[#allocation2] sm:$0xff]
      %v5083 = vld [vmem:[#allocation2 + $0x8] sm:$0xff]
      %v5084 = vld [vmem:[#allocation2 + $0x10] sm:$0xff]
      %v5085 = vpack.c.bf16 %v5082, %v5082
      %v5086 = vpack.c.bf16 %v5083, %v5083
      %v5087 = vpack.c.bf16 %v5084, %v5084
      %v5091 = vunpack.c.l.b16 %v5085
      %v5092 = vunpack.c.l.b16 %v5086
      %v5093 = vunpack.c.l.b16 %v5087
      %v5094 = vpack.c.b16 %v5092, %v5091
      %v5095 = vpack.c.b16 %v5093, %v5093
      %5096 = vrot.lane.b32.xlu0 %v5094, 16
      %v5097 = vpop.permute.xlu0 %5096
      %5098 = vrot.lane.b32.xlu0 %v5095, 16
      %v5099 = vpop.permute.xlu0 %5098
      %v5100 = vrot.slane %v5097, 4
      %v5101 = vrot.slane %v5099, 4
      %v5102 = vsel %vm264, %v5100, %v5101
      %v5103 = vsel %vm266, %v5097, %v5102
      %5105 = vst [vmem:[#allocation3 + $0x8] sm:$0xff] %v5103
      %v5106 = vld [vmem:[#allocation2] sm:$0xff]
      %v5107 = vld [vmem:[#allocation2 + $0x8] sm:$0xff]
      %v5108 = vld [vmem:[#allocation2 + $0x10] sm:$0xff]
      %5112 = vrot.lane.b32.xlu0 %v5106, 15
      %v5113 = vpop.permute.xlu0 %5112
      %5114 = vrot.lane.b32.xlu0 %v5107, 15
      %v5115 = vpop.permute.xlu0 %5114
      %5116 = vrot.lane.b32.xlu0 %v5108, 15
      %v5117 = vpop.permute.xlu0 %5116
      %v5118 = vsel %vm286, %v5113, %v5115
      %v5119 = vsel %vm286, %v5115, %v5117
      %v5122 = vsel %vm275, %v5118, 0.0
      %v5123 = vsel %vm276, %v5119, 0.0
      %v5124 = vpack.c.bf16 %v5122, %v5122
      %v5125 = vpack.c.bf16 %v5123, %v5123
      %v5128 = vunpack.c.l.b16 %v5124
      %v5129 = vunpack.c.l.b16 %v5125
      %v5130 = vpack.c.b16 %v5129, %v5128
      %5132 = vst [vmem:[#allocation3 + $0x10] sm:$0xff] %v5130
      %v5133 = vld [vmem:[#allocation2] sm:$0xff]
      %v5134 = vld [vmem:[#allocation2 + $0x8] sm:$0xff]
      %v5135 = vld [vmem:[#allocation2 + $0x10] sm:$0xff]
      %5139 = vrot.lane.b32.xlu0 %v5133, 1
      %v5140 = vpop.permute.xlu0 %5139
      %5141 = vrot.lane.b32.xlu0 %v5134, 1
      %v5142 = vpop.permute.xlu0 %5141
      %5143 = vrot.lane.b32.xlu0 %v5135, 1
      %v5144 = vpop.permute.xlu0 %5143
      %v5145 = vsel %vm314, %v5140, %v5142
      %v5146 = vsel %vm314, %v5142, %v5144
      %v5149 = vsel %vm218, %v5145, 0.0
      %v5150 = vsel %vm219, %v5146, 0.0
      %v5151 = vpack.c.bf16 %v5149, %v5149
      %v5152 = vpack.c.bf16 %v5150, %v5150
      %v5155 = vunpack.c.l.b16 %v5151
      %v5156 = vunpack.c.l.b16 %v5152
      %v5157 = vpack.c.b16 %v5156, %v5155
      %5159 = vst [vmem:[#allocation3 + $0x18] sm:$0xff] %v5157
      %v5160 = vld [vmem:[#allocation2 + $0x8] sm:$0xff]
      %v5161 = vld [vmem:[#allocation2 + $0x10] sm:$0xff]
      %v5162 = vpack.c.bf16 %v5160, %v5160
      %v5163 = vpack.c.bf16 %v5161, %v5161
      %v5166 = vunpack.c.l.b16 %v5162
      %v5167 = vunpack.c.l.b16 %v5163
      %v5168 = vpack.c.b16 %v5167, %v5166
      %5170 = vst [vmem:[#allocation3 + $0x20] sm:$0xff] %v5168
      %v5171 = vld [vmem:[#allocation2 + $0x8] sm:$0xff]
      %v5172 = vld [vmem:[#allocation2 + $0x10] sm:$0xff]
      %v5173 = vld [vmem:[#allocation2 + $0x18] sm:$0xff]
      %5177 = vrot.lane.b32.xlu0 %v5171, 127
      %v5178 = vpop.permute.xlu0 %5177
      %5179 = vrot.lane.b32.xlu0 %v5172, 127
      %v5180 = vpop.permute.xlu0 %5179
      %5181 = vrot.lane.b32.xlu0 %v5173, 127
      %v5182 = vpop.permute.xlu0 %5181
      %v5183 = vsel %vm353, %v5178, %v5180
      %v5184 = vsel %vm353, %v5180, %v5182
      %v5187 = vsel %vm275, %v5183, 0.0
      %v5188 = vsel %vm276, %v5184, 0.0
      %v5189 = vpack.c.bf16 %v5187, %v5187
      %v5190 = vpack.c.bf16 %v5188, %v5188
      %v5193 = vunpack.c.l.b16 %v5189
      %v5194 = vunpack.c.l.b16 %v5190
      %v5195 = vpack.c.b16 %v5194, %v5193
      %5197 = vst [vmem:[#allocation3 + $0x28] sm:$0xff] %v5195
      %v5198 = vld [vmem:[#allocation2 + $0x8] sm:$0xff]
      %v5199 = vld [vmem:[#allocation2 + $0x10] sm:$0xff]
      %v5200 = vld [vmem:[#allocation2 + $0x18] sm:$0xff]
      %5204 = vrot.lane.b32.xlu0 %v5198, 113
      %v5205 = vpop.permute.xlu0 %5204
      %5206 = vrot.lane.b32.xlu0 %v5199, 113
      %v5207 = vpop.permute.xlu0 %5206
      %5208 = vrot.lane.b32.xlu0 %v5200, 113
      %v5209 = vpop.permute.xlu0 %5208
      %v5210 = vsel %vm381, %v5205, %v5207
      %v5211 = vsel %vm381, %v5207, %v5209
      %v5214 = vsel %vm218, %v5210, 0.0
      %v5215 = vsel %vm219, %v5211, 0.0
      %v5216 = vpack.c.bf16 %v5214, %v5214
      %v5217 = vpack.c.bf16 %v5215, %v5215
      %v5220 = vunpack.c.l.b16 %v5216
      %v5221 = vunpack.c.l.b16 %v5217
      %v5222 = vpack.c.b16 %v5221, %v5220
      %5224 = vst [vmem:[#allocation3 + $0x30] sm:$0xff] %v5222
      %v5225 = vld [vmem:[#allocation2 + $0x8] sm:$0xff]
      %v5226 = vld [vmem:[#allocation2 + $0x10] sm:$0xff]
      %v5227 = vld [vmem:[#allocation2 + $0x18] sm:$0xff]
      %v5228 = vpack.c.bf16 %v5225, %v5225
      %v5229 = vpack.c.bf16 %v5226, %v5226
      %v5230 = vpack.c.bf16 %v5227, %v5227
      %v5234 = vunpack.c.l.b16 %v5228
      %v5235 = vunpack.c.l.b16 %v5229
      %v5236 = vunpack.c.l.b16 %v5230
      %v5237 = vpack.c.b16 %v5235, %v5234
      %v5238 = vpack.c.b16 %v5236, %v5236
      %5239 = vrot.lane.b32.xlu0 %v5237, 112
      %v5240 = vpop.permute.xlu0 %5239
      %5241 = vrot.lane.b32.xlu0 %v5238, 112
      %v5242 = vpop.permute.xlu0 %5241
      %v5243 = vrot.slane %v5240, 4
      %v5244 = vrot.slane %v5242, 4
      %v5245 = vsel %vm264, %v5243, %v5244
      %v5246 = vsel %vm418, %v5240, %v5245
      %5248 = vst [vmem:[#allocation3 + $0x38] sm:$0xff] %v5246
      %v5249 = vld [vmem:[#allocation2 + $0x8] sm:$0xff]
      %v5250 = vld [vmem:[#allocation2 + $0x10] sm:$0xff]
      %v5251 = vld [vmem:[#allocation2 + $0x18] sm:$0xff]
      %5255 = vrot.lane.b32.xlu0 %v5249, 111
      %v5256 = vpop.permute.xlu0 %5255
      %5257 = vrot.lane.b32.xlu0 %v5250, 111
      %v5258 = vpop.permute.xlu0 %5257
      %5259 = vrot.lane.b32.xlu0 %v5251, 111
      %v5260 = vpop.permute.xlu0 %5259
      %v5261 = vsel %vm434, %v5256, %v5258
      %v5262 = vsel %vm434, %v5258, %v5260
      %v5265 = vsel %vm275, %v5261, 0.0
      %v5266 = vsel %vm276, %v5262, 0.0
      %v5267 = vpack.c.bf16 %v5265, %v5265
      %v5268 = vpack.c.bf16 %v5266, %v5266
      %v5271 = vunpack.c.l.b16 %v5267
      %v5272 = vunpack.c.l.b16 %v5268
      %v5273 = vpack.c.b16 %v5272, %v5271
      %5275 = vst [vmem:[#allocation3 + $0x40] sm:$0xff] %v5273
      %v5276 = vld [vmem:[#allocation3] sm:$0xff]
      %v5277 = vld [vmem:[#allocation3 + $0x8] sm:$0xff]
      %v5278 = vld [vmem:[#allocation3 + $0x10] sm:$0xff]
      %v5279 = vld [vmem:[#allocation3 + $0x18] sm:$0xff]
      %v5280 = vld [vmem:[#allocation3 + $0x20] sm:$0xff]
      %v5281 = vld [vmem:[#allocation3 + $0x28] sm:$0xff]
      %v5282 = vld [vmem:[#allocation3 + $0x30] sm:$0xff]
      %v5283 = vld [vmem:[#allocation3 + $0x38] sm:$0xff]
      %v5284 = vld [vmem:[#allocation3 + $0x40] sm:$0xff]
      %5286 = vset.pattern.permute.xlu0 0
      %5287 = vperm.xlu0 %5286, %v5050
      %v5288 = vpop.permute.xlu0 %5287
      %v5299 = vunpack.c.l.b16 %v5276
      %v5300 = vunpack.c.h.b16 %v5276
      %v5301 = vunpack.c.l.b16 %v5277
      %v5302 = vunpack.c.h.b16 %v5277
      %v5303 = vunpack.c.l.b16 %v5278
      %v5304 = vunpack.c.h.b16 %v5278
      %v5305 = vunpack.c.l.b16 %v5279
      %v5306 = vunpack.c.h.b16 %v5279
      %v5307 = vunpack.c.l.b16 %v5280
      %v5308 = vunpack.c.h.b16 %v5280
      %v5309 = vunpack.c.l.b16 %v5281
      %v5310 = vunpack.c.h.b16 %v5281
      %v5311 = vunpack.c.l.b16 %v5282
      %v5312 = vunpack.c.h.b16 %v5282
      %v5313 = vunpack.c.l.b16 %v5283
      %v5314 = vunpack.c.h.b16 %v5283
      %v5315 = vunpack.c.l.b16 %v5284
      %v5316 = vunpack.c.h.b16 %v5284
      %v5317 = vpack.c.b16 %v5301, %v5299
      %v5318 = vpack.c.b16 %v5302, %v5300
      %v5319 = vpack.c.b16 %v5305, %v5303
      %v5320 = vpack.c.b16 %v5306, %v5304
      %v5321 = vpack.c.b16 %v5309, %v5307
      %v5322 = vpack.c.b16 %v5310, %v5308
      %v5323 = vpack.c.b16 %v5313, %v5311
      %v5324 = vpack.c.b16 %v5314, %v5312
      %v5325 = vpack.c.b16 %v5315, %v5315
      %v5326 = vpack.c.b16 %v5316, %v5316
      %v5336 = vsel %vm509, %v5049, 0
      %v5339 = vsel %vm513, %v5325, 0
      %v5342 = vsel %vm513, %v5326, 0
      %5344 = vmatprep.subr.bf16.mxu0 0
      %5345 = vmatpush1.bf16.msra.mxu0 0
      %5346 = vmatprep.subr.bf16.mxu0 0
      %5347 = vmatpush1.bf16.msra.mxu0 0
      %5348 = vmatprep.subr.bf16.mxu0 0
      %5349 = vmatpush1.bf16.msra.mxu0 0
      %5350 = vmatprep.subr.bf16.mxu0 %v5342
      %5351 = vmatpush1.bf16.msra.mxu0 %v5339
      %5352 = vmatprep.subr.bf16.mxu0 %v5324
      %5353 = vmatpush1.bf16.msra.mxu0 %v5323
      %5354 = vmatprep.subr.bf16.mxu0 %v5322
      %5355 = vmatpush1.bf16.msra.mxu0 %v5321
      %5356 = vmatprep.subr.bf16.mxu0 %v5320
      %5357 = vmatpush1.bf16.msra.mxu0 %v5319
      %5358 = vmatprep.subr.bf16.mxu0 %v5318
      %5359 = vmatpush1.bf16.msra.mxu0 %v5317
      %5360 = vmatprep.subr.bf16.mxu0 0
      %5361 = vmatpush2.bf16.msra.mxu0 0
      %5362 = vmatprep.subr.bf16.mxu0 0
      %5363 = vmatpush2.bf16.msra.mxu0 0
      %5364 = vmatprep.subr.bf16.mxu0 0
      %5365 = vmatpush2.bf16.msra.mxu0 0
      %5366 = vmatprep.subr.bf16.mxu0 0
      %5367 = vmatpush2.bf16.msra.mxu0 0
      %5368 = vmatprep.subr.bf16.mxu0 0
      %5369 = vmatpush2.bf16.msra.mxu0 0
      %5370 = vmatprep.subr.bf16.mxu0 0
      %5371 = vmatpush2.bf16.msra.mxu0 0
      %5372 = vmatprep.subr.bf16.mxu0 0
      %5373 = vmatpush2.bf16.msra.mxu0 0
      %5374 = vmatprep.subr.bf16.mxu0 0
      %5375 = vmatpush2.bf16.msra.mxu0 0
      %5376 = vmatprep.mubr.bf16.mxu0 0
      %5377 = vmatmul.mubr.bf16.gmra.mxu0 %v5336
      %v5378 = vpop.f32.mrf.mxu0
      %v5379 = vadd.f32 %v5288, %v5378
      %v5380 = vpop.f32.mrf.mxu0
      %v5381 = vadd.f32 %v5288, %v5380
      %v5382 = vpop.f32.mrf.mxu0
      %v5383 = vpop.f32.mrf.mxu0
      %5384 = vdwg.mxu0
      %v5385 = vmax.f32 %v5379, 0.0
      %v5386 = vmax.f32 %v5381, 0.0
      %v5387 = vld [vmem:[%s1 + $0x5e0] sm:$0x1]
      %v5388 = vld [vmem:[%s2 + $0x90] sm:$0x3]
      %v5389 = vpack.c.bf16 %v5385, %v5385
      %v5390 = vpack.c.bf16 %v5386, %v5386
      %5392 = vset.pattern.permute.xlu0 0
      %5393 = vperm.xlu0 %5392, %v5388
      %v5394 = vpop.permute.xlu0 %5393
      %vm5396 = vcmask 64512
      %v5398 = vsel %vm5396, %v5387, 0
      %v5401 = vsel %vm513, %v5389, 0
      %v5404 = vsel %vm513, %v5390, 0
      %5406 = vmatprep.subr.bf16.mxu0 0
      %5407 = vmatpush1.bf16.msra.mxu0 0
      %5408 = vmatprep.subr.bf16.mxu0 0
      %5409 = vmatpush1.bf16.msra.mxu0 0
      %5410 = vmatprep.subr.bf16.mxu0 0
      %5411 = vmatpush1.bf16.msra.mxu0 0
      %5412 = vmatprep.subr.bf16.mxu0 0
      %5413 = vmatpush1.bf16.msra.mxu0 0
      %5414 = vmatprep.subr.bf16.mxu0 0
      %5415 = vmatpush1.bf16.msra.mxu0 0
      %5416 = vmatprep.subr.bf16.mxu0 0
      %5417 = vmatpush1.bf16.msra.mxu0 0
      %5418 = vmatprep.subr.bf16.mxu0 0
      %5419 = vmatpush1.bf16.msra.mxu0 0
      %5420 = vmatprep.subr.bf16.mxu0 %v5404
      %5421 = vmatpush1.bf16.msra.mxu0 %v5401
      %5422 = vmatprep.subr.bf16.mxu0 0
      %5423 = vmatpush2.bf16.msra.mxu0 0
      %5424 = vmatprep.subr.bf16.mxu0 0
      %5425 = vmatpush2.bf16.msra.mxu0 0
      %5426 = vmatprep.subr.bf16.mxu0 0
      %5427 = vmatpush2.bf16.msra.mxu0 0
      %5428 = vmatprep.subr.bf16.mxu0 0
      %5429 = vmatpush2.bf16.msra.mxu0 0
      %5430 = vmatprep.subr.bf16.mxu0 0
      %5431 = vmatpush2.bf16.msra.mxu0 0
      %5432 = vmatprep.subr.bf16.mxu0 0
      %5433 = vmatpush2.bf16.msra.mxu0 0
      %5434 = vmatprep.subr.bf16.mxu0 0
      %5435 = vmatpush2.bf16.msra.mxu0 0
      %5436 = vmatprep.subr.bf16.mxu0 0
      %5437 = vmatpush2.bf16.msra.mxu0 0
      %5438 = vmatprep.mubr.bf16.mxu0 0
      %5439 = vmatmul.mubr.bf16.gmra.mxu0 %v5398
      %v5440 = vpop.f32.mrf.mxu0
      %v5441 = vadd.f32 %v5394, %v5440
      %v5442 = vpop.f32.mrf.mxu0
      %v5443 = vadd.f32 %v5394, %v5442
      %v5444 = vpop.f32.mrf.mxu0
      %v5445 = vpop.f32.mrf.mxu0
      %5446 = vdwg.mxu0
      %v5449 = vcombine.low %v5441, %v5443
      %v5451 = vunpack.c.l.s4 1983009808
      %v5452 = vunpack.c.0.s8 %v5451
      %v5453 = vlaneseq
      %v5454 = vshrl.u32 %v5453, 7
      %v5455 = vsub.s32 %v5452, %v5454
      %v5456 = vrot.slane %v5449, %v5455
      %5458 = vst [vmem:[%s170] sm:$0xf] %v5456
      %p5459 = scmp.lt.s32.totalorder %s14, 1
      %s5460 = scalar_select %p5459, %s14, 1
      %s5461 = smul.addr %s5460, 2
      %s5462 = smul.addr %s5461, 2
      %s5463 = scalar_lea.vmem %s3, %s5462
      // Predicated region
      $region33: #{ladder_forward.1} parent=31 // pred_check
        %p5464 = pneg %p100
      $region34: #{ladder_forward.1} parent=31 // pred_check_branch
        %5466 = sbr.rel (%p5464) target = $region36
      $region35: #{ladder_forward.1} parent=31 // pred_region
        _
      $region36: #{ladder_forward.1} parent=31 // pred_fallthru
        _
    $region32: #{ladder_forward.1} parent=5 // pred_fallthru
      _
    %p5467 = scmp.le.s32.totalorder 2, %s9
    // Predicated region
    $region37: #{ladder_forward.1} parent=5 // pred_check
      %p5468 = pneg %p5467
    $region38: #{ladder_forward.1} parent=5 // pred_check_branch
      %5470 = sbr.rel (%p5468) target = $region40
    $region39: #{ladder_forward.1} parent=5 // pred_region
      %s5471 = ssub.s32 %s9, 2
      // Predicated region
      $region41: #{ladder_forward.1} parent=39 // pred_check
        %p5472 = pneg %p106
      $region42: #{ladder_forward.1} parent=39 // pred_check_branch
        %5474 = sbr.rel (%p5472) target = $region44
      $region43: #{ladder_forward.1} parent=39 // pred_region
        %p5475 = scmp.lt.s32.totalorder %s15, 1
        %s5476 = scalar_select %p5475, %s15, 1
        %s5477 = smul.addr %s5476, 2
        %s5478 = smul.addr %s5477, 2
        %s5479 = scalar_lea.vmem %s3, %s5478
      $region44: #{ladder_forward.1} parent=39 // pred_fallthru
        _
    $region40: #{ladder_forward.1} parent=5 // pred_fallthru
      _
  $region6: #{ladder_forward.1} parent=0 // loop_footer
    %s13 = sadd.s32 1, %s9
  $region7: #{ladder_forward.1} parent=0 // loop_footer_branch
    %8 = sbr.rel target = $region3
  $region8: #{ladder_forward.1} parent=0 // loop_exit
    _

</llo_original>
